<compile_context>
chip_gen: v5e
topology: v5e:2x2
jax: 0.10.0
libtpu: 0.0.40
codegen_flags: <defaults>
</compile_context>

<pallas_src>
import math
from functools import partial

import jax
import jax.numpy as jnp
from jax.experimental import pallas as pl
from jax.experimental.pallas import tpu as pltpu


def _round_up(x, m):
    return ((x + m - 1) // m) * m


def _vq_kernel(x_ref, wt_ref, b_ref, g_ref, beta_ref, cbn_ref,
               q_ref, idx_ref, cnt_ref, sse_ref,
               *, ln_eps, norm_eps, n_valid, has_pad):
    i = pl.program_id(0)
    tm, d = x_ref.shape
    k = cbn_ref.shape[0]
    f32 = jnp.float32
    hi = jax.lax.Precision.HIGHEST

    x = x_ref[...].astype(f32)                                       # (TM, D)

    # ---- pre_vq: Linear (weight pre-transposed in wrapper) + LayerNorm ------
    h = jnp.dot(x, wt_ref[...], preferred_element_type=f32, precision=hi)
    h = h + b_ref[...]
    mu = jnp.mean(h, axis=-1, keepdims=True)
    var = jnp.mean((h - mu) ** 2, axis=-1, keepdims=True)
    inputs = (h - mu) * jax.lax.rsqrt(var + ln_eps)
    inputs = inputs * g_ref[...] + beta_ref[...]                     # (TM, D)

    # ---- F.normalize rows (codebook rows already normalized in wrapper) -----
    nrm = jnp.sqrt(jnp.sum(inputs * inputs, axis=-1, keepdims=True))
    flat = inputs / jnp.maximum(nrm, norm_eps)                       # (TM, D)

    # ---- cosine similarity: argmin(distance) == argmax(similarity) ----------
    cbn = cbn_ref[...]                                               # (K, D)
    s = jax.lax.dot_general(flat, cbn, (((1,), (1,)), ((), ())),
                            preferred_element_type=f32, precision=hi)  # (TM,K)

    # ---- hard assignment: row max -> first index attaining it ---------------
    iota_k = jax.lax.broadcasted_iota(jnp.int32, (1, k), 1)          # (1, K)
    smax = jnp.max(s, axis=-1, keepdims=True)                        # (TM, 1)
    idx = jnp.min(jnp.where(s == smax, iota_k, k), axis=-1,
                  keepdims=True)                                     # (TM, 1)

    onehot = (iota_k == idx).astype(f32)                             # (TM, K)

    # ---- quantize (HIGHEST so selected codebook rows stay f32-exact) --------
    quantized = jnp.dot(onehot, cbn, preferred_element_type=f32, precision=hi)

    diff = quantized - inputs
    row_sse = jnp.sum(diff * diff, axis=-1, keepdims=True)           # (TM, 1)

    q_ref[...] = quantized.astype(q_ref.dtype)
    idx_ref[...] = idx

    # ---- per-tile stats: counts on the idle MXU, sublane-replicated blocks ---
    def _stats(row_w, row_mask):
        cnt = jax.lax.dot_general(row_w, onehot, (((1,), (0,)), ((), ())),
                                  preferred_element_type=f32)        # (1, K)
        cnt_ref[...] = jnp.broadcast_to(cnt, (8, k))
        if row_mask is None:
            sse = jnp.sum(row_sse, keepdims=True)                    # (1, 1)
        else:
            sse = jnp.sum(jnp.where(row_mask, row_sse, 0.0), keepdims=True)
        sse_ref[...] = jnp.broadcast_to(sse, (8, 128))

    if has_pad:
        last = pl.num_programs(0) - 1

        @pl.when(i != last)
        def _steady():
            _stats(jnp.ones((1, tm), f32), None)

        @pl.when(i == last)
        def _tail():
            base = i * tm
            row_w = (base + jax.lax.broadcasted_iota(jnp.int32, (1, tm), 1)
                     < n_valid).astype(f32)                          # (1, TM)
            row_mask = (base + jax.lax.broadcasted_iota(jnp.int32, (tm, 1), 0)
                        < n_valid)                                   # (TM, 1)
            _stats(row_w, row_mask)
    else:
        _stats(jnp.ones((1, tm), f32), None)


def vector_quantizer_forward(x, w_lin, b_lin, ln_w, ln_b, codebook,
                             commitment_cost=0.25, tile_rows=None):
    """Eval-mode forward of VectorQuantizer. x: (..., D) feature-last."""
    *lead, D = x.shape
    N = int(math.prod(lead))
    K, Dc = codebook.shape
    assert Dc == D

    flat_x = x.reshape(N, D).astype(jnp.float32)

    # One-time XLA-side prep (free relative to the tiled kernel):
    #   * L2-normalize codebook rows once (the module overwrites its weights
    #     with the normalized version before computing distances / quantize).
    #   * pre-transpose the Linear weight so the kernel never transposes.
    cb_n = codebook / jnp.maximum(
        jnp.sqrt(jnp.sum(codebook * codebook, axis=1, keepdims=True)), 1e-12)
    w_t = jnp.transpose(w_lin)                                       # (D, D)

    # ---- tile over N ---------------------------------------------------------
    n8 = max(8, _round_up(N, 8))
    if tile_rows is None:
        # ~5 simultaneously live (TM, K) f32 working slabs per step; keep them
        # inside ~20 MiB so tiles + resident params stay well under the 48 MiB
        # vmem cap (headroom against v7x's 64 MiB physical per-TC VMEM).
        tile_rows = (20 << 20) // (5 * 4 * max(K, 1))
    tm = max(8, min(int(tile_rows), 512, n8))
    if tm >= 256:
        tm = (tm // 256) * 256      # keep the MXU M dimension full on v6e/v7x
    else:
        tm = (tm // 8) * 8
    tm = max(8, tm)
    n_pad = _round_up(N, tm)
    has_pad = n_pad != N
    if has_pad:
        flat_x = jnp.pad(flat_x, ((0, n_pad - N), (0, 0)))
    grid_n = n_pad // tm

    # VMEM budget: double-buffered resident params + tiles + (TM, K) slabs.
    est = 4 * (2 * (K * D + D * D + 3 * D)       # resident params (x2 buffers)
               + 2 * tm * (2 * D + 2)            # x / q / idx tiles (x2)
               + 2 * (8 * K + 8 * 128)           # per-tile cnt / sse blocks
               + 6 * tm * K)                     # live (TM, K) f32 working set
    vmem_limit = int(min(max(est + (4 << 20), 32 << 20), 48 << 20))

    cost = pl.CostEstimate(
        flops=2 * N * D * (2 * K + D) + 2 * N * K + 10 * N * K,
        transcendentals=3 * N,
        bytes_accessed=4 * (2 * N * D + K * D + D * D + N
                            + grid_n * (8 * K + 8 * 128)),
    )

    kernel = partial(_vq_kernel, ln_eps=1e-5, norm_eps=1e-12,
                     n_valid=N, has_pad=has_pad)

    out_shapes = (
        jax.ShapeDtypeStruct((n_pad, D), jnp.float32),       # quantized
        jax.ShapeDtypeStruct((n_pad, 1), jnp.int32),         # encoding indices
        jax.ShapeDtypeStruct((8 * grid_n, K), jnp.float32),  # per-tile counts
        jax.ShapeDtypeStruct((8 * grid_n, 128), jnp.float32),  # per-tile SSE
    )
    grid_spec = pltpu.PrefetchScalarGridSpec(
        num_scalar_prefetch=0,
        grid=(grid_n,),
        in_specs=[
            pl.BlockSpec((tm, D), lambda i: (i, 0)),     # x tile (pipelined)
            pl.BlockSpec((D, D), lambda i: (0, 0)),      # W^T      (resident)
            pl.BlockSpec((1, D), lambda i: (0, 0)),      # bias     (resident)
            pl.BlockSpec((1, D), lambda i: (0, 0)),      # ln gamma (resident)
            pl.BlockSpec((1, D), lambda i: (0, 0)),      # ln beta  (resident)
            pl.BlockSpec((K, D), lambda i: (0, 0)),      # cb_n     (resident)
        ],
        out_specs=(
            pl.BlockSpec((tm, D), lambda i: (i, 0)),     # quantized tile
            pl.BlockSpec((tm, 1), lambda i: (i, 0)),     # idx tile
            pl.BlockSpec((8, K), lambda i: (i, 0)),      # per-tile counts
            pl.BlockSpec((8, 128), lambda i: (i, 0)),    # per-tile SSE
        ),
    )

    q, idx, cnt_p, sse_p = pl.pallas_call(
        kernel,
        grid_spec=grid_spec,
        out_shape=out_shapes,
        compiler_params=pltpu.CompilerParams(
            dimension_semantics=("parallel",),   # no cross-tile state
            vmem_limit_bytes=vmem_limit),
        cost_estimate=cost,
    )(flat_x, w_t, b_lin.reshape(1, D), ln_w.reshape(1, D),
      ln_b.reshape(1, D), cb_n.astype(jnp.float32))

    # ---- tiny XLA-side finalize (K-length reductions; counts exact < 2^24) ---
    counts = jnp.sum(cnt_p.reshape(grid_n, 8, K)[:, 0, :], axis=0)   # (K,)
    sse = jnp.sum(sse_p.reshape(grid_n, 8, 128)[:, 0, 0])
    avg = counts / jnp.float32(N)
    ent = jnp.sum(avg * jnp.log(avg + 1e-10))
    mse = sse / jnp.float32(N * D)
    loss = mse + commitment_cost * mse - ent
    perplexity = jnp.exp(-ent)
    num_active = jnp.sum(counts > 0)

    quantized = q[:N].reshape(x.shape).astype(x.dtype)
    encoding_indices = idx[:N, 0].reshape(tuple(lead))
    return quantized, loss, encoding_indices, perplexity, num_active


def _reference_forward(x, w_lin, b_lin, ln_w, ln_b, codebook,
                       commitment_cost=0.25):
    """Pure-JAX reference mirroring the PyTorch eval-mode forward."""
    *lead, D = x.shape
    hi = jax.lax.Precision.HIGHEST
    h = jnp.dot(x, w_lin.T, precision=hi) + b_lin
    mu = h.mean(-1, keepdims=True)
    var = ((h - mu) ** 2).mean(-1, keepdims=True)
    inputs = (h - mu) / jnp.sqrt(var + 1e-5) * ln_w + ln_b
    cb_n = codebook / jnp.maximum(
        jnp.linalg.norm(codebook, axis=1, keepdims=True), 1e-12)
    flat = inputs.reshape(-1, D)
    flat = flat / jnp.maximum(jnp.linalg.norm(flat, axis=1, keepdims=True), 1e-12)
    d = (jnp.sum(flat ** 2, 1, keepdims=True)
         - 2 * jnp.dot(flat, cb_n.T, precision=hi)
         + jnp.sum(cb_n ** 2, 1))
    idx = jnp.argmin(d, axis=1)
    probs = jax.nn.one_hot(idx, codebook.shape[0], dtype=jnp.float32)
    avg = probs.mean(0)
    ent = jnp.sum(avg * jnp.log(avg + 1e-10))
    perp = jnp.exp(-ent)
    active = jnp.sum(avg > 0)
    quant = jnp.dot(probs, cb_n, precision=hi).reshape(x.shape)
    e = jnp.mean((quant - inputs) ** 2)
    loss = e + commitment_cost * e - ent
    return quant, loss, idx.reshape(tuple(lead)), perp, active


if __name__ == "__main__":
    # small shapes consistent with the module: a sequence of embedding vectors
    B, T, D, K = 2, 8, 32, 1024
    key = jax.random.PRNGKey(0)
    kx, kcb, kw, kb = jax.random.split(key, 4)

    x = jax.random.normal(kx, (B, T, D), dtype=jnp.float32)
    codebook = jax.random.uniform(kcb, (K, D), minval=-1.0, maxval=1.0,
                                  dtype=jnp.float32)
    bound = 1.0 / math.sqrt(D)
    w_lin = jax.random.uniform(kw, (D, D), minval=-bound, maxval=bound,
                               dtype=jnp.float32)
    b_lin = jax.random.uniform(kb, (D,), minval=-bound, maxval=bound,
                               dtype=jnp.float32)
    ln_w = jnp.ones((D,), jnp.float32)
    ln_b = jnp.zeros((D,), jnp.float32)

    # single-tile path (no padding)
    outs = vector_quantizer_forward(x, w_lin, b_lin, ln_w, ln_b, codebook)
    outs = jax.block_until_ready(outs)
    quantized, loss, indices, perplexity, num_active = outs

    ref = _reference_forward(x, w_lin, b_lin, ln_w, ln_b, codebook)
    assert quantized.shape == x.shape and indices.shape == (B, T)
    assert jnp.allclose(quantized, ref[0], atol=1e-5, rtol=1e-5)
    assert jnp.allclose(loss, ref[1], atol=1e-5, rtol=1e-5)
    assert jnp.array_equal(indices, ref[2])
    assert jnp.allclose(perplexity, ref[3], atol=1e-4, rtol=1e-5)
    assert int(num_active) == int(ref[4])

    # multi-tile + row-padding path: N=176 tokens, forced TM=64 -> 3 tiles with
    # the last tile partially masked; exercises the grid, the resident
    # codebook, the deferred tail mask, and the per-tile count/SSE partials.
    x2 = jax.random.normal(jax.random.PRNGKey(1), (2, 88, D), dtype=jnp.float32)
    o2 = vector_quantizer_forward(x2, w_lin, b_lin, ln_w, ln_b, codebook,
                                  tile_rows=64)
    o2 = jax.block_until_ready(o2)
    r2 = _reference_forward(x2, w_lin, b_lin, ln_w, ln_b, codebook)
    assert jnp.allclose(o2[0], r2[0], atol=1e-5, rtol=1e-5)
    assert jnp.allclose(o2[1], r2[1], atol=1e-5, rtol=1e-5)
    assert jnp.array_equal(o2[2], r2[2])
    assert jnp.allclose(o2[3], r2[3], atol=1e-4, rtol=1e-5)
    assert int(o2[4]) == int(r2[4])

    print("KERNEL_OK")
</pallas_src>

<mosaic_0001>
module attributes {stable_mosaic.version = 11 : i64} {
  func.func @_vq_kernel(%arg0: i32, %arg1: memref<16x32xf32, #tpu.memory_space<vmem>>, %arg2: memref<32x32xf32, #tpu.memory_space<vmem>>, %arg3: memref<1x32xf32, #tpu.memory_space<vmem>>, %arg4: memref<1x32xf32, #tpu.memory_space<vmem>>, %arg5: memref<1x32xf32, #tpu.memory_space<vmem>>, %arg6: memref<1024x32xf32, #tpu.memory_space<vmem>>, %arg7: memref<16x32xf32, #tpu.memory_space<vmem>>, %arg8: memref<16x1xi32, #tpu.memory_space<vmem>>, %arg9: memref<8x1024xf32, #tpu.memory_space<vmem>>, %arg10: memref<8x128xf32, #tpu.memory_space<vmem>>) attributes {dimension_semantics = [#tpu.dimension_semantics<parallel>], iteration_bounds = array<i64: 1>, scalar_prefetch = 0 : i64, scratch_operands = 0 : i64, tpu.core_type = #tpu.core_type<tc>, window_params = [{transform_indices = @transform_0, window_bounds = array<i64: 16, 32>}, {pipeline_mode = #tpu.pipeline_mode<synchronous>, transform_indices = @transform_1, window_bounds = array<i64: 32, 32>}, {pipeline_mode = #tpu.pipeline_mode<synchronous>, transform_indices = @transform_2, window_bounds = array<i64: 1, 32>}, {pipeline_mode = #tpu.pipeline_mode<synchronous>, transform_indices = @transform_3, window_bounds = array<i64: 1, 32>}, {pipeline_mode = #tpu.pipeline_mode<synchronous>, transform_indices = @transform_4, window_bounds = array<i64: 1, 32>}, {pipeline_mode = #tpu.pipeline_mode<synchronous>, transform_indices = @transform_5, window_bounds = array<i64: 1024, 32>}, {transform_indices = @transform_6, window_bounds = array<i64: 16, 32>}, {transform_indices = @transform_7, window_bounds = array<i64: 16, 1>}, {transform_indices = @transform_8, window_bounds = array<i64: 8, 1024>}, {transform_indices = @transform_9, window_bounds = array<i64: 8, 128>}]} {
    %c0 = arith.constant 0 : index
    %c0_0 = arith.constant 0 : index
    %0 = vector.load %arg1[%c0, %c0_0] : memref<16x32xf32, #tpu.memory_space<vmem>>, vector<16x32xf32>
    %c0_1 = arith.constant 0 : index
    %c0_2 = arith.constant 0 : index
    %1 = vector.load %arg2[%c0_1, %c0_2] : memref<32x32xf32, #tpu.memory_space<vmem>>, vector<32x32xf32>
    %cst = arith.constant dense<0.000000e+00> : vector<16x32xf32>
    %2 = tpu.matmul %0, %1, %cst {dimension_numbers = #tpu.dot_dimension_numbers<[1], [0], [0], [1], [0, 0, 1, 1], [], []>, precision = #tpu.contract_precision<fp32>} : vector<16x32xf32>, vector<32x32xf32>, vector<16x32xf32> -> vector<16x32xf32>
    %c0_3 = arith.constant 0 : index
    %c0_4 = arith.constant 0 : index
    %3 = vector.load %arg3[%c0_3, %c0_4] : memref<1x32xf32, #tpu.memory_space<vmem>>, vector<1x32xf32>
    %4 = vector.broadcast %3 : vector<1x32xf32> to vector<16x32xf32>
    %5 = arith.addf %2, %4 : vector<16x32xf32>
    %cst_5 = arith.constant dense<0.000000e+00> : vector<16xf32>
    %6 = vector.multi_reduction <add>, %5, %cst_5 [1] : vector<16x32xf32> to vector<16xf32>
    %7 = vector.shape_cast %6 : vector<16xf32> to vector<16x1xf32>
    %cst_6 = arith.constant 3.200000e+01 : f32
    %8 = vector.broadcast %cst_6 : f32 to vector<16x1xf32>
    %9 = arith.divf %7, %8 : vector<16x1xf32>
    %10 = vector.broadcast %9 : vector<16x1xf32> to vector<16x32xf32>
    %11 = arith.subf %5, %10 : vector<16x32xf32>
    %12 = arith.mulf %11, %11 : vector<16x32xf32>
    %cst_7 = arith.constant dense<0.000000e+00> : vector<16xf32>
    %13 = vector.multi_reduction <add>, %12, %cst_7 [1] : vector<16x32xf32> to vector<16xf32>
    %14 = vector.shape_cast %13 : vector<16xf32> to vector<16x1xf32>
    %cst_8 = arith.constant 3.200000e+01 : f32
    %15 = vector.broadcast %cst_8 : f32 to vector<16x1xf32>
    %16 = arith.divf %14, %15 : vector<16x1xf32>
    %17 = vector.broadcast %9 : vector<16x1xf32> to vector<16x32xf32>
    %18 = arith.subf %5, %17 : vector<16x32xf32>
    %cst_9 = arith.constant 9.99999974E-6 : f32
    %19 = vector.broadcast %cst_9 : f32 to vector<16x1xf32>
    %20 = arith.addf %16, %19 : vector<16x1xf32>
    %21 = math.rsqrt %20 : vector<16x1xf32>
    %22 = vector.broadcast %21 : vector<16x1xf32> to vector<16x32xf32>
    %23 = arith.mulf %18, %22 : vector<16x32xf32>
    %c0_10 = arith.constant 0 : index
    %c0_11 = arith.constant 0 : index
    %24 = vector.load %arg4[%c0_10, %c0_11] : memref<1x32xf32, #tpu.memory_space<vmem>>, vector<1x32xf32>
    %25 = vector.broadcast %24 : vector<1x32xf32> to vector<16x32xf32>
    %26 = arith.mulf %23, %25 : vector<16x32xf32>
    %c0_12 = arith.constant 0 : index
    %c0_13 = arith.constant 0 : index
    %27 = vector.load %arg5[%c0_12, %c0_13] : memref<1x32xf32, #tpu.memory_space<vmem>>, vector<1x32xf32>
    %28 = vector.broadcast %27 : vector<1x32xf32> to vector<16x32xf32>
    %29 = arith.addf %26, %28 : vector<16x32xf32>
    %30 = arith.mulf %29, %29 : vector<16x32xf32>
    %cst_14 = arith.constant dense<0.000000e+00> : vector<16xf32>
    %31 = vector.multi_reduction <add>, %30, %cst_14 [1] : vector<16x32xf32> to vector<16xf32>
    %32 = vector.shape_cast %31 : vector<16xf32> to vector<16x1xf32>
    %33 = math.sqrt %32 : vector<16x1xf32>
    %cst_15 = arith.constant 9.99999996E-13 : f32
    %34 = vector.broadcast %cst_15 : f32 to vector<16x1xf32>
    %35 = arith.maximumf %33, %34 : vector<16x1xf32>
    %36 = vector.broadcast %35 : vector<16x1xf32> to vector<16x32xf32>
    %37 = arith.divf %29, %36 : vector<16x32xf32>
    %c0_16 = arith.constant 0 : index
    %c0_17 = arith.constant 0 : index
    %38 = vector.load %arg6[%c0_16, %c0_17] : memref<1024x32xf32, #tpu.memory_space<vmem>>, vector<1024x32xf32>
    %cst_18 = arith.constant dense<0.000000e+00> : vector<16x1024xf32>
    %39 = tpu.matmul %37, %38, %cst_18 {dimension_numbers = #tpu.dot_dimension_numbers<[1], [1], [0], [0], [0, 0, 1, 0], [], []>, precision = #tpu.contract_precision<fp32>} : vector<16x32xf32>, vector<1024x32xf32>, vector<16x1024xf32> -> vector<16x1024xf32>
    %40 = tpu.iota {dimensions = array<i32: 1>} : vector<1x1024xi32>
    %cst_19 = arith.constant dense<0xFF800000> : vector<16xf32>
    %41 = vector.multi_reduction <maximumf>, %39, %cst_19 [1] : vector<16x1024xf32> to vector<16xf32>
    %42 = vector.shape_cast %41 : vector<16xf32> to vector<16x1xf32>
    %43 = vector.broadcast %42 : vector<16x1xf32> to vector<16x1024xf32>
    %44 = arith.cmpf oeq, %39, %43 : vector<16x1024xf32>
    %c1024_i32 = arith.constant 1024 : i32
    %45 = vector.shape_cast %40 : vector<1x1024xi32> to vector<1x1024xi32>
    %46 = vector.broadcast %45 : vector<1x1024xi32> to vector<16x1024xi32>
    %47 = vector.broadcast %c1024_i32 : i32 to vector<16x1024xi32>
    %48 = arith.select %44, %46, %47 : vector<16x1024xi1>, vector<16x1024xi32>
    %cst_20 = arith.constant dense<2147483647> : vector<16xi32>
    %49 = vector.multi_reduction <minsi>, %48, %cst_20 [1] : vector<16x1024xi32> to vector<16xi32>
    %50 = vector.shape_cast %49 : vector<16xi32> to vector<16x1xi32>
    %51 = vector.broadcast %40 : vector<1x1024xi32> to vector<16x1024xi32>
    %52 = vector.broadcast %50 : vector<16x1xi32> to vector<16x1024xi32>
    %53 = arith.cmpi eq, %51, %52 : vector<16x1024xi32>
    %54 = arith.extui %53 : vector<16x1024xi1> to vector<16x1024xi32>
    %55 = arith.sitofp %54 : vector<16x1024xi32> to vector<16x1024xf32>
    %cst_21 = arith.constant dense<0.000000e+00> : vector<16x32xf32>
    %56 = tpu.matmul %55, %38, %cst_21 {dimension_numbers = #tpu.dot_dimension_numbers<[1], [0], [0], [1], [0, 0, 1, 1], [], []>, precision = #tpu.contract_precision<fp32>} : vector<16x1024xf32>, vector<1024x32xf32>, vector<16x32xf32> -> vector<16x32xf32>
    %57 = arith.subf %56, %29 : vector<16x32xf32>
    %58 = arith.mulf %57, %57 : vector<16x32xf32>
    %cst_22 = arith.constant dense<0.000000e+00> : vector<16xf32>
    %59 = vector.multi_reduction <add>, %58, %cst_22 [1] : vector<16x32xf32> to vector<16xf32>
    %60 = vector.shape_cast %59 : vector<16xf32> to vector<16x1xf32>
    %c0_23 = arith.constant 0 : index
    %c0_24 = arith.constant 0 : index
    %61 = vector.load %arg7[%c0_23, %c0_24] : memref<16x32xf32, #tpu.memory_space<vmem>>, vector<16x32xf32>
    tpu.vector_store %arg7[%c0_23, %c0_24], %56 {strides = array<i32>} : memref<16x32xf32, #tpu.memory_space<vmem>>, vector<16x32xf32>,
    %c0_25 = arith.constant 0 : index
    %c0_26 = arith.constant 0 : index
    %62 = vector.load %arg8[%c0_25, %c0_26] : memref<16x1xi32, #tpu.memory_space<vmem>>, vector<16x1xi32>
    tpu.vector_store %arg8[%c0_25, %c0_26], %50 {strides = array<i32>} : memref<16x1xi32, #tpu.memory_space<vmem>>, vector<16x1xi32>,
    %cst_27 = arith.constant 1.000000e+00 : f32
    %63 = vector.broadcast %cst_27 : f32 to vector<1x16xf32>
    %cst_28 = arith.constant dense<0.000000e+00> : vector<1x1024xf32>
    %64 = tpu.matmul %63, %55, %cst_28 {dimension_numbers = #tpu.dot_dimension_numbers<[1], [0], [0], [1], [0, 0, 1, 1], [], []>} : vector<1x16xf32>, vector<16x1024xf32>, vector<1x1024xf32> -> vector<1x1024xf32>
    %65 = vector.shape_cast %64 : vector<1x1024xf32> to vector<1x1024xf32>
    %66 = vector.broadcast %65 : vector<1x1024xf32> to vector<8x1024xf32>
    %c0_29 = arith.constant 0 : index
    %c0_30 = arith.constant 0 : index
    %67 = vector.load %arg9[%c0_29, %c0_30] : memref<8x1024xf32, #tpu.memory_space<vmem>>, vector<8x1024xf32>
    tpu.vector_store %arg9[%c0_29, %c0_30], %66 {strides = array<i32>} : memref<8x1024xf32, #tpu.memory_space<vmem>>, vector<8x1024xf32>,
    %68 = vector.shape_cast %60 : vector<16x1xf32> to vector<1x16x1xf32>
    %cst_31 = arith.constant dense<0.000000e+00> : vector<1xf32>
    %69 = vector.multi_reduction <add>, %68, %cst_31 [1, 2] : vector<1x16x1xf32> to vector<1xf32>
    %70 = vector.shape_cast %69 : vector<1xf32> to vector<1x1x1xf32>
    %71 = vector.extract %70[0, 0, 0] : f32 from vector<1x1x1xf32>
    %72 = vector.broadcast %71 : f32 to vector<1x1xf32>
    %73 = vector.shape_cast %72 : vector<1x1xf32> to vector<1x1xf32>
    %74 = vector.broadcast %73 : vector<1x1xf32> to vector<8x128xf32>
    %c0_32 = arith.constant 0 : index
    %c0_33 = arith.constant 0 : index
    %75 = vector.load %arg10[%c0_32, %c0_33] : memref<8x128xf32, #tpu.memory_space<vmem>>, vector<8x128xf32>
    tpu.vector_store %arg10[%c0_32, %c0_33], %74 {strides = array<i32>} : memref<8x128xf32, #tpu.memory_space<vmem>>, vector<8x128xf32>,
    return
  }
  func.func @transform_0(%arg0: i32) -> (i32, i32) {
    %c0_i32 = arith.constant 0 : i32
    %c0_i32_0 = arith.constant 0 : i32
    return %arg0, %c0_i32 : i32, i32
  }
  func.func @transform_1(%arg0: i32) -> (i32, i32) {
    %c0_i32 = arith.constant 0 : i32
    %c0_i32_0 = arith.constant 0 : i32
    %c0_i32_1 = arith.constant 0 : i32
    return %c0_i32, %c0_i32_0 : i32, i32
  }
  func.func @transform_2(%arg0: i32) -> (i32, i32) {
    %c0_i32 = arith.constant 0 : i32
    %c0_i32_0 = arith.constant 0 : i32
    %c0_i32_1 = arith.constant 0 : i32
    return %c0_i32, %c0_i32_0 : i32, i32
  }
  func.func @transform_3(%arg0: i32) -> (i32, i32) {
    %c0_i32 = arith.constant 0 : i32
    %c0_i32_0 = arith.constant 0 : i32
    %c0_i32_1 = arith.constant 0 : i32
    return %c0_i32, %c0_i32_0 : i32, i32
  }
  func.func @transform_4(%arg0: i32) -> (i32, i32) {
    %c0_i32 = arith.constant 0 : i32
    %c0_i32_0 = arith.constant 0 : i32
    %c0_i32_1 = arith.constant 0 : i32
    return %c0_i32, %c0_i32_0 : i32, i32
  }
  func.func @transform_5(%arg0: i32) -> (i32, i32) {
    %c0_i32 = arith.constant 0 : i32
    %c0_i32_0 = arith.constant 0 : i32
    %c0_i32_1 = arith.constant 0 : i32
    return %c0_i32, %c0_i32_0 : i32, i32
  }
  func.func @transform_6(%arg0: i32) -> (i32, i32) {
    %c0_i32 = arith.constant 0 : i32
    %c0_i32_0 = arith.constant 0 : i32
    return %arg0, %c0_i32 : i32, i32
  }
  func.func @transform_7(%arg0: i32) -> (i32, i32) {
    %c0_i32 = arith.constant 0 : i32
    %c0_i32_0 = arith.constant 0 : i32
    return %arg0, %c0_i32 : i32, i32
  }
  func.func @transform_8(%arg0: i32) -> (i32, i32) {
    %c0_i32 = arith.constant 0 : i32
    %c0_i32_0 = arith.constant 0 : i32
    return %arg0, %c0_i32 : i32, i32
  }
  func.func @transform_9(%arg0: i32) -> (i32, i32) {
    %c0_i32 = arith.constant 0 : i32
    %c0_i32_0 = arith.constant 0 : i32
    return %arg0, %c0_i32 : i32, i32
  }
}

</mosaic_0001>

<llo_original>
// kernel: tpu_custom_call.1
$region0: #{tpu_custom_call.1}
  #allocation0 [shape = 'u32[]', space=smem, size = 0x4, offset = 0x4, fixed_abs, tag = 'smem constant byte address 0x4 - core index']
  #allocation1 [shape = 'u32[72,128]{1,0:T(1,128)}', space=vmem, size = 0x9000, scoped, tag = 'internal scratch']
  %s0 = inlined_call_operand.vmem [shape: f32[16,32], index: 0, kind: input, shape index: {}]
  %s1 = inlined_call_operand.vmem [shape: f32[32,32], index: 1, kind: input, shape index: {}]
  %s2 = inlined_call_operand.vmem [shape: f32[1,32], index: 2, kind: input, shape index: {}]
  %s3 = inlined_call_operand.vmem [shape: f32[1,32], index: 3, kind: input, shape index: {}]
  %s4 = inlined_call_operand.vmem [shape: f32[1,32], index: 4, kind: input, shape index: {}]
  %s5 = inlined_call_operand.vmem [shape: f32[1024,32], index: 5, kind: input, shape index: {}]
  %s6 = inlined_call_operand.hbm [shape: f32[16,32], index: 6, kind: output, shape index: {0}]
  %s7 = inlined_call_operand.vmem [shape: s32[16,1], index: 7, kind: output, shape index: {1}]
  %s8 = inlined_call_operand.hbm [shape: f32[8,1024], index: 8, kind: output, shape index: {2}]
  %s9 = inlined_call_operand.hbm [shape: f32[8,128], index: 9, kind: output, shape index: {3}]
  %10 = xla_tuple %s6, %s7, %s8, %s9
  %s11 = sld [smem:[#allocation0]]
  $region58: #{tpu_custom_call.1} parent=0
    _
  %s13 = ssub.s32 1, %s11
  %s14 = scalar_select 0, %s13, %s11
  $region1: #{tpu_custom_call.1} parent=0
    #allocation2 [shape = 'u8[8192]{0}', space=vmem, size = 0x2000, scoped, tag = 'output window, operand 0, single buffered']
    #allocation3 [shape = 's32[1]{0}', space=sflag, size = 0x4, scoped, tag = 'scoped memory for tpu_custom_call.1']
    #allocation4 [shape = 'u8[32768]{0}', space=vmem, size = 0x8000, scoped, tag = 'output window, operand 2, single buffered']
    #allocation5 [shape = 's32[1]{0}', space=sflag, size = 0x4, scoped, tag = 'scoped memory for tpu_custom_call.1']
    #allocation6 [shape = 'u8[4096]{0}', space=vmem, size = 0x1000, scoped, tag = 'output window, operand 3, single buffered']
    %15 = vsyncpa [#allocation3], 0
    %16 = vsyncpa [#allocation5], 0
    // Predicated region
    $region2: #{tpu_custom_call.1} parent=1 // pred_check
      _
    $region3: #{tpu_custom_call.1} parent=1 // pred_check_branch
      %18 = sbr.rel (0) target = $region5
    $region4: #{tpu_custom_call.1} parent=1 // pred_region
      _
    $region5: #{tpu_custom_call.1} parent=1 // pred_fallthru
      _
    // Predicated region
    $region6: #{tpu_custom_call.1} parent=1 // pred_check
      _
    $region7: #{tpu_custom_call.1} parent=1 // pred_check_branch
      %20 = sbr.rel (0) target = $region9
    $region8: #{tpu_custom_call.1} parent=1 // pred_region
      _
    $region9: #{tpu_custom_call.1} parent=1 // pred_fallthru
      _
    // Predicated region
    $region10: #{tpu_custom_call.1} parent=1 // pred_check
      _
    $region11: #{tpu_custom_call.1} parent=1 // pred_check_branch
      %22 = sbr.rel (0) target = $region13
    $region12: #{tpu_custom_call.1} parent=1 // pred_region
      _
    $region13: #{tpu_custom_call.1} parent=1 // pred_fallthru
      _
    // Predicated region
    $region14: #{tpu_custom_call.1} parent=1 // pred_check
      _
    $region15: #{tpu_custom_call.1} parent=1 // pred_check_branch
      %24 = sbr.rel (0) target = $region17
    $region16: #{tpu_custom_call.1} parent=1 // pred_region
      _
    $region17: #{tpu_custom_call.1} parent=1 // pred_fallthru
      _
    // Predicated region
    $region18: #{tpu_custom_call.1} parent=1 // pred_check
      _
    $region19: #{tpu_custom_call.1} parent=1 // pred_check_branch
      %26 = sbr.rel (0) target = $region21
    $region20: #{tpu_custom_call.1} parent=1 // pred_region
      _
    $region21: #{tpu_custom_call.1} parent=1 // pred_fallthru
      _
    // Predicated region
    $region22: #{tpu_custom_call.1} parent=1 // pred_check
      _
    $region23: #{tpu_custom_call.1} parent=1 // pred_check_branch
      %28 = sbr.rel (0) target = $region25
    $region24: #{tpu_custom_call.1} parent=1 // pred_region
      _
    $region25: #{tpu_custom_call.1} parent=1 // pred_fallthru
      _
    %v29 = vld [vmem:[%s0] sm:$0xff]
    %v30 = vld [vmem:[%s0 + $0x8] sm:$0xff]
    %v31 = vld [vmem:[%s1] sm:$0xff]
    %v32 = vld [vmem:[%s1 + $0x8] sm:$0xff]
    %v33 = vld [vmem:[%s1 + $0x10] sm:$0xff]
    %v34 = vld [vmem:[%s1 + $0x18] sm:$0xff]
    %v35 = vld [vmem:[%s2] sm:$0x1]
    %v37 = vperm.slane %v35, 0
    %vm39 = vcmask 261120
    %v41 = vsel %vm39, %v29, 0
    %v44 = vsel %vm39, %v30, 0
    %46 = vmatpush.msra.mxu0 0.0
    %47 = vmatpush.msra.mxu0 0.0
    %48 = vmatpush.msra.mxu0 0.0
    %49 = vmatpush.msra.mxu0 0.0
    %50 = vmatpush.msra.mxu0 0.0
    %51 = vmatpush.msra.mxu0 0.0
    %52 = vmatpush.msra.mxu0 0.0
    %53 = vmatpush.msra.mxu0 0.0
    %54 = vmatpush.msra.mxu0 0.0
    %55 = vmatpush.msra.mxu0 0.0
    %56 = vmatpush.msra.mxu0 0.0
    %57 = vmatpush.msra.mxu0 0.0
    %v58 = vand.u32 %v34, 4294901760
    %59 = vmatpush.msra.mxu0 %v58
    %v60 = vand.u32 %v33, 4294901760
    %61 = vmatpush.msra.mxu0 %v60
    %v62 = vand.u32 %v32, 4294901760
    %63 = vmatpush.msra.mxu0 %v62
    %v64 = vand.u32 %v31, 4294901760
    %65 = vmatpush.msra.mxu0 %v64
    %v66 = vand.u32 %v41, 4294901760
    %v67 = vsub.f32 %v41, %v66
    %v68 = vand.u32 %v67, 4294901760
    %v69 = vsub.f32 %v67, %v68
    %v70 = vand.u32 %v69, 4294901760
    %71 = vmatmul.f32.gmra.mxu0 %v70
    %v72 = vpop.f32.mrf.mxu0
    %v73 = vadd.f32 %v37, %v72
    %v74 = vand.u32 %v44, 4294901760
    %v75 = vsub.f32 %v44, %v74
    %v76 = vand.u32 %v75, 4294901760
    %v77 = vsub.f32 %v75, %v76
    %v78 = vand.u32 %v77, 4294901760
    %79 = vmatmul.f32.gmra.mxu0 %v78
    %v80 = vpop.f32.mrf.mxu0
    %v81 = vadd.f32 %v37, %v80
    %82 = vdwg.mxu0
    %83 = vmatpush.msra.mxu0 0.0
    %84 = vmatpush.msra.mxu0 0.0
    %85 = vmatpush.msra.mxu0 0.0
    %86 = vmatpush.msra.mxu0 0.0
    %87 = vmatpush.msra.mxu0 0.0
    %88 = vmatpush.msra.mxu0 0.0
    %89 = vmatpush.msra.mxu0 0.0
    %90 = vmatpush.msra.mxu0 0.0
    %91 = vmatpush.msra.mxu0 0.0
    %92 = vmatpush.msra.mxu0 0.0
    %93 = vmatpush.msra.mxu0 0.0
    %94 = vmatpush.msra.mxu0 0.0
    %v95 = vand.u32 %v34, 4294901760
    %v96 = vsub.f32 %v34, %v95
    %v97 = vand.u32 %v96, 4294901760
    %v98 = vsub.f32 %v96, %v97
    %v99 = vand.u32 %v98, 4294901760
    %100 = vmatpush.msra.mxu0 %v99
    %v101 = vand.u32 %v33, 4294901760
    %v102 = vsub.f32 %v33, %v101
    %v103 = vand.u32 %v102, 4294901760
    %v104 = vsub.f32 %v102, %v103
    %v105 = vand.u32 %v104, 4294901760
    %106 = vmatpush.msra.mxu0 %v105
    %v107 = vand.u32 %v32, 4294901760
    %v108 = vsub.f32 %v32, %v107
    %v109 = vand.u32 %v108, 4294901760
    %v110 = vsub.f32 %v108, %v109
    %v111 = vand.u32 %v110, 4294901760
    %112 = vmatpush.msra.mxu0 %v111
    %v113 = vand.u32 %v31, 4294901760
    %v114 = vsub.f32 %v31, %v113
    %v115 = vand.u32 %v114, 4294901760
    %v116 = vsub.f32 %v114, %v115
    %v117 = vand.u32 %v116, 4294901760
    %118 = vmatpush.msra.mxu0 %v117
    %v119 = vand.u32 %v41, 4294901760
    %120 = vmatmul.f32.gmra.mxu0 %v119
    %v121 = vpop.f32.mrf.mxu0
    %v122 = vadd.f32 %v73, %v121
    %v123 = vand.u32 %v44, 4294901760
    %124 = vmatmul.f32.gmra.mxu0 %v123
    %v125 = vpop.f32.mrf.mxu0
    %v126 = vadd.f32 %v81, %v125
    %127 = vdwg.mxu0
    %128 = vmatpush.msra.mxu0 0.0
    %129 = vmatpush.msra.mxu0 0.0
    %130 = vmatpush.msra.mxu0 0.0
    %131 = vmatpush.msra.mxu0 0.0
    %132 = vmatpush.msra.mxu0 0.0
    %133 = vmatpush.msra.mxu0 0.0
    %134 = vmatpush.msra.mxu0 0.0
    %135 = vmatpush.msra.mxu0 0.0
    %136 = vmatpush.msra.mxu0 0.0
    %137 = vmatpush.msra.mxu0 0.0
    %138 = vmatpush.msra.mxu0 0.0
    %139 = vmatpush.msra.mxu0 0.0
    %v140 = vand.u32 %v34, 4294901760
    %v141 = vsub.f32 %v34, %v140
    %142 = vmatpush.msra.mxu0 %v141
    %v143 = vand.u32 %v33, 4294901760
    %v144 = vsub.f32 %v33, %v143
    %145 = vmatpush.msra.mxu0 %v144
    %v146 = vand.u32 %v32, 4294901760
    %v147 = vsub.f32 %v32, %v146
    %148 = vmatpush.msra.mxu0 %v147
    %v149 = vand.u32 %v31, 4294901760
    %v150 = vsub.f32 %v31, %v149
    %151 = vmatpush.msra.mxu0 %v150
    %v152 = vand.u32 %v41, 4294901760
    %v153 = vsub.f32 %v41, %v152
    %154 = vmatmul.f32.gmra.mxu0 %v153
    %v155 = vpop.f32.mrf.mxu0
    %v156 = vadd.f32 %v122, %v155
    %v157 = vand.u32 %v44, 4294901760
    %v158 = vsub.f32 %v44, %v157
    %159 = vmatmul.f32.gmra.mxu0 %v158
    %v160 = vpop.f32.mrf.mxu0
    %v161 = vadd.f32 %v126, %v160
    %162 = vdwg.mxu0
    %163 = vmatpush.msra.mxu0 0.0
    %164 = vmatpush.msra.mxu0 0.0
    %165 = vmatpush.msra.mxu0 0.0
    %166 = vmatpush.msra.mxu0 0.0
    %167 = vmatpush.msra.mxu0 0.0
    %168 = vmatpush.msra.mxu0 0.0
    %169 = vmatpush.msra.mxu0 0.0
    %170 = vmatpush.msra.mxu0 0.0
    %171 = vmatpush.msra.mxu0 0.0
    %172 = vmatpush.msra.mxu0 0.0
    %173 = vmatpush.msra.mxu0 0.0
    %174 = vmatpush.msra.mxu0 0.0
    %v175 = vand.u32 %v34, 4294901760
    %176 = vmatpush.msra.mxu0 %v175
    %v177 = vand.u32 %v33, 4294901760
    %178 = vmatpush.msra.mxu0 %v177
    %v179 = vand.u32 %v32, 4294901760
    %180 = vmatpush.msra.mxu0 %v179
    %v181 = vand.u32 %v31, 4294901760
    %182 = vmatpush.msra.mxu0 %v181
    %v183 = vand.u32 %v41, 4294901760
    %v184 = vsub.f32 %v41, %v183
    %v185 = vand.u32 %v184, 4294901760
    %186 = vmatmul.f32.gmra.mxu0 %v185
    %v187 = vpop.f32.mrf.mxu0
    %v188 = vadd.f32 %v156, %v187
    %v189 = vand.u32 %v44, 4294901760
    %v190 = vsub.f32 %v44, %v189
    %v191 = vand.u32 %v190, 4294901760
    %192 = vmatmul.f32.gmra.mxu0 %v191
    %v193 = vpop.f32.mrf.mxu0
    %v194 = vadd.f32 %v161, %v193
    %195 = vdwg.mxu0
    %196 = vmatpush.msra.mxu0 0.0
    %197 = vmatpush.msra.mxu0 0.0
    %198 = vmatpush.msra.mxu0 0.0
    %199 = vmatpush.msra.mxu0 0.0
    %200 = vmatpush.msra.mxu0 0.0
    %201 = vmatpush.msra.mxu0 0.0
    %202 = vmatpush.msra.mxu0 0.0
    %203 = vmatpush.msra.mxu0 0.0
    %204 = vmatpush.msra.mxu0 0.0
    %205 = vmatpush.msra.mxu0 0.0
    %206 = vmatpush.msra.mxu0 0.0
    %207 = vmatpush.msra.mxu0 0.0
    %v208 = vand.u32 %v34, 4294901760
    %v209 = vsub.f32 %v34, %v208
    %v210 = vand.u32 %v209, 4294901760
    %211 = vmatpush.msra.mxu0 %v210
    %v212 = vand.u32 %v33, 4294901760
    %v213 = vsub.f32 %v33, %v212
    %v214 = vand.u32 %v213, 4294901760
    %215 = vmatpush.msra.mxu0 %v214
    %v216 = vand.u32 %v32, 4294901760
    %v217 = vsub.f32 %v32, %v216
    %v218 = vand.u32 %v217, 4294901760
    %219 = vmatpush.msra.mxu0 %v218
    %v220 = vand.u32 %v31, 4294901760
    %v221 = vsub.f32 %v31, %v220
    %v222 = vand.u32 %v221, 4294901760
    %223 = vmatpush.msra.mxu0 %v222
    %v224 = vand.u32 %v41, 4294901760
    %225 = vmatmul.f32.gmra.mxu0 %v224
    %v226 = vpop.f32.mrf.mxu0
    %v227 = vadd.f32 %v188, %v226
    %v228 = vand.u32 %v44, 4294901760
    %229 = vmatmul.f32.gmra.mxu0 %v228
    %v230 = vpop.f32.mrf.mxu0
    %v231 = vadd.f32 %v194, %v230
    %232 = vdwg.mxu0
    %233 = vmatpush.msra.mxu0 0.0
    %234 = vmatpush.msra.mxu0 0.0
    %235 = vmatpush.msra.mxu0 0.0
    %236 = vmatpush.msra.mxu0 0.0
    %237 = vmatpush.msra.mxu0 0.0
    %238 = vmatpush.msra.mxu0 0.0
    %239 = vmatpush.msra.mxu0 0.0
    %240 = vmatpush.msra.mxu0 0.0
    %241 = vmatpush.msra.mxu0 0.0
    %242 = vmatpush.msra.mxu0 0.0
    %243 = vmatpush.msra.mxu0 0.0
    %244 = vmatpush.msra.mxu0 0.0
    %v245 = vand.u32 %v34, 4294901760
    %246 = vmatpush.msra.mxu0 %v245
    %v247 = vand.u32 %v33, 4294901760
    %248 = vmatpush.msra.mxu0 %v247
    %v249 = vand.u32 %v32, 4294901760
    %250 = vmatpush.msra.mxu0 %v249
    %v251 = vand.u32 %v31, 4294901760
    %252 = vmatpush.msra.mxu0 %v251
    %v253 = vand.u32 %v41, 4294901760
    %254 = vmatmul.f32.gmra.mxu0 %v253
    %v255 = vpop.f32.mrf.mxu0
    %v256 = vadd.f32 %v227, %v255
    %v257 = vand.u32 %v44, 4294901760
    %258 = vmatmul.f32.gmra.mxu0 %v257
    %v259 = vpop.f32.mrf.mxu0
    %v260 = vadd.f32 %v231, %v259
    %261 = vdwg.mxu0
    %v262 = vsel %vm39, %v256, 0.0
    %263 = vadd.xlane.f32.xlu0 %v262
    %v264 = vpop.xlane.xlu0 %263
    %v265 = vsel %vm39, %v260, 0.0
    %266 = vadd.xlane.f32.xlu0 %v265
    %v267 = vpop.xlane.xlu0 %266
    %v268 = vrcp.pop 32.0
    %v269 = vmul.f32 32.0, %v268
    %v270 = vsub.f32 1.0, %v269
    %v271 = vmul.f32 %v268, %v270
    %v272 = vadd.f32 %v268, %v271
    %vm273 = vweird.f32 %v268
    %v274 = vsel %vm273, %v268, %v272
    %v275 = vmul.f32 %v264, %v274
    %v276 = vmul.f32 %v267, %v274
    %v277 = vsub.f32 %v256, %v275
    %v278 = vsub.f32 %v260, %v276
    %v279 = vmul.f32 %v277, %v277
    %v280 = vmul.f32 %v278, %v278
    %v281 = vsel %vm39, %v279, 0.0
    %282 = vadd.xlane.f32.xlu0 %v281
    %v283 = vpop.xlane.xlu0 %282
    %v284 = vsel %vm39, %v280, 0.0
    %285 = vadd.xlane.f32.xlu0 %v284
    %v286 = vpop.xlane.xlu0 %285
    %v287 = vmul.f32 %v283, %v274
    %v288 = vmul.f32 %v286, %v274
    %v289 = vadd.f32 %v287, 1e-05
    %v290 = vadd.f32 %v288, 1e-05
    %v291 = vrsqrt.pop %v289
    %v292 = vmul.f32 %v291, %v289
    %v293 = vmul.f32 %v292, %v291
    %v294 = vmul.f32 0.5, %v293
    %v295 = vsub.f32 1.5, %v294
    %v296 = vmul.f32 %v291, %v295
    %vm297 = vweird.f32 %v289
    %vm298 = vweird.f32 %v291
    %vm299 = vmor %vm297, %vm298
    %v300 = vsel %vm299, %v291, %v296
    %v301 = vrsqrt.pop %v290
    %v302 = vmul.f32 %v301, %v290
    %v303 = vmul.f32 %v302, %v301
    %v304 = vmul.f32 0.5, %v303
    %v305 = vsub.f32 1.5, %v304
    %v306 = vmul.f32 %v301, %v305
    %vm307 = vweird.f32 %v290
    %vm308 = vweird.f32 %v301
    %vm309 = vmor %vm307, %vm308
    %v310 = vsel %vm309, %v301, %v306
    %v311 = vmul.f32 %v277, %v300
    %v312 = vmul.f32 %v278, %v310
    %v313 = vld [vmem:[%s3] sm:$0x1]
    %v315 = vperm.slane %v313, 0
    %v317 = vmul.f32 %v311, %v315
    %v318 = vmul.f32 %v312, %v315
    %v319 = vld [vmem:[%s4] sm:$0x1]
    %v321 = vperm.slane %v319, 0
    %v323 = vadd.f32 %v317, %v321
    %v324 = vadd.f32 %v318, %v321
    %v325 = vmul.f32 %v323, %v323
    %v326 = vmul.f32 %v324, %v324
    %v327 = vsel %vm39, %v325, 0.0
    %328 = vadd.xlane.f32.xlu0 %v327
    %v329 = vpop.xlane.xlu0 %328
    %v330 = vsel %vm39, %v326, 0.0
    %331 = vadd.xlane.f32.xlu0 %v330
    %v332 = vpop.xlane.xlu0 %331
    %v333 = vrsqrt.pop %v329
    %v334 = vmul.f32 %v333, %v329
    %v335 = vmul.f32 %v334, %v333
    %v336 = vmul.f32 0.5, %v335
    %v337 = vsub.f32 1.5, %v336
    %v338 = vmul.f32 %v333, %v337
    %v339 = vmul.f32 %v329, %v338
    %vm340 = vcmp.eq.f32.partialorder %v329, inf
    %v341 = vsel %vm340, %v329, %v339
    %vm342 = vcmp.eq.f32.partialorder %v329, 0.0
    %v343 = vand.u32 %v329, 2147483648
    %v344 = vsel %vm342, %v343, %v341
    %v345 = vrsqrt.pop %v332
    %v346 = vmul.f32 %v345, %v332
    %v347 = vmul.f32 %v346, %v345
    %v348 = vmul.f32 0.5, %v347
    %v349 = vsub.f32 1.5, %v348
    %v350 = vmul.f32 %v345, %v349
    %v351 = vmul.f32 %v332, %v350
    %vm352 = vcmp.eq.f32.partialorder %v332, inf
    %v353 = vsel %vm352, %v332, %v351
    %vm354 = vcmp.eq.f32.partialorder %v332, 0.0
    %v355 = vand.u32 %v332, 2147483648
    %v356 = vsel %vm354, %v355, %v353
    %v357 = vmax.f32 %v344, 1e-12
    %v358 = vmax.f32 %v356, 1e-12
    %v359 = vrcp.pop %v357
    %v360 = vmul.f32 %v357, %v359
    %v361 = vsub.f32 1.0, %v360
    %v362 = vmul.f32 %v359, %v361
    %v363 = vadd.f32 %v359, %v362
    %vm364 = vweird.f32 %v357
    %vm365 = vweird.f32 %v359
    %vm366 = vmor %vm364, %vm365
    %v367 = vsel %vm366, %v359, %v363
    %v368 = vand.u32 2147483647, %v357
    %vm369 = vcmp.eq.f32.partialorder %v368, 8.507059e+37
    %v370 = vand.u32 %v357, 2147483648
    %v371 = vor.u32 1.1754944e-38, %v370
    %v372 = vsel %vm369, %v371, %v367
    %v373 = vmul.f32 %v323, %v372
    %v374 = vrcp.pop %v358
    %v375 = vmul.f32 %v358, %v374
    %v376 = vsub.f32 1.0, %v375
    %v377 = vmul.f32 %v374, %v376
    %v378 = vadd.f32 %v374, %v377
    %vm379 = vweird.f32 %v358
    %vm380 = vweird.f32 %v374
    %vm381 = vmor %vm379, %vm380
    %v382 = vsel %vm381, %v374, %v378
    %v383 = vand.u32 2147483647, %v358
    %vm384 = vcmp.eq.f32.partialorder %v383, 8.507059e+37
    %v385 = vand.u32 %v358, 2147483648
    %v386 = vor.u32 1.1754944e-38, %v385
    %v387 = vsel %vm384, %v386, %v382
    %v388 = vmul.f32 %v324, %v387
    %v389 = vld [vmem:[%s5] sm:$0xff]
    %v390 = vld [vmem:[%s5 + $0x8] sm:$0xff]
    %v391 = vld [vmem:[%s5 + $0x10] sm:$0xff]
    %v392 = vld [vmem:[%s5 + $0x18] sm:$0xff]
    %v393 = vld [vmem:[%s5 + $0x20] sm:$0xff]
    %v394 = vld [vmem:[%s5 + $0x28] sm:$0xff]
    %v395 = vld [vmem:[%s5 + $0x30] sm:$0xff]
    %v396 = vld [vmem:[%s5 + $0x38] sm:$0xff]
    %v397 = vld [vmem:[%s5 + $0x40] sm:$0xff]
    %v398 = vld [vmem:[%s5 + $0x48] sm:$0xff]
    %v399 = vld [vmem:[%s5 + $0x50] sm:$0xff]
    %v400 = vld [vmem:[%s5 + $0x58] sm:$0xff]
    %v401 = vld [vmem:[%s5 + $0x60] sm:$0xff]
    %v402 = vld [vmem:[%s5 + $0x68] sm:$0xff]
    %v403 = vld [vmem:[%s5 + $0x70] sm:$0xff]
    %v404 = vld [vmem:[%s5 + $0x78] sm:$0xff]
    %v405 = vld [vmem:[%s5 + $0x80] sm:$0xff]
    %v406 = vld [vmem:[%s5 + $0x88] sm:$0xff]
    %v407 = vld [vmem:[%s5 + $0x90] sm:$0xff]
    %v408 = vld [vmem:[%s5 + $0x98] sm:$0xff]
    %v409 = vld [vmem:[%s5 + $0xa0] sm:$0xff]
    %v410 = vld [vmem:[%s5 + $0xa8] sm:$0xff]
    %v411 = vld [vmem:[%s5 + $0xb0] sm:$0xff]
    %v412 = vld [vmem:[%s5 + $0xb8] sm:$0xff]
    %v413 = vld [vmem:[%s5 + $0xc0] sm:$0xff]
    %v414 = vld [vmem:[%s5 + $0xc8] sm:$0xff]
    %v415 = vld [vmem:[%s5 + $0xd0] sm:$0xff]
    %v416 = vld [vmem:[%s5 + $0xd8] sm:$0xff]
    %v417 = vld [vmem:[%s5 + $0xe0] sm:$0xff]
    %v418 = vld [vmem:[%s5 + $0xe8] sm:$0xff]
    %v419 = vld [vmem:[%s5 + $0xf0] sm:$0xff]
    %v420 = vld [vmem:[%s5 + $0xf8] sm:$0xff]
    %v421 = vld [vmem:[%s5 + $0x100] sm:$0xff]
    %v422 = vld [vmem:[%s5 + $0x108] sm:$0xff]
    %v423 = vld [vmem:[%s5 + $0x110] sm:$0xff]
    %v424 = vld [vmem:[%s5 + $0x118] sm:$0xff]
    %v425 = vld [vmem:[%s5 + $0x120] sm:$0xff]
    %v426 = vld [vmem:[%s5 + $0x128] sm:$0xff]
    %v427 = vld [vmem:[%s5 + $0x130] sm:$0xff]
    %v428 = vld [vmem:[%s5 + $0x138] sm:$0xff]
    %v429 = vld [vmem:[%s5 + $0x140] sm:$0xff]
    %v430 = vld [vmem:[%s5 + $0x148] sm:$0xff]
    %v431 = vld [vmem:[%s5 + $0x150] sm:$0xff]
    %v432 = vld [vmem:[%s5 + $0x158] sm:$0xff]
    %v433 = vld [vmem:[%s5 + $0x160] sm:$0xff]
    %v434 = vld [vmem:[%s5 + $0x168] sm:$0xff]
    %v435 = vld [vmem:[%s5 + $0x170] sm:$0xff]
    %v436 = vld [vmem:[%s5 + $0x178] sm:$0xff]
    %v437 = vld [vmem:[%s5 + $0x180] sm:$0xff]
    %v438 = vld [vmem:[%s5 + $0x188] sm:$0xff]
    %v439 = vld [vmem:[%s5 + $0x190] sm:$0xff]
    %v440 = vld [vmem:[%s5 + $0x198] sm:$0xff]
    %v441 = vld [vmem:[%s5 + $0x1a0] sm:$0xff]
    %v442 = vld [vmem:[%s5 + $0x1a8] sm:$0xff]
    %v443 = vld [vmem:[%s5 + $0x1b0] sm:$0xff]
    %v444 = vld [vmem:[%s5 + $0x1b8] sm:$0xff]
    %v445 = vld [vmem:[%s5 + $0x1c0] sm:$0xff]
    %v446 = vld [vmem:[%s5 + $0x1c8] sm:$0xff]
    %v447 = vld [vmem:[%s5 + $0x1d0] sm:$0xff]
    %v448 = vld [vmem:[%s5 + $0x1d8] sm:$0xff]
    %v449 = vld [vmem:[%s5 + $0x1e0] sm:$0xff]
    %v450 = vld [vmem:[%s5 + $0x1e8] sm:$0xff]
    %v451 = vld [vmem:[%s5 + $0x1f0] sm:$0xff]
    %v452 = vld [vmem:[%s5 + $0x1f8] sm:$0xff]
    %v453 = vld [vmem:[%s5 + $0x200] sm:$0xff]
    %v454 = vld [vmem:[%s5 + $0x208] sm:$0xff]
    %v455 = vld [vmem:[%s5 + $0x210] sm:$0xff]
    %v456 = vld [vmem:[%s5 + $0x218] sm:$0xff]
    %v457 = vld [vmem:[%s5 + $0x220] sm:$0xff]
    %v458 = vld [vmem:[%s5 + $0x228] sm:$0xff]
    %v459 = vld [vmem:[%s5 + $0x230] sm:$0xff]
    %v460 = vld [vmem:[%s5 + $0x238] sm:$0xff]
    %v461 = vld [vmem:[%s5 + $0x240] sm:$0xff]
    %v462 = vld [vmem:[%s5 + $0x248] sm:$0xff]
    %v463 = vld [vmem:[%s5 + $0x250] sm:$0xff]
    %v464 = vld [vmem:[%s5 + $0x258] sm:$0xff]
    %v465 = vld [vmem:[%s5 + $0x260] sm:$0xff]
    %v466 = vld [vmem:[%s5 + $0x268] sm:$0xff]
    %v467 = vld [vmem:[%s5 + $0x270] sm:$0xff]
    %v468 = vld [vmem:[%s5 + $0x278] sm:$0xff]
    %v469 = vld [vmem:[%s5 + $0x280] sm:$0xff]
    %v470 = vld [vmem:[%s5 + $0x288] sm:$0xff]
    %v471 = vld [vmem:[%s5 + $0x290] sm:$0xff]
    %v472 = vld [vmem:[%s5 + $0x298] sm:$0xff]
    %v473 = vld [vmem:[%s5 + $0x2a0] sm:$0xff]
    %v474 = vld [vmem:[%s5 + $0x2a8] sm:$0xff]
    %v475 = vld [vmem:[%s5 + $0x2b0] sm:$0xff]
    %v476 = vld [vmem:[%s5 + $0x2b8] sm:$0xff]
    %v477 = vld [vmem:[%s5 + $0x2c0] sm:$0xff]
    %v478 = vld [vmem:[%s5 + $0x2c8] sm:$0xff]
    %v479 = vld [vmem:[%s5 + $0x2d0] sm:$0xff]
    %v480 = vld [vmem:[%s5 + $0x2d8] sm:$0xff]
    %v481 = vld [vmem:[%s5 + $0x2e0] sm:$0xff]
    %v482 = vld [vmem:[%s5 + $0x2e8] sm:$0xff]
    %v483 = vld [vmem:[%s5 + $0x2f0] sm:$0xff]
    %v484 = vld [vmem:[%s5 + $0x2f8] sm:$0xff]
    %v485 = vld [vmem:[%s5 + $0x300] sm:$0xff]
    %v486 = vld [vmem:[%s5 + $0x308] sm:$0xff]
    %v487 = vld [vmem:[%s5 + $0x310] sm:$0xff]
    %v488 = vld [vmem:[%s5 + $0x318] sm:$0xff]
    %v489 = vld [vmem:[%s5 + $0x320] sm:$0xff]
    %v490 = vld [vmem:[%s5 + $0x328] sm:$0xff]
    %v491 = vld [vmem:[%s5 + $0x330] sm:$0xff]
    %v492 = vld [vmem:[%s5 + $0x338] sm:$0xff]
    %v493 = vld [vmem:[%s5 + $0x340] sm:$0xff]
    %v494 = vld [vmem:[%s5 + $0x348] sm:$0xff]
    %v495 = vld [vmem:[%s5 + $0x350] sm:$0xff]
    %v496 = vld [vmem:[%s5 + $0x358] sm:$0xff]
    %v497 = vld [vmem:[%s5 + $0x360] sm:$0xff]
    %v498 = vld [vmem:[%s5 + $0x368] sm:$0xff]
    %v499 = vld [vmem:[%s5 + $0x370] sm:$0xff]
    %v500 = vld [vmem:[%s5 + $0x378] sm:$0xff]
    %v501 = vld [vmem:[%s5 + $0x380] sm:$0xff]
    %v502 = vld [vmem:[%s5 + $0x388] sm:$0xff]
    %v503 = vld [vmem:[%s5 + $0x390] sm:$0xff]
    %v504 = vld [vmem:[%s5 + $0x398] sm:$0xff]
    %v505 = vld [vmem:[%s5 + $0x3a0] sm:$0xff]
    %v506 = vld [vmem:[%s5 + $0x3a8] sm:$0xff]
    %v507 = vld [vmem:[%s5 + $0x3b0] sm:$0xff]
    %v508 = vld [vmem:[%s5 + $0x3b8] sm:$0xff]
    %v509 = vld [vmem:[%s5 + $0x3c0] sm:$0xff]
    %v510 = vld [vmem:[%s5 + $0x3c8] sm:$0xff]
    %v511 = vld [vmem:[%s5 + $0x3d0] sm:$0xff]
    %v512 = vld [vmem:[%s5 + $0x3d8] sm:$0xff]
    %v513 = vld [vmem:[%s5 + $0x3e0] sm:$0xff]
    %v514 = vld [vmem:[%s5 + $0x3e8] sm:$0xff]
    %v515 = vld [vmem:[%s5 + $0x3f0] sm:$0xff]
    %v516 = vld [vmem:[%s5 + $0x3f8] sm:$0xff]
    %v518 = vsel %vm39, %v373, 0
    %v521 = vsel %vm39, %v388, 0
    %v524 = vsel %vm39, %v389, 0
    %v527 = vsel %vm39, %v390, 0
    %v530 = vsel %vm39, %v391, 0
    %v533 = vsel %vm39, %v392, 0
    %v536 = vsel %vm39, %v393, 0
    %v539 = vsel %vm39, %v394, 0
    %v542 = vsel %vm39, %v395, 0
    %v545 = vsel %vm39, %v396, 0
    %v548 = vsel %vm39, %v397, 0
    %v551 = vsel %vm39, %v398, 0
    %v554 = vsel %vm39, %v399, 0
    %v557 = vsel %vm39, %v400, 0
    %v560 = vsel %vm39, %v401, 0
    %v563 = vsel %vm39, %v402, 0
    %v566 = vsel %vm39, %v403, 0
    %v569 = vsel %vm39, %v404, 0
    %v572 = vsel %vm39, %v405, 0
    %v575 = vsel %vm39, %v406, 0
    %v578 = vsel %vm39, %v407, 0
    %v581 = vsel %vm39, %v408, 0
    %v584 = vsel %vm39, %v409, 0
    %v587 = vsel %vm39, %v410, 0
    %v590 = vsel %vm39, %v411, 0
    %v593 = vsel %vm39, %v412, 0
    %v596 = vsel %vm39, %v413, 0
    %v599 = vsel %vm39, %v414, 0
    %v602 = vsel %vm39, %v415, 0
    %v605 = vsel %vm39, %v416, 0
    %v608 = vsel %vm39, %v417, 0
    %v611 = vsel %vm39, %v418, 0
    %v614 = vsel %vm39, %v419, 0
    %v617 = vsel %vm39, %v420, 0
    %v620 = vsel %vm39, %v421, 0
    %v623 = vsel %vm39, %v422, 0
    %v626 = vsel %vm39, %v423, 0
    %v629 = vsel %vm39, %v424, 0
    %v632 = vsel %vm39, %v425, 0
    %v635 = vsel %vm39, %v426, 0
    %v638 = vsel %vm39, %v427, 0
    %v641 = vsel %vm39, %v428, 0
    %v644 = vsel %vm39, %v429, 0
    %v647 = vsel %vm39, %v430, 0
    %v650 = vsel %vm39, %v431, 0
    %v653 = vsel %vm39, %v432, 0
    %v656 = vsel %vm39, %v433, 0
    %v659 = vsel %vm39, %v434, 0
    %v662 = vsel %vm39, %v435, 0
    %v665 = vsel %vm39, %v436, 0
    %v668 = vsel %vm39, %v437, 0
    %v671 = vsel %vm39, %v438, 0
    %v674 = vsel %vm39, %v439, 0
    %v677 = vsel %vm39, %v440, 0
    %v680 = vsel %vm39, %v441, 0
    %v683 = vsel %vm39, %v442, 0
    %v686 = vsel %vm39, %v443, 0
    %v689 = vsel %vm39, %v444, 0
    %v692 = vsel %vm39, %v445, 0
    %v695 = vsel %vm39, %v446, 0
    %v698 = vsel %vm39, %v447, 0
    %v701 = vsel %vm39, %v448, 0
    %v704 = vsel %vm39, %v449, 0
    %v707 = vsel %vm39, %v450, 0
    %v710 = vsel %vm39, %v451, 0
    %v713 = vsel %vm39, %v452, 0
    %v716 = vsel %vm39, %v453, 0
    %v719 = vsel %vm39, %v454, 0
    %v722 = vsel %vm39, %v455, 0
    %v725 = vsel %vm39, %v456, 0
    %v728 = vsel %vm39, %v457, 0
    %v731 = vsel %vm39, %v458, 0
    %v734 = vsel %vm39, %v459, 0
    %v737 = vsel %vm39, %v460, 0
    %v740 = vsel %vm39, %v461, 0
    %v743 = vsel %vm39, %v462, 0
    %v746 = vsel %vm39, %v463, 0
    %v749 = vsel %vm39, %v464, 0
    %v752 = vsel %vm39, %v465, 0
    %v755 = vsel %vm39, %v466, 0
    %v758 = vsel %vm39, %v467, 0
    %v761 = vsel %vm39, %v468, 0
    %v764 = vsel %vm39, %v469, 0
    %v767 = vsel %vm39, %v470, 0
    %v770 = vsel %vm39, %v471, 0
    %v773 = vsel %vm39, %v472, 0
    %v776 = vsel %vm39, %v473, 0
    %v779 = vsel %vm39, %v474, 0
    %v782 = vsel %vm39, %v475, 0
    %v785 = vsel %vm39, %v476, 0
    %v788 = vsel %vm39, %v477, 0
    %v791 = vsel %vm39, %v478, 0
    %v794 = vsel %vm39, %v479, 0
    %v797 = vsel %vm39, %v480, 0
    %v800 = vsel %vm39, %v481, 0
    %v803 = vsel %vm39, %v482, 0
    %v806 = vsel %vm39, %v483, 0
    %v809 = vsel %vm39, %v484, 0
    %v812 = vsel %vm39, %v485, 0
    %v815 = vsel %vm39, %v486, 0
    %v818 = vsel %vm39, %v487, 0
    %v821 = vsel %vm39, %v488, 0
    %v824 = vsel %vm39, %v489, 0
    %v827 = vsel %vm39, %v490, 0
    %v830 = vsel %vm39, %v491, 0
    %v833 = vsel %vm39, %v492, 0
    %v836 = vsel %vm39, %v493, 0
    %v839 = vsel %vm39, %v494, 0
    %v842 = vsel %vm39, %v495, 0
    %v845 = vsel %vm39, %v496, 0
    %v848 = vsel %vm39, %v497, 0
    %v851 = vsel %vm39, %v498, 0
    %v854 = vsel %vm39, %v499, 0
    %v857 = vsel %vm39, %v500, 0
    %v860 = vsel %vm39, %v501, 0
    %v863 = vsel %vm39, %v502, 0
    %v866 = vsel %vm39, %v503, 0
    %v869 = vsel %vm39, %v504, 0
    %v872 = vsel %vm39, %v505, 0
    %v875 = vsel %vm39, %v506, 0
    %v878 = vsel %vm39, %v507, 0
    %v881 = vsel %vm39, %v508, 0
    %v884 = vsel %vm39, %v509, 0
    %v887 = vsel %vm39, %v510, 0
    %v890 = vsel %vm39, %v511, 0
    %v893 = vsel %vm39, %v512, 0
    %v896 = vsel %vm39, %v513, 0
    %v899 = vsel %vm39, %v514, 0
    %v902 = vsel %vm39, %v515, 0
    %v905 = vsel %vm39, %v516, 0
    %v907 = vand.u32 %v569, 4294901760
    %908 = vmatpush.xpose.msra.mxu0 %v907
    %v909 = vand.u32 %v566, 4294901760
    %910 = vmatpush.xpose.msra.mxu0 %v909
    %v911 = vand.u32 %v563, 4294901760
    %912 = vmatpush.xpose.msra.mxu0 %v911
    %v913 = vand.u32 %v560, 4294901760
    %914 = vmatpush.xpose.msra.mxu0 %v913
    %v915 = vand.u32 %v557, 4294901760
    %916 = vmatpush.xpose.msra.mxu0 %v915
    %v917 = vand.u32 %v554, 4294901760
    %918 = vmatpush.xpose.msra.mxu0 %v917
    %v919 = vand.u32 %v551, 4294901760
    %920 = vmatpush.xpose.msra.mxu0 %v919
    %v921 = vand.u32 %v548, 4294901760
    %922 = vmatpush.xpose.msra.mxu0 %v921
    %v923 = vand.u32 %v545, 4294901760
    %924 = vmatpush.xpose.msra.mxu0 %v923
    %v925 = vand.u32 %v542, 4294901760
    %926 = vmatpush.xpose.msra.mxu0 %v925
    %v927 = vand.u32 %v539, 4294901760
    %928 = vmatpush.xpose.msra.mxu0 %v927
    %v929 = vand.u32 %v536, 4294901760
    %930 = vmatpush.xpose.msra.mxu0 %v929
    %v931 = vand.u32 %v533, 4294901760
    %932 = vmatpush.xpose.msra.mxu0 %v931
    %v933 = vand.u32 %v530, 4294901760
    %934 = vmatpush.xpose.msra.mxu0 %v933
    %v935 = vand.u32 %v527, 4294901760
    %936 = vmatpush.xpose.msra.mxu0 %v935
    %v937 = vand.u32 %v524, 4294901760
    %938 = vmatpush.xpose.msra.mxu0 %v937
    %v939 = vand.u32 %v518, 4294901760
    %v940 = vsub.f32 %v518, %v939
    %v941 = vand.u32 %v940, 4294901760
    %v942 = vsub.f32 %v940, %v941
    %v943 = vand.u32 %v942, 4294901760
    %944 = vmatmul.f32.gmra.mxu0 %v943
    %v945 = vpop.f32.mrf.mxu0
    %v946 = vadd.f32 0.0, %v945
    %v947 = vand.u32 %v521, 4294901760
    %v948 = vsub.f32 %v521, %v947
    %v949 = vand.u32 %v948, 4294901760
    %v950 = vsub.f32 %v948, %v949
    %v951 = vand.u32 %v950, 4294901760
    %952 = vmatmul.f32.gmra.mxu0 %v951
    %v953 = vpop.f32.mrf.mxu0
    %v954 = vadd.f32 0.0, %v953
    %955 = vdwg.mxu0
    %v956 = vand.u32 %v569, 4294901760
    %v957 = vsub.f32 %v569, %v956
    %v958 = vand.u32 %v957, 4294901760
    %v959 = vsub.f32 %v957, %v958
    %v960 = vand.u32 %v959, 4294901760
    %961 = vmatpush.xpose.msra.mxu0 %v960
    %v962 = vand.u32 %v566, 4294901760
    %v963 = vsub.f32 %v566, %v962
    %v964 = vand.u32 %v963, 4294901760
    %v965 = vsub.f32 %v963, %v964
    %v966 = vand.u32 %v965, 4294901760
    %967 = vmatpush.xpose.msra.mxu0 %v966
    %v968 = vand.u32 %v563, 4294901760
    %v969 = vsub.f32 %v563, %v968
    %v970 = vand.u32 %v969, 4294901760
    %v971 = vsub.f32 %v969, %v970
    %v972 = vand.u32 %v971, 4294901760
    %973 = vmatpush.xpose.msra.mxu0 %v972
    %v974 = vand.u32 %v560, 4294901760
    %v975 = vsub.f32 %v560, %v974
    %v976 = vand.u32 %v975, 4294901760
    %v977 = vsub.f32 %v975, %v976
    %v978 = vand.u32 %v977, 4294901760
    %979 = vmatpush.xpose.msra.mxu0 %v978
    %v980 = vand.u32 %v557, 4294901760
    %v981 = vsub.f32 %v557, %v980
    %v982 = vand.u32 %v981, 4294901760
    %v983 = vsub.f32 %v981, %v982
    %v984 = vand.u32 %v983, 4294901760
    %985 = vmatpush.xpose.msra.mxu0 %v984
    %v986 = vand.u32 %v554, 4294901760
    %v987 = vsub.f32 %v554, %v986
    %v988 = vand.u32 %v987, 4294901760
    %v989 = vsub.f32 %v987, %v988
    %v990 = vand.u32 %v989, 4294901760
    %991 = vmatpush.xpose.msra.mxu0 %v990
    %v992 = vand.u32 %v551, 4294901760
    %v993 = vsub.f32 %v551, %v992
    %v994 = vand.u32 %v993, 4294901760
    %v995 = vsub.f32 %v993, %v994
    %v996 = vand.u32 %v995, 4294901760
    %997 = vmatpush.xpose.msra.mxu0 %v996
    %v998 = vand.u32 %v548, 4294901760
    %v999 = vsub.f32 %v548, %v998
    %v1000 = vand.u32 %v999, 4294901760
    %v1001 = vsub.f32 %v999, %v1000
    %v1002 = vand.u32 %v1001, 4294901760
    %1003 = vmatpush.xpose.msra.mxu0 %v1002
    %v1004 = vand.u32 %v545, 4294901760
    %v1005 = vsub.f32 %v545, %v1004
    %v1006 = vand.u32 %v1005, 4294901760
    %v1007 = vsub.f32 %v1005, %v1006
    %v1008 = vand.u32 %v1007, 4294901760
    %1009 = vmatpush.xpose.msra.mxu0 %v1008
    %v1010 = vand.u32 %v542, 4294901760
    %v1011 = vsub.f32 %v542, %v1010
    %v1012 = vand.u32 %v1011, 4294901760
    %v1013 = vsub.f32 %v1011, %v1012
    %v1014 = vand.u32 %v1013, 4294901760
    %1015 = vmatpush.xpose.msra.mxu0 %v1014
    %v1016 = vand.u32 %v539, 4294901760
    %v1017 = vsub.f32 %v539, %v1016
    %v1018 = vand.u32 %v1017, 4294901760
    %v1019 = vsub.f32 %v1017, %v1018
    %v1020 = vand.u32 %v1019, 4294901760
    %1021 = vmatpush.xpose.msra.mxu0 %v1020
    %v1022 = vand.u32 %v536, 4294901760
    %v1023 = vsub.f32 %v536, %v1022
    %v1024 = vand.u32 %v1023, 4294901760
    %v1025 = vsub.f32 %v1023, %v1024
    %v1026 = vand.u32 %v1025, 4294901760
    %1027 = vmatpush.xpose.msra.mxu0 %v1026
    %v1028 = vand.u32 %v533, 4294901760
    %v1029 = vsub.f32 %v533, %v1028
    %v1030 = vand.u32 %v1029, 4294901760
    %v1031 = vsub.f32 %v1029, %v1030
    %v1032 = vand.u32 %v1031, 4294901760
    %1033 = vmatpush.xpose.msra.mxu0 %v1032
    %v1034 = vand.u32 %v530, 4294901760
    %v1035 = vsub.f32 %v530, %v1034
    %v1036 = vand.u32 %v1035, 4294901760
    %v1037 = vsub.f32 %v1035, %v1036
    %v1038 = vand.u32 %v1037, 4294901760
    %1039 = vmatpush.xpose.msra.mxu0 %v1038
    %v1040 = vand.u32 %v527, 4294901760
    %v1041 = vsub.f32 %v527, %v1040
    %v1042 = vand.u32 %v1041, 4294901760
    %v1043 = vsub.f32 %v1041, %v1042
    %v1044 = vand.u32 %v1043, 4294901760
    %1045 = vmatpush.xpose.msra.mxu0 %v1044
    %v1046 = vand.u32 %v524, 4294901760
    %v1047 = vsub.f32 %v524, %v1046
    %v1048 = vand.u32 %v1047, 4294901760
    %v1049 = vsub.f32 %v1047, %v1048
    %v1050 = vand.u32 %v1049, 4294901760
    %1051 = vmatpush.xpose.msra.mxu0 %v1050
    %v1052 = vand.u32 %v518, 4294901760
    %1053 = vmatmul.f32.gmra.mxu0 %v1052
    %v1054 = vpop.f32.mrf.mxu0
    %v1055 = vadd.f32 %v946, %v1054
    %v1056 = vand.u32 %v521, 4294901760
    %1057 = vmatmul.f32.gmra.mxu0 %v1056
    %v1058 = vpop.f32.mrf.mxu0
    %v1059 = vadd.f32 %v954, %v1058
    %1060 = vdwg.mxu0
    %v1061 = vand.u32 %v569, 4294901760
    %v1062 = vsub.f32 %v569, %v1061
    %1063 = vmatpush.xpose.msra.mxu0 %v1062
    %v1064 = vand.u32 %v566, 4294901760
    %v1065 = vsub.f32 %v566, %v1064
    %1066 = vmatpush.xpose.msra.mxu0 %v1065
    %v1067 = vand.u32 %v563, 4294901760
    %v1068 = vsub.f32 %v563, %v1067
    %1069 = vmatpush.xpose.msra.mxu0 %v1068
    %v1070 = vand.u32 %v560, 4294901760
    %v1071 = vsub.f32 %v560, %v1070
    %1072 = vmatpush.xpose.msra.mxu0 %v1071
    %v1073 = vand.u32 %v557, 4294901760
    %v1074 = vsub.f32 %v557, %v1073
    %1075 = vmatpush.xpose.msra.mxu0 %v1074
    %v1076 = vand.u32 %v554, 4294901760
    %v1077 = vsub.f32 %v554, %v1076
    %1078 = vmatpush.xpose.msra.mxu0 %v1077
    %v1079 = vand.u32 %v551, 4294901760
    %v1080 = vsub.f32 %v551, %v1079
    %1081 = vmatpush.xpose.msra.mxu0 %v1080
    %v1082 = vand.u32 %v548, 4294901760
    %v1083 = vsub.f32 %v548, %v1082
    %1084 = vmatpush.xpose.msra.mxu0 %v1083
    %v1085 = vand.u32 %v545, 4294901760
    %v1086 = vsub.f32 %v545, %v1085
    %1087 = vmatpush.xpose.msra.mxu0 %v1086
    %v1088 = vand.u32 %v542, 4294901760
    %v1089 = vsub.f32 %v542, %v1088
    %1090 = vmatpush.xpose.msra.mxu0 %v1089
    %v1091 = vand.u32 %v539, 4294901760
    %v1092 = vsub.f32 %v539, %v1091
    %1093 = vmatpush.xpose.msra.mxu0 %v1092
    %v1094 = vand.u32 %v536, 4294901760
    %v1095 = vsub.f32 %v536, %v1094
    %1096 = vmatpush.xpose.msra.mxu0 %v1095
    %v1097 = vand.u32 %v533, 4294901760
    %v1098 = vsub.f32 %v533, %v1097
    %1099 = vmatpush.xpose.msra.mxu0 %v1098
    %v1100 = vand.u32 %v530, 4294901760
    %v1101 = vsub.f32 %v530, %v1100
    %1102 = vmatpush.xpose.msra.mxu0 %v1101
    %v1103 = vand.u32 %v527, 4294901760
    %v1104 = vsub.f32 %v527, %v1103
    %1105 = vmatpush.xpose.msra.mxu0 %v1104
    %v1106 = vand.u32 %v524, 4294901760
    %v1107 = vsub.f32 %v524, %v1106
    %1108 = vmatpush.xpose.msra.mxu0 %v1107
    %v1109 = vand.u32 %v518, 4294901760
    %v1110 = vsub.f32 %v518, %v1109
    %1111 = vmatmul.f32.gmra.mxu0 %v1110
    %v1112 = vpop.f32.mrf.mxu0
    %v1113 = vadd.f32 %v1055, %v1112
    %v1114 = vand.u32 %v521, 4294901760
    %v1115 = vsub.f32 %v521, %v1114
    %1116 = vmatmul.f32.gmra.mxu0 %v1115
    %v1117 = vpop.f32.mrf.mxu0
    %v1118 = vadd.f32 %v1059, %v1117
    %1119 = vdwg.mxu0
    %v1120 = vand.u32 %v569, 4294901760
    %1121 = vmatpush.xpose.msra.mxu0 %v1120
    %v1122 = vand.u32 %v566, 4294901760
    %1123 = vmatpush.xpose.msra.mxu0 %v1122
    %v1124 = vand.u32 %v563, 4294901760
    %1125 = vmatpush.xpose.msra.mxu0 %v1124
    %v1126 = vand.u32 %v560, 4294901760
    %1127 = vmatpush.xpose.msra.mxu0 %v1126
    %v1128 = vand.u32 %v557, 4294901760
    %1129 = vmatpush.xpose.msra.mxu0 %v1128
    %v1130 = vand.u32 %v554, 4294901760
    %1131 = vmatpush.xpose.msra.mxu0 %v1130
    %v1132 = vand.u32 %v551, 4294901760
    %1133 = vmatpush.xpose.msra.mxu0 %v1132
    %v1134 = vand.u32 %v548, 4294901760
    %1135 = vmatpush.xpose.msra.mxu0 %v1134
    %v1136 = vand.u32 %v545, 4294901760
    %1137 = vmatpush.xpose.msra.mxu0 %v1136
    %v1138 = vand.u32 %v542, 4294901760
    %1139 = vmatpush.xpose.msra.mxu0 %v1138
    %v1140 = vand.u32 %v539, 4294901760
    %1141 = vmatpush.xpose.msra.mxu0 %v1140
    %v1142 = vand.u32 %v536, 4294901760
    %1143 = vmatpush.xpose.msra.mxu0 %v1142
    %v1144 = vand.u32 %v533, 4294901760
    %1145 = vmatpush.xpose.msra.mxu0 %v1144
    %v1146 = vand.u32 %v530, 4294901760
    %1147 = vmatpush.xpose.msra.mxu0 %v1146
    %v1148 = vand.u32 %v527, 4294901760
    %1149 = vmatpush.xpose.msra.mxu0 %v1148
    %v1150 = vand.u32 %v524, 4294901760
    %1151 = vmatpush.xpose.msra.mxu0 %v1150
    %v1152 = vand.u32 %v518, 4294901760
    %v1153 = vsub.f32 %v518, %v1152
    %v1154 = vand.u32 %v1153, 4294901760
    %1155 = vmatmul.f32.gmra.mxu0 %v1154
    %v1156 = vpop.f32.mrf.mxu0
    %v1157 = vadd.f32 %v1113, %v1156
    %v1158 = vand.u32 %v521, 4294901760
    %v1159 = vsub.f32 %v521, %v1158
    %v1160 = vand.u32 %v1159, 4294901760
    %1161 = vmatmul.f32.gmra.mxu0 %v1160
    %v1162 = vpop.f32.mrf.mxu0
    %v1163 = vadd.f32 %v1118, %v1162
    %1164 = vdwg.mxu0
    %v1165 = vand.u32 %v569, 4294901760
    %v1166 = vsub.f32 %v569, %v1165
    %v1167 = vand.u32 %v1166, 4294901760
    %1168 = vmatpush.xpose.msra.mxu0 %v1167
    %v1169 = vand.u32 %v566, 4294901760
    %v1170 = vsub.f32 %v566, %v1169
    %v1171 = vand.u32 %v1170, 4294901760
    %1172 = vmatpush.xpose.msra.mxu0 %v1171
    %v1173 = vand.u32 %v563, 4294901760
    %v1174 = vsub.f32 %v563, %v1173
    %v1175 = vand.u32 %v1174, 4294901760
    %1176 = vmatpush.xpose.msra.mxu0 %v1175
    %v1177 = vand.u32 %v560, 4294901760
    %v1178 = vsub.f32 %v560, %v1177
    %v1179 = vand.u32 %v1178, 4294901760
    %1180 = vmatpush.xpose.msra.mxu0 %v1179
    %v1181 = vand.u32 %v557, 4294901760
    %v1182 = vsub.f32 %v557, %v1181
    %v1183 = vand.u32 %v1182, 4294901760
    %1184 = vmatpush.xpose.msra.mxu0 %v1183
    %v1185 = vand.u32 %v554, 4294901760
    %v1186 = vsub.f32 %v554, %v1185
    %v1187 = vand.u32 %v1186, 4294901760
    %1188 = vmatpush.xpose.msra.mxu0 %v1187
    %v1189 = vand.u32 %v551, 4294901760
    %v1190 = vsub.f32 %v551, %v1189
    %v1191 = vand.u32 %v1190, 4294901760
    %1192 = vmatpush.xpose.msra.mxu0 %v1191
    %v1193 = vand.u32 %v548, 4294901760
    %v1194 = vsub.f32 %v548, %v1193
    %v1195 = vand.u32 %v1194, 4294901760
    %1196 = vmatpush.xpose.msra.mxu0 %v1195
    %v1197 = vand.u32 %v545, 4294901760
    %v1198 = vsub.f32 %v545, %v1197
    %v1199 = vand.u32 %v1198, 4294901760
    %1200 = vmatpush.xpose.msra.mxu0 %v1199
    %v1201 = vand.u32 %v542, 4294901760
    %v1202 = vsub.f32 %v542, %v1201
    %v1203 = vand.u32 %v1202, 4294901760
    %1204 = vmatpush.xpose.msra.mxu0 %v1203
    %v1205 = vand.u32 %v539, 4294901760
    %v1206 = vsub.f32 %v539, %v1205
    %v1207 = vand.u32 %v1206, 4294901760
    %1208 = vmatpush.xpose.msra.mxu0 %v1207
    %v1209 = vand.u32 %v536, 4294901760
    %v1210 = vsub.f32 %v536, %v1209
    %v1211 = vand.u32 %v1210, 4294901760
    %1212 = vmatpush.xpose.msra.mxu0 %v1211
    %v1213 = vand.u32 %v533, 4294901760
    %v1214 = vsub.f32 %v533, %v1213
    %v1215 = vand.u32 %v1214, 4294901760
    %1216 = vmatpush.xpose.msra.mxu0 %v1215
    %v1217 = vand.u32 %v530, 4294901760
    %v1218 = vsub.f32 %v530, %v1217
    %v1219 = vand.u32 %v1218, 4294901760
    %1220 = vmatpush.xpose.msra.mxu0 %v1219
    %v1221 = vand.u32 %v527, 4294901760
    %v1222 = vsub.f32 %v527, %v1221
    %v1223 = vand.u32 %v1222, 4294901760
    %1224 = vmatpush.xpose.msra.mxu0 %v1223
    %v1225 = vand.u32 %v524, 4294901760
    %v1226 = vsub.f32 %v524, %v1225
    %v1227 = vand.u32 %v1226, 4294901760
    %1228 = vmatpush.xpose.msra.mxu0 %v1227
    %v1229 = vand.u32 %v518, 4294901760
    %1230 = vmatmul.f32.gmra.mxu0 %v1229
    %v1231 = vpop.f32.mrf.mxu0
    %v1232 = vadd.f32 %v1157, %v1231
    %v1233 = vand.u32 %v521, 4294901760
    %1234 = vmatmul.f32.gmra.mxu0 %v1233
    %v1235 = vpop.f32.mrf.mxu0
    %v1236 = vadd.f32 %v1163, %v1235
    %1237 = vdwg.mxu0
    %v1238 = vand.u32 %v569, 4294901760
    %1239 = vmatpush.xpose.msra.mxu0 %v1238
    %v1240 = vand.u32 %v566, 4294901760
    %1241 = vmatpush.xpose.msra.mxu0 %v1240
    %v1242 = vand.u32 %v563, 4294901760
    %1243 = vmatpush.xpose.msra.mxu0 %v1242
    %v1244 = vand.u32 %v560, 4294901760
    %1245 = vmatpush.xpose.msra.mxu0 %v1244
    %v1246 = vand.u32 %v557, 4294901760
    %1247 = vmatpush.xpose.msra.mxu0 %v1246
    %v1248 = vand.u32 %v554, 4294901760
    %1249 = vmatpush.xpose.msra.mxu0 %v1248
    %v1250 = vand.u32 %v551, 4294901760
    %1251 = vmatpush.xpose.msra.mxu0 %v1250
    %v1252 = vand.u32 %v548, 4294901760
    %1253 = vmatpush.xpose.msra.mxu0 %v1252
    %v1254 = vand.u32 %v545, 4294901760
    %1255 = vmatpush.xpose.msra.mxu0 %v1254
    %v1256 = vand.u32 %v542, 4294901760
    %1257 = vmatpush.xpose.msra.mxu0 %v1256
    %v1258 = vand.u32 %v539, 4294901760
    %1259 = vmatpush.xpose.msra.mxu0 %v1258
    %v1260 = vand.u32 %v536, 4294901760
    %1261 = vmatpush.xpose.msra.mxu0 %v1260
    %v1262 = vand.u32 %v533, 4294901760
    %1263 = vmatpush.xpose.msra.mxu0 %v1262
    %v1264 = vand.u32 %v530, 4294901760
    %1265 = vmatpush.xpose.msra.mxu0 %v1264
    %v1266 = vand.u32 %v527, 4294901760
    %1267 = vmatpush.xpose.msra.mxu0 %v1266
    %v1268 = vand.u32 %v524, 4294901760
    %1269 = vmatpush.xpose.msra.mxu0 %v1268
    %v1270 = vand.u32 %v518, 4294901760
    %1271 = vmatmul.f32.gmra.mxu0 %v1270
    %v1272 = vpop.f32.mrf.mxu0
    %v1273 = vadd.f32 %v1232, %v1272
    %v1274 = vand.u32 %v521, 4294901760
    %1275 = vmatmul.f32.gmra.mxu0 %v1274
    %v1276 = vpop.f32.mrf.mxu0
    %v1277 = vadd.f32 %v1236, %v1276
    %1278 = vdwg.mxu0
    %v1279 = vand.u32 %v617, 4294901760
    %1280 = vmatpush.xpose.msra.mxu0 %v1279
    %v1281 = vand.u32 %v614, 4294901760
    %1282 = vmatpush.xpose.msra.mxu0 %v1281
    %v1283 = vand.u32 %v611, 4294901760
    %1284 = vmatpush.xpose.msra.mxu0 %v1283
    %v1285 = vand.u32 %v608, 4294901760
    %1286 = vmatpush.xpose.msra.mxu0 %v1285
    %v1287 = vand.u32 %v605, 4294901760
    %1288 = vmatpush.xpose.msra.mxu0 %v1287
    %v1289 = vand.u32 %v602, 4294901760
    %1290 = vmatpush.xpose.msra.mxu0 %v1289
    %v1291 = vand.u32 %v599, 4294901760
    %1292 = vmatpush.xpose.msra.mxu0 %v1291
    %v1293 = vand.u32 %v596, 4294901760
    %1294 = vmatpush.xpose.msra.mxu0 %v1293
    %v1295 = vand.u32 %v593, 4294901760
    %1296 = vmatpush.xpose.msra.mxu0 %v1295
    %v1297 = vand.u32 %v590, 4294901760
    %1298 = vmatpush.xpose.msra.mxu0 %v1297
    %v1299 = vand.u32 %v587, 4294901760
    %1300 = vmatpush.xpose.msra.mxu0 %v1299
    %v1301 = vand.u32 %v584, 4294901760
    %1302 = vmatpush.xpose.msra.mxu0 %v1301
    %v1303 = vand.u32 %v581, 4294901760
    %1304 = vmatpush.xpose.msra.mxu0 %v1303
    %v1305 = vand.u32 %v578, 4294901760
    %1306 = vmatpush.xpose.msra.mxu0 %v1305
    %v1307 = vand.u32 %v575, 4294901760
    %1308 = vmatpush.xpose.msra.mxu0 %v1307
    %v1309 = vand.u32 %v572, 4294901760
    %1310 = vmatpush.xpose.msra.mxu0 %v1309
    %v1311 = vand.u32 %v518, 4294901760
    %v1312 = vsub.f32 %v518, %v1311
    %v1313 = vand.u32 %v1312, 4294901760
    %v1314 = vsub.f32 %v1312, %v1313
    %v1315 = vand.u32 %v1314, 4294901760
    %1316 = vmatmul.f32.gmra.mxu0 %v1315
    %v1317 = vpop.f32.mrf.mxu0
    %v1318 = vadd.f32 0.0, %v1317
    %v1319 = vand.u32 %v521, 4294901760
    %v1320 = vsub.f32 %v521, %v1319
    %v1321 = vand.u32 %v1320, 4294901760
    %v1322 = vsub.f32 %v1320, %v1321
    %v1323 = vand.u32 %v1322, 4294901760
    %1324 = vmatmul.f32.gmra.mxu0 %v1323
    %v1325 = vpop.f32.mrf.mxu0
    %v1326 = vadd.f32 0.0, %v1325
    %1327 = vdwg.mxu0
    %v1328 = vand.u32 %v617, 4294901760
    %v1329 = vsub.f32 %v617, %v1328
    %v1330 = vand.u32 %v1329, 4294901760
    %v1331 = vsub.f32 %v1329, %v1330
    %v1332 = vand.u32 %v1331, 4294901760
    %1333 = vmatpush.xpose.msra.mxu0 %v1332
    %v1334 = vand.u32 %v614, 4294901760
    %v1335 = vsub.f32 %v614, %v1334
    %v1336 = vand.u32 %v1335, 4294901760
    %v1337 = vsub.f32 %v1335, %v1336
    %v1338 = vand.u32 %v1337, 4294901760
    %1339 = vmatpush.xpose.msra.mxu0 %v1338
    %v1340 = vand.u32 %v611, 4294901760
    %v1341 = vsub.f32 %v611, %v1340
    %v1342 = vand.u32 %v1341, 4294901760
    %v1343 = vsub.f32 %v1341, %v1342
    %v1344 = vand.u32 %v1343, 4294901760
    %1345 = vmatpush.xpose.msra.mxu0 %v1344
    %v1346 = vand.u32 %v608, 4294901760
    %v1347 = vsub.f32 %v608, %v1346
    %v1348 = vand.u32 %v1347, 4294901760
    %v1349 = vsub.f32 %v1347, %v1348
    %v1350 = vand.u32 %v1349, 4294901760
    %1351 = vmatpush.xpose.msra.mxu0 %v1350
    %v1352 = vand.u32 %v605, 4294901760
    %v1353 = vsub.f32 %v605, %v1352
    %v1354 = vand.u32 %v1353, 4294901760
    %v1355 = vsub.f32 %v1353, %v1354
    %v1356 = vand.u32 %v1355, 4294901760
    %1357 = vmatpush.xpose.msra.mxu0 %v1356
    %v1358 = vand.u32 %v602, 4294901760
    %v1359 = vsub.f32 %v602, %v1358
    %v1360 = vand.u32 %v1359, 4294901760
    %v1361 = vsub.f32 %v1359, %v1360
    %v1362 = vand.u32 %v1361, 4294901760
    %1363 = vmatpush.xpose.msra.mxu0 %v1362
    %v1364 = vand.u32 %v599, 4294901760
    %v1365 = vsub.f32 %v599, %v1364
    %v1366 = vand.u32 %v1365, 4294901760
    %v1367 = vsub.f32 %v1365, %v1366
    %v1368 = vand.u32 %v1367, 4294901760
    %1369 = vmatpush.xpose.msra.mxu0 %v1368
    %v1370 = vand.u32 %v596, 4294901760
    %v1371 = vsub.f32 %v596, %v1370
    %v1372 = vand.u32 %v1371, 4294901760
    %v1373 = vsub.f32 %v1371, %v1372
    %v1374 = vand.u32 %v1373, 4294901760
    %1375 = vmatpush.xpose.msra.mxu0 %v1374
    %v1376 = vand.u32 %v593, 4294901760
    %v1377 = vsub.f32 %v593, %v1376
    %v1378 = vand.u32 %v1377, 4294901760
    %v1379 = vsub.f32 %v1377, %v1378
    %v1380 = vand.u32 %v1379, 4294901760
    %1381 = vmatpush.xpose.msra.mxu0 %v1380
    %v1382 = vand.u32 %v590, 4294901760
    %v1383 = vsub.f32 %v590, %v1382
    %v1384 = vand.u32 %v1383, 4294901760
    %v1385 = vsub.f32 %v1383, %v1384
    %v1386 = vand.u32 %v1385, 4294901760
    %1387 = vmatpush.xpose.msra.mxu0 %v1386
    %v1388 = vand.u32 %v587, 4294901760
    %v1389 = vsub.f32 %v587, %v1388
    %v1390 = vand.u32 %v1389, 4294901760
    %v1391 = vsub.f32 %v1389, %v1390
    %v1392 = vand.u32 %v1391, 4294901760
    %1393 = vmatpush.xpose.msra.mxu0 %v1392
    %v1394 = vand.u32 %v584, 4294901760
    %v1395 = vsub.f32 %v584, %v1394
    %v1396 = vand.u32 %v1395, 4294901760
    %v1397 = vsub.f32 %v1395, %v1396
    %v1398 = vand.u32 %v1397, 4294901760
    %1399 = vmatpush.xpose.msra.mxu0 %v1398
    %v1400 = vand.u32 %v581, 4294901760
    %v1401 = vsub.f32 %v581, %v1400
    %v1402 = vand.u32 %v1401, 4294901760
    %v1403 = vsub.f32 %v1401, %v1402
    %v1404 = vand.u32 %v1403, 4294901760
    %1405 = vmatpush.xpose.msra.mxu0 %v1404
    %v1406 = vand.u32 %v578, 4294901760
    %v1407 = vsub.f32 %v578, %v1406
    %v1408 = vand.u32 %v1407, 4294901760
    %v1409 = vsub.f32 %v1407, %v1408
    %v1410 = vand.u32 %v1409, 4294901760
    %1411 = vmatpush.xpose.msra.mxu0 %v1410
    %v1412 = vand.u32 %v575, 4294901760
    %v1413 = vsub.f32 %v575, %v1412
    %v1414 = vand.u32 %v1413, 4294901760
    %v1415 = vsub.f32 %v1413, %v1414
    %v1416 = vand.u32 %v1415, 4294901760
    %1417 = vmatpush.xpose.msra.mxu0 %v1416
    %v1418 = vand.u32 %v572, 4294901760
    %v1419 = vsub.f32 %v572, %v1418
    %v1420 = vand.u32 %v1419, 4294901760
    %v1421 = vsub.f32 %v1419, %v1420
    %v1422 = vand.u32 %v1421, 4294901760
    %1423 = vmatpush.xpose.msra.mxu0 %v1422
    %v1424 = vand.u32 %v518, 4294901760
    %1425 = vmatmul.f32.gmra.mxu0 %v1424
    %v1426 = vpop.f32.mrf.mxu0
    %v1427 = vadd.f32 %v1318, %v1426
    %v1428 = vand.u32 %v521, 4294901760
    %1429 = vmatmul.f32.gmra.mxu0 %v1428
    %v1430 = vpop.f32.mrf.mxu0
    %v1431 = vadd.f32 %v1326, %v1430
    %1432 = vdwg.mxu0
    %v1433 = vand.u32 %v617, 4294901760
    %v1434 = vsub.f32 %v617, %v1433
    %1435 = vmatpush.xpose.msra.mxu0 %v1434
    %v1436 = vand.u32 %v614, 4294901760
    %v1437 = vsub.f32 %v614, %v1436
    %1438 = vmatpush.xpose.msra.mxu0 %v1437
    %v1439 = vand.u32 %v611, 4294901760
    %v1440 = vsub.f32 %v611, %v1439
    %1441 = vmatpush.xpose.msra.mxu0 %v1440
    %v1442 = vand.u32 %v608, 4294901760
    %v1443 = vsub.f32 %v608, %v1442
    %1444 = vmatpush.xpose.msra.mxu0 %v1443
    %v1445 = vand.u32 %v605, 4294901760
    %v1446 = vsub.f32 %v605, %v1445
    %1447 = vmatpush.xpose.msra.mxu0 %v1446
    %v1448 = vand.u32 %v602, 4294901760
    %v1449 = vsub.f32 %v602, %v1448
    %1450 = vmatpush.xpose.msra.mxu0 %v1449
    %v1451 = vand.u32 %v599, 4294901760
    %v1452 = vsub.f32 %v599, %v1451
    %1453 = vmatpush.xpose.msra.mxu0 %v1452
    %v1454 = vand.u32 %v596, 4294901760
    %v1455 = vsub.f32 %v596, %v1454
    %1456 = vmatpush.xpose.msra.mxu0 %v1455
    %v1457 = vand.u32 %v593, 4294901760
    %v1458 = vsub.f32 %v593, %v1457
    %1459 = vmatpush.xpose.msra.mxu0 %v1458
    %v1460 = vand.u32 %v590, 4294901760
    %v1461 = vsub.f32 %v590, %v1460
    %1462 = vmatpush.xpose.msra.mxu0 %v1461
    %v1463 = vand.u32 %v587, 4294901760
    %v1464 = vsub.f32 %v587, %v1463
    %1465 = vmatpush.xpose.msra.mxu0 %v1464
    %v1466 = vand.u32 %v584, 4294901760
    %v1467 = vsub.f32 %v584, %v1466
    %1468 = vmatpush.xpose.msra.mxu0 %v1467
    %v1469 = vand.u32 %v581, 4294901760
    %v1470 = vsub.f32 %v581, %v1469
    %1471 = vmatpush.xpose.msra.mxu0 %v1470
    %v1472 = vand.u32 %v578, 4294901760
    %v1473 = vsub.f32 %v578, %v1472
    %1474 = vmatpush.xpose.msra.mxu0 %v1473
    %v1475 = vand.u32 %v575, 4294901760
    %v1476 = vsub.f32 %v575, %v1475
    %1477 = vmatpush.xpose.msra.mxu0 %v1476
    %v1478 = vand.u32 %v572, 4294901760
    %v1479 = vsub.f32 %v572, %v1478
    %1480 = vmatpush.xpose.msra.mxu0 %v1479
    %v1481 = vand.u32 %v518, 4294901760
    %v1482 = vsub.f32 %v518, %v1481
    %1483 = vmatmul.f32.gmra.mxu0 %v1482
    %v1484 = vpop.f32.mrf.mxu0
    %v1485 = vadd.f32 %v1427, %v1484
    %v1486 = vand.u32 %v521, 4294901760
    %v1487 = vsub.f32 %v521, %v1486
    %1488 = vmatmul.f32.gmra.mxu0 %v1487
    %v1489 = vpop.f32.mrf.mxu0
    %v1490 = vadd.f32 %v1431, %v1489
    %1491 = vdwg.mxu0
    %v1492 = vand.u32 %v617, 4294901760
    %1493 = vmatpush.xpose.msra.mxu0 %v1492
    %v1494 = vand.u32 %v614, 4294901760
    %1495 = vmatpush.xpose.msra.mxu0 %v1494
    %v1496 = vand.u32 %v611, 4294901760
    %1497 = vmatpush.xpose.msra.mxu0 %v1496
    %v1498 = vand.u32 %v608, 4294901760
    %1499 = vmatpush.xpose.msra.mxu0 %v1498
    %v1500 = vand.u32 %v605, 4294901760
    %1501 = vmatpush.xpose.msra.mxu0 %v1500
    %v1502 = vand.u32 %v602, 4294901760
    %1503 = vmatpush.xpose.msra.mxu0 %v1502
    %v1504 = vand.u32 %v599, 4294901760
    %1505 = vmatpush.xpose.msra.mxu0 %v1504
    %v1506 = vand.u32 %v596, 4294901760
    %1507 = vmatpush.xpose.msra.mxu0 %v1506
    %v1508 = vand.u32 %v593, 4294901760
    %1509 = vmatpush.xpose.msra.mxu0 %v1508
    %v1510 = vand.u32 %v590, 4294901760
    %1511 = vmatpush.xpose.msra.mxu0 %v1510
    %v1512 = vand.u32 %v587, 4294901760
    %1513 = vmatpush.xpose.msra.mxu0 %v1512
    %v1514 = vand.u32 %v584, 4294901760
    %1515 = vmatpush.xpose.msra.mxu0 %v1514
    %v1516 = vand.u32 %v581, 4294901760
    %1517 = vmatpush.xpose.msra.mxu0 %v1516
    %v1518 = vand.u32 %v578, 4294901760
    %1519 = vmatpush.xpose.msra.mxu0 %v1518
    %v1520 = vand.u32 %v575, 4294901760
    %1521 = vmatpush.xpose.msra.mxu0 %v1520
    %v1522 = vand.u32 %v572, 4294901760
    %1523 = vmatpush.xpose.msra.mxu0 %v1522
    %v1524 = vand.u32 %v518, 4294901760
    %v1525 = vsub.f32 %v518, %v1524
    %v1526 = vand.u32 %v1525, 4294901760
    %1527 = vmatmul.f32.gmra.mxu0 %v1526
    %v1528 = vpop.f32.mrf.mxu0
    %v1529 = vadd.f32 %v1485, %v1528
    %v1530 = vand.u32 %v521, 4294901760
    %v1531 = vsub.f32 %v521, %v1530
    %v1532 = vand.u32 %v1531, 4294901760
    %1533 = vmatmul.f32.gmra.mxu0 %v1532
    %v1534 = vpop.f32.mrf.mxu0
    %v1535 = vadd.f32 %v1490, %v1534
    %1536 = vdwg.mxu0
    %v1537 = vand.u32 %v617, 4294901760
    %v1538 = vsub.f32 %v617, %v1537
    %v1539 = vand.u32 %v1538, 4294901760
    %1540 = vmatpush.xpose.msra.mxu0 %v1539
    %v1541 = vand.u32 %v614, 4294901760
    %v1542 = vsub.f32 %v614, %v1541
    %v1543 = vand.u32 %v1542, 4294901760
    %1544 = vmatpush.xpose.msra.mxu0 %v1543
    %v1545 = vand.u32 %v611, 4294901760
    %v1546 = vsub.f32 %v611, %v1545
    %v1547 = vand.u32 %v1546, 4294901760
    %1548 = vmatpush.xpose.msra.mxu0 %v1547
    %v1549 = vand.u32 %v608, 4294901760
    %v1550 = vsub.f32 %v608, %v1549
    %v1551 = vand.u32 %v1550, 4294901760
    %1552 = vmatpush.xpose.msra.mxu0 %v1551
    %v1553 = vand.u32 %v605, 4294901760
    %v1554 = vsub.f32 %v605, %v1553
    %v1555 = vand.u32 %v1554, 4294901760
    %1556 = vmatpush.xpose.msra.mxu0 %v1555
    %v1557 = vand.u32 %v602, 4294901760
    %v1558 = vsub.f32 %v602, %v1557
    %v1559 = vand.u32 %v1558, 4294901760
    %1560 = vmatpush.xpose.msra.mxu0 %v1559
    %v1561 = vand.u32 %v599, 4294901760
    %v1562 = vsub.f32 %v599, %v1561
    %v1563 = vand.u32 %v1562, 4294901760
    %1564 = vmatpush.xpose.msra.mxu0 %v1563
    %v1565 = vand.u32 %v596, 4294901760
    %v1566 = vsub.f32 %v596, %v1565
    %v1567 = vand.u32 %v1566, 4294901760
    %1568 = vmatpush.xpose.msra.mxu0 %v1567
    %v1569 = vand.u32 %v593, 4294901760
    %v1570 = vsub.f32 %v593, %v1569
    %v1571 = vand.u32 %v1570, 4294901760
    %1572 = vmatpush.xpose.msra.mxu0 %v1571
    %v1573 = vand.u32 %v590, 4294901760
    %v1574 = vsub.f32 %v590, %v1573
    %v1575 = vand.u32 %v1574, 4294901760
    %1576 = vmatpush.xpose.msra.mxu0 %v1575
    %v1577 = vand.u32 %v587, 4294901760
    %v1578 = vsub.f32 %v587, %v1577
    %v1579 = vand.u32 %v1578, 4294901760
    %1580 = vmatpush.xpose.msra.mxu0 %v1579
    %v1581 = vand.u32 %v584, 4294901760
    %v1582 = vsub.f32 %v584, %v1581
    %v1583 = vand.u32 %v1582, 4294901760
    %1584 = vmatpush.xpose.msra.mxu0 %v1583
    %v1585 = vand.u32 %v581, 4294901760
    %v1586 = vsub.f32 %v581, %v1585
    %v1587 = vand.u32 %v1586, 4294901760
    %1588 = vmatpush.xpose.msra.mxu0 %v1587
    %v1589 = vand.u32 %v578, 4294901760
    %v1590 = vsub.f32 %v578, %v1589
    %v1591 = vand.u32 %v1590, 4294901760
    %1592 = vmatpush.xpose.msra.mxu0 %v1591
    %v1593 = vand.u32 %v575, 4294901760
    %v1594 = vsub.f32 %v575, %v1593
    %v1595 = vand.u32 %v1594, 4294901760
    %1596 = vmatpush.xpose.msra.mxu0 %v1595
    %v1597 = vand.u32 %v572, 4294901760
    %v1598 = vsub.f32 %v572, %v1597
    %v1599 = vand.u32 %v1598, 4294901760
    %1600 = vmatpush.xpose.msra.mxu0 %v1599
    %v1601 = vand.u32 %v518, 4294901760
    %1602 = vmatmul.f32.gmra.mxu0 %v1601
    %v1603 = vpop.f32.mrf.mxu0
    %v1604 = vadd.f32 %v1529, %v1603
    %v1605 = vand.u32 %v521, 4294901760
    %1606 = vmatmul.f32.gmra.mxu0 %v1605
    %v1607 = vpop.f32.mrf.mxu0
    %v1608 = vadd.f32 %v1535, %v1607
    %1609 = vdwg.mxu0
    %v1610 = vand.u32 %v617, 4294901760
    %1611 = vmatpush.xpose.msra.mxu0 %v1610
    %v1612 = vand.u32 %v614, 4294901760
    %1613 = vmatpush.xpose.msra.mxu0 %v1612
    %v1614 = vand.u32 %v611, 4294901760
    %1615 = vmatpush.xpose.msra.mxu0 %v1614
    %v1616 = vand.u32 %v608, 4294901760
    %1617 = vmatpush.xpose.msra.mxu0 %v1616
    %v1618 = vand.u32 %v605, 4294901760
    %1619 = vmatpush.xpose.msra.mxu0 %v1618
    %v1620 = vand.u32 %v602, 4294901760
    %1621 = vmatpush.xpose.msra.mxu0 %v1620
    %v1622 = vand.u32 %v599, 4294901760
    %1623 = vmatpush.xpose.msra.mxu0 %v1622
    %v1624 = vand.u32 %v596, 4294901760
    %1625 = vmatpush.xpose.msra.mxu0 %v1624
    %v1626 = vand.u32 %v593, 4294901760
    %1627 = vmatpush.xpose.msra.mxu0 %v1626
    %v1628 = vand.u32 %v590, 4294901760
    %1629 = vmatpush.xpose.msra.mxu0 %v1628
    %v1630 = vand.u32 %v587, 4294901760
    %1631 = vmatpush.xpose.msra.mxu0 %v1630
    %v1632 = vand.u32 %v584, 4294901760
    %1633 = vmatpush.xpose.msra.mxu0 %v1632
    %v1634 = vand.u32 %v581, 4294901760
    %1635 = vmatpush.xpose.msra.mxu0 %v1634
    %v1636 = vand.u32 %v578, 4294901760
    %1637 = vmatpush.xpose.msra.mxu0 %v1636
    %v1638 = vand.u32 %v575, 4294901760
    %1639 = vmatpush.xpose.msra.mxu0 %v1638
    %v1640 = vand.u32 %v572, 4294901760
    %1641 = vmatpush.xpose.msra.mxu0 %v1640
    %v1642 = vand.u32 %v518, 4294901760
    %1643 = vmatmul.f32.gmra.mxu0 %v1642
    %v1644 = vpop.f32.mrf.mxu0
    %v1645 = vadd.f32 %v1604, %v1644
    %v1646 = vand.u32 %v521, 4294901760
    %1647 = vmatmul.f32.gmra.mxu0 %v1646
    %v1648 = vpop.f32.mrf.mxu0
    %v1649 = vadd.f32 %v1608, %v1648
    %1650 = vdwg.mxu0
    %v1651 = vand.u32 %v665, 4294901760
    %1652 = vmatpush.xpose.msra.mxu0 %v1651
    %v1653 = vand.u32 %v662, 4294901760
    %1654 = vmatpush.xpose.msra.mxu0 %v1653
    %v1655 = vand.u32 %v659, 4294901760
    %1656 = vmatpush.xpose.msra.mxu0 %v1655
    %v1657 = vand.u32 %v656, 4294901760
    %1658 = vmatpush.xpose.msra.mxu0 %v1657
    %v1659 = vand.u32 %v653, 4294901760
    %1660 = vmatpush.xpose.msra.mxu0 %v1659
    %v1661 = vand.u32 %v650, 4294901760
    %1662 = vmatpush.xpose.msra.mxu0 %v1661
    %v1663 = vand.u32 %v647, 4294901760
    %1664 = vmatpush.xpose.msra.mxu0 %v1663
    %v1665 = vand.u32 %v644, 4294901760
    %1666 = vmatpush.xpose.msra.mxu0 %v1665
    %v1667 = vand.u32 %v641, 4294901760
    %1668 = vmatpush.xpose.msra.mxu0 %v1667
    %v1669 = vand.u32 %v638, 4294901760
    %1670 = vmatpush.xpose.msra.mxu0 %v1669
    %v1671 = vand.u32 %v635, 4294901760
    %1672 = vmatpush.xpose.msra.mxu0 %v1671
    %v1673 = vand.u32 %v632, 4294901760
    %1674 = vmatpush.xpose.msra.mxu0 %v1673
    %v1675 = vand.u32 %v629, 4294901760
    %1676 = vmatpush.xpose.msra.mxu0 %v1675
    %v1677 = vand.u32 %v626, 4294901760
    %1678 = vmatpush.xpose.msra.mxu0 %v1677
    %v1679 = vand.u32 %v623, 4294901760
    %1680 = vmatpush.xpose.msra.mxu0 %v1679
    %v1681 = vand.u32 %v620, 4294901760
    %1682 = vmatpush.xpose.msra.mxu0 %v1681
    %v1683 = vand.u32 %v518, 4294901760
    %v1684 = vsub.f32 %v518, %v1683
    %v1685 = vand.u32 %v1684, 4294901760
    %v1686 = vsub.f32 %v1684, %v1685
    %v1687 = vand.u32 %v1686, 4294901760
    %1688 = vmatmul.f32.gmra.mxu0 %v1687
    %v1689 = vpop.f32.mrf.mxu0
    %v1690 = vadd.f32 0.0, %v1689
    %v1691 = vand.u32 %v521, 4294901760
    %v1692 = vsub.f32 %v521, %v1691
    %v1693 = vand.u32 %v1692, 4294901760
    %v1694 = vsub.f32 %v1692, %v1693
    %v1695 = vand.u32 %v1694, 4294901760
    %1696 = vmatmul.f32.gmra.mxu0 %v1695
    %v1697 = vpop.f32.mrf.mxu0
    %v1698 = vadd.f32 0.0, %v1697
    %1699 = vdwg.mxu0
    %v1700 = vand.u32 %v665, 4294901760
    %v1701 = vsub.f32 %v665, %v1700
    %v1702 = vand.u32 %v1701, 4294901760
    %v1703 = vsub.f32 %v1701, %v1702
    %v1704 = vand.u32 %v1703, 4294901760
    %1705 = vmatpush.xpose.msra.mxu0 %v1704
    %v1706 = vand.u32 %v662, 4294901760
    %v1707 = vsub.f32 %v662, %v1706
    %v1708 = vand.u32 %v1707, 4294901760
    %v1709 = vsub.f32 %v1707, %v1708
    %v1710 = vand.u32 %v1709, 4294901760
    %1711 = vmatpush.xpose.msra.mxu0 %v1710
    %v1712 = vand.u32 %v659, 4294901760
    %v1713 = vsub.f32 %v659, %v1712
    %v1714 = vand.u32 %v1713, 4294901760
    %v1715 = vsub.f32 %v1713, %v1714
    %v1716 = vand.u32 %v1715, 4294901760
    %1717 = vmatpush.xpose.msra.mxu0 %v1716
    %v1718 = vand.u32 %v656, 4294901760
    %v1719 = vsub.f32 %v656, %v1718
    %v1720 = vand.u32 %v1719, 4294901760
    %v1721 = vsub.f32 %v1719, %v1720
    %v1722 = vand.u32 %v1721, 4294901760
    %1723 = vmatpush.xpose.msra.mxu0 %v1722
    %v1724 = vand.u32 %v653, 4294901760
    %v1725 = vsub.f32 %v653, %v1724
    %v1726 = vand.u32 %v1725, 4294901760
    %v1727 = vsub.f32 %v1725, %v1726
    %v1728 = vand.u32 %v1727, 4294901760
    %1729 = vmatpush.xpose.msra.mxu0 %v1728
    %v1730 = vand.u32 %v650, 4294901760
    %v1731 = vsub.f32 %v650, %v1730
    %v1732 = vand.u32 %v1731, 4294901760
    %v1733 = vsub.f32 %v1731, %v1732
    %v1734 = vand.u32 %v1733, 4294901760
    %1735 = vmatpush.xpose.msra.mxu0 %v1734
    %v1736 = vand.u32 %v647, 4294901760
    %v1737 = vsub.f32 %v647, %v1736
    %v1738 = vand.u32 %v1737, 4294901760
    %v1739 = vsub.f32 %v1737, %v1738
    %v1740 = vand.u32 %v1739, 4294901760
    %1741 = vmatpush.xpose.msra.mxu0 %v1740
    %v1742 = vand.u32 %v644, 4294901760
    %v1743 = vsub.f32 %v644, %v1742
    %v1744 = vand.u32 %v1743, 4294901760
    %v1745 = vsub.f32 %v1743, %v1744
    %v1746 = vand.u32 %v1745, 4294901760
    %1747 = vmatpush.xpose.msra.mxu0 %v1746
    %v1748 = vand.u32 %v641, 4294901760
    %v1749 = vsub.f32 %v641, %v1748
    %v1750 = vand.u32 %v1749, 4294901760
    %v1751 = vsub.f32 %v1749, %v1750
    %v1752 = vand.u32 %v1751, 4294901760
    %1753 = vmatpush.xpose.msra.mxu0 %v1752
    %v1754 = vand.u32 %v638, 4294901760
    %v1755 = vsub.f32 %v638, %v1754
    %v1756 = vand.u32 %v1755, 4294901760
    %v1757 = vsub.f32 %v1755, %v1756
    %v1758 = vand.u32 %v1757, 4294901760
    %1759 = vmatpush.xpose.msra.mxu0 %v1758
    %v1760 = vand.u32 %v635, 4294901760
    %v1761 = vsub.f32 %v635, %v1760
    %v1762 = vand.u32 %v1761, 4294901760
    %v1763 = vsub.f32 %v1761, %v1762
    %v1764 = vand.u32 %v1763, 4294901760
    %1765 = vmatpush.xpose.msra.mxu0 %v1764
    %v1766 = vand.u32 %v632, 4294901760
    %v1767 = vsub.f32 %v632, %v1766
    %v1768 = vand.u32 %v1767, 4294901760
    %v1769 = vsub.f32 %v1767, %v1768
    %v1770 = vand.u32 %v1769, 4294901760
    %1771 = vmatpush.xpose.msra.mxu0 %v1770
    %v1772 = vand.u32 %v629, 4294901760
    %v1773 = vsub.f32 %v629, %v1772
    %v1774 = vand.u32 %v1773, 4294901760
    %v1775 = vsub.f32 %v1773, %v1774
    %v1776 = vand.u32 %v1775, 4294901760
    %1777 = vmatpush.xpose.msra.mxu0 %v1776
    %v1778 = vand.u32 %v626, 4294901760
    %v1779 = vsub.f32 %v626, %v1778
    %v1780 = vand.u32 %v1779, 4294901760
    %v1781 = vsub.f32 %v1779, %v1780
    %v1782 = vand.u32 %v1781, 4294901760
    %1783 = vmatpush.xpose.msra.mxu0 %v1782
    %v1784 = vand.u32 %v623, 4294901760
    %v1785 = vsub.f32 %v623, %v1784
    %v1786 = vand.u32 %v1785, 4294901760
    %v1787 = vsub.f32 %v1785, %v1786
    %v1788 = vand.u32 %v1787, 4294901760
    %1789 = vmatpush.xpose.msra.mxu0 %v1788
    %v1790 = vand.u32 %v620, 4294901760
    %v1791 = vsub.f32 %v620, %v1790
    %v1792 = vand.u32 %v1791, 4294901760
    %v1793 = vsub.f32 %v1791, %v1792
    %v1794 = vand.u32 %v1793, 4294901760
    %1795 = vmatpush.xpose.msra.mxu0 %v1794
    %v1796 = vand.u32 %v518, 4294901760
    %1797 = vmatmul.f32.gmra.mxu0 %v1796
    %v1798 = vpop.f32.mrf.mxu0
    %v1799 = vadd.f32 %v1690, %v1798
    %v1800 = vand.u32 %v521, 4294901760
    %1801 = vmatmul.f32.gmra.mxu0 %v1800
    %v1802 = vpop.f32.mrf.mxu0
    %v1803 = vadd.f32 %v1698, %v1802
    %1804 = vdwg.mxu0
    %v1805 = vand.u32 %v665, 4294901760
    %v1806 = vsub.f32 %v665, %v1805
    %1807 = vmatpush.xpose.msra.mxu0 %v1806
    %v1808 = vand.u32 %v662, 4294901760
    %v1809 = vsub.f32 %v662, %v1808
    %1810 = vmatpush.xpose.msra.mxu0 %v1809
    %v1811 = vand.u32 %v659, 4294901760
    %v1812 = vsub.f32 %v659, %v1811
    %1813 = vmatpush.xpose.msra.mxu0 %v1812
    %v1814 = vand.u32 %v656, 4294901760
    %v1815 = vsub.f32 %v656, %v1814
    %1816 = vmatpush.xpose.msra.mxu0 %v1815
    %v1817 = vand.u32 %v653, 4294901760
    %v1818 = vsub.f32 %v653, %v1817
    %1819 = vmatpush.xpose.msra.mxu0 %v1818
    %v1820 = vand.u32 %v650, 4294901760
    %v1821 = vsub.f32 %v650, %v1820
    %1822 = vmatpush.xpose.msra.mxu0 %v1821
    %v1823 = vand.u32 %v647, 4294901760
    %v1824 = vsub.f32 %v647, %v1823
    %1825 = vmatpush.xpose.msra.mxu0 %v1824
    %v1826 = vand.u32 %v644, 4294901760
    %v1827 = vsub.f32 %v644, %v1826
    %1828 = vmatpush.xpose.msra.mxu0 %v1827
    %v1829 = vand.u32 %v641, 4294901760
    %v1830 = vsub.f32 %v641, %v1829
    %1831 = vmatpush.xpose.msra.mxu0 %v1830
    %v1832 = vand.u32 %v638, 4294901760
    %v1833 = vsub.f32 %v638, %v1832
    %1834 = vmatpush.xpose.msra.mxu0 %v1833
    %v1835 = vand.u32 %v635, 4294901760
    %v1836 = vsub.f32 %v635, %v1835
    %1837 = vmatpush.xpose.msra.mxu0 %v1836
    %v1838 = vand.u32 %v632, 4294901760
    %v1839 = vsub.f32 %v632, %v1838
    %1840 = vmatpush.xpose.msra.mxu0 %v1839
    %v1841 = vand.u32 %v629, 4294901760
    %v1842 = vsub.f32 %v629, %v1841
    %1843 = vmatpush.xpose.msra.mxu0 %v1842
    %v1844 = vand.u32 %v626, 4294901760
    %v1845 = vsub.f32 %v626, %v1844
    %1846 = vmatpush.xpose.msra.mxu0 %v1845
    %v1847 = vand.u32 %v623, 4294901760
    %v1848 = vsub.f32 %v623, %v1847
    %1849 = vmatpush.xpose.msra.mxu0 %v1848
    %v1850 = vand.u32 %v620, 4294901760
    %v1851 = vsub.f32 %v620, %v1850
    %1852 = vmatpush.xpose.msra.mxu0 %v1851
    %v1853 = vand.u32 %v518, 4294901760
    %v1854 = vsub.f32 %v518, %v1853
    %1855 = vmatmul.f32.gmra.mxu0 %v1854
    %v1856 = vpop.f32.mrf.mxu0
    %v1857 = vadd.f32 %v1799, %v1856
    %v1858 = vand.u32 %v521, 4294901760
    %v1859 = vsub.f32 %v521, %v1858
    %1860 = vmatmul.f32.gmra.mxu0 %v1859
    %v1861 = vpop.f32.mrf.mxu0
    %v1862 = vadd.f32 %v1803, %v1861
    %1863 = vdwg.mxu0
    %v1864 = vand.u32 %v665, 4294901760
    %1865 = vmatpush.xpose.msra.mxu0 %v1864
    %v1866 = vand.u32 %v662, 4294901760
    %1867 = vmatpush.xpose.msra.mxu0 %v1866
    %v1868 = vand.u32 %v659, 4294901760
    %1869 = vmatpush.xpose.msra.mxu0 %v1868
    %v1870 = vand.u32 %v656, 4294901760
    %1871 = vmatpush.xpose.msra.mxu0 %v1870
    %v1872 = vand.u32 %v653, 4294901760
    %1873 = vmatpush.xpose.msra.mxu0 %v1872
    %v1874 = vand.u32 %v650, 4294901760
    %1875 = vmatpush.xpose.msra.mxu0 %v1874
    %v1876 = vand.u32 %v647, 4294901760
    %1877 = vmatpush.xpose.msra.mxu0 %v1876
    %v1878 = vand.u32 %v644, 4294901760
    %1879 = vmatpush.xpose.msra.mxu0 %v1878
    %v1880 = vand.u32 %v641, 4294901760
    %1881 = vmatpush.xpose.msra.mxu0 %v1880
    %v1882 = vand.u32 %v638, 4294901760
    %1883 = vmatpush.xpose.msra.mxu0 %v1882
    %v1884 = vand.u32 %v635, 4294901760
    %1885 = vmatpush.xpose.msra.mxu0 %v1884
    %v1886 = vand.u32 %v632, 4294901760
    %1887 = vmatpush.xpose.msra.mxu0 %v1886
    %v1888 = vand.u32 %v629, 4294901760
    %1889 = vmatpush.xpose.msra.mxu0 %v1888
    %v1890 = vand.u32 %v626, 4294901760
    %1891 = vmatpush.xpose.msra.mxu0 %v1890
    %v1892 = vand.u32 %v623, 4294901760
    %1893 = vmatpush.xpose.msra.mxu0 %v1892
    %v1894 = vand.u32 %v620, 4294901760
    %1895 = vmatpush.xpose.msra.mxu0 %v1894
    %v1896 = vand.u32 %v518, 4294901760
    %v1897 = vsub.f32 %v518, %v1896
    %v1898 = vand.u32 %v1897, 4294901760
    %1899 = vmatmul.f32.gmra.mxu0 %v1898
    %v1900 = vpop.f32.mrf.mxu0
    %v1901 = vadd.f32 %v1857, %v1900
    %v1902 = vand.u32 %v521, 4294901760
    %v1903 = vsub.f32 %v521, %v1902
    %v1904 = vand.u32 %v1903, 4294901760
    %1905 = vmatmul.f32.gmra.mxu0 %v1904
    %v1906 = vpop.f32.mrf.mxu0
    %v1907 = vadd.f32 %v1862, %v1906
    %1908 = vdwg.mxu0
    %v1909 = vand.u32 %v665, 4294901760
    %v1910 = vsub.f32 %v665, %v1909
    %v1911 = vand.u32 %v1910, 4294901760
    %1912 = vmatpush.xpose.msra.mxu0 %v1911
    %v1913 = vand.u32 %v662, 4294901760
    %v1914 = vsub.f32 %v662, %v1913
    %v1915 = vand.u32 %v1914, 4294901760
    %1916 = vmatpush.xpose.msra.mxu0 %v1915
    %v1917 = vand.u32 %v659, 4294901760
    %v1918 = vsub.f32 %v659, %v1917
    %v1919 = vand.u32 %v1918, 4294901760
    %1920 = vmatpush.xpose.msra.mxu0 %v1919
    %v1921 = vand.u32 %v656, 4294901760
    %v1922 = vsub.f32 %v656, %v1921
    %v1923 = vand.u32 %v1922, 4294901760
    %1924 = vmatpush.xpose.msra.mxu0 %v1923
    %v1925 = vand.u32 %v653, 4294901760
    %v1926 = vsub.f32 %v653, %v1925
    %v1927 = vand.u32 %v1926, 4294901760
    %1928 = vmatpush.xpose.msra.mxu0 %v1927
    %v1929 = vand.u32 %v650, 4294901760
    %v1930 = vsub.f32 %v650, %v1929
    %v1931 = vand.u32 %v1930, 4294901760
    %1932 = vmatpush.xpose.msra.mxu0 %v1931
    %v1933 = vand.u32 %v647, 4294901760
    %v1934 = vsub.f32 %v647, %v1933
    %v1935 = vand.u32 %v1934, 4294901760
    %1936 = vmatpush.xpose.msra.mxu0 %v1935
    %v1937 = vand.u32 %v644, 4294901760
    %v1938 = vsub.f32 %v644, %v1937
    %v1939 = vand.u32 %v1938, 4294901760
    %1940 = vmatpush.xpose.msra.mxu0 %v1939
    %v1941 = vand.u32 %v641, 4294901760
    %v1942 = vsub.f32 %v641, %v1941
    %v1943 = vand.u32 %v1942, 4294901760
    %1944 = vmatpush.xpose.msra.mxu0 %v1943
    %v1945 = vand.u32 %v638, 4294901760
    %v1946 = vsub.f32 %v638, %v1945
    %v1947 = vand.u32 %v1946, 4294901760
    %1948 = vmatpush.xpose.msra.mxu0 %v1947
    %v1949 = vand.u32 %v635, 4294901760
    %v1950 = vsub.f32 %v635, %v1949
    %v1951 = vand.u32 %v1950, 4294901760
    %1952 = vmatpush.xpose.msra.mxu0 %v1951
    %v1953 = vand.u32 %v632, 4294901760
    %v1954 = vsub.f32 %v632, %v1953
    %v1955 = vand.u32 %v1954, 4294901760
    %1956 = vmatpush.xpose.msra.mxu0 %v1955
    %v1957 = vand.u32 %v629, 4294901760
    %v1958 = vsub.f32 %v629, %v1957
    %v1959 = vand.u32 %v1958, 4294901760
    %1960 = vmatpush.xpose.msra.mxu0 %v1959
    %v1961 = vand.u32 %v626, 4294901760
    %v1962 = vsub.f32 %v626, %v1961
    %v1963 = vand.u32 %v1962, 4294901760
    %1964 = vmatpush.xpose.msra.mxu0 %v1963
    %v1965 = vand.u32 %v623, 4294901760
    %v1966 = vsub.f32 %v623, %v1965
    %v1967 = vand.u32 %v1966, 4294901760
    %1968 = vmatpush.xpose.msra.mxu0 %v1967
    %v1969 = vand.u32 %v620, 4294901760
    %v1970 = vsub.f32 %v620, %v1969
    %v1971 = vand.u32 %v1970, 4294901760
    %1972 = vmatpush.xpose.msra.mxu0 %v1971
    %v1973 = vand.u32 %v518, 4294901760
    %1974 = vmatmul.f32.gmra.mxu0 %v1973
    %v1975 = vpop.f32.mrf.mxu0
    %v1976 = vadd.f32 %v1901, %v1975
    %v1977 = vand.u32 %v521, 4294901760
    %1978 = vmatmul.f32.gmra.mxu0 %v1977
    %v1979 = vpop.f32.mrf.mxu0
    %v1980 = vadd.f32 %v1907, %v1979
    %1981 = vdwg.mxu0
    %v1982 = vand.u32 %v665, 4294901760
    %1983 = vmatpush.xpose.msra.mxu0 %v1982
    %v1984 = vand.u32 %v662, 4294901760
    %1985 = vmatpush.xpose.msra.mxu0 %v1984
    %v1986 = vand.u32 %v659, 4294901760
    %1987 = vmatpush.xpose.msra.mxu0 %v1986
    %v1988 = vand.u32 %v656, 4294901760
    %1989 = vmatpush.xpose.msra.mxu0 %v1988
    %v1990 = vand.u32 %v653, 4294901760
    %1991 = vmatpush.xpose.msra.mxu0 %v1990
    %v1992 = vand.u32 %v650, 4294901760
    %1993 = vmatpush.xpose.msra.mxu0 %v1992
    %v1994 = vand.u32 %v647, 4294901760
    %1995 = vmatpush.xpose.msra.mxu0 %v1994
    %v1996 = vand.u32 %v644, 4294901760
    %1997 = vmatpush.xpose.msra.mxu0 %v1996
    %v1998 = vand.u32 %v641, 4294901760
    %1999 = vmatpush.xpose.msra.mxu0 %v1998
    %v2000 = vand.u32 %v638, 4294901760
    %2001 = vmatpush.xpose.msra.mxu0 %v2000
    %v2002 = vand.u32 %v635, 4294901760
    %2003 = vmatpush.xpose.msra.mxu0 %v2002
    %v2004 = vand.u32 %v632, 4294901760
    %2005 = vmatpush.xpose.msra.mxu0 %v2004
    %v2006 = vand.u32 %v629, 4294901760
    %2007 = vmatpush.xpose.msra.mxu0 %v2006
    %v2008 = vand.u32 %v626, 4294901760
    %2009 = vmatpush.xpose.msra.mxu0 %v2008
    %v2010 = vand.u32 %v623, 4294901760
    %2011 = vmatpush.xpose.msra.mxu0 %v2010
    %v2012 = vand.u32 %v620, 4294901760
    %2013 = vmatpush.xpose.msra.mxu0 %v2012
    %v2014 = vand.u32 %v518, 4294901760
    %2015 = vmatmul.f32.gmra.mxu0 %v2014
    %v2016 = vpop.f32.mrf.mxu0
    %v2017 = vadd.f32 %v1976, %v2016
    %v2018 = vand.u32 %v521, 4294901760
    %2019 = vmatmul.f32.gmra.mxu0 %v2018
    %v2020 = vpop.f32.mrf.mxu0
    %v2021 = vadd.f32 %v1980, %v2020
    %2022 = vdwg.mxu0
    %v2023 = vand.u32 %v713, 4294901760
    %2024 = vmatpush.xpose.msra.mxu0 %v2023
    %v2025 = vand.u32 %v710, 4294901760
    %2026 = vmatpush.xpose.msra.mxu0 %v2025
    %v2027 = vand.u32 %v707, 4294901760
    %2028 = vmatpush.xpose.msra.mxu0 %v2027
    %v2029 = vand.u32 %v704, 4294901760
    %2030 = vmatpush.xpose.msra.mxu0 %v2029
    %v2031 = vand.u32 %v701, 4294901760
    %2032 = vmatpush.xpose.msra.mxu0 %v2031
    %v2033 = vand.u32 %v698, 4294901760
    %2034 = vmatpush.xpose.msra.mxu0 %v2033
    %v2035 = vand.u32 %v695, 4294901760
    %2036 = vmatpush.xpose.msra.mxu0 %v2035
    %v2037 = vand.u32 %v692, 4294901760
    %2038 = vmatpush.xpose.msra.mxu0 %v2037
    %v2039 = vand.u32 %v689, 4294901760
    %2040 = vmatpush.xpose.msra.mxu0 %v2039
    %v2041 = vand.u32 %v686, 4294901760
    %2042 = vmatpush.xpose.msra.mxu0 %v2041
    %v2043 = vand.u32 %v683, 4294901760
    %2044 = vmatpush.xpose.msra.mxu0 %v2043
    %v2045 = vand.u32 %v680, 4294901760
    %2046 = vmatpush.xpose.msra.mxu0 %v2045
    %v2047 = vand.u32 %v677, 4294901760
    %2048 = vmatpush.xpose.msra.mxu0 %v2047
    %v2049 = vand.u32 %v674, 4294901760
    %2050 = vmatpush.xpose.msra.mxu0 %v2049
    %v2051 = vand.u32 %v671, 4294901760
    %2052 = vmatpush.xpose.msra.mxu0 %v2051
    %v2053 = vand.u32 %v668, 4294901760
    %2054 = vmatpush.xpose.msra.mxu0 %v2053
    %v2055 = vand.u32 %v518, 4294901760
    %v2056 = vsub.f32 %v518, %v2055
    %v2057 = vand.u32 %v2056, 4294901760
    %v2058 = vsub.f32 %v2056, %v2057
    %v2059 = vand.u32 %v2058, 4294901760
    %2060 = vmatmul.f32.gmra.mxu0 %v2059
    %v2061 = vpop.f32.mrf.mxu0
    %v2062 = vadd.f32 0.0, %v2061
    %v2063 = vand.u32 %v521, 4294901760
    %v2064 = vsub.f32 %v521, %v2063
    %v2065 = vand.u32 %v2064, 4294901760
    %v2066 = vsub.f32 %v2064, %v2065
    %v2067 = vand.u32 %v2066, 4294901760
    %2068 = vmatmul.f32.gmra.mxu0 %v2067
    %v2069 = vpop.f32.mrf.mxu0
    %v2070 = vadd.f32 0.0, %v2069
    %2071 = vdwg.mxu0
    %v2072 = vand.u32 %v713, 4294901760
    %v2073 = vsub.f32 %v713, %v2072
    %v2074 = vand.u32 %v2073, 4294901760
    %v2075 = vsub.f32 %v2073, %v2074
    %v2076 = vand.u32 %v2075, 4294901760
    %2077 = vmatpush.xpose.msra.mxu0 %v2076
    %v2078 = vand.u32 %v710, 4294901760
    %v2079 = vsub.f32 %v710, %v2078
    %v2080 = vand.u32 %v2079, 4294901760
    %v2081 = vsub.f32 %v2079, %v2080
    %v2082 = vand.u32 %v2081, 4294901760
    %2083 = vmatpush.xpose.msra.mxu0 %v2082
    %v2084 = vand.u32 %v707, 4294901760
    %v2085 = vsub.f32 %v707, %v2084
    %v2086 = vand.u32 %v2085, 4294901760
    %v2087 = vsub.f32 %v2085, %v2086
    %v2088 = vand.u32 %v2087, 4294901760
    %2089 = vmatpush.xpose.msra.mxu0 %v2088
    %v2090 = vand.u32 %v704, 4294901760
    %v2091 = vsub.f32 %v704, %v2090
    %v2092 = vand.u32 %v2091, 4294901760
    %v2093 = vsub.f32 %v2091, %v2092
    %v2094 = vand.u32 %v2093, 4294901760
    %2095 = vmatpush.xpose.msra.mxu0 %v2094
    %v2096 = vand.u32 %v701, 4294901760
    %v2097 = vsub.f32 %v701, %v2096
    %v2098 = vand.u32 %v2097, 4294901760
    %v2099 = vsub.f32 %v2097, %v2098
    %v2100 = vand.u32 %v2099, 4294901760
    %2101 = vmatpush.xpose.msra.mxu0 %v2100
    %v2102 = vand.u32 %v698, 4294901760
    %v2103 = vsub.f32 %v698, %v2102
    %v2104 = vand.u32 %v2103, 4294901760
    %v2105 = vsub.f32 %v2103, %v2104
    %v2106 = vand.u32 %v2105, 4294901760
    %2107 = vmatpush.xpose.msra.mxu0 %v2106
    %v2108 = vand.u32 %v695, 4294901760
    %v2109 = vsub.f32 %v695, %v2108
    %v2110 = vand.u32 %v2109, 4294901760
    %v2111 = vsub.f32 %v2109, %v2110
    %v2112 = vand.u32 %v2111, 4294901760
    %2113 = vmatpush.xpose.msra.mxu0 %v2112
    %v2114 = vand.u32 %v692, 4294901760
    %v2115 = vsub.f32 %v692, %v2114
    %v2116 = vand.u32 %v2115, 4294901760
    %v2117 = vsub.f32 %v2115, %v2116
    %v2118 = vand.u32 %v2117, 4294901760
    %2119 = vmatpush.xpose.msra.mxu0 %v2118
    %v2120 = vand.u32 %v689, 4294901760
    %v2121 = vsub.f32 %v689, %v2120
    %v2122 = vand.u32 %v2121, 4294901760
    %v2123 = vsub.f32 %v2121, %v2122
    %v2124 = vand.u32 %v2123, 4294901760
    %2125 = vmatpush.xpose.msra.mxu0 %v2124
    %v2126 = vand.u32 %v686, 4294901760
    %v2127 = vsub.f32 %v686, %v2126
    %v2128 = vand.u32 %v2127, 4294901760
    %v2129 = vsub.f32 %v2127, %v2128
    %v2130 = vand.u32 %v2129, 4294901760
    %2131 = vmatpush.xpose.msra.mxu0 %v2130
    %v2132 = vand.u32 %v683, 4294901760
    %v2133 = vsub.f32 %v683, %v2132
    %v2134 = vand.u32 %v2133, 4294901760
    %v2135 = vsub.f32 %v2133, %v2134
    %v2136 = vand.u32 %v2135, 4294901760
    %2137 = vmatpush.xpose.msra.mxu0 %v2136
    %v2138 = vand.u32 %v680, 4294901760
    %v2139 = vsub.f32 %v680, %v2138
    %v2140 = vand.u32 %v2139, 4294901760
    %v2141 = vsub.f32 %v2139, %v2140
    %v2142 = vand.u32 %v2141, 4294901760
    %2143 = vmatpush.xpose.msra.mxu0 %v2142
    %v2144 = vand.u32 %v677, 4294901760
    %v2145 = vsub.f32 %v677, %v2144
    %v2146 = vand.u32 %v2145, 4294901760
    %v2147 = vsub.f32 %v2145, %v2146
    %v2148 = vand.u32 %v2147, 4294901760
    %2149 = vmatpush.xpose.msra.mxu0 %v2148
    %v2150 = vand.u32 %v674, 4294901760
    %v2151 = vsub.f32 %v674, %v2150
    %v2152 = vand.u32 %v2151, 4294901760
    %v2153 = vsub.f32 %v2151, %v2152
    %v2154 = vand.u32 %v2153, 4294901760
    %2155 = vmatpush.xpose.msra.mxu0 %v2154
    %v2156 = vand.u32 %v671, 4294901760
    %v2157 = vsub.f32 %v671, %v2156
    %v2158 = vand.u32 %v2157, 4294901760
    %v2159 = vsub.f32 %v2157, %v2158
    %v2160 = vand.u32 %v2159, 4294901760
    %2161 = vmatpush.xpose.msra.mxu0 %v2160
    %v2162 = vand.u32 %v668, 4294901760
    %v2163 = vsub.f32 %v668, %v2162
    %v2164 = vand.u32 %v2163, 4294901760
    %v2165 = vsub.f32 %v2163, %v2164
    %v2166 = vand.u32 %v2165, 4294901760
    %2167 = vmatpush.xpose.msra.mxu0 %v2166
    %v2168 = vand.u32 %v518, 4294901760
    %2169 = vmatmul.f32.gmra.mxu0 %v2168
    %v2170 = vpop.f32.mrf.mxu0
    %v2171 = vadd.f32 %v2062, %v2170
    %v2172 = vand.u32 %v521, 4294901760
    %2173 = vmatmul.f32.gmra.mxu0 %v2172
    %v2174 = vpop.f32.mrf.mxu0
    %v2175 = vadd.f32 %v2070, %v2174
    %2176 = vdwg.mxu0
    %v2177 = vand.u32 %v713, 4294901760
    %v2178 = vsub.f32 %v713, %v2177
    %2179 = vmatpush.xpose.msra.mxu0 %v2178
    %v2180 = vand.u32 %v710, 4294901760
    %v2181 = vsub.f32 %v710, %v2180
    %2182 = vmatpush.xpose.msra.mxu0 %v2181
    %v2183 = vand.u32 %v707, 4294901760
    %v2184 = vsub.f32 %v707, %v2183
    %2185 = vmatpush.xpose.msra.mxu0 %v2184
    %v2186 = vand.u32 %v704, 4294901760
    %v2187 = vsub.f32 %v704, %v2186
    %2188 = vmatpush.xpose.msra.mxu0 %v2187
    %v2189 = vand.u32 %v701, 4294901760
    %v2190 = vsub.f32 %v701, %v2189
    %2191 = vmatpush.xpose.msra.mxu0 %v2190
    %v2192 = vand.u32 %v698, 4294901760
    %v2193 = vsub.f32 %v698, %v2192
    %2194 = vmatpush.xpose.msra.mxu0 %v2193
    %v2195 = vand.u32 %v695, 4294901760
    %v2196 = vsub.f32 %v695, %v2195
    %2197 = vmatpush.xpose.msra.mxu0 %v2196
    %v2198 = vand.u32 %v692, 4294901760
    %v2199 = vsub.f32 %v692, %v2198
    %2200 = vmatpush.xpose.msra.mxu0 %v2199
    %v2201 = vand.u32 %v689, 4294901760
    %v2202 = vsub.f32 %v689, %v2201
    %2203 = vmatpush.xpose.msra.mxu0 %v2202
    %v2204 = vand.u32 %v686, 4294901760
    %v2205 = vsub.f32 %v686, %v2204
    %2206 = vmatpush.xpose.msra.mxu0 %v2205
    %v2207 = vand.u32 %v683, 4294901760
    %v2208 = vsub.f32 %v683, %v2207
    %2209 = vmatpush.xpose.msra.mxu0 %v2208
    %v2210 = vand.u32 %v680, 4294901760
    %v2211 = vsub.f32 %v680, %v2210
    %2212 = vmatpush.xpose.msra.mxu0 %v2211
    %v2213 = vand.u32 %v677, 4294901760
    %v2214 = vsub.f32 %v677, %v2213
    %2215 = vmatpush.xpose.msra.mxu0 %v2214
    %v2216 = vand.u32 %v674, 4294901760
    %v2217 = vsub.f32 %v674, %v2216
    %2218 = vmatpush.xpose.msra.mxu0 %v2217
    %v2219 = vand.u32 %v671, 4294901760
    %v2220 = vsub.f32 %v671, %v2219
    %2221 = vmatpush.xpose.msra.mxu0 %v2220
    %v2222 = vand.u32 %v668, 4294901760
    %v2223 = vsub.f32 %v668, %v2222
    %2224 = vmatpush.xpose.msra.mxu0 %v2223
    %v2225 = vand.u32 %v518, 4294901760
    %v2226 = vsub.f32 %v518, %v2225
    %2227 = vmatmul.f32.gmra.mxu0 %v2226
    %v2228 = vpop.f32.mrf.mxu0
    %v2229 = vadd.f32 %v2171, %v2228
    %v2230 = vand.u32 %v521, 4294901760
    %v2231 = vsub.f32 %v521, %v2230
    %2232 = vmatmul.f32.gmra.mxu0 %v2231
    %v2233 = vpop.f32.mrf.mxu0
    %v2234 = vadd.f32 %v2175, %v2233
    %2235 = vdwg.mxu0
    %v2236 = vand.u32 %v713, 4294901760
    %2237 = vmatpush.xpose.msra.mxu0 %v2236
    %v2238 = vand.u32 %v710, 4294901760
    %2239 = vmatpush.xpose.msra.mxu0 %v2238
    %v2240 = vand.u32 %v707, 4294901760
    %2241 = vmatpush.xpose.msra.mxu0 %v2240
    %v2242 = vand.u32 %v704, 4294901760
    %2243 = vmatpush.xpose.msra.mxu0 %v2242
    %v2244 = vand.u32 %v701, 4294901760
    %2245 = vmatpush.xpose.msra.mxu0 %v2244
    %v2246 = vand.u32 %v698, 4294901760
    %2247 = vmatpush.xpose.msra.mxu0 %v2246
    %v2248 = vand.u32 %v695, 4294901760
    %2249 = vmatpush.xpose.msra.mxu0 %v2248
    %v2250 = vand.u32 %v692, 4294901760
    %2251 = vmatpush.xpose.msra.mxu0 %v2250
    %v2252 = vand.u32 %v689, 4294901760
    %2253 = vmatpush.xpose.msra.mxu0 %v2252
    %v2254 = vand.u32 %v686, 4294901760
    %2255 = vmatpush.xpose.msra.mxu0 %v2254
    %v2256 = vand.u32 %v683, 4294901760
    %2257 = vmatpush.xpose.msra.mxu0 %v2256
    %v2258 = vand.u32 %v680, 4294901760
    %2259 = vmatpush.xpose.msra.mxu0 %v2258
    %v2260 = vand.u32 %v677, 4294901760
    %2261 = vmatpush.xpose.msra.mxu0 %v2260
    %v2262 = vand.u32 %v674, 4294901760
    %2263 = vmatpush.xpose.msra.mxu0 %v2262
    %v2264 = vand.u32 %v671, 4294901760
    %2265 = vmatpush.xpose.msra.mxu0 %v2264
    %v2266 = vand.u32 %v668, 4294901760
    %2267 = vmatpush.xpose.msra.mxu0 %v2266
    %v2268 = vand.u32 %v518, 4294901760
    %v2269 = vsub.f32 %v518, %v2268
    %v2270 = vand.u32 %v2269, 4294901760
    %2271 = vmatmul.f32.gmra.mxu0 %v2270
    %v2272 = vpop.f32.mrf.mxu0
    %v2273 = vadd.f32 %v2229, %v2272
    %v2274 = vand.u32 %v521, 4294901760
    %v2275 = vsub.f32 %v521, %v2274
    %v2276 = vand.u32 %v2275, 4294901760
    %2277 = vmatmul.f32.gmra.mxu0 %v2276
    %v2278 = vpop.f32.mrf.mxu0
    %v2279 = vadd.f32 %v2234, %v2278
    %2280 = vdwg.mxu0
    %v2281 = vand.u32 %v713, 4294901760
    %v2282 = vsub.f32 %v713, %v2281
    %v2283 = vand.u32 %v2282, 4294901760
    %2284 = vmatpush.xpose.msra.mxu0 %v2283
    %v2285 = vand.u32 %v710, 4294901760
    %v2286 = vsub.f32 %v710, %v2285
    %v2287 = vand.u32 %v2286, 4294901760
    %2288 = vmatpush.xpose.msra.mxu0 %v2287
    %v2289 = vand.u32 %v707, 4294901760
    %v2290 = vsub.f32 %v707, %v2289
    %v2291 = vand.u32 %v2290, 4294901760
    %2292 = vmatpush.xpose.msra.mxu0 %v2291
    %v2293 = vand.u32 %v704, 4294901760
    %v2294 = vsub.f32 %v704, %v2293
    %v2295 = vand.u32 %v2294, 4294901760
    %2296 = vmatpush.xpose.msra.mxu0 %v2295
    %v2297 = vand.u32 %v701, 4294901760
    %v2298 = vsub.f32 %v701, %v2297
    %v2299 = vand.u32 %v2298, 4294901760
    %2300 = vmatpush.xpose.msra.mxu0 %v2299
    %v2301 = vand.u32 %v698, 4294901760
    %v2302 = vsub.f32 %v698, %v2301
    %v2303 = vand.u32 %v2302, 4294901760
    %2304 = vmatpush.xpose.msra.mxu0 %v2303
    %v2305 = vand.u32 %v695, 4294901760
    %v2306 = vsub.f32 %v695, %v2305
    %v2307 = vand.u32 %v2306, 4294901760
    %2308 = vmatpush.xpose.msra.mxu0 %v2307
    %v2309 = vand.u32 %v692, 4294901760
    %v2310 = vsub.f32 %v692, %v2309
    %v2311 = vand.u32 %v2310, 4294901760
    %2312 = vmatpush.xpose.msra.mxu0 %v2311
    %v2313 = vand.u32 %v689, 4294901760
    %v2314 = vsub.f32 %v689, %v2313
    %v2315 = vand.u32 %v2314, 4294901760
    %2316 = vmatpush.xpose.msra.mxu0 %v2315
    %v2317 = vand.u32 %v686, 4294901760
    %v2318 = vsub.f32 %v686, %v2317
    %v2319 = vand.u32 %v2318, 4294901760
    %2320 = vmatpush.xpose.msra.mxu0 %v2319
    %v2321 = vand.u32 %v683, 4294901760
    %v2322 = vsub.f32 %v683, %v2321
    %v2323 = vand.u32 %v2322, 4294901760
    %2324 = vmatpush.xpose.msra.mxu0 %v2323
    %v2325 = vand.u32 %v680, 4294901760
    %v2326 = vsub.f32 %v680, %v2325
    %v2327 = vand.u32 %v2326, 4294901760
    %2328 = vmatpush.xpose.msra.mxu0 %v2327
    %v2329 = vand.u32 %v677, 4294901760
    %v2330 = vsub.f32 %v677, %v2329
    %v2331 = vand.u32 %v2330, 4294901760
    %2332 = vmatpush.xpose.msra.mxu0 %v2331
    %v2333 = vand.u32 %v674, 4294901760
    %v2334 = vsub.f32 %v674, %v2333
    %v2335 = vand.u32 %v2334, 4294901760
    %2336 = vmatpush.xpose.msra.mxu0 %v2335
    %v2337 = vand.u32 %v671, 4294901760
    %v2338 = vsub.f32 %v671, %v2337
    %v2339 = vand.u32 %v2338, 4294901760
    %2340 = vmatpush.xpose.msra.mxu0 %v2339
    %v2341 = vand.u32 %v668, 4294901760
    %v2342 = vsub.f32 %v668, %v2341
    %v2343 = vand.u32 %v2342, 4294901760
    %2344 = vmatpush.xpose.msra.mxu0 %v2343
    %v2345 = vand.u32 %v518, 4294901760
    %2346 = vmatmul.f32.gmra.mxu0 %v2345
    %v2347 = vpop.f32.mrf.mxu0
    %v2348 = vadd.f32 %v2273, %v2347
    %v2349 = vand.u32 %v521, 4294901760
    %2350 = vmatmul.f32.gmra.mxu0 %v2349
    %v2351 = vpop.f32.mrf.mxu0
    %v2352 = vadd.f32 %v2279, %v2351
    %2353 = vdwg.mxu0
    %v2354 = vand.u32 %v713, 4294901760
    %2355 = vmatpush.xpose.msra.mxu0 %v2354
    %v2356 = vand.u32 %v710, 4294901760
    %2357 = vmatpush.xpose.msra.mxu0 %v2356
    %v2358 = vand.u32 %v707, 4294901760
    %2359 = vmatpush.xpose.msra.mxu0 %v2358
    %v2360 = vand.u32 %v704, 4294901760
    %2361 = vmatpush.xpose.msra.mxu0 %v2360
    %v2362 = vand.u32 %v701, 4294901760
    %2363 = vmatpush.xpose.msra.mxu0 %v2362
    %v2364 = vand.u32 %v698, 4294901760
    %2365 = vmatpush.xpose.msra.mxu0 %v2364
    %v2366 = vand.u32 %v695, 4294901760
    %2367 = vmatpush.xpose.msra.mxu0 %v2366
    %v2368 = vand.u32 %v692, 4294901760
    %2369 = vmatpush.xpose.msra.mxu0 %v2368
    %v2370 = vand.u32 %v689, 4294901760
    %2371 = vmatpush.xpose.msra.mxu0 %v2370
    %v2372 = vand.u32 %v686, 4294901760
    %2373 = vmatpush.xpose.msra.mxu0 %v2372
    %v2374 = vand.u32 %v683, 4294901760
    %2375 = vmatpush.xpose.msra.mxu0 %v2374
    %v2376 = vand.u32 %v680, 4294901760
    %2377 = vmatpush.xpose.msra.mxu0 %v2376
    %v2378 = vand.u32 %v677, 4294901760
    %2379 = vmatpush.xpose.msra.mxu0 %v2378
    %v2380 = vand.u32 %v674, 4294901760
    %2381 = vmatpush.xpose.msra.mxu0 %v2380
    %v2382 = vand.u32 %v671, 4294901760
    %2383 = vmatpush.xpose.msra.mxu0 %v2382
    %v2384 = vand.u32 %v668, 4294901760
    %2385 = vmatpush.xpose.msra.mxu0 %v2384
    %v2386 = vand.u32 %v518, 4294901760
    %2387 = vmatmul.f32.gmra.mxu0 %v2386
    %v2388 = vpop.f32.mrf.mxu0
    %v2389 = vadd.f32 %v2348, %v2388
    %v2390 = vand.u32 %v521, 4294901760
    %2391 = vmatmul.f32.gmra.mxu0 %v2390
    %v2392 = vpop.f32.mrf.mxu0
    %v2393 = vadd.f32 %v2352, %v2392
    %2394 = vdwg.mxu0
    %v2395 = vand.u32 %v761, 4294901760
    %2396 = vmatpush.xpose.msra.mxu0 %v2395
    %v2397 = vand.u32 %v758, 4294901760
    %2398 = vmatpush.xpose.msra.mxu0 %v2397
    %v2399 = vand.u32 %v755, 4294901760
    %2400 = vmatpush.xpose.msra.mxu0 %v2399
    %v2401 = vand.u32 %v752, 4294901760
    %2402 = vmatpush.xpose.msra.mxu0 %v2401
    %v2403 = vand.u32 %v749, 4294901760
    %2404 = vmatpush.xpose.msra.mxu0 %v2403
    %v2405 = vand.u32 %v746, 4294901760
    %2406 = vmatpush.xpose.msra.mxu0 %v2405
    %v2407 = vand.u32 %v743, 4294901760
    %2408 = vmatpush.xpose.msra.mxu0 %v2407
    %v2409 = vand.u32 %v740, 4294901760
    %2410 = vmatpush.xpose.msra.mxu0 %v2409
    %v2411 = vand.u32 %v737, 4294901760
    %2412 = vmatpush.xpose.msra.mxu0 %v2411
    %v2413 = vand.u32 %v734, 4294901760
    %2414 = vmatpush.xpose.msra.mxu0 %v2413
    %v2415 = vand.u32 %v731, 4294901760
    %2416 = vmatpush.xpose.msra.mxu0 %v2415
    %v2417 = vand.u32 %v728, 4294901760
    %2418 = vmatpush.xpose.msra.mxu0 %v2417
    %v2419 = vand.u32 %v725, 4294901760
    %2420 = vmatpush.xpose.msra.mxu0 %v2419
    %v2421 = vand.u32 %v722, 4294901760
    %2422 = vmatpush.xpose.msra.mxu0 %v2421
    %v2423 = vand.u32 %v719, 4294901760
    %2424 = vmatpush.xpose.msra.mxu0 %v2423
    %v2425 = vand.u32 %v716, 4294901760
    %2426 = vmatpush.xpose.msra.mxu0 %v2425
    %v2427 = vand.u32 %v518, 4294901760
    %v2428 = vsub.f32 %v518, %v2427
    %v2429 = vand.u32 %v2428, 4294901760
    %v2430 = vsub.f32 %v2428, %v2429
    %v2431 = vand.u32 %v2430, 4294901760
    %2432 = vmatmul.f32.gmra.mxu0 %v2431
    %v2433 = vpop.f32.mrf.mxu0
    %v2434 = vadd.f32 0.0, %v2433
    %v2435 = vand.u32 %v521, 4294901760
    %v2436 = vsub.f32 %v521, %v2435
    %v2437 = vand.u32 %v2436, 4294901760
    %v2438 = vsub.f32 %v2436, %v2437
    %v2439 = vand.u32 %v2438, 4294901760
    %2440 = vmatmul.f32.gmra.mxu0 %v2439
    %v2441 = vpop.f32.mrf.mxu0
    %v2442 = vadd.f32 0.0, %v2441
    %2443 = vdwg.mxu0
    %v2444 = vand.u32 %v761, 4294901760
    %v2445 = vsub.f32 %v761, %v2444
    %v2446 = vand.u32 %v2445, 4294901760
    %v2447 = vsub.f32 %v2445, %v2446
    %v2448 = vand.u32 %v2447, 4294901760
    %2449 = vmatpush.xpose.msra.mxu0 %v2448
    %v2450 = vand.u32 %v758, 4294901760
    %v2451 = vsub.f32 %v758, %v2450
    %v2452 = vand.u32 %v2451, 4294901760
    %v2453 = vsub.f32 %v2451, %v2452
    %v2454 = vand.u32 %v2453, 4294901760
    %2455 = vmatpush.xpose.msra.mxu0 %v2454
    %v2456 = vand.u32 %v755, 4294901760
    %v2457 = vsub.f32 %v755, %v2456
    %v2458 = vand.u32 %v2457, 4294901760
    %v2459 = vsub.f32 %v2457, %v2458
    %v2460 = vand.u32 %v2459, 4294901760
    %2461 = vmatpush.xpose.msra.mxu0 %v2460
    %v2462 = vand.u32 %v752, 4294901760
    %v2463 = vsub.f32 %v752, %v2462
    %v2464 = vand.u32 %v2463, 4294901760
    %v2465 = vsub.f32 %v2463, %v2464
    %v2466 = vand.u32 %v2465, 4294901760
    %2467 = vmatpush.xpose.msra.mxu0 %v2466
    %v2468 = vand.u32 %v749, 4294901760
    %v2469 = vsub.f32 %v749, %v2468
    %v2470 = vand.u32 %v2469, 4294901760
    %v2471 = vsub.f32 %v2469, %v2470
    %v2472 = vand.u32 %v2471, 4294901760
    %2473 = vmatpush.xpose.msra.mxu0 %v2472
    %v2474 = vand.u32 %v746, 4294901760
    %v2475 = vsub.f32 %v746, %v2474
    %v2476 = vand.u32 %v2475, 4294901760
    %v2477 = vsub.f32 %v2475, %v2476
    %v2478 = vand.u32 %v2477, 4294901760
    %2479 = vmatpush.xpose.msra.mxu0 %v2478
    %v2480 = vand.u32 %v743, 4294901760
    %v2481 = vsub.f32 %v743, %v2480
    %v2482 = vand.u32 %v2481, 4294901760
    %v2483 = vsub.f32 %v2481, %v2482
    %v2484 = vand.u32 %v2483, 4294901760
    %2485 = vmatpush.xpose.msra.mxu0 %v2484
    %v2486 = vand.u32 %v740, 4294901760
    %v2487 = vsub.f32 %v740, %v2486
    %v2488 = vand.u32 %v2487, 4294901760
    %v2489 = vsub.f32 %v2487, %v2488
    %v2490 = vand.u32 %v2489, 4294901760
    %2491 = vmatpush.xpose.msra.mxu0 %v2490
    %v2492 = vand.u32 %v737, 4294901760
    %v2493 = vsub.f32 %v737, %v2492
    %v2494 = vand.u32 %v2493, 4294901760
    %v2495 = vsub.f32 %v2493, %v2494
    %v2496 = vand.u32 %v2495, 4294901760
    %2497 = vmatpush.xpose.msra.mxu0 %v2496
    %v2498 = vand.u32 %v734, 4294901760
    %v2499 = vsub.f32 %v734, %v2498
    %v2500 = vand.u32 %v2499, 4294901760
    %v2501 = vsub.f32 %v2499, %v2500
    %v2502 = vand.u32 %v2501, 4294901760
    %2503 = vmatpush.xpose.msra.mxu0 %v2502
    %v2504 = vand.u32 %v731, 4294901760
    %v2505 = vsub.f32 %v731, %v2504
    %v2506 = vand.u32 %v2505, 4294901760
    %v2507 = vsub.f32 %v2505, %v2506
    %v2508 = vand.u32 %v2507, 4294901760
    %2509 = vmatpush.xpose.msra.mxu0 %v2508
    %v2510 = vand.u32 %v728, 4294901760
    %v2511 = vsub.f32 %v728, %v2510
    %v2512 = vand.u32 %v2511, 4294901760
    %v2513 = vsub.f32 %v2511, %v2512
    %v2514 = vand.u32 %v2513, 4294901760
    %2515 = vmatpush.xpose.msra.mxu0 %v2514
    %v2516 = vand.u32 %v725, 4294901760
    %v2517 = vsub.f32 %v725, %v2516
    %v2518 = vand.u32 %v2517, 4294901760
    %v2519 = vsub.f32 %v2517, %v2518
    %v2520 = vand.u32 %v2519, 4294901760
    %2521 = vmatpush.xpose.msra.mxu0 %v2520
    %v2522 = vand.u32 %v722, 4294901760
    %v2523 = vsub.f32 %v722, %v2522
    %v2524 = vand.u32 %v2523, 4294901760
    %v2525 = vsub.f32 %v2523, %v2524
    %v2526 = vand.u32 %v2525, 4294901760
    %2527 = vmatpush.xpose.msra.mxu0 %v2526
    %v2528 = vand.u32 %v719, 4294901760
    %v2529 = vsub.f32 %v719, %v2528
    %v2530 = vand.u32 %v2529, 4294901760
    %v2531 = vsub.f32 %v2529, %v2530
    %v2532 = vand.u32 %v2531, 4294901760
    %2533 = vmatpush.xpose.msra.mxu0 %v2532
    %v2534 = vand.u32 %v716, 4294901760
    %v2535 = vsub.f32 %v716, %v2534
    %v2536 = vand.u32 %v2535, 4294901760
    %v2537 = vsub.f32 %v2535, %v2536
    %v2538 = vand.u32 %v2537, 4294901760
    %2539 = vmatpush.xpose.msra.mxu0 %v2538
    %v2540 = vand.u32 %v518, 4294901760
    %2541 = vmatmul.f32.gmra.mxu0 %v2540
    %v2542 = vpop.f32.mrf.mxu0
    %v2543 = vadd.f32 %v2434, %v2542
    %v2544 = vand.u32 %v521, 4294901760
    %2545 = vmatmul.f32.gmra.mxu0 %v2544
    %v2546 = vpop.f32.mrf.mxu0
    %v2547 = vadd.f32 %v2442, %v2546
    %2548 = vdwg.mxu0
    %v2549 = vand.u32 %v761, 4294901760
    %v2550 = vsub.f32 %v761, %v2549
    %2551 = vmatpush.xpose.msra.mxu0 %v2550
    %v2552 = vand.u32 %v758, 4294901760
    %v2553 = vsub.f32 %v758, %v2552
    %2554 = vmatpush.xpose.msra.mxu0 %v2553
    %v2555 = vand.u32 %v755, 4294901760
    %v2556 = vsub.f32 %v755, %v2555
    %2557 = vmatpush.xpose.msra.mxu0 %v2556
    %v2558 = vand.u32 %v752, 4294901760
    %v2559 = vsub.f32 %v752, %v2558
    %2560 = vmatpush.xpose.msra.mxu0 %v2559
    %v2561 = vand.u32 %v749, 4294901760
    %v2562 = vsub.f32 %v749, %v2561
    %2563 = vmatpush.xpose.msra.mxu0 %v2562
    %v2564 = vand.u32 %v746, 4294901760
    %v2565 = vsub.f32 %v746, %v2564
    %2566 = vmatpush.xpose.msra.mxu0 %v2565
    %v2567 = vand.u32 %v743, 4294901760
    %v2568 = vsub.f32 %v743, %v2567
    %2569 = vmatpush.xpose.msra.mxu0 %v2568
    %v2570 = vand.u32 %v740, 4294901760
    %v2571 = vsub.f32 %v740, %v2570
    %2572 = vmatpush.xpose.msra.mxu0 %v2571
    %v2573 = vand.u32 %v737, 4294901760
    %v2574 = vsub.f32 %v737, %v2573
    %2575 = vmatpush.xpose.msra.mxu0 %v2574
    %v2576 = vand.u32 %v734, 4294901760
    %v2577 = vsub.f32 %v734, %v2576
    %2578 = vmatpush.xpose.msra.mxu0 %v2577
    %v2579 = vand.u32 %v731, 4294901760
    %v2580 = vsub.f32 %v731, %v2579
    %2581 = vmatpush.xpose.msra.mxu0 %v2580
    %v2582 = vand.u32 %v728, 4294901760
    %v2583 = vsub.f32 %v728, %v2582
    %2584 = vmatpush.xpose.msra.mxu0 %v2583
    %v2585 = vand.u32 %v725, 4294901760
    %v2586 = vsub.f32 %v725, %v2585
    %2587 = vmatpush.xpose.msra.mxu0 %v2586
    %v2588 = vand.u32 %v722, 4294901760
    %v2589 = vsub.f32 %v722, %v2588
    %2590 = vmatpush.xpose.msra.mxu0 %v2589
    %v2591 = vand.u32 %v719, 4294901760
    %v2592 = vsub.f32 %v719, %v2591
    %2593 = vmatpush.xpose.msra.mxu0 %v2592
    %v2594 = vand.u32 %v716, 4294901760
    %v2595 = vsub.f32 %v716, %v2594
    %2596 = vmatpush.xpose.msra.mxu0 %v2595
    %v2597 = vand.u32 %v518, 4294901760
    %v2598 = vsub.f32 %v518, %v2597
    %2599 = vmatmul.f32.gmra.mxu0 %v2598
    %v2600 = vpop.f32.mrf.mxu0
    %v2601 = vadd.f32 %v2543, %v2600
    %v2602 = vand.u32 %v521, 4294901760
    %v2603 = vsub.f32 %v521, %v2602
    %2604 = vmatmul.f32.gmra.mxu0 %v2603
    %v2605 = vpop.f32.mrf.mxu0
    %v2606 = vadd.f32 %v2547, %v2605
    %2607 = vdwg.mxu0
    %v2608 = vand.u32 %v761, 4294901760
    %2609 = vmatpush.xpose.msra.mxu0 %v2608
    %v2610 = vand.u32 %v758, 4294901760
    %2611 = vmatpush.xpose.msra.mxu0 %v2610
    %v2612 = vand.u32 %v755, 4294901760
    %2613 = vmatpush.xpose.msra.mxu0 %v2612
    %v2614 = vand.u32 %v752, 4294901760
    %2615 = vmatpush.xpose.msra.mxu0 %v2614
    %v2616 = vand.u32 %v749, 4294901760
    %2617 = vmatpush.xpose.msra.mxu0 %v2616
    %v2618 = vand.u32 %v746, 4294901760
    %2619 = vmatpush.xpose.msra.mxu0 %v2618
    %v2620 = vand.u32 %v743, 4294901760
    %2621 = vmatpush.xpose.msra.mxu0 %v2620
    %v2622 = vand.u32 %v740, 4294901760
    %2623 = vmatpush.xpose.msra.mxu0 %v2622
    %v2624 = vand.u32 %v737, 4294901760
    %2625 = vmatpush.xpose.msra.mxu0 %v2624
    %v2626 = vand.u32 %v734, 4294901760
    %2627 = vmatpush.xpose.msra.mxu0 %v2626
    %v2628 = vand.u32 %v731, 4294901760
    %2629 = vmatpush.xpose.msra.mxu0 %v2628
    %v2630 = vand.u32 %v728, 4294901760
    %2631 = vmatpush.xpose.msra.mxu0 %v2630
    %v2632 = vand.u32 %v725, 4294901760
    %2633 = vmatpush.xpose.msra.mxu0 %v2632
    %v2634 = vand.u32 %v722, 4294901760
    %2635 = vmatpush.xpose.msra.mxu0 %v2634
    %v2636 = vand.u32 %v719, 4294901760
    %2637 = vmatpush.xpose.msra.mxu0 %v2636
    %v2638 = vand.u32 %v716, 4294901760
    %2639 = vmatpush.xpose.msra.mxu0 %v2638
    %v2640 = vand.u32 %v518, 4294901760
    %v2641 = vsub.f32 %v518, %v2640
    %v2642 = vand.u32 %v2641, 4294901760
    %2643 = vmatmul.f32.gmra.mxu0 %v2642
    %v2644 = vpop.f32.mrf.mxu0
    %v2645 = vadd.f32 %v2601, %v2644
    %v2646 = vand.u32 %v521, 4294901760
    %v2647 = vsub.f32 %v521, %v2646
    %v2648 = vand.u32 %v2647, 4294901760
    %2649 = vmatmul.f32.gmra.mxu0 %v2648
    %v2650 = vpop.f32.mrf.mxu0
    %v2651 = vadd.f32 %v2606, %v2650
    %2652 = vdwg.mxu0
    %v2653 = vand.u32 %v761, 4294901760
    %v2654 = vsub.f32 %v761, %v2653
    %v2655 = vand.u32 %v2654, 4294901760
    %2656 = vmatpush.xpose.msra.mxu0 %v2655
    %v2657 = vand.u32 %v758, 4294901760
    %v2658 = vsub.f32 %v758, %v2657
    %v2659 = vand.u32 %v2658, 4294901760
    %2660 = vmatpush.xpose.msra.mxu0 %v2659
    %v2661 = vand.u32 %v755, 4294901760
    %v2662 = vsub.f32 %v755, %v2661
    %v2663 = vand.u32 %v2662, 4294901760
    %2664 = vmatpush.xpose.msra.mxu0 %v2663
    %v2665 = vand.u32 %v752, 4294901760
    %v2666 = vsub.f32 %v752, %v2665
    %v2667 = vand.u32 %v2666, 4294901760
    %2668 = vmatpush.xpose.msra.mxu0 %v2667
    %v2669 = vand.u32 %v749, 4294901760
    %v2670 = vsub.f32 %v749, %v2669
    %v2671 = vand.u32 %v2670, 4294901760
    %2672 = vmatpush.xpose.msra.mxu0 %v2671
    %v2673 = vand.u32 %v746, 4294901760
    %v2674 = vsub.f32 %v746, %v2673
    %v2675 = vand.u32 %v2674, 4294901760
    %2676 = vmatpush.xpose.msra.mxu0 %v2675
    %v2677 = vand.u32 %v743, 4294901760
    %v2678 = vsub.f32 %v743, %v2677
    %v2679 = vand.u32 %v2678, 4294901760
    %2680 = vmatpush.xpose.msra.mxu0 %v2679
    %v2681 = vand.u32 %v740, 4294901760
    %v2682 = vsub.f32 %v740, %v2681
    %v2683 = vand.u32 %v2682, 4294901760
    %2684 = vmatpush.xpose.msra.mxu0 %v2683
    %v2685 = vand.u32 %v737, 4294901760
    %v2686 = vsub.f32 %v737, %v2685
    %v2687 = vand.u32 %v2686, 4294901760
    %2688 = vmatpush.xpose.msra.mxu0 %v2687
    %v2689 = vand.u32 %v734, 4294901760
    %v2690 = vsub.f32 %v734, %v2689
    %v2691 = vand.u32 %v2690, 4294901760
    %2692 = vmatpush.xpose.msra.mxu0 %v2691
    %v2693 = vand.u32 %v731, 4294901760
    %v2694 = vsub.f32 %v731, %v2693
    %v2695 = vand.u32 %v2694, 4294901760
    %2696 = vmatpush.xpose.msra.mxu0 %v2695
    %v2697 = vand.u32 %v728, 4294901760
    %v2698 = vsub.f32 %v728, %v2697
    %v2699 = vand.u32 %v2698, 4294901760
    %2700 = vmatpush.xpose.msra.mxu0 %v2699
    %v2701 = vand.u32 %v725, 4294901760
    %v2702 = vsub.f32 %v725, %v2701
    %v2703 = vand.u32 %v2702, 4294901760
    %2704 = vmatpush.xpose.msra.mxu0 %v2703
    %v2705 = vand.u32 %v722, 4294901760
    %v2706 = vsub.f32 %v722, %v2705
    %v2707 = vand.u32 %v2706, 4294901760
    %2708 = vmatpush.xpose.msra.mxu0 %v2707
    %v2709 = vand.u32 %v719, 4294901760
    %v2710 = vsub.f32 %v719, %v2709
    %v2711 = vand.u32 %v2710, 4294901760
    %2712 = vmatpush.xpose.msra.mxu0 %v2711
    %v2713 = vand.u32 %v716, 4294901760
    %v2714 = vsub.f32 %v716, %v2713
    %v2715 = vand.u32 %v2714, 4294901760
    %2716 = vmatpush.xpose.msra.mxu0 %v2715
    %v2717 = vand.u32 %v518, 4294901760
    %2718 = vmatmul.f32.gmra.mxu0 %v2717
    %v2719 = vpop.f32.mrf.mxu0
    %v2720 = vadd.f32 %v2645, %v2719
    %v2721 = vand.u32 %v521, 4294901760
    %2722 = vmatmul.f32.gmra.mxu0 %v2721
    %v2723 = vpop.f32.mrf.mxu0
    %v2724 = vadd.f32 %v2651, %v2723
    %2725 = vdwg.mxu0
    %v2726 = vand.u32 %v761, 4294901760
    %2727 = vmatpush.xpose.msra.mxu0 %v2726
    %v2728 = vand.u32 %v758, 4294901760
    %2729 = vmatpush.xpose.msra.mxu0 %v2728
    %v2730 = vand.u32 %v755, 4294901760
    %2731 = vmatpush.xpose.msra.mxu0 %v2730
    %v2732 = vand.u32 %v752, 4294901760
    %2733 = vmatpush.xpose.msra.mxu0 %v2732
    %v2734 = vand.u32 %v749, 4294901760
    %2735 = vmatpush.xpose.msra.mxu0 %v2734
    %v2736 = vand.u32 %v746, 4294901760
    %2737 = vmatpush.xpose.msra.mxu0 %v2736
    %v2738 = vand.u32 %v743, 4294901760
    %2739 = vmatpush.xpose.msra.mxu0 %v2738
    %v2740 = vand.u32 %v740, 4294901760
    %2741 = vmatpush.xpose.msra.mxu0 %v2740
    %v2742 = vand.u32 %v737, 4294901760
    %2743 = vmatpush.xpose.msra.mxu0 %v2742
    %v2744 = vand.u32 %v734, 4294901760
    %2745 = vmatpush.xpose.msra.mxu0 %v2744
    %v2746 = vand.u32 %v731, 4294901760
    %2747 = vmatpush.xpose.msra.mxu0 %v2746
    %v2748 = vand.u32 %v728, 4294901760
    %2749 = vmatpush.xpose.msra.mxu0 %v2748
    %v2750 = vand.u32 %v725, 4294901760
    %2751 = vmatpush.xpose.msra.mxu0 %v2750
    %v2752 = vand.u32 %v722, 4294901760
    %2753 = vmatpush.xpose.msra.mxu0 %v2752
    %v2754 = vand.u32 %v719, 4294901760
    %2755 = vmatpush.xpose.msra.mxu0 %v2754
    %v2756 = vand.u32 %v716, 4294901760
    %2757 = vmatpush.xpose.msra.mxu0 %v2756
    %v2758 = vand.u32 %v518, 4294901760
    %2759 = vmatmul.f32.gmra.mxu0 %v2758
    %v2760 = vpop.f32.mrf.mxu0
    %v2761 = vadd.f32 %v2720, %v2760
    %v2762 = vand.u32 %v521, 4294901760
    %2763 = vmatmul.f32.gmra.mxu0 %v2762
    %v2764 = vpop.f32.mrf.mxu0
    %v2765 = vadd.f32 %v2724, %v2764
    %2766 = vdwg.mxu0
    %v2767 = vand.u32 %v809, 4294901760
    %2768 = vmatpush.xpose.msra.mxu0 %v2767
    %v2769 = vand.u32 %v806, 4294901760
    %2770 = vmatpush.xpose.msra.mxu0 %v2769
    %v2771 = vand.u32 %v803, 4294901760
    %2772 = vmatpush.xpose.msra.mxu0 %v2771
    %v2773 = vand.u32 %v800, 4294901760
    %2774 = vmatpush.xpose.msra.mxu0 %v2773
    %v2775 = vand.u32 %v797, 4294901760
    %2776 = vmatpush.xpose.msra.mxu0 %v2775
    %v2777 = vand.u32 %v794, 4294901760
    %2778 = vmatpush.xpose.msra.mxu0 %v2777
    %v2779 = vand.u32 %v791, 4294901760
    %2780 = vmatpush.xpose.msra.mxu0 %v2779
    %v2781 = vand.u32 %v788, 4294901760
    %2782 = vmatpush.xpose.msra.mxu0 %v2781
    %v2783 = vand.u32 %v785, 4294901760
    %2784 = vmatpush.xpose.msra.mxu0 %v2783
    %v2785 = vand.u32 %v782, 4294901760
    %2786 = vmatpush.xpose.msra.mxu0 %v2785
    %v2787 = vand.u32 %v779, 4294901760
    %2788 = vmatpush.xpose.msra.mxu0 %v2787
    %v2789 = vand.u32 %v776, 4294901760
    %2790 = vmatpush.xpose.msra.mxu0 %v2789
    %v2791 = vand.u32 %v773, 4294901760
    %2792 = vmatpush.xpose.msra.mxu0 %v2791
    %v2793 = vand.u32 %v770, 4294901760
    %2794 = vmatpush.xpose.msra.mxu0 %v2793
    %v2795 = vand.u32 %v767, 4294901760
    %2796 = vmatpush.xpose.msra.mxu0 %v2795
    %v2797 = vand.u32 %v764, 4294901760
    %2798 = vmatpush.xpose.msra.mxu0 %v2797
    %v2799 = vand.u32 %v518, 4294901760
    %v2800 = vsub.f32 %v518, %v2799
    %v2801 = vand.u32 %v2800, 4294901760
    %v2802 = vsub.f32 %v2800, %v2801
    %v2803 = vand.u32 %v2802, 4294901760
    %2804 = vmatmul.f32.gmra.mxu0 %v2803
    %v2805 = vpop.f32.mrf.mxu0
    %v2806 = vadd.f32 0.0, %v2805
    %v2807 = vand.u32 %v521, 4294901760
    %v2808 = vsub.f32 %v521, %v2807
    %v2809 = vand.u32 %v2808, 4294901760
    %v2810 = vsub.f32 %v2808, %v2809
    %v2811 = vand.u32 %v2810, 4294901760
    %2812 = vmatmul.f32.gmra.mxu0 %v2811
    %v2813 = vpop.f32.mrf.mxu0
    %v2814 = vadd.f32 0.0, %v2813
    %2815 = vdwg.mxu0
    %v2816 = vand.u32 %v809, 4294901760
    %v2817 = vsub.f32 %v809, %v2816
    %v2818 = vand.u32 %v2817, 4294901760
    %v2819 = vsub.f32 %v2817, %v2818
    %v2820 = vand.u32 %v2819, 4294901760
    %2821 = vmatpush.xpose.msra.mxu0 %v2820
    %v2822 = vand.u32 %v806, 4294901760
    %v2823 = vsub.f32 %v806, %v2822
    %v2824 = vand.u32 %v2823, 4294901760
    %v2825 = vsub.f32 %v2823, %v2824
    %v2826 = vand.u32 %v2825, 4294901760
    %2827 = vmatpush.xpose.msra.mxu0 %v2826
    %v2828 = vand.u32 %v803, 4294901760
    %v2829 = vsub.f32 %v803, %v2828
    %v2830 = vand.u32 %v2829, 4294901760
    %v2831 = vsub.f32 %v2829, %v2830
    %v2832 = vand.u32 %v2831, 4294901760
    %2833 = vmatpush.xpose.msra.mxu0 %v2832
    %v2834 = vand.u32 %v800, 4294901760
    %v2835 = vsub.f32 %v800, %v2834
    %v2836 = vand.u32 %v2835, 4294901760
    %v2837 = vsub.f32 %v2835, %v2836
    %v2838 = vand.u32 %v2837, 4294901760
    %2839 = vmatpush.xpose.msra.mxu0 %v2838
    %v2840 = vand.u32 %v797, 4294901760
    %v2841 = vsub.f32 %v797, %v2840
    %v2842 = vand.u32 %v2841, 4294901760
    %v2843 = vsub.f32 %v2841, %v2842
    %v2844 = vand.u32 %v2843, 4294901760
    %2845 = vmatpush.xpose.msra.mxu0 %v2844
    %v2846 = vand.u32 %v794, 4294901760
    %v2847 = vsub.f32 %v794, %v2846
    %v2848 = vand.u32 %v2847, 4294901760
    %v2849 = vsub.f32 %v2847, %v2848
    %v2850 = vand.u32 %v2849, 4294901760
    %2851 = vmatpush.xpose.msra.mxu0 %v2850
    %v2852 = vand.u32 %v791, 4294901760
    %v2853 = vsub.f32 %v791, %v2852
    %v2854 = vand.u32 %v2853, 4294901760
    %v2855 = vsub.f32 %v2853, %v2854
    %v2856 = vand.u32 %v2855, 4294901760
    %2857 = vmatpush.xpose.msra.mxu0 %v2856
    %v2858 = vand.u32 %v788, 4294901760
    %v2859 = vsub.f32 %v788, %v2858
    %v2860 = vand.u32 %v2859, 4294901760
    %v2861 = vsub.f32 %v2859, %v2860
    %v2862 = vand.u32 %v2861, 4294901760
    %2863 = vmatpush.xpose.msra.mxu0 %v2862
    %v2864 = vand.u32 %v785, 4294901760
    %v2865 = vsub.f32 %v785, %v2864
    %v2866 = vand.u32 %v2865, 4294901760
    %v2867 = vsub.f32 %v2865, %v2866
    %v2868 = vand.u32 %v2867, 4294901760
    %2869 = vmatpush.xpose.msra.mxu0 %v2868
    %v2870 = vand.u32 %v782, 4294901760
    %v2871 = vsub.f32 %v782, %v2870
    %v2872 = vand.u32 %v2871, 4294901760
    %v2873 = vsub.f32 %v2871, %v2872
    %v2874 = vand.u32 %v2873, 4294901760
    %2875 = vmatpush.xpose.msra.mxu0 %v2874
    %v2876 = vand.u32 %v779, 4294901760
    %v2877 = vsub.f32 %v779, %v2876
    %v2878 = vand.u32 %v2877, 4294901760
    %v2879 = vsub.f32 %v2877, %v2878
    %v2880 = vand.u32 %v2879, 4294901760
    %2881 = vmatpush.xpose.msra.mxu0 %v2880
    %v2882 = vand.u32 %v776, 4294901760
    %v2883 = vsub.f32 %v776, %v2882
    %v2884 = vand.u32 %v2883, 4294901760
    %v2885 = vsub.f32 %v2883, %v2884
    %v2886 = vand.u32 %v2885, 4294901760
    %2887 = vmatpush.xpose.msra.mxu0 %v2886
    %v2888 = vand.u32 %v773, 4294901760
    %v2889 = vsub.f32 %v773, %v2888
    %v2890 = vand.u32 %v2889, 4294901760
    %v2891 = vsub.f32 %v2889, %v2890
    %v2892 = vand.u32 %v2891, 4294901760
    %2893 = vmatpush.xpose.msra.mxu0 %v2892
    %v2894 = vand.u32 %v770, 4294901760
    %v2895 = vsub.f32 %v770, %v2894
    %v2896 = vand.u32 %v2895, 4294901760
    %v2897 = vsub.f32 %v2895, %v2896
    %v2898 = vand.u32 %v2897, 4294901760
    %2899 = vmatpush.xpose.msra.mxu0 %v2898
    %v2900 = vand.u32 %v767, 4294901760
    %v2901 = vsub.f32 %v767, %v2900
    %v2902 = vand.u32 %v2901, 4294901760
    %v2903 = vsub.f32 %v2901, %v2902
    %v2904 = vand.u32 %v2903, 4294901760
    %2905 = vmatpush.xpose.msra.mxu0 %v2904
    %v2906 = vand.u32 %v764, 4294901760
    %v2907 = vsub.f32 %v764, %v2906
    %v2908 = vand.u32 %v2907, 4294901760
    %v2909 = vsub.f32 %v2907, %v2908
    %v2910 = vand.u32 %v2909, 4294901760
    %2911 = vmatpush.xpose.msra.mxu0 %v2910
    %v2912 = vand.u32 %v518, 4294901760
    %2913 = vmatmul.f32.gmra.mxu0 %v2912
    %v2914 = vpop.f32.mrf.mxu0
    %v2915 = vadd.f32 %v2806, %v2914
    %v2916 = vand.u32 %v521, 4294901760
    %2917 = vmatmul.f32.gmra.mxu0 %v2916
    %v2918 = vpop.f32.mrf.mxu0
    %v2919 = vadd.f32 %v2814, %v2918
    %2920 = vdwg.mxu0
    %v2921 = vand.u32 %v809, 4294901760
    %v2922 = vsub.f32 %v809, %v2921
    %2923 = vmatpush.xpose.msra.mxu0 %v2922
    %v2924 = vand.u32 %v806, 4294901760
    %v2925 = vsub.f32 %v806, %v2924
    %2926 = vmatpush.xpose.msra.mxu0 %v2925
    %v2927 = vand.u32 %v803, 4294901760
    %v2928 = vsub.f32 %v803, %v2927
    %2929 = vmatpush.xpose.msra.mxu0 %v2928
    %v2930 = vand.u32 %v800, 4294901760
    %v2931 = vsub.f32 %v800, %v2930
    %2932 = vmatpush.xpose.msra.mxu0 %v2931
    %v2933 = vand.u32 %v797, 4294901760
    %v2934 = vsub.f32 %v797, %v2933
    %2935 = vmatpush.xpose.msra.mxu0 %v2934
    %v2936 = vand.u32 %v794, 4294901760
    %v2937 = vsub.f32 %v794, %v2936
    %2938 = vmatpush.xpose.msra.mxu0 %v2937
    %v2939 = vand.u32 %v791, 4294901760
    %v2940 = vsub.f32 %v791, %v2939
    %2941 = vmatpush.xpose.msra.mxu0 %v2940
    %v2942 = vand.u32 %v788, 4294901760
    %v2943 = vsub.f32 %v788, %v2942
    %2944 = vmatpush.xpose.msra.mxu0 %v2943
    %v2945 = vand.u32 %v785, 4294901760
    %v2946 = vsub.f32 %v785, %v2945
    %2947 = vmatpush.xpose.msra.mxu0 %v2946
    %v2948 = vand.u32 %v782, 4294901760
    %v2949 = vsub.f32 %v782, %v2948
    %2950 = vmatpush.xpose.msra.mxu0 %v2949
    %v2951 = vand.u32 %v779, 4294901760
    %v2952 = vsub.f32 %v779, %v2951
    %2953 = vmatpush.xpose.msra.mxu0 %v2952
    %v2954 = vand.u32 %v776, 4294901760
    %v2955 = vsub.f32 %v776, %v2954
    %2956 = vmatpush.xpose.msra.mxu0 %v2955
    %v2957 = vand.u32 %v773, 4294901760
    %v2958 = vsub.f32 %v773, %v2957
    %2959 = vmatpush.xpose.msra.mxu0 %v2958
    %v2960 = vand.u32 %v770, 4294901760
    %v2961 = vsub.f32 %v770, %v2960
    %2962 = vmatpush.xpose.msra.mxu0 %v2961
    %v2963 = vand.u32 %v767, 4294901760
    %v2964 = vsub.f32 %v767, %v2963
    %2965 = vmatpush.xpose.msra.mxu0 %v2964
    %v2966 = vand.u32 %v764, 4294901760
    %v2967 = vsub.f32 %v764, %v2966
    %2968 = vmatpush.xpose.msra.mxu0 %v2967
    %v2969 = vand.u32 %v518, 4294901760
    %v2970 = vsub.f32 %v518, %v2969
    %2971 = vmatmul.f32.gmra.mxu0 %v2970
    %v2972 = vpop.f32.mrf.mxu0
    %v2973 = vadd.f32 %v2915, %v2972
    %v2974 = vand.u32 %v521, 4294901760
    %v2975 = vsub.f32 %v521, %v2974
    %2976 = vmatmul.f32.gmra.mxu0 %v2975
    %v2977 = vpop.f32.mrf.mxu0
    %v2978 = vadd.f32 %v2919, %v2977
    %2979 = vdwg.mxu0
    %v2980 = vand.u32 %v809, 4294901760
    %2981 = vmatpush.xpose.msra.mxu0 %v2980
    %v2982 = vand.u32 %v806, 4294901760
    %2983 = vmatpush.xpose.msra.mxu0 %v2982
    %v2984 = vand.u32 %v803, 4294901760
    %2985 = vmatpush.xpose.msra.mxu0 %v2984
    %v2986 = vand.u32 %v800, 4294901760
    %2987 = vmatpush.xpose.msra.mxu0 %v2986
    %v2988 = vand.u32 %v797, 4294901760
    %2989 = vmatpush.xpose.msra.mxu0 %v2988
    %v2990 = vand.u32 %v794, 4294901760
    %2991 = vmatpush.xpose.msra.mxu0 %v2990
    %v2992 = vand.u32 %v791, 4294901760
    %2993 = vmatpush.xpose.msra.mxu0 %v2992
    %v2994 = vand.u32 %v788, 4294901760
    %2995 = vmatpush.xpose.msra.mxu0 %v2994
    %v2996 = vand.u32 %v785, 4294901760
    %2997 = vmatpush.xpose.msra.mxu0 %v2996
    %v2998 = vand.u32 %v782, 4294901760
    %2999 = vmatpush.xpose.msra.mxu0 %v2998
    %v3000 = vand.u32 %v779, 4294901760
    %3001 = vmatpush.xpose.msra.mxu0 %v3000
    %v3002 = vand.u32 %v776, 4294901760
    %3003 = vmatpush.xpose.msra.mxu0 %v3002
    %v3004 = vand.u32 %v773, 4294901760
    %3005 = vmatpush.xpose.msra.mxu0 %v3004
    %v3006 = vand.u32 %v770, 4294901760
    %3007 = vmatpush.xpose.msra.mxu0 %v3006
    %v3008 = vand.u32 %v767, 4294901760
    %3009 = vmatpush.xpose.msra.mxu0 %v3008
    %v3010 = vand.u32 %v764, 4294901760
    %3011 = vmatpush.xpose.msra.mxu0 %v3010
    %v3012 = vand.u32 %v518, 4294901760
    %v3013 = vsub.f32 %v518, %v3012
    %v3014 = vand.u32 %v3013, 4294901760
    %3015 = vmatmul.f32.gmra.mxu0 %v3014
    %v3016 = vpop.f32.mrf.mxu0
    %v3017 = vadd.f32 %v2973, %v3016
    %v3018 = vand.u32 %v521, 4294901760
    %v3019 = vsub.f32 %v521, %v3018
    %v3020 = vand.u32 %v3019, 4294901760
    %3021 = vmatmul.f32.gmra.mxu0 %v3020
    %v3022 = vpop.f32.mrf.mxu0
    %v3023 = vadd.f32 %v2978, %v3022
    %3024 = vdwg.mxu0
    %v3025 = vand.u32 %v809, 4294901760
    %v3026 = vsub.f32 %v809, %v3025
    %v3027 = vand.u32 %v3026, 4294901760
    %3028 = vmatpush.xpose.msra.mxu0 %v3027
    %v3029 = vand.u32 %v806, 4294901760
    %v3030 = vsub.f32 %v806, %v3029
    %v3031 = vand.u32 %v3030, 4294901760
    %3032 = vmatpush.xpose.msra.mxu0 %v3031
    %v3033 = vand.u32 %v803, 4294901760
    %v3034 = vsub.f32 %v803, %v3033
    %v3035 = vand.u32 %v3034, 4294901760
    %3036 = vmatpush.xpose.msra.mxu0 %v3035
    %v3037 = vand.u32 %v800, 4294901760
    %v3038 = vsub.f32 %v800, %v3037
    %v3039 = vand.u32 %v3038, 4294901760
    %3040 = vmatpush.xpose.msra.mxu0 %v3039
    %v3041 = vand.u32 %v797, 4294901760
    %v3042 = vsub.f32 %v797, %v3041
    %v3043 = vand.u32 %v3042, 4294901760
    %3044 = vmatpush.xpose.msra.mxu0 %v3043
    %v3045 = vand.u32 %v794, 4294901760
    %v3046 = vsub.f32 %v794, %v3045
    %v3047 = vand.u32 %v3046, 4294901760
    %3048 = vmatpush.xpose.msra.mxu0 %v3047
    %v3049 = vand.u32 %v791, 4294901760
    %v3050 = vsub.f32 %v791, %v3049
    %v3051 = vand.u32 %v3050, 4294901760
    %3052 = vmatpush.xpose.msra.mxu0 %v3051
    %v3053 = vand.u32 %v788, 4294901760
    %v3054 = vsub.f32 %v788, %v3053
    %v3055 = vand.u32 %v3054, 4294901760
    %3056 = vmatpush.xpose.msra.mxu0 %v3055
    %v3057 = vand.u32 %v785, 4294901760
    %v3058 = vsub.f32 %v785, %v3057
    %v3059 = vand.u32 %v3058, 4294901760
    %3060 = vmatpush.xpose.msra.mxu0 %v3059
    %v3061 = vand.u32 %v782, 4294901760
    %v3062 = vsub.f32 %v782, %v3061
    %v3063 = vand.u32 %v3062, 4294901760
    %3064 = vmatpush.xpose.msra.mxu0 %v3063
    %v3065 = vand.u32 %v779, 4294901760
    %v3066 = vsub.f32 %v779, %v3065
    %v3067 = vand.u32 %v3066, 4294901760
    %3068 = vmatpush.xpose.msra.mxu0 %v3067
    %v3069 = vand.u32 %v776, 4294901760
    %v3070 = vsub.f32 %v776, %v3069
    %v3071 = vand.u32 %v3070, 4294901760
    %3072 = vmatpush.xpose.msra.mxu0 %v3071
    %v3073 = vand.u32 %v773, 4294901760
    %v3074 = vsub.f32 %v773, %v3073
    %v3075 = vand.u32 %v3074, 4294901760
    %3076 = vmatpush.xpose.msra.mxu0 %v3075
    %v3077 = vand.u32 %v770, 4294901760
    %v3078 = vsub.f32 %v770, %v3077
    %v3079 = vand.u32 %v3078, 4294901760
    %3080 = vmatpush.xpose.msra.mxu0 %v3079
    %v3081 = vand.u32 %v767, 4294901760
    %v3082 = vsub.f32 %v767, %v3081
    %v3083 = vand.u32 %v3082, 4294901760
    %3084 = vmatpush.xpose.msra.mxu0 %v3083
    %v3085 = vand.u32 %v764, 4294901760
    %v3086 = vsub.f32 %v764, %v3085
    %v3087 = vand.u32 %v3086, 4294901760
    %3088 = vmatpush.xpose.msra.mxu0 %v3087
    %v3089 = vand.u32 %v518, 4294901760
    %3090 = vmatmul.f32.gmra.mxu0 %v3089
    %v3091 = vpop.f32.mrf.mxu0
    %v3092 = vadd.f32 %v3017, %v3091
    %v3093 = vand.u32 %v521, 4294901760
    %3094 = vmatmul.f32.gmra.mxu0 %v3093
    %v3095 = vpop.f32.mrf.mxu0
    %v3096 = vadd.f32 %v3023, %v3095
    %3097 = vdwg.mxu0
    %v3098 = vand.u32 %v809, 4294901760
    %3099 = vmatpush.xpose.msra.mxu0 %v3098
    %v3100 = vand.u32 %v806, 4294901760
    %3101 = vmatpush.xpose.msra.mxu0 %v3100
    %v3102 = vand.u32 %v803, 4294901760
    %3103 = vmatpush.xpose.msra.mxu0 %v3102
    %v3104 = vand.u32 %v800, 4294901760
    %3105 = vmatpush.xpose.msra.mxu0 %v3104
    %v3106 = vand.u32 %v797, 4294901760
    %3107 = vmatpush.xpose.msra.mxu0 %v3106
    %v3108 = vand.u32 %v794, 4294901760
    %3109 = vmatpush.xpose.msra.mxu0 %v3108
    %v3110 = vand.u32 %v791, 4294901760
    %3111 = vmatpush.xpose.msra.mxu0 %v3110
    %v3112 = vand.u32 %v788, 4294901760
    %3113 = vmatpush.xpose.msra.mxu0 %v3112
    %v3114 = vand.u32 %v785, 4294901760
    %3115 = vmatpush.xpose.msra.mxu0 %v3114
    %v3116 = vand.u32 %v782, 4294901760
    %3117 = vmatpush.xpose.msra.mxu0 %v3116
    %v3118 = vand.u32 %v779, 4294901760
    %3119 = vmatpush.xpose.msra.mxu0 %v3118
    %v3120 = vand.u32 %v776, 4294901760
    %3121 = vmatpush.xpose.msra.mxu0 %v3120
    %v3122 = vand.u32 %v773, 4294901760
    %3123 = vmatpush.xpose.msra.mxu0 %v3122
    %v3124 = vand.u32 %v770, 4294901760
    %3125 = vmatpush.xpose.msra.mxu0 %v3124
    %v3126 = vand.u32 %v767, 4294901760
    %3127 = vmatpush.xpose.msra.mxu0 %v3126
    %v3128 = vand.u32 %v764, 4294901760
    %3129 = vmatpush.xpose.msra.mxu0 %v3128
    %v3130 = vand.u32 %v518, 4294901760
    %3131 = vmatmul.f32.gmra.mxu0 %v3130
    %v3132 = vpop.f32.mrf.mxu0
    %v3133 = vadd.f32 %v3092, %v3132
    %v3134 = vand.u32 %v521, 4294901760
    %3135 = vmatmul.f32.gmra.mxu0 %v3134
    %v3136 = vpop.f32.mrf.mxu0
    %v3137 = vadd.f32 %v3096, %v3136
    %3138 = vdwg.mxu0
    %v3139 = vand.u32 %v857, 4294901760
    %3140 = vmatpush.xpose.msra.mxu0 %v3139
    %v3141 = vand.u32 %v854, 4294901760
    %3142 = vmatpush.xpose.msra.mxu0 %v3141
    %v3143 = vand.u32 %v851, 4294901760
    %3144 = vmatpush.xpose.msra.mxu0 %v3143
    %v3145 = vand.u32 %v848, 4294901760
    %3146 = vmatpush.xpose.msra.mxu0 %v3145
    %v3147 = vand.u32 %v845, 4294901760
    %3148 = vmatpush.xpose.msra.mxu0 %v3147
    %v3149 = vand.u32 %v842, 4294901760
    %3150 = vmatpush.xpose.msra.mxu0 %v3149
    %v3151 = vand.u32 %v839, 4294901760
    %3152 = vmatpush.xpose.msra.mxu0 %v3151
    %v3153 = vand.u32 %v836, 4294901760
    %3154 = vmatpush.xpose.msra.mxu0 %v3153
    %v3155 = vand.u32 %v833, 4294901760
    %3156 = vmatpush.xpose.msra.mxu0 %v3155
    %v3157 = vand.u32 %v830, 4294901760
    %3158 = vmatpush.xpose.msra.mxu0 %v3157
    %v3159 = vand.u32 %v827, 4294901760
    %3160 = vmatpush.xpose.msra.mxu0 %v3159
    %v3161 = vand.u32 %v824, 4294901760
    %3162 = vmatpush.xpose.msra.mxu0 %v3161
    %v3163 = vand.u32 %v821, 4294901760
    %3164 = vmatpush.xpose.msra.mxu0 %v3163
    %v3165 = vand.u32 %v818, 4294901760
    %3166 = vmatpush.xpose.msra.mxu0 %v3165
    %v3167 = vand.u32 %v815, 4294901760
    %3168 = vmatpush.xpose.msra.mxu0 %v3167
    %v3169 = vand.u32 %v812, 4294901760
    %3170 = vmatpush.xpose.msra.mxu0 %v3169
    %v3171 = vand.u32 %v518, 4294901760
    %v3172 = vsub.f32 %v518, %v3171
    %v3173 = vand.u32 %v3172, 4294901760
    %v3174 = vsub.f32 %v3172, %v3173
    %v3175 = vand.u32 %v3174, 4294901760
    %3176 = vmatmul.f32.gmra.mxu0 %v3175
    %v3177 = vpop.f32.mrf.mxu0
    %v3178 = vadd.f32 0.0, %v3177
    %v3179 = vand.u32 %v521, 4294901760
    %v3180 = vsub.f32 %v521, %v3179
    %v3181 = vand.u32 %v3180, 4294901760
    %v3182 = vsub.f32 %v3180, %v3181
    %v3183 = vand.u32 %v3182, 4294901760
    %3184 = vmatmul.f32.gmra.mxu0 %v3183
    %v3185 = vpop.f32.mrf.mxu0
    %v3186 = vadd.f32 0.0, %v3185
    %3187 = vdwg.mxu0
    %v3188 = vand.u32 %v857, 4294901760
    %v3189 = vsub.f32 %v857, %v3188
    %v3190 = vand.u32 %v3189, 4294901760
    %v3191 = vsub.f32 %v3189, %v3190
    %v3192 = vand.u32 %v3191, 4294901760
    %3193 = vmatpush.xpose.msra.mxu0 %v3192
    %v3194 = vand.u32 %v854, 4294901760
    %v3195 = vsub.f32 %v854, %v3194
    %v3196 = vand.u32 %v3195, 4294901760
    %v3197 = vsub.f32 %v3195, %v3196
    %v3198 = vand.u32 %v3197, 4294901760
    %3199 = vmatpush.xpose.msra.mxu0 %v3198
    %v3200 = vand.u32 %v851, 4294901760
    %v3201 = vsub.f32 %v851, %v3200
    %v3202 = vand.u32 %v3201, 4294901760
    %v3203 = vsub.f32 %v3201, %v3202
    %v3204 = vand.u32 %v3203, 4294901760
    %3205 = vmatpush.xpose.msra.mxu0 %v3204
    %v3206 = vand.u32 %v848, 4294901760
    %v3207 = vsub.f32 %v848, %v3206
    %v3208 = vand.u32 %v3207, 4294901760
    %v3209 = vsub.f32 %v3207, %v3208
    %v3210 = vand.u32 %v3209, 4294901760
    %3211 = vmatpush.xpose.msra.mxu0 %v3210
    %v3212 = vand.u32 %v845, 4294901760
    %v3213 = vsub.f32 %v845, %v3212
    %v3214 = vand.u32 %v3213, 4294901760
    %v3215 = vsub.f32 %v3213, %v3214
    %v3216 = vand.u32 %v3215, 4294901760
    %3217 = vmatpush.xpose.msra.mxu0 %v3216
    %v3218 = vand.u32 %v842, 4294901760
    %v3219 = vsub.f32 %v842, %v3218
    %v3220 = vand.u32 %v3219, 4294901760
    %v3221 = vsub.f32 %v3219, %v3220
    %v3222 = vand.u32 %v3221, 4294901760
    %3223 = vmatpush.xpose.msra.mxu0 %v3222
    %v3224 = vand.u32 %v839, 4294901760
    %v3225 = vsub.f32 %v839, %v3224
    %v3226 = vand.u32 %v3225, 4294901760
    %v3227 = vsub.f32 %v3225, %v3226
    %v3228 = vand.u32 %v3227, 4294901760
    %3229 = vmatpush.xpose.msra.mxu0 %v3228
    %v3230 = vand.u32 %v836, 4294901760
    %v3231 = vsub.f32 %v836, %v3230
    %v3232 = vand.u32 %v3231, 4294901760
    %v3233 = vsub.f32 %v3231, %v3232
    %v3234 = vand.u32 %v3233, 4294901760
    %3235 = vmatpush.xpose.msra.mxu0 %v3234
    %v3236 = vand.u32 %v833, 4294901760
    %v3237 = vsub.f32 %v833, %v3236
    %v3238 = vand.u32 %v3237, 4294901760
    %v3239 = vsub.f32 %v3237, %v3238
    %v3240 = vand.u32 %v3239, 4294901760
    %3241 = vmatpush.xpose.msra.mxu0 %v3240
    %v3242 = vand.u32 %v830, 4294901760
    %v3243 = vsub.f32 %v830, %v3242
    %v3244 = vand.u32 %v3243, 4294901760
    %v3245 = vsub.f32 %v3243, %v3244
    %v3246 = vand.u32 %v3245, 4294901760
    %3247 = vmatpush.xpose.msra.mxu0 %v3246
    %v3248 = vand.u32 %v827, 4294901760
    %v3249 = vsub.f32 %v827, %v3248
    %v3250 = vand.u32 %v3249, 4294901760
    %v3251 = vsub.f32 %v3249, %v3250
    %v3252 = vand.u32 %v3251, 4294901760
    %3253 = vmatpush.xpose.msra.mxu0 %v3252
    %v3254 = vand.u32 %v824, 4294901760
    %v3255 = vsub.f32 %v824, %v3254
    %v3256 = vand.u32 %v3255, 4294901760
    %v3257 = vsub.f32 %v3255, %v3256
    %v3258 = vand.u32 %v3257, 4294901760
    %3259 = vmatpush.xpose.msra.mxu0 %v3258
    %v3260 = vand.u32 %v821, 4294901760
    %v3261 = vsub.f32 %v821, %v3260
    %v3262 = vand.u32 %v3261, 4294901760
    %v3263 = vsub.f32 %v3261, %v3262
    %v3264 = vand.u32 %v3263, 4294901760
    %3265 = vmatpush.xpose.msra.mxu0 %v3264
    %v3266 = vand.u32 %v818, 4294901760
    %v3267 = vsub.f32 %v818, %v3266
    %v3268 = vand.u32 %v3267, 4294901760
    %v3269 = vsub.f32 %v3267, %v3268
    %v3270 = vand.u32 %v3269, 4294901760
    %3271 = vmatpush.xpose.msra.mxu0 %v3270
    %v3272 = vand.u32 %v815, 4294901760
    %v3273 = vsub.f32 %v815, %v3272
    %v3274 = vand.u32 %v3273, 4294901760
    %v3275 = vsub.f32 %v3273, %v3274
    %v3276 = vand.u32 %v3275, 4294901760
    %3277 = vmatpush.xpose.msra.mxu0 %v3276
    %v3278 = vand.u32 %v812, 4294901760
    %v3279 = vsub.f32 %v812, %v3278
    %v3280 = vand.u32 %v3279, 4294901760
    %v3281 = vsub.f32 %v3279, %v3280
    %v3282 = vand.u32 %v3281, 4294901760
    %3283 = vmatpush.xpose.msra.mxu0 %v3282
    %v3284 = vand.u32 %v518, 4294901760
    %3285 = vmatmul.f32.gmra.mxu0 %v3284
    %v3286 = vpop.f32.mrf.mxu0
    %v3287 = vadd.f32 %v3178, %v3286
    %v3288 = vand.u32 %v521, 4294901760
    %3289 = vmatmul.f32.gmra.mxu0 %v3288
    %v3290 = vpop.f32.mrf.mxu0
    %v3291 = vadd.f32 %v3186, %v3290
    %3292 = vdwg.mxu0
    %v3293 = vand.u32 %v857, 4294901760
    %v3294 = vsub.f32 %v857, %v3293
    %3295 = vmatpush.xpose.msra.mxu0 %v3294
    %v3296 = vand.u32 %v854, 4294901760
    %v3297 = vsub.f32 %v854, %v3296
    %3298 = vmatpush.xpose.msra.mxu0 %v3297
    %v3299 = vand.u32 %v851, 4294901760
    %v3300 = vsub.f32 %v851, %v3299
    %3301 = vmatpush.xpose.msra.mxu0 %v3300
    %v3302 = vand.u32 %v848, 4294901760
    %v3303 = vsub.f32 %v848, %v3302
    %3304 = vmatpush.xpose.msra.mxu0 %v3303
    %v3305 = vand.u32 %v845, 4294901760
    %v3306 = vsub.f32 %v845, %v3305
    %3307 = vmatpush.xpose.msra.mxu0 %v3306
    %v3308 = vand.u32 %v842, 4294901760
    %v3309 = vsub.f32 %v842, %v3308
    %3310 = vmatpush.xpose.msra.mxu0 %v3309
    %v3311 = vand.u32 %v839, 4294901760
    %v3312 = vsub.f32 %v839, %v3311
    %3313 = vmatpush.xpose.msra.mxu0 %v3312
    %v3314 = vand.u32 %v836, 4294901760
    %v3315 = vsub.f32 %v836, %v3314
    %3316 = vmatpush.xpose.msra.mxu0 %v3315
    %v3317 = vand.u32 %v833, 4294901760
    %v3318 = vsub.f32 %v833, %v3317
    %3319 = vmatpush.xpose.msra.mxu0 %v3318
    %v3320 = vand.u32 %v830, 4294901760
    %v3321 = vsub.f32 %v830, %v3320
    %3322 = vmatpush.xpose.msra.mxu0 %v3321
    %v3323 = vand.u32 %v827, 4294901760
    %v3324 = vsub.f32 %v827, %v3323
    %3325 = vmatpush.xpose.msra.mxu0 %v3324
    %v3326 = vand.u32 %v824, 4294901760
    %v3327 = vsub.f32 %v824, %v3326
    %3328 = vmatpush.xpose.msra.mxu0 %v3327
    %v3329 = vand.u32 %v821, 4294901760
    %v3330 = vsub.f32 %v821, %v3329
    %3331 = vmatpush.xpose.msra.mxu0 %v3330
    %v3332 = vand.u32 %v818, 4294901760
    %v3333 = vsub.f32 %v818, %v3332
    %3334 = vmatpush.xpose.msra.mxu0 %v3333
    %v3335 = vand.u32 %v815, 4294901760
    %v3336 = vsub.f32 %v815, %v3335
    %3337 = vmatpush.xpose.msra.mxu0 %v3336
    %v3338 = vand.u32 %v812, 4294901760
    %v3339 = vsub.f32 %v812, %v3338
    %3340 = vmatpush.xpose.msra.mxu0 %v3339
    %v3341 = vand.u32 %v518, 4294901760
    %v3342 = vsub.f32 %v518, %v3341
    %3343 = vmatmul.f32.gmra.mxu0 %v3342
    %v3344 = vpop.f32.mrf.mxu0
    %v3345 = vadd.f32 %v3287, %v3344
    %v3346 = vand.u32 %v521, 4294901760
    %v3347 = vsub.f32 %v521, %v3346
    %3348 = vmatmul.f32.gmra.mxu0 %v3347
    %v3349 = vpop.f32.mrf.mxu0
    %v3350 = vadd.f32 %v3291, %v3349
    %3351 = vdwg.mxu0
    %v3352 = vand.u32 %v857, 4294901760
    %3353 = vmatpush.xpose.msra.mxu0 %v3352
    %v3354 = vand.u32 %v854, 4294901760
    %3355 = vmatpush.xpose.msra.mxu0 %v3354
    %v3356 = vand.u32 %v851, 4294901760
    %3357 = vmatpush.xpose.msra.mxu0 %v3356
    %v3358 = vand.u32 %v848, 4294901760
    %3359 = vmatpush.xpose.msra.mxu0 %v3358
    %v3360 = vand.u32 %v845, 4294901760
    %3361 = vmatpush.xpose.msra.mxu0 %v3360
    %v3362 = vand.u32 %v842, 4294901760
    %3363 = vmatpush.xpose.msra.mxu0 %v3362
    %v3364 = vand.u32 %v839, 4294901760
    %3365 = vmatpush.xpose.msra.mxu0 %v3364
    %v3366 = vand.u32 %v836, 4294901760
    %3367 = vmatpush.xpose.msra.mxu0 %v3366
    %v3368 = vand.u32 %v833, 4294901760
    %3369 = vmatpush.xpose.msra.mxu0 %v3368
    %v3370 = vand.u32 %v830, 4294901760
    %3371 = vmatpush.xpose.msra.mxu0 %v3370
    %v3372 = vand.u32 %v827, 4294901760
    %3373 = vmatpush.xpose.msra.mxu0 %v3372
    %v3374 = vand.u32 %v824, 4294901760
    %3375 = vmatpush.xpose.msra.mxu0 %v3374
    %v3376 = vand.u32 %v821, 4294901760
    %3377 = vmatpush.xpose.msra.mxu0 %v3376
    %v3378 = vand.u32 %v818, 4294901760
    %3379 = vmatpush.xpose.msra.mxu0 %v3378
    %v3380 = vand.u32 %v815, 4294901760
    %3381 = vmatpush.xpose.msra.mxu0 %v3380
    %v3382 = vand.u32 %v812, 4294901760
    %3383 = vmatpush.xpose.msra.mxu0 %v3382
    %v3384 = vand.u32 %v518, 4294901760
    %v3385 = vsub.f32 %v518, %v3384
    %v3386 = vand.u32 %v3385, 4294901760
    %3387 = vmatmul.f32.gmra.mxu0 %v3386
    %v3388 = vpop.f32.mrf.mxu0
    %v3389 = vadd.f32 %v3345, %v3388
    %v3390 = vand.u32 %v521, 4294901760
    %v3391 = vsub.f32 %v521, %v3390
    %v3392 = vand.u32 %v3391, 4294901760
    %3393 = vmatmul.f32.gmra.mxu0 %v3392
    %v3394 = vpop.f32.mrf.mxu0
    %v3395 = vadd.f32 %v3350, %v3394
    %3396 = vdwg.mxu0
    %v3397 = vand.u32 %v857, 4294901760
    %v3398 = vsub.f32 %v857, %v3397
    %v3399 = vand.u32 %v3398, 4294901760
    %3400 = vmatpush.xpose.msra.mxu0 %v3399
    %v3401 = vand.u32 %v854, 4294901760
    %v3402 = vsub.f32 %v854, %v3401
    %v3403 = vand.u32 %v3402, 4294901760
    %3404 = vmatpush.xpose.msra.mxu0 %v3403
    %v3405 = vand.u32 %v851, 4294901760
    %v3406 = vsub.f32 %v851, %v3405
    %v3407 = vand.u32 %v3406, 4294901760
    %3408 = vmatpush.xpose.msra.mxu0 %v3407
    %v3409 = vand.u32 %v848, 4294901760
    %v3410 = vsub.f32 %v848, %v3409
    %v3411 = vand.u32 %v3410, 4294901760
    %3412 = vmatpush.xpose.msra.mxu0 %v3411
    %v3413 = vand.u32 %v845, 4294901760
    %v3414 = vsub.f32 %v845, %v3413
    %v3415 = vand.u32 %v3414, 4294901760
    %3416 = vmatpush.xpose.msra.mxu0 %v3415
    %v3417 = vand.u32 %v842, 4294901760
    %v3418 = vsub.f32 %v842, %v3417
    %v3419 = vand.u32 %v3418, 4294901760
    %3420 = vmatpush.xpose.msra.mxu0 %v3419
    %v3421 = vand.u32 %v839, 4294901760
    %v3422 = vsub.f32 %v839, %v3421
    %v3423 = vand.u32 %v3422, 4294901760
    %3424 = vmatpush.xpose.msra.mxu0 %v3423
    %v3425 = vand.u32 %v836, 4294901760
    %v3426 = vsub.f32 %v836, %v3425
    %v3427 = vand.u32 %v3426, 4294901760
    %3428 = vmatpush.xpose.msra.mxu0 %v3427
    %v3429 = vand.u32 %v833, 4294901760
    %v3430 = vsub.f32 %v833, %v3429
    %v3431 = vand.u32 %v3430, 4294901760
    %3432 = vmatpush.xpose.msra.mxu0 %v3431
    %v3433 = vand.u32 %v830, 4294901760
    %v3434 = vsub.f32 %v830, %v3433
    %v3435 = vand.u32 %v3434, 4294901760
    %3436 = vmatpush.xpose.msra.mxu0 %v3435
    %v3437 = vand.u32 %v827, 4294901760
    %v3438 = vsub.f32 %v827, %v3437
    %v3439 = vand.u32 %v3438, 4294901760
    %3440 = vmatpush.xpose.msra.mxu0 %v3439
    %v3441 = vand.u32 %v824, 4294901760
    %v3442 = vsub.f32 %v824, %v3441
    %v3443 = vand.u32 %v3442, 4294901760
    %3444 = vmatpush.xpose.msra.mxu0 %v3443
    %v3445 = vand.u32 %v821, 4294901760
    %v3446 = vsub.f32 %v821, %v3445
    %v3447 = vand.u32 %v3446, 4294901760
    %3448 = vmatpush.xpose.msra.mxu0 %v3447
    %v3449 = vand.u32 %v818, 4294901760
    %v3450 = vsub.f32 %v818, %v3449
    %v3451 = vand.u32 %v3450, 4294901760
    %3452 = vmatpush.xpose.msra.mxu0 %v3451
    %v3453 = vand.u32 %v815, 4294901760
    %v3454 = vsub.f32 %v815, %v3453
    %v3455 = vand.u32 %v3454, 4294901760
    %3456 = vmatpush.xpose.msra.mxu0 %v3455
    %v3457 = vand.u32 %v812, 4294901760
    %v3458 = vsub.f32 %v812, %v3457
    %v3459 = vand.u32 %v3458, 4294901760
    %3460 = vmatpush.xpose.msra.mxu0 %v3459
    %v3461 = vand.u32 %v518, 4294901760
    %3462 = vmatmul.f32.gmra.mxu0 %v3461
    %v3463 = vpop.f32.mrf.mxu0
    %v3464 = vadd.f32 %v3389, %v3463
    %v3465 = vand.u32 %v521, 4294901760
    %3466 = vmatmul.f32.gmra.mxu0 %v3465
    %v3467 = vpop.f32.mrf.mxu0
    %v3468 = vadd.f32 %v3395, %v3467
    %3469 = vdwg.mxu0
    %v3470 = vand.u32 %v857, 4294901760
    %3471 = vmatpush.xpose.msra.mxu0 %v3470
    %v3472 = vand.u32 %v854, 4294901760
    %3473 = vmatpush.xpose.msra.mxu0 %v3472
    %v3474 = vand.u32 %v851, 4294901760
    %3475 = vmatpush.xpose.msra.mxu0 %v3474
    %v3476 = vand.u32 %v848, 4294901760
    %3477 = vmatpush.xpose.msra.mxu0 %v3476
    %v3478 = vand.u32 %v845, 4294901760
    %3479 = vmatpush.xpose.msra.mxu0 %v3478
    %v3480 = vand.u32 %v842, 4294901760
    %3481 = vmatpush.xpose.msra.mxu0 %v3480
    %v3482 = vand.u32 %v839, 4294901760
    %3483 = vmatpush.xpose.msra.mxu0 %v3482
    %v3484 = vand.u32 %v836, 4294901760
    %3485 = vmatpush.xpose.msra.mxu0 %v3484
    %v3486 = vand.u32 %v833, 4294901760
    %3487 = vmatpush.xpose.msra.mxu0 %v3486
    %v3488 = vand.u32 %v830, 4294901760
    %3489 = vmatpush.xpose.msra.mxu0 %v3488
    %v3490 = vand.u32 %v827, 4294901760
    %3491 = vmatpush.xpose.msra.mxu0 %v3490
    %v3492 = vand.u32 %v824, 4294901760
    %3493 = vmatpush.xpose.msra.mxu0 %v3492
    %v3494 = vand.u32 %v821, 4294901760
    %3495 = vmatpush.xpose.msra.mxu0 %v3494
    %v3496 = vand.u32 %v818, 4294901760
    %3497 = vmatpush.xpose.msra.mxu0 %v3496
    %v3498 = vand.u32 %v815, 4294901760
    %3499 = vmatpush.xpose.msra.mxu0 %v3498
    %v3500 = vand.u32 %v812, 4294901760
    %3501 = vmatpush.xpose.msra.mxu0 %v3500
    %v3502 = vand.u32 %v518, 4294901760
    %3503 = vmatmul.f32.gmra.mxu0 %v3502
    %v3504 = vpop.f32.mrf.mxu0
    %v3505 = vadd.f32 %v3464, %v3504
    %v3506 = vand.u32 %v521, 4294901760
    %3507 = vmatmul.f32.gmra.mxu0 %v3506
    %v3508 = vpop.f32.mrf.mxu0
    %v3509 = vadd.f32 %v3468, %v3508
    %3510 = vdwg.mxu0
    %v3511 = vand.u32 %v905, 4294901760
    %3512 = vmatpush.xpose.msra.mxu0 %v3511
    %v3513 = vand.u32 %v902, 4294901760
    %3514 = vmatpush.xpose.msra.mxu0 %v3513
    %v3515 = vand.u32 %v899, 4294901760
    %3516 = vmatpush.xpose.msra.mxu0 %v3515
    %v3517 = vand.u32 %v896, 4294901760
    %3518 = vmatpush.xpose.msra.mxu0 %v3517
    %v3519 = vand.u32 %v893, 4294901760
    %3520 = vmatpush.xpose.msra.mxu0 %v3519
    %v3521 = vand.u32 %v890, 4294901760
    %3522 = vmatpush.xpose.msra.mxu0 %v3521
    %v3523 = vand.u32 %v887, 4294901760
    %3524 = vmatpush.xpose.msra.mxu0 %v3523
    %v3525 = vand.u32 %v884, 4294901760
    %3526 = vmatpush.xpose.msra.mxu0 %v3525
    %v3527 = vand.u32 %v881, 4294901760
    %3528 = vmatpush.xpose.msra.mxu0 %v3527
    %v3529 = vand.u32 %v878, 4294901760
    %3530 = vmatpush.xpose.msra.mxu0 %v3529
    %v3531 = vand.u32 %v875, 4294901760
    %3532 = vmatpush.xpose.msra.mxu0 %v3531
    %v3533 = vand.u32 %v872, 4294901760
    %3534 = vmatpush.xpose.msra.mxu0 %v3533
    %v3535 = vand.u32 %v869, 4294901760
    %3536 = vmatpush.xpose.msra.mxu0 %v3535
    %v3537 = vand.u32 %v866, 4294901760
    %3538 = vmatpush.xpose.msra.mxu0 %v3537
    %v3539 = vand.u32 %v863, 4294901760
    %3540 = vmatpush.xpose.msra.mxu0 %v3539
    %v3541 = vand.u32 %v860, 4294901760
    %3542 = vmatpush.xpose.msra.mxu0 %v3541
    %v3543 = vand.u32 %v518, 4294901760
    %v3544 = vsub.f32 %v518, %v3543
    %v3545 = vand.u32 %v3544, 4294901760
    %v3546 = vsub.f32 %v3544, %v3545
    %v3547 = vand.u32 %v3546, 4294901760
    %3548 = vmatmul.f32.gmra.mxu0 %v3547
    %v3549 = vpop.f32.mrf.mxu0
    %v3550 = vadd.f32 0.0, %v3549
    %v3551 = vand.u32 %v521, 4294901760
    %v3552 = vsub.f32 %v521, %v3551
    %v3553 = vand.u32 %v3552, 4294901760
    %v3554 = vsub.f32 %v3552, %v3553
    %v3555 = vand.u32 %v3554, 4294901760
    %3556 = vmatmul.f32.gmra.mxu0 %v3555
    %v3557 = vpop.f32.mrf.mxu0
    %v3558 = vadd.f32 0.0, %v3557
    %3559 = vdwg.mxu0
    %v3560 = vand.u32 %v905, 4294901760
    %v3561 = vsub.f32 %v905, %v3560
    %v3562 = vand.u32 %v3561, 4294901760
    %v3563 = vsub.f32 %v3561, %v3562
    %v3564 = vand.u32 %v3563, 4294901760
    %3565 = vmatpush.xpose.msra.mxu0 %v3564
    %v3566 = vand.u32 %v902, 4294901760
    %v3567 = vsub.f32 %v902, %v3566
    %v3568 = vand.u32 %v3567, 4294901760
    %v3569 = vsub.f32 %v3567, %v3568
    %v3570 = vand.u32 %v3569, 4294901760
    %3571 = vmatpush.xpose.msra.mxu0 %v3570
    %v3572 = vand.u32 %v899, 4294901760
    %v3573 = vsub.f32 %v899, %v3572
    %v3574 = vand.u32 %v3573, 4294901760
    %v3575 = vsub.f32 %v3573, %v3574
    %v3576 = vand.u32 %v3575, 4294901760
    %3577 = vmatpush.xpose.msra.mxu0 %v3576
    %v3578 = vand.u32 %v896, 4294901760
    %v3579 = vsub.f32 %v896, %v3578
    %v3580 = vand.u32 %v3579, 4294901760
    %v3581 = vsub.f32 %v3579, %v3580
    %v3582 = vand.u32 %v3581, 4294901760
    %3583 = vmatpush.xpose.msra.mxu0 %v3582
    %v3584 = vand.u32 %v893, 4294901760
    %v3585 = vsub.f32 %v893, %v3584
    %v3586 = vand.u32 %v3585, 4294901760
    %v3587 = vsub.f32 %v3585, %v3586
    %v3588 = vand.u32 %v3587, 4294901760
    %3589 = vmatpush.xpose.msra.mxu0 %v3588
    %v3590 = vand.u32 %v890, 4294901760
    %v3591 = vsub.f32 %v890, %v3590
    %v3592 = vand.u32 %v3591, 4294901760
    %v3593 = vsub.f32 %v3591, %v3592
    %v3594 = vand.u32 %v3593, 4294901760
    %3595 = vmatpush.xpose.msra.mxu0 %v3594
    %v3596 = vand.u32 %v887, 4294901760
    %v3597 = vsub.f32 %v887, %v3596
    %v3598 = vand.u32 %v3597, 4294901760
    %v3599 = vsub.f32 %v3597, %v3598
    %v3600 = vand.u32 %v3599, 4294901760
    %3601 = vmatpush.xpose.msra.mxu0 %v3600
    %v3602 = vand.u32 %v884, 4294901760
    %v3603 = vsub.f32 %v884, %v3602
    %v3604 = vand.u32 %v3603, 4294901760
    %v3605 = vsub.f32 %v3603, %v3604
    %v3606 = vand.u32 %v3605, 4294901760
    %3607 = vmatpush.xpose.msra.mxu0 %v3606
    %v3608 = vand.u32 %v881, 4294901760
    %v3609 = vsub.f32 %v881, %v3608
    %v3610 = vand.u32 %v3609, 4294901760
    %v3611 = vsub.f32 %v3609, %v3610
    %v3612 = vand.u32 %v3611, 4294901760
    %3613 = vmatpush.xpose.msra.mxu0 %v3612
    %v3614 = vand.u32 %v878, 4294901760
    %v3615 = vsub.f32 %v878, %v3614
    %v3616 = vand.u32 %v3615, 4294901760
    %v3617 = vsub.f32 %v3615, %v3616
    %v3618 = vand.u32 %v3617, 4294901760
    %3619 = vmatpush.xpose.msra.mxu0 %v3618
    %v3620 = vand.u32 %v875, 4294901760
    %v3621 = vsub.f32 %v875, %v3620
    %v3622 = vand.u32 %v3621, 4294901760
    %v3623 = vsub.f32 %v3621, %v3622
    %v3624 = vand.u32 %v3623, 4294901760
    %3625 = vmatpush.xpose.msra.mxu0 %v3624
    %v3626 = vand.u32 %v872, 4294901760
    %v3627 = vsub.f32 %v872, %v3626
    %v3628 = vand.u32 %v3627, 4294901760
    %v3629 = vsub.f32 %v3627, %v3628
    %v3630 = vand.u32 %v3629, 4294901760
    %3631 = vmatpush.xpose.msra.mxu0 %v3630
    %v3632 = vand.u32 %v869, 4294901760
    %v3633 = vsub.f32 %v869, %v3632
    %v3634 = vand.u32 %v3633, 4294901760
    %v3635 = vsub.f32 %v3633, %v3634
    %v3636 = vand.u32 %v3635, 4294901760
    %3637 = vmatpush.xpose.msra.mxu0 %v3636
    %v3638 = vand.u32 %v866, 4294901760
    %v3639 = vsub.f32 %v866, %v3638
    %v3640 = vand.u32 %v3639, 4294901760
    %v3641 = vsub.f32 %v3639, %v3640
    %v3642 = vand.u32 %v3641, 4294901760
    %3643 = vmatpush.xpose.msra.mxu0 %v3642
    %v3644 = vand.u32 %v863, 4294901760
    %v3645 = vsub.f32 %v863, %v3644
    %v3646 = vand.u32 %v3645, 4294901760
    %v3647 = vsub.f32 %v3645, %v3646
    %v3648 = vand.u32 %v3647, 4294901760
    %3649 = vmatpush.xpose.msra.mxu0 %v3648
    %v3650 = vand.u32 %v860, 4294901760
    %v3651 = vsub.f32 %v860, %v3650
    %v3652 = vand.u32 %v3651, 4294901760
    %v3653 = vsub.f32 %v3651, %v3652
    %v3654 = vand.u32 %v3653, 4294901760
    %3655 = vmatpush.xpose.msra.mxu0 %v3654
    %v3656 = vand.u32 %v518, 4294901760
    %3657 = vmatmul.f32.gmra.mxu0 %v3656
    %v3658 = vpop.f32.mrf.mxu0
    %v3659 = vadd.f32 %v3550, %v3658
    %v3660 = vand.u32 %v521, 4294901760
    %3661 = vmatmul.f32.gmra.mxu0 %v3660
    %v3662 = vpop.f32.mrf.mxu0
    %v3663 = vadd.f32 %v3558, %v3662
    %3664 = vdwg.mxu0
    %v3665 = vand.u32 %v905, 4294901760
    %v3666 = vsub.f32 %v905, %v3665
    %3667 = vmatpush.xpose.msra.mxu0 %v3666
    %v3668 = vand.u32 %v902, 4294901760
    %v3669 = vsub.f32 %v902, %v3668
    %3670 = vmatpush.xpose.msra.mxu0 %v3669
    %v3671 = vand.u32 %v899, 4294901760
    %v3672 = vsub.f32 %v899, %v3671
    %3673 = vmatpush.xpose.msra.mxu0 %v3672
    %v3674 = vand.u32 %v896, 4294901760
    %v3675 = vsub.f32 %v896, %v3674
    %3676 = vmatpush.xpose.msra.mxu0 %v3675
    %v3677 = vand.u32 %v893, 4294901760
    %v3678 = vsub.f32 %v893, %v3677
    %3679 = vmatpush.xpose.msra.mxu0 %v3678
    %v3680 = vand.u32 %v890, 4294901760
    %v3681 = vsub.f32 %v890, %v3680
    %3682 = vmatpush.xpose.msra.mxu0 %v3681
    %v3683 = vand.u32 %v887, 4294901760
    %v3684 = vsub.f32 %v887, %v3683
    %3685 = vmatpush.xpose.msra.mxu0 %v3684
    %v3686 = vand.u32 %v884, 4294901760
    %v3687 = vsub.f32 %v884, %v3686
    %3688 = vmatpush.xpose.msra.mxu0 %v3687
    %v3689 = vand.u32 %v881, 4294901760
    %v3690 = vsub.f32 %v881, %v3689
    %3691 = vmatpush.xpose.msra.mxu0 %v3690
    %v3692 = vand.u32 %v878, 4294901760
    %v3693 = vsub.f32 %v878, %v3692
    %3694 = vmatpush.xpose.msra.mxu0 %v3693
    %v3695 = vand.u32 %v875, 4294901760
    %v3696 = vsub.f32 %v875, %v3695
    %3697 = vmatpush.xpose.msra.mxu0 %v3696
    %v3698 = vand.u32 %v872, 4294901760
    %v3699 = vsub.f32 %v872, %v3698
    %3700 = vmatpush.xpose.msra.mxu0 %v3699
    %v3701 = vand.u32 %v869, 4294901760
    %v3702 = vsub.f32 %v869, %v3701
    %3703 = vmatpush.xpose.msra.mxu0 %v3702
    %v3704 = vand.u32 %v866, 4294901760
    %v3705 = vsub.f32 %v866, %v3704
    %3706 = vmatpush.xpose.msra.mxu0 %v3705
    %v3707 = vand.u32 %v863, 4294901760
    %v3708 = vsub.f32 %v863, %v3707
    %3709 = vmatpush.xpose.msra.mxu0 %v3708
    %v3710 = vand.u32 %v860, 4294901760
    %v3711 = vsub.f32 %v860, %v3710
    %3712 = vmatpush.xpose.msra.mxu0 %v3711
    %v3713 = vand.u32 %v518, 4294901760
    %v3714 = vsub.f32 %v518, %v3713
    %3715 = vmatmul.f32.gmra.mxu0 %v3714
    %v3716 = vpop.f32.mrf.mxu0
    %v3717 = vadd.f32 %v3659, %v3716
    %v3718 = vand.u32 %v521, 4294901760
    %v3719 = vsub.f32 %v521, %v3718
    %3720 = vmatmul.f32.gmra.mxu0 %v3719
    %v3721 = vpop.f32.mrf.mxu0
    %v3722 = vadd.f32 %v3663, %v3721
    %3723 = vdwg.mxu0
    %v3724 = vand.u32 %v905, 4294901760
    %3725 = vmatpush.xpose.msra.mxu0 %v3724
    %v3726 = vand.u32 %v902, 4294901760
    %3727 = vmatpush.xpose.msra.mxu0 %v3726
    %v3728 = vand.u32 %v899, 4294901760
    %3729 = vmatpush.xpose.msra.mxu0 %v3728
    %v3730 = vand.u32 %v896, 4294901760
    %3731 = vmatpush.xpose.msra.mxu0 %v3730
    %v3732 = vand.u32 %v893, 4294901760
    %3733 = vmatpush.xpose.msra.mxu0 %v3732
    %v3734 = vand.u32 %v890, 4294901760
    %3735 = vmatpush.xpose.msra.mxu0 %v3734
    %v3736 = vand.u32 %v887, 4294901760
    %3737 = vmatpush.xpose.msra.mxu0 %v3736
    %v3738 = vand.u32 %v884, 4294901760
    %3739 = vmatpush.xpose.msra.mxu0 %v3738
    %v3740 = vand.u32 %v881, 4294901760
    %3741 = vmatpush.xpose.msra.mxu0 %v3740
    %v3742 = vand.u32 %v878, 4294901760
    %3743 = vmatpush.xpose.msra.mxu0 %v3742
    %v3744 = vand.u32 %v875, 4294901760
    %3745 = vmatpush.xpose.msra.mxu0 %v3744
    %v3746 = vand.u32 %v872, 4294901760
    %3747 = vmatpush.xpose.msra.mxu0 %v3746
    %v3748 = vand.u32 %v869, 4294901760
    %3749 = vmatpush.xpose.msra.mxu0 %v3748
    %v3750 = vand.u32 %v866, 4294901760
    %3751 = vmatpush.xpose.msra.mxu0 %v3750
    %v3752 = vand.u32 %v863, 4294901760
    %3753 = vmatpush.xpose.msra.mxu0 %v3752
    %v3754 = vand.u32 %v860, 4294901760
    %3755 = vmatpush.xpose.msra.mxu0 %v3754
    %v3756 = vand.u32 %v518, 4294901760
    %v3757 = vsub.f32 %v518, %v3756
    %v3758 = vand.u32 %v3757, 4294901760
    %3759 = vmatmul.f32.gmra.mxu0 %v3758
    %v3760 = vpop.f32.mrf.mxu0
    %v3761 = vadd.f32 %v3717, %v3760
    %v3762 = vand.u32 %v521, 4294901760
    %v3763 = vsub.f32 %v521, %v3762
    %v3764 = vand.u32 %v3763, 4294901760
    %3765 = vmatmul.f32.gmra.mxu0 %v3764
    %v3766 = vpop.f32.mrf.mxu0
    %v3767 = vadd.f32 %v3722, %v3766
    %3768 = vdwg.mxu0
    %v3769 = vand.u32 %v905, 4294901760
    %v3770 = vsub.f32 %v905, %v3769
    %v3771 = vand.u32 %v3770, 4294901760
    %3772 = vmatpush.xpose.msra.mxu0 %v3771
    %v3773 = vand.u32 %v902, 4294901760
    %v3774 = vsub.f32 %v902, %v3773
    %v3775 = vand.u32 %v3774, 4294901760
    %3776 = vmatpush.xpose.msra.mxu0 %v3775
    %v3777 = vand.u32 %v899, 4294901760
    %v3778 = vsub.f32 %v899, %v3777
    %v3779 = vand.u32 %v3778, 4294901760
    %3780 = vmatpush.xpose.msra.mxu0 %v3779
    %v3781 = vand.u32 %v896, 4294901760
    %v3782 = vsub.f32 %v896, %v3781
    %v3783 = vand.u32 %v3782, 4294901760
    %3784 = vmatpush.xpose.msra.mxu0 %v3783
    %v3785 = vand.u32 %v893, 4294901760
    %v3786 = vsub.f32 %v893, %v3785
    %v3787 = vand.u32 %v3786, 4294901760
    %3788 = vmatpush.xpose.msra.mxu0 %v3787
    %v3789 = vand.u32 %v890, 4294901760
    %v3790 = vsub.f32 %v890, %v3789
    %v3791 = vand.u32 %v3790, 4294901760
    %3792 = vmatpush.xpose.msra.mxu0 %v3791
    %v3793 = vand.u32 %v887, 4294901760
    %v3794 = vsub.f32 %v887, %v3793
    %v3795 = vand.u32 %v3794, 4294901760
    %3796 = vmatpush.xpose.msra.mxu0 %v3795
    %v3797 = vand.u32 %v884, 4294901760
    %v3798 = vsub.f32 %v884, %v3797
    %v3799 = vand.u32 %v3798, 4294901760
    %3800 = vmatpush.xpose.msra.mxu0 %v3799
    %v3801 = vand.u32 %v881, 4294901760
    %v3802 = vsub.f32 %v881, %v3801
    %v3803 = vand.u32 %v3802, 4294901760
    %3804 = vmatpush.xpose.msra.mxu0 %v3803
    %v3805 = vand.u32 %v878, 4294901760
    %v3806 = vsub.f32 %v878, %v3805
    %v3807 = vand.u32 %v3806, 4294901760
    %3808 = vmatpush.xpose.msra.mxu0 %v3807
    %v3809 = vand.u32 %v875, 4294901760
    %v3810 = vsub.f32 %v875, %v3809
    %v3811 = vand.u32 %v3810, 4294901760
    %3812 = vmatpush.xpose.msra.mxu0 %v3811
    %v3813 = vand.u32 %v872, 4294901760
    %v3814 = vsub.f32 %v872, %v3813
    %v3815 = vand.u32 %v3814, 4294901760
    %3816 = vmatpush.xpose.msra.mxu0 %v3815
    %v3817 = vand.u32 %v869, 4294901760
    %v3818 = vsub.f32 %v869, %v3817
    %v3819 = vand.u32 %v3818, 4294901760
    %3820 = vmatpush.xpose.msra.mxu0 %v3819
    %v3821 = vand.u32 %v866, 4294901760
    %v3822 = vsub.f32 %v866, %v3821
    %v3823 = vand.u32 %v3822, 4294901760
    %3824 = vmatpush.xpose.msra.mxu0 %v3823
    %v3825 = vand.u32 %v863, 4294901760
    %v3826 = vsub.f32 %v863, %v3825
    %v3827 = vand.u32 %v3826, 4294901760
    %3828 = vmatpush.xpose.msra.mxu0 %v3827
    %v3829 = vand.u32 %v860, 4294901760
    %v3830 = vsub.f32 %v860, %v3829
    %v3831 = vand.u32 %v3830, 4294901760
    %3832 = vmatpush.xpose.msra.mxu0 %v3831
    %v3833 = vand.u32 %v518, 4294901760
    %3834 = vmatmul.f32.gmra.mxu0 %v3833
    %v3835 = vpop.f32.mrf.mxu0
    %v3836 = vadd.f32 %v3761, %v3835
    %v3837 = vand.u32 %v521, 4294901760
    %3838 = vmatmul.f32.gmra.mxu0 %v3837
    %v3839 = vpop.f32.mrf.mxu0
    %v3840 = vadd.f32 %v3767, %v3839
    %3841 = vdwg.mxu0
    %v3842 = vand.u32 %v905, 4294901760
    %3843 = vmatpush.xpose.msra.mxu0 %v3842
    %v3844 = vand.u32 %v902, 4294901760
    %3845 = vmatpush.xpose.msra.mxu0 %v3844
    %v3846 = vand.u32 %v899, 4294901760
    %3847 = vmatpush.xpose.msra.mxu0 %v3846
    %v3848 = vand.u32 %v896, 4294901760
    %3849 = vmatpush.xpose.msra.mxu0 %v3848
    %v3850 = vand.u32 %v893, 4294901760
    %3851 = vmatpush.xpose.msra.mxu0 %v3850
    %v3852 = vand.u32 %v890, 4294901760
    %3853 = vmatpush.xpose.msra.mxu0 %v3852
    %v3854 = vand.u32 %v887, 4294901760
    %3855 = vmatpush.xpose.msra.mxu0 %v3854
    %v3856 = vand.u32 %v884, 4294901760
    %3857 = vmatpush.xpose.msra.mxu0 %v3856
    %v3858 = vand.u32 %v881, 4294901760
    %3859 = vmatpush.xpose.msra.mxu0 %v3858
    %v3860 = vand.u32 %v878, 4294901760
    %3861 = vmatpush.xpose.msra.mxu0 %v3860
    %v3862 = vand.u32 %v875, 4294901760
    %3863 = vmatpush.xpose.msra.mxu0 %v3862
    %v3864 = vand.u32 %v872, 4294901760
    %3865 = vmatpush.xpose.msra.mxu0 %v3864
    %v3866 = vand.u32 %v869, 4294901760
    %3867 = vmatpush.xpose.msra.mxu0 %v3866
    %v3868 = vand.u32 %v866, 4294901760
    %3869 = vmatpush.xpose.msra.mxu0 %v3868
    %v3870 = vand.u32 %v863, 4294901760
    %3871 = vmatpush.xpose.msra.mxu0 %v3870
    %v3872 = vand.u32 %v860, 4294901760
    %3873 = vmatpush.xpose.msra.mxu0 %v3872
    %v3874 = vand.u32 %v518, 4294901760
    %3875 = vmatmul.f32.gmra.mxu0 %v3874
    %v3876 = vpop.f32.mrf.mxu0
    %v3877 = vadd.f32 %v3836, %v3876
    %v3878 = vand.u32 %v521, 4294901760
    %3879 = vmatmul.f32.gmra.mxu0 %v3878
    %v3880 = vpop.f32.mrf.mxu0
    %v3881 = vadd.f32 %v3840, %v3880
    %3882 = vdwg.mxu0
    %v3883 = vlaneseq
    %v3884 = vand.u32 %v3883, 127
    %v3885 = vadd.s32 %v3884, 128
    %v3886 = vadd.s32 %v3884, 256
    %v3887 = vadd.s32 %v3884, 384
    %v3888 = vadd.s32 %v3884, 512
    %v3889 = vadd.s32 %v3884, 640
    %v3890 = vadd.s32 %v3884, 768
    %v3891 = vadd.s32 %v3884, 896
    %v3892 = vmax.f32 %v1273, %v2017
    %v3893 = vmax.f32 %v1645, %v2389
    %v3894 = vmax.f32 %v3892, %v2761
    %v3895 = vmax.f32 %v3893, %v3133
    %v3896 = vmax.f32 %v3894, %v3505
    %v3897 = vmax.f32 %v3895, %v3877
    %v3898 = vmax.f32 %v3896, %v3897
    %3899 = vmax.xlane.f32.xlu0 %v3898
    %v3900 = vpop.xlane.xlu0 %3899
    %v3901 = vmax.f32 %v1277, %v2021
    %v3902 = vmax.f32 %v1649, %v2393
    %v3903 = vmax.f32 %v3901, %v2765
    %v3904 = vmax.f32 %v3902, %v3137
    %v3905 = vmax.f32 %v3903, %v3509
    %v3906 = vmax.f32 %v3904, %v3881
    %v3907 = vmax.f32 %v3905, %v3906
    %3908 = vmax.xlane.f32.xlu0 %v3907
    %v3909 = vpop.xlane.xlu0 %3908
    %vm3910 = vcmp.eq.f32.partialorder %v1273, %v3900
    %vm3911 = vcmp.eq.f32.partialorder %v1645, %v3900
    %vm3912 = vcmp.eq.f32.partialorder %v2017, %v3900
    %vm3913 = vcmp.eq.f32.partialorder %v2389, %v3900
    %vm3914 = vcmp.eq.f32.partialorder %v2761, %v3900
    %vm3915 = vcmp.eq.f32.partialorder %v3133, %v3900
    %vm3916 = vcmp.eq.f32.partialorder %v3505, %v3900
    %vm3917 = vcmp.eq.f32.partialorder %v3877, %v3900
    %vm3918 = vcmp.eq.f32.partialorder %v1277, %v3909
    %vm3919 = vcmp.eq.f32.partialorder %v1649, %v3909
    %vm3920 = vcmp.eq.f32.partialorder %v2021, %v3909
    %vm3921 = vcmp.eq.f32.partialorder %v2393, %v3909
    %vm3922 = vcmp.eq.f32.partialorder %v2765, %v3909
    %vm3923 = vcmp.eq.f32.partialorder %v3137, %v3909
    %vm3924 = vcmp.eq.f32.partialorder %v3509, %v3909
    %vm3925 = vcmp.eq.f32.partialorder %v3881, %v3909
    %v3926 = vsel %vm3910, %v3884, 1024
    %v3927 = vsel %vm3911, %v3885, 1024
    %v3928 = vsel %vm3912, %v3886, 1024
    %v3929 = vsel %vm3913, %v3887, 1024
    %v3930 = vsel %vm3914, %v3888, 1024
    %v3931 = vsel %vm3915, %v3889, 1024
    %v3932 = vsel %vm3916, %v3890, 1024
    %v3933 = vsel %vm3917, %v3891, 1024
    %v3934 = vsel %vm3918, %v3884, 1024
    %v3935 = vsel %vm3919, %v3885, 1024
    %v3936 = vsel %vm3920, %v3886, 1024
    %v3937 = vsel %vm3921, %v3887, 1024
    %v3938 = vsel %vm3922, %v3888, 1024
    %v3939 = vsel %vm3923, %v3889, 1024
    %v3940 = vsel %vm3924, %v3890, 1024
    %v3941 = vsel %vm3925, %v3891, 1024
    %vm3942 = vcmp.lt.s32.totalorder %v3926, %v3928
    %v3943 = vsel %vm3942, %v3926, %v3928
    %vm3944 = vcmp.lt.s32.totalorder %v3927, %v3929
    %v3945 = vsel %vm3944, %v3927, %v3929
    %vm3946 = vcmp.lt.s32.totalorder %v3943, %v3930
    %v3947 = vsel %vm3946, %v3943, %v3930
    %vm3948 = vcmp.lt.s32.totalorder %v3945, %v3931
    %v3949 = vsel %vm3948, %v3945, %v3931
    %vm3950 = vcmp.lt.s32.totalorder %v3947, %v3932
    %v3951 = vsel %vm3950, %v3947, %v3932
    %vm3952 = vcmp.lt.s32.totalorder %v3949, %v3933
    %v3953 = vsel %vm3952, %v3949, %v3933
    %vm3954 = vcmp.lt.s32.totalorder %v3951, %v3953
    %v3955 = vsel %vm3954, %v3951, %v3953
    %v3956 = vand.u32 %v3955, 65535
    %v3957 = vshra.s32 %v3955, 16
    %v3958 = vcvt.s32.f32 %v3956
    %v3959 = vcvt.s32.f32 %v3957
    %3960 = vmin.xlane.f32.xlu0 %v3959
    %v3961 = vpop.xlane.xlu0 %3960
    %vm3962 = vcmp.eq.f32.partialorder %v3959, %v3961
    %v3963 = vsel %vm3962, %v3958, inf
    %3964 = vmin.xlane.f32.xlu0 %v3963
    %v3965 = vpop.xlane.xlu0 %3964
    %v3966 = vcvt.f32.s32 %v3965
    %v3967 = vcvt.f32.s32 %v3961
    %v3968 = vshll.u32 %v3967, 16
    %v3969 = vadd.s32 %v3968, %v3966
    %vm3970 = vcmp.lt.s32.totalorder %v3934, %v3936
    %v3971 = vsel %vm3970, %v3934, %v3936
    %vm3972 = vcmp.lt.s32.totalorder %v3935, %v3937
    %v3973 = vsel %vm3972, %v3935, %v3937
    %vm3974 = vcmp.lt.s32.totalorder %v3971, %v3938
    %v3975 = vsel %vm3974, %v3971, %v3938
    %vm3976 = vcmp.lt.s32.totalorder %v3973, %v3939
    %v3977 = vsel %vm3976, %v3973, %v3939
    %vm3978 = vcmp.lt.s32.totalorder %v3975, %v3940
    %v3979 = vsel %vm3978, %v3975, %v3940
    %vm3980 = vcmp.lt.s32.totalorder %v3977, %v3941
    %v3981 = vsel %vm3980, %v3977, %v3941
    %vm3982 = vcmp.lt.s32.totalorder %v3979, %v3981
    %v3983 = vsel %vm3982, %v3979, %v3981
    %v3984 = vand.u32 %v3983, 65535
    %v3985 = vshra.s32 %v3983, 16
    %v3986 = vcvt.s32.f32 %v3984
    %v3987 = vcvt.s32.f32 %v3985
    %3988 = vmin.xlane.f32.xlu0 %v3987
    %v3989 = vpop.xlane.xlu0 %3988
    %vm3990 = vcmp.eq.f32.partialorder %v3987, %v3989
    %v3991 = vsel %vm3990, %v3986, inf
    %3992 = vmin.xlane.f32.xlu0 %v3991
    %v3993 = vpop.xlane.xlu0 %3992
    %v3994 = vcvt.f32.s32 %v3993
    %v3995 = vcvt.f32.s32 %v3989
    %v3996 = vshll.u32 %v3995, 16
    %v3997 = vadd.s32 %v3996, %v3994
    %vm3998 = vcmp.eq.s32.totalorder %v3884, %v3969
    %vm3999 = vcmp.eq.s32.totalorder %v3885, %v3969
    %vm4000 = vcmp.eq.s32.totalorder %v3886, %v3969
    %vm4001 = vcmp.eq.s32.totalorder %v3887, %v3969
    %vm4002 = vcmp.eq.s32.totalorder %v3888, %v3969
    %vm4003 = vcmp.eq.s32.totalorder %v3889, %v3969
    %vm4004 = vcmp.eq.s32.totalorder %v3890, %v3969
    %vm4005 = vcmp.eq.s32.totalorder %v3891, %v3969
    %vm4006 = vcmp.eq.s32.totalorder %v3884, %v3997
    %vm4007 = vcmp.eq.s32.totalorder %v3885, %v3997
    %vm4008 = vcmp.eq.s32.totalorder %v3886, %v3997
    %vm4009 = vcmp.eq.s32.totalorder %v3887, %v3997
    %vm4010 = vcmp.eq.s32.totalorder %v3888, %v3997
    %vm4011 = vcmp.eq.s32.totalorder %v3889, %v3997
    %vm4012 = vcmp.eq.s32.totalorder %v3890, %v3997
    %vm4013 = vcmp.eq.s32.totalorder %v3891, %v3997
    %v4014 = vsel %vm3998, 1, 0
    %v4015 = vsel %vm3999, 1, 0
    %v4016 = vsel %vm4000, 1, 0
    %v4017 = vsel %vm4001, 1, 0
    %v4018 = vsel %vm4002, 1, 0
    %v4019 = vsel %vm4003, 1, 0
    %v4020 = vsel %vm4004, 1, 0
    %v4021 = vsel %vm4005, 1, 0
    %v4022 = vsel %vm4006, 1, 0
    %v4023 = vsel %vm4007, 1, 0
    %v4024 = vsel %vm4008, 1, 0
    %v4025 = vsel %vm4009, 1, 0
    %v4026 = vsel %vm4010, 1, 0
    %v4027 = vsel %vm4011, 1, 0
    %v4028 = vsel %vm4012, 1, 0
    %v4029 = vsel %vm4013, 1, 0
    %v4030 = vcvt.s32.f32 %v4014
    %v4031 = vcvt.s32.f32 %v4015
    %v4032 = vcvt.s32.f32 %v4016
    %v4033 = vcvt.s32.f32 %v4017
    %v4034 = vcvt.s32.f32 %v4018
    %v4035 = vcvt.s32.f32 %v4019
    %v4036 = vcvt.s32.f32 %v4020
    %v4037 = vcvt.s32.f32 %v4021
    %v4038 = vcvt.s32.f32 %v4022
    %v4039 = vcvt.s32.f32 %v4023
    %v4040 = vcvt.s32.f32 %v4024
    %v4041 = vcvt.s32.f32 %v4025
    %v4042 = vcvt.s32.f32 %v4026
    %v4043 = vcvt.s32.f32 %v4027
    %v4044 = vcvt.s32.f32 %v4028
    %v4045 = vcvt.s32.f32 %v4029
    %v4046 = vand.u32 %v404, 4294901760
    %4047 = vmatpush.msra.mxu0 %v4046
    %v4048 = vand.u32 %v403, 4294901760
    %4049 = vmatpush.msra.mxu0 %v4048
    %v4050 = vand.u32 %v402, 4294901760
    %4051 = vmatpush.msra.mxu0 %v4050
    %v4052 = vand.u32 %v401, 4294901760
    %4053 = vmatpush.msra.mxu0 %v4052
    %v4054 = vand.u32 %v400, 4294901760
    %4055 = vmatpush.msra.mxu0 %v4054
    %v4056 = vand.u32 %v399, 4294901760
    %4057 = vmatpush.msra.mxu0 %v4056
    %v4058 = vand.u32 %v398, 4294901760
    %4059 = vmatpush.msra.mxu0 %v4058
    %v4060 = vand.u32 %v397, 4294901760
    %4061 = vmatpush.msra.mxu0 %v4060
    %v4062 = vand.u32 %v396, 4294901760
    %4063 = vmatpush.msra.mxu0 %v4062
    %v4064 = vand.u32 %v395, 4294901760
    %4065 = vmatpush.msra.mxu0 %v4064
    %v4066 = vand.u32 %v394, 4294901760
    %4067 = vmatpush.msra.mxu0 %v4066
    %v4068 = vand.u32 %v393, 4294901760
    %4069 = vmatpush.msra.mxu0 %v4068
    %v4070 = vand.u32 %v392, 4294901760
    %4071 = vmatpush.msra.mxu0 %v4070
    %v4072 = vand.u32 %v391, 4294901760
    %4073 = vmatpush.msra.mxu0 %v4072
    %v4074 = vand.u32 %v390, 4294901760
    %4075 = vmatpush.msra.mxu0 %v4074
    %v4076 = vand.u32 %v389, 4294901760
    %4077 = vmatpush.msra.mxu0 %v4076
    %v4078 = vand.u32 %v4030, 4294901760
    %v4079 = vsub.f32 %v4030, %v4078
    %v4080 = vand.u32 %v4079, 4294901760
    %v4081 = vsub.f32 %v4079, %v4080
    %v4082 = vand.u32 %v4081, 4294901760
    %4083 = vmatmul.f32.gmra.mxu0 %v4082
    %v4084 = vpop.f32.mrf.mxu0
    %v4085 = vadd.f32 0.0, %v4084
    %v4086 = vand.u32 %v4038, 4294901760
    %v4087 = vsub.f32 %v4038, %v4086
    %v4088 = vand.u32 %v4087, 4294901760
    %v4089 = vsub.f32 %v4087, %v4088
    %v4090 = vand.u32 %v4089, 4294901760
    %4091 = vmatmul.f32.gmra.mxu0 %v4090
    %v4092 = vpop.f32.mrf.mxu0
    %v4093 = vadd.f32 0.0, %v4092
    %4094 = vdwg.mxu0
    %v4095 = vand.u32 %v404, 4294901760
    %v4096 = vsub.f32 %v404, %v4095
    %v4097 = vand.u32 %v4096, 4294901760
    %v4098 = vsub.f32 %v4096, %v4097
    %v4099 = vand.u32 %v4098, 4294901760
    %4100 = vmatpush.msra.mxu0 %v4099
    %v4101 = vand.u32 %v403, 4294901760
    %v4102 = vsub.f32 %v403, %v4101
    %v4103 = vand.u32 %v4102, 4294901760
    %v4104 = vsub.f32 %v4102, %v4103
    %v4105 = vand.u32 %v4104, 4294901760
    %4106 = vmatpush.msra.mxu0 %v4105
    %v4107 = vand.u32 %v402, 4294901760
    %v4108 = vsub.f32 %v402, %v4107
    %v4109 = vand.u32 %v4108, 4294901760
    %v4110 = vsub.f32 %v4108, %v4109
    %v4111 = vand.u32 %v4110, 4294901760
    %4112 = vmatpush.msra.mxu0 %v4111
    %v4113 = vand.u32 %v401, 4294901760
    %v4114 = vsub.f32 %v401, %v4113
    %v4115 = vand.u32 %v4114, 4294901760
    %v4116 = vsub.f32 %v4114, %v4115
    %v4117 = vand.u32 %v4116, 4294901760
    %4118 = vmatpush.msra.mxu0 %v4117
    %v4119 = vand.u32 %v400, 4294901760
    %v4120 = vsub.f32 %v400, %v4119
    %v4121 = vand.u32 %v4120, 4294901760
    %v4122 = vsub.f32 %v4120, %v4121
    %v4123 = vand.u32 %v4122, 4294901760
    %4124 = vmatpush.msra.mxu0 %v4123
    %v4125 = vand.u32 %v399, 4294901760
    %v4126 = vsub.f32 %v399, %v4125
    %v4127 = vand.u32 %v4126, 4294901760
    %v4128 = vsub.f32 %v4126, %v4127
    %v4129 = vand.u32 %v4128, 4294901760
    %4130 = vmatpush.msra.mxu0 %v4129
    %v4131 = vand.u32 %v398, 4294901760
    %v4132 = vsub.f32 %v398, %v4131
    %v4133 = vand.u32 %v4132, 4294901760
    %v4134 = vsub.f32 %v4132, %v4133
    %v4135 = vand.u32 %v4134, 4294901760
    %4136 = vmatpush.msra.mxu0 %v4135
    %v4137 = vand.u32 %v397, 4294901760
    %v4138 = vsub.f32 %v397, %v4137
    %v4139 = vand.u32 %v4138, 4294901760
    %v4140 = vsub.f32 %v4138, %v4139
    %v4141 = vand.u32 %v4140, 4294901760
    %4142 = vmatpush.msra.mxu0 %v4141
    %v4143 = vand.u32 %v396, 4294901760
    %v4144 = vsub.f32 %v396, %v4143
    %v4145 = vand.u32 %v4144, 4294901760
    %v4146 = vsub.f32 %v4144, %v4145
    %v4147 = vand.u32 %v4146, 4294901760
    %4148 = vmatpush.msra.mxu0 %v4147
    %v4149 = vand.u32 %v395, 4294901760
    %v4150 = vsub.f32 %v395, %v4149
    %v4151 = vand.u32 %v4150, 4294901760
    %v4152 = vsub.f32 %v4150, %v4151
    %v4153 = vand.u32 %v4152, 4294901760
    %4154 = vmatpush.msra.mxu0 %v4153
    %v4155 = vand.u32 %v394, 4294901760
    %v4156 = vsub.f32 %v394, %v4155
    %v4157 = vand.u32 %v4156, 4294901760
    %v4158 = vsub.f32 %v4156, %v4157
    %v4159 = vand.u32 %v4158, 4294901760
    %4160 = vmatpush.msra.mxu0 %v4159
    %v4161 = vand.u32 %v393, 4294901760
    %v4162 = vsub.f32 %v393, %v4161
    %v4163 = vand.u32 %v4162, 4294901760
    %v4164 = vsub.f32 %v4162, %v4163
    %v4165 = vand.u32 %v4164, 4294901760
    %4166 = vmatpush.msra.mxu0 %v4165
    %v4167 = vand.u32 %v392, 4294901760
    %v4168 = vsub.f32 %v392, %v4167
    %v4169 = vand.u32 %v4168, 4294901760
    %v4170 = vsub.f32 %v4168, %v4169
    %v4171 = vand.u32 %v4170, 4294901760
    %4172 = vmatpush.msra.mxu0 %v4171
    %v4173 = vand.u32 %v391, 4294901760
    %v4174 = vsub.f32 %v391, %v4173
    %v4175 = vand.u32 %v4174, 4294901760
    %v4176 = vsub.f32 %v4174, %v4175
    %v4177 = vand.u32 %v4176, 4294901760
    %4178 = vmatpush.msra.mxu0 %v4177
    %v4179 = vand.u32 %v390, 4294901760
    %v4180 = vsub.f32 %v390, %v4179
    %v4181 = vand.u32 %v4180, 4294901760
    %v4182 = vsub.f32 %v4180, %v4181
    %v4183 = vand.u32 %v4182, 4294901760
    %4184 = vmatpush.msra.mxu0 %v4183
    %v4185 = vand.u32 %v389, 4294901760
    %v4186 = vsub.f32 %v389, %v4185
    %v4187 = vand.u32 %v4186, 4294901760
    %v4188 = vsub.f32 %v4186, %v4187
    %v4189 = vand.u32 %v4188, 4294901760
    %4190 = vmatpush.msra.mxu0 %v4189
    %v4191 = vand.u32 %v4030, 4294901760
    %4192 = vmatmul.f32.gmra.mxu0 %v4191
    %v4193 = vpop.f32.mrf.mxu0
    %v4194 = vadd.f32 %v4085, %v4193
    %v4195 = vand.u32 %v4038, 4294901760
    %4196 = vmatmul.f32.gmra.mxu0 %v4195
    %v4197 = vpop.f32.mrf.mxu0
    %v4198 = vadd.f32 %v4093, %v4197
    %4199 = vdwg.mxu0
    %v4200 = vand.u32 %v404, 4294901760
    %v4201 = vsub.f32 %v404, %v4200
    %4202 = vmatpush.msra.mxu0 %v4201
    %v4203 = vand.u32 %v403, 4294901760
    %v4204 = vsub.f32 %v403, %v4203
    %4205 = vmatpush.msra.mxu0 %v4204
    %v4206 = vand.u32 %v402, 4294901760
    %v4207 = vsub.f32 %v402, %v4206
    %4208 = vmatpush.msra.mxu0 %v4207
    %v4209 = vand.u32 %v401, 4294901760
    %v4210 = vsub.f32 %v401, %v4209
    %4211 = vmatpush.msra.mxu0 %v4210
    %v4212 = vand.u32 %v400, 4294901760
    %v4213 = vsub.f32 %v400, %v4212
    %4214 = vmatpush.msra.mxu0 %v4213
    %v4215 = vand.u32 %v399, 4294901760
    %v4216 = vsub.f32 %v399, %v4215
    %4217 = vmatpush.msra.mxu0 %v4216
    %v4218 = vand.u32 %v398, 4294901760
    %v4219 = vsub.f32 %v398, %v4218
    %4220 = vmatpush.msra.mxu0 %v4219
    %v4221 = vand.u32 %v397, 4294901760
    %v4222 = vsub.f32 %v397, %v4221
    %4223 = vmatpush.msra.mxu0 %v4222
    %v4224 = vand.u32 %v396, 4294901760
    %v4225 = vsub.f32 %v396, %v4224
    %4226 = vmatpush.msra.mxu0 %v4225
    %v4227 = vand.u32 %v395, 4294901760
    %v4228 = vsub.f32 %v395, %v4227
    %4229 = vmatpush.msra.mxu0 %v4228
    %v4230 = vand.u32 %v394, 4294901760
    %v4231 = vsub.f32 %v394, %v4230
    %4232 = vmatpush.msra.mxu0 %v4231
    %v4233 = vand.u32 %v393, 4294901760
    %v4234 = vsub.f32 %v393, %v4233
    %4235 = vmatpush.msra.mxu0 %v4234
    %v4236 = vand.u32 %v392, 4294901760
    %v4237 = vsub.f32 %v392, %v4236
    %4238 = vmatpush.msra.mxu0 %v4237
    %v4239 = vand.u32 %v391, 4294901760
    %v4240 = vsub.f32 %v391, %v4239
    %4241 = vmatpush.msra.mxu0 %v4240
    %v4242 = vand.u32 %v390, 4294901760
    %v4243 = vsub.f32 %v390, %v4242
    %4244 = vmatpush.msra.mxu0 %v4243
    %v4245 = vand.u32 %v389, 4294901760
    %v4246 = vsub.f32 %v389, %v4245
    %4247 = vmatpush.msra.mxu0 %v4246
    %v4248 = vand.u32 %v4030, 4294901760
    %v4249 = vsub.f32 %v4030, %v4248
    %4250 = vmatmul.f32.gmra.mxu0 %v4249
    %v4251 = vpop.f32.mrf.mxu0
    %v4252 = vadd.f32 %v4194, %v4251
    %v4253 = vand.u32 %v4038, 4294901760
    %v4254 = vsub.f32 %v4038, %v4253
    %4255 = vmatmul.f32.gmra.mxu0 %v4254
    %v4256 = vpop.f32.mrf.mxu0
    %v4257 = vadd.f32 %v4198, %v4256
    %4258 = vdwg.mxu0
    %v4259 = vand.u32 %v404, 4294901760
    %4260 = vmatpush.msra.mxu0 %v4259
    %v4261 = vand.u32 %v403, 4294901760
    %4262 = vmatpush.msra.mxu0 %v4261
    %v4263 = vand.u32 %v402, 4294901760
    %4264 = vmatpush.msra.mxu0 %v4263
    %v4265 = vand.u32 %v401, 4294901760
    %4266 = vmatpush.msra.mxu0 %v4265
    %v4267 = vand.u32 %v400, 4294901760
    %4268 = vmatpush.msra.mxu0 %v4267
    %v4269 = vand.u32 %v399, 4294901760
    %4270 = vmatpush.msra.mxu0 %v4269
    %v4271 = vand.u32 %v398, 4294901760
    %4272 = vmatpush.msra.mxu0 %v4271
    %v4273 = vand.u32 %v397, 4294901760
    %4274 = vmatpush.msra.mxu0 %v4273
    %v4275 = vand.u32 %v396, 4294901760
    %4276 = vmatpush.msra.mxu0 %v4275
    %v4277 = vand.u32 %v395, 4294901760
    %4278 = vmatpush.msra.mxu0 %v4277
    %v4279 = vand.u32 %v394, 4294901760
    %4280 = vmatpush.msra.mxu0 %v4279
    %v4281 = vand.u32 %v393, 4294901760
    %4282 = vmatpush.msra.mxu0 %v4281
    %v4283 = vand.u32 %v392, 4294901760
    %4284 = vmatpush.msra.mxu0 %v4283
    %v4285 = vand.u32 %v391, 4294901760
    %4286 = vmatpush.msra.mxu0 %v4285
    %v4287 = vand.u32 %v390, 4294901760
    %4288 = vmatpush.msra.mxu0 %v4287
    %v4289 = vand.u32 %v389, 4294901760
    %4290 = vmatpush.msra.mxu0 %v4289
    %v4291 = vand.u32 %v4030, 4294901760
    %v4292 = vsub.f32 %v4030, %v4291
    %v4293 = vand.u32 %v4292, 4294901760
    %4294 = vmatmul.f32.gmra.mxu0 %v4293
    %v4295 = vpop.f32.mrf.mxu0
    %v4296 = vadd.f32 %v4252, %v4295
    %v4297 = vand.u32 %v4038, 4294901760
    %v4298 = vsub.f32 %v4038, %v4297
    %v4299 = vand.u32 %v4298, 4294901760
    %4300 = vmatmul.f32.gmra.mxu0 %v4299
    %v4301 = vpop.f32.mrf.mxu0
    %v4302 = vadd.f32 %v4257, %v4301
    %4303 = vdwg.mxu0
    %v4304 = vand.u32 %v404, 4294901760
    %v4305 = vsub.f32 %v404, %v4304
    %v4306 = vand.u32 %v4305, 4294901760
    %4307 = vmatpush.msra.mxu0 %v4306
    %v4308 = vand.u32 %v403, 4294901760
    %v4309 = vsub.f32 %v403, %v4308
    %v4310 = vand.u32 %v4309, 4294901760
    %4311 = vmatpush.msra.mxu0 %v4310
    %v4312 = vand.u32 %v402, 4294901760
    %v4313 = vsub.f32 %v402, %v4312
    %v4314 = vand.u32 %v4313, 4294901760
    %4315 = vmatpush.msra.mxu0 %v4314
    %v4316 = vand.u32 %v401, 4294901760
    %v4317 = vsub.f32 %v401, %v4316
    %v4318 = vand.u32 %v4317, 4294901760
    %4319 = vmatpush.msra.mxu0 %v4318
    %v4320 = vand.u32 %v400, 4294901760
    %v4321 = vsub.f32 %v400, %v4320
    %v4322 = vand.u32 %v4321, 4294901760
    %4323 = vmatpush.msra.mxu0 %v4322
    %v4324 = vand.u32 %v399, 4294901760
    %v4325 = vsub.f32 %v399, %v4324
    %v4326 = vand.u32 %v4325, 4294901760
    %4327 = vmatpush.msra.mxu0 %v4326
    %v4328 = vand.u32 %v398, 4294901760
    %v4329 = vsub.f32 %v398, %v4328
    %v4330 = vand.u32 %v4329, 4294901760
    %4331 = vmatpush.msra.mxu0 %v4330
    %v4332 = vand.u32 %v397, 4294901760
    %v4333 = vsub.f32 %v397, %v4332
    %v4334 = vand.u32 %v4333, 4294901760
    %4335 = vmatpush.msra.mxu0 %v4334
    %v4336 = vand.u32 %v396, 4294901760
    %v4337 = vsub.f32 %v396, %v4336
    %v4338 = vand.u32 %v4337, 4294901760
    %4339 = vmatpush.msra.mxu0 %v4338
    %v4340 = vand.u32 %v395, 4294901760
    %v4341 = vsub.f32 %v395, %v4340
    %v4342 = vand.u32 %v4341, 4294901760
    %4343 = vmatpush.msra.mxu0 %v4342
    %v4344 = vand.u32 %v394, 4294901760
    %v4345 = vsub.f32 %v394, %v4344
    %v4346 = vand.u32 %v4345, 4294901760
    %4347 = vmatpush.msra.mxu0 %v4346
    %v4348 = vand.u32 %v393, 4294901760
    %v4349 = vsub.f32 %v393, %v4348
    %v4350 = vand.u32 %v4349, 4294901760
    %4351 = vmatpush.msra.mxu0 %v4350
    %v4352 = vand.u32 %v392, 4294901760
    %v4353 = vsub.f32 %v392, %v4352
    %v4354 = vand.u32 %v4353, 4294901760
    %4355 = vmatpush.msra.mxu0 %v4354
    %v4356 = vand.u32 %v391, 4294901760
    %v4357 = vsub.f32 %v391, %v4356
    %v4358 = vand.u32 %v4357, 4294901760
    %4359 = vmatpush.msra.mxu0 %v4358
    %v4360 = vand.u32 %v390, 4294901760
    %v4361 = vsub.f32 %v390, %v4360
    %v4362 = vand.u32 %v4361, 4294901760
    %4363 = vmatpush.msra.mxu0 %v4362
    %v4364 = vand.u32 %v389, 4294901760
    %v4365 = vsub.f32 %v389, %v4364
    %v4366 = vand.u32 %v4365, 4294901760
    %4367 = vmatpush.msra.mxu0 %v4366
    %v4368 = vand.u32 %v4030, 4294901760
    %4369 = vmatmul.f32.gmra.mxu0 %v4368
    %v4370 = vpop.f32.mrf.mxu0
    %v4371 = vadd.f32 %v4296, %v4370
    %v4372 = vand.u32 %v4038, 4294901760
    %4373 = vmatmul.f32.gmra.mxu0 %v4372
    %v4374 = vpop.f32.mrf.mxu0
    %v4375 = vadd.f32 %v4302, %v4374
    %4376 = vdwg.mxu0
    %v4377 = vand.u32 %v404, 4294901760
    %4378 = vmatpush.msra.mxu0 %v4377
    %v4379 = vand.u32 %v403, 4294901760
    %4380 = vmatpush.msra.mxu0 %v4379
    %v4381 = vand.u32 %v402, 4294901760
    %4382 = vmatpush.msra.mxu0 %v4381
    %v4383 = vand.u32 %v401, 4294901760
    %4384 = vmatpush.msra.mxu0 %v4383
    %v4385 = vand.u32 %v400, 4294901760
    %4386 = vmatpush.msra.mxu0 %v4385
    %v4387 = vand.u32 %v399, 4294901760
    %4388 = vmatpush.msra.mxu0 %v4387
    %v4389 = vand.u32 %v398, 4294901760
    %4390 = vmatpush.msra.mxu0 %v4389
    %v4391 = vand.u32 %v397, 4294901760
    %4392 = vmatpush.msra.mxu0 %v4391
    %v4393 = vand.u32 %v396, 4294901760
    %4394 = vmatpush.msra.mxu0 %v4393
    %v4395 = vand.u32 %v395, 4294901760
    %4396 = vmatpush.msra.mxu0 %v4395
    %v4397 = vand.u32 %v394, 4294901760
    %4398 = vmatpush.msra.mxu0 %v4397
    %v4399 = vand.u32 %v393, 4294901760
    %4400 = vmatpush.msra.mxu0 %v4399
    %v4401 = vand.u32 %v392, 4294901760
    %4402 = vmatpush.msra.mxu0 %v4401
    %v4403 = vand.u32 %v391, 4294901760
    %4404 = vmatpush.msra.mxu0 %v4403
    %v4405 = vand.u32 %v390, 4294901760
    %4406 = vmatpush.msra.mxu0 %v4405
    %v4407 = vand.u32 %v389, 4294901760
    %4408 = vmatpush.msra.mxu0 %v4407
    %v4409 = vand.u32 %v4030, 4294901760
    %4410 = vmatmul.f32.gmra.mxu0 %v4409
    %v4411 = vpop.f32.mrf.mxu0
    %v4412 = vadd.f32 %v4371, %v4411
    %v4413 = vand.u32 %v4038, 4294901760
    %4414 = vmatmul.f32.gmra.mxu0 %v4413
    %v4415 = vpop.f32.mrf.mxu0
    %v4416 = vadd.f32 %v4375, %v4415
    %4417 = vdwg.mxu0
    %v4418 = vand.u32 %v420, 4294901760
    %4419 = vmatpush.msra.mxu0 %v4418
    %v4420 = vand.u32 %v419, 4294901760
    %4421 = vmatpush.msra.mxu0 %v4420
    %v4422 = vand.u32 %v418, 4294901760
    %4423 = vmatpush.msra.mxu0 %v4422
    %v4424 = vand.u32 %v417, 4294901760
    %4425 = vmatpush.msra.mxu0 %v4424
    %v4426 = vand.u32 %v416, 4294901760
    %4427 = vmatpush.msra.mxu0 %v4426
    %v4428 = vand.u32 %v415, 4294901760
    %4429 = vmatpush.msra.mxu0 %v4428
    %v4430 = vand.u32 %v414, 4294901760
    %4431 = vmatpush.msra.mxu0 %v4430
    %v4432 = vand.u32 %v413, 4294901760
    %4433 = vmatpush.msra.mxu0 %v4432
    %v4434 = vand.u32 %v412, 4294901760
    %4435 = vmatpush.msra.mxu0 %v4434
    %v4436 = vand.u32 %v411, 4294901760
    %4437 = vmatpush.msra.mxu0 %v4436
    %v4438 = vand.u32 %v410, 4294901760
    %4439 = vmatpush.msra.mxu0 %v4438
    %v4440 = vand.u32 %v409, 4294901760
    %4441 = vmatpush.msra.mxu0 %v4440
    %v4442 = vand.u32 %v408, 4294901760
    %4443 = vmatpush.msra.mxu0 %v4442
    %v4444 = vand.u32 %v407, 4294901760
    %4445 = vmatpush.msra.mxu0 %v4444
    %v4446 = vand.u32 %v406, 4294901760
    %4447 = vmatpush.msra.mxu0 %v4446
    %v4448 = vand.u32 %v405, 4294901760
    %4449 = vmatpush.msra.mxu0 %v4448
    %v4450 = vand.u32 %v4031, 4294901760
    %v4451 = vsub.f32 %v4031, %v4450
    %v4452 = vand.u32 %v4451, 4294901760
    %v4453 = vsub.f32 %v4451, %v4452
    %v4454 = vand.u32 %v4453, 4294901760
    %4455 = vmatmul.f32.gmra.mxu0 %v4454
    %v4456 = vpop.f32.mrf.mxu0
    %v4457 = vadd.f32 %v4412, %v4456
    %v4458 = vand.u32 %v4039, 4294901760
    %v4459 = vsub.f32 %v4039, %v4458
    %v4460 = vand.u32 %v4459, 4294901760
    %v4461 = vsub.f32 %v4459, %v4460
    %v4462 = vand.u32 %v4461, 4294901760
    %4463 = vmatmul.f32.gmra.mxu0 %v4462
    %v4464 = vpop.f32.mrf.mxu0
    %v4465 = vadd.f32 %v4416, %v4464
    %4466 = vdwg.mxu0
    %v4467 = vand.u32 %v420, 4294901760
    %v4468 = vsub.f32 %v420, %v4467
    %v4469 = vand.u32 %v4468, 4294901760
    %v4470 = vsub.f32 %v4468, %v4469
    %v4471 = vand.u32 %v4470, 4294901760
    %4472 = vmatpush.msra.mxu0 %v4471
    %v4473 = vand.u32 %v419, 4294901760
    %v4474 = vsub.f32 %v419, %v4473
    %v4475 = vand.u32 %v4474, 4294901760
    %v4476 = vsub.f32 %v4474, %v4475
    %v4477 = vand.u32 %v4476, 4294901760
    %4478 = vmatpush.msra.mxu0 %v4477
    %v4479 = vand.u32 %v418, 4294901760
    %v4480 = vsub.f32 %v418, %v4479
    %v4481 = vand.u32 %v4480, 4294901760
    %v4482 = vsub.f32 %v4480, %v4481
    %v4483 = vand.u32 %v4482, 4294901760
    %4484 = vmatpush.msra.mxu0 %v4483
    %v4485 = vand.u32 %v417, 4294901760
    %v4486 = vsub.f32 %v417, %v4485
    %v4487 = vand.u32 %v4486, 4294901760
    %v4488 = vsub.f32 %v4486, %v4487
    %v4489 = vand.u32 %v4488, 4294901760
    %4490 = vmatpush.msra.mxu0 %v4489
    %v4491 = vand.u32 %v416, 4294901760
    %v4492 = vsub.f32 %v416, %v4491
    %v4493 = vand.u32 %v4492, 4294901760
    %v4494 = vsub.f32 %v4492, %v4493
    %v4495 = vand.u32 %v4494, 4294901760
    %4496 = vmatpush.msra.mxu0 %v4495
    %v4497 = vand.u32 %v415, 4294901760
    %v4498 = vsub.f32 %v415, %v4497
    %v4499 = vand.u32 %v4498, 4294901760
    %v4500 = vsub.f32 %v4498, %v4499
    %v4501 = vand.u32 %v4500, 4294901760
    %4502 = vmatpush.msra.mxu0 %v4501
    %v4503 = vand.u32 %v414, 4294901760
    %v4504 = vsub.f32 %v414, %v4503
    %v4505 = vand.u32 %v4504, 4294901760
    %v4506 = vsub.f32 %v4504, %v4505
    %v4507 = vand.u32 %v4506, 4294901760
    %4508 = vmatpush.msra.mxu0 %v4507
    %v4509 = vand.u32 %v413, 4294901760
    %v4510 = vsub.f32 %v413, %v4509
    %v4511 = vand.u32 %v4510, 4294901760
    %v4512 = vsub.f32 %v4510, %v4511
    %v4513 = vand.u32 %v4512, 4294901760
    %4514 = vmatpush.msra.mxu0 %v4513
    %v4515 = vand.u32 %v412, 4294901760
    %v4516 = vsub.f32 %v412, %v4515
    %v4517 = vand.u32 %v4516, 4294901760
    %v4518 = vsub.f32 %v4516, %v4517
    %v4519 = vand.u32 %v4518, 4294901760
    %4520 = vmatpush.msra.mxu0 %v4519
    %v4521 = vand.u32 %v411, 4294901760
    %v4522 = vsub.f32 %v411, %v4521
    %v4523 = vand.u32 %v4522, 4294901760
    %v4524 = vsub.f32 %v4522, %v4523
    %v4525 = vand.u32 %v4524, 4294901760
    %4526 = vmatpush.msra.mxu0 %v4525
    %v4527 = vand.u32 %v410, 4294901760
    %v4528 = vsub.f32 %v410, %v4527
    %v4529 = vand.u32 %v4528, 4294901760
    %v4530 = vsub.f32 %v4528, %v4529
    %v4531 = vand.u32 %v4530, 4294901760
    %4532 = vmatpush.msra.mxu0 %v4531
    %v4533 = vand.u32 %v409, 4294901760
    %v4534 = vsub.f32 %v409, %v4533
    %v4535 = vand.u32 %v4534, 4294901760
    %v4536 = vsub.f32 %v4534, %v4535
    %v4537 = vand.u32 %v4536, 4294901760
    %4538 = vmatpush.msra.mxu0 %v4537
    %v4539 = vand.u32 %v408, 4294901760
    %v4540 = vsub.f32 %v408, %v4539
    %v4541 = vand.u32 %v4540, 4294901760
    %v4542 = vsub.f32 %v4540, %v4541
    %v4543 = vand.u32 %v4542, 4294901760
    %4544 = vmatpush.msra.mxu0 %v4543
    %v4545 = vand.u32 %v407, 4294901760
    %v4546 = vsub.f32 %v407, %v4545
    %v4547 = vand.u32 %v4546, 4294901760
    %v4548 = vsub.f32 %v4546, %v4547
    %v4549 = vand.u32 %v4548, 4294901760
    %4550 = vmatpush.msra.mxu0 %v4549
    %v4551 = vand.u32 %v406, 4294901760
    %v4552 = vsub.f32 %v406, %v4551
    %v4553 = vand.u32 %v4552, 4294901760
    %v4554 = vsub.f32 %v4552, %v4553
    %v4555 = vand.u32 %v4554, 4294901760
    %4556 = vmatpush.msra.mxu0 %v4555
    %v4557 = vand.u32 %v405, 4294901760
    %v4558 = vsub.f32 %v405, %v4557
    %v4559 = vand.u32 %v4558, 4294901760
    %v4560 = vsub.f32 %v4558, %v4559
    %v4561 = vand.u32 %v4560, 4294901760
    %4562 = vmatpush.msra.mxu0 %v4561
    %v4563 = vand.u32 %v4031, 4294901760
    %4564 = vmatmul.f32.gmra.mxu0 %v4563
    %v4565 = vpop.f32.mrf.mxu0
    %v4566 = vadd.f32 %v4457, %v4565
    %v4567 = vand.u32 %v4039, 4294901760
    %4568 = vmatmul.f32.gmra.mxu0 %v4567
    %v4569 = vpop.f32.mrf.mxu0
    %v4570 = vadd.f32 %v4465, %v4569
    %4571 = vdwg.mxu0
    %v4572 = vand.u32 %v420, 4294901760
    %v4573 = vsub.f32 %v420, %v4572
    %4574 = vmatpush.msra.mxu0 %v4573
    %v4575 = vand.u32 %v419, 4294901760
    %v4576 = vsub.f32 %v419, %v4575
    %4577 = vmatpush.msra.mxu0 %v4576
    %v4578 = vand.u32 %v418, 4294901760
    %v4579 = vsub.f32 %v418, %v4578
    %4580 = vmatpush.msra.mxu0 %v4579
    %v4581 = vand.u32 %v417, 4294901760
    %v4582 = vsub.f32 %v417, %v4581
    %4583 = vmatpush.msra.mxu0 %v4582
    %v4584 = vand.u32 %v416, 4294901760
    %v4585 = vsub.f32 %v416, %v4584
    %4586 = vmatpush.msra.mxu0 %v4585
    %v4587 = vand.u32 %v415, 4294901760
    %v4588 = vsub.f32 %v415, %v4587
    %4589 = vmatpush.msra.mxu0 %v4588
    %v4590 = vand.u32 %v414, 4294901760
    %v4591 = vsub.f32 %v414, %v4590
    %4592 = vmatpush.msra.mxu0 %v4591
    %v4593 = vand.u32 %v413, 4294901760
    %v4594 = vsub.f32 %v413, %v4593
    %4595 = vmatpush.msra.mxu0 %v4594
    %v4596 = vand.u32 %v412, 4294901760
    %v4597 = vsub.f32 %v412, %v4596
    %4598 = vmatpush.msra.mxu0 %v4597
    %v4599 = vand.u32 %v411, 4294901760
    %v4600 = vsub.f32 %v411, %v4599
    %4601 = vmatpush.msra.mxu0 %v4600
    %v4602 = vand.u32 %v410, 4294901760
    %v4603 = vsub.f32 %v410, %v4602
    %4604 = vmatpush.msra.mxu0 %v4603
    %v4605 = vand.u32 %v409, 4294901760
    %v4606 = vsub.f32 %v409, %v4605
    %4607 = vmatpush.msra.mxu0 %v4606
    %v4608 = vand.u32 %v408, 4294901760
    %v4609 = vsub.f32 %v408, %v4608
    %4610 = vmatpush.msra.mxu0 %v4609
    %v4611 = vand.u32 %v407, 4294901760
    %v4612 = vsub.f32 %v407, %v4611
    %4613 = vmatpush.msra.mxu0 %v4612
    %v4614 = vand.u32 %v406, 4294901760
    %v4615 = vsub.f32 %v406, %v4614
    %4616 = vmatpush.msra.mxu0 %v4615
    %v4617 = vand.u32 %v405, 4294901760
    %v4618 = vsub.f32 %v405, %v4617
    %4619 = vmatpush.msra.mxu0 %v4618
    %v4620 = vand.u32 %v4031, 4294901760
    %v4621 = vsub.f32 %v4031, %v4620
    %4622 = vmatmul.f32.gmra.mxu0 %v4621
    %v4623 = vpop.f32.mrf.mxu0
    %v4624 = vadd.f32 %v4566, %v4623
    %v4625 = vand.u32 %v4039, 4294901760
    %v4626 = vsub.f32 %v4039, %v4625
    %4627 = vmatmul.f32.gmra.mxu0 %v4626
    %v4628 = vpop.f32.mrf.mxu0
    %v4629 = vadd.f32 %v4570, %v4628
    %4630 = vdwg.mxu0
    %v4631 = vand.u32 %v420, 4294901760
    %4632 = vmatpush.msra.mxu0 %v4631
    %v4633 = vand.u32 %v419, 4294901760
    %4634 = vmatpush.msra.mxu0 %v4633
    %v4635 = vand.u32 %v418, 4294901760
    %4636 = vmatpush.msra.mxu0 %v4635
    %v4637 = vand.u32 %v417, 4294901760
    %4638 = vmatpush.msra.mxu0 %v4637
    %v4639 = vand.u32 %v416, 4294901760
    %4640 = vmatpush.msra.mxu0 %v4639
    %v4641 = vand.u32 %v415, 4294901760
    %4642 = vmatpush.msra.mxu0 %v4641
    %v4643 = vand.u32 %v414, 4294901760
    %4644 = vmatpush.msra.mxu0 %v4643
    %v4645 = vand.u32 %v413, 4294901760
    %4646 = vmatpush.msra.mxu0 %v4645
    %v4647 = vand.u32 %v412, 4294901760
    %4648 = vmatpush.msra.mxu0 %v4647
    %v4649 = vand.u32 %v411, 4294901760
    %4650 = vmatpush.msra.mxu0 %v4649
    %v4651 = vand.u32 %v410, 4294901760
    %4652 = vmatpush.msra.mxu0 %v4651
    %v4653 = vand.u32 %v409, 4294901760
    %4654 = vmatpush.msra.mxu0 %v4653
    %v4655 = vand.u32 %v408, 4294901760
    %4656 = vmatpush.msra.mxu0 %v4655
    %v4657 = vand.u32 %v407, 4294901760
    %4658 = vmatpush.msra.mxu0 %v4657
    %v4659 = vand.u32 %v406, 4294901760
    %4660 = vmatpush.msra.mxu0 %v4659
    %v4661 = vand.u32 %v405, 4294901760
    %4662 = vmatpush.msra.mxu0 %v4661
    %v4663 = vand.u32 %v4031, 4294901760
    %v4664 = vsub.f32 %v4031, %v4663
    %v4665 = vand.u32 %v4664, 4294901760
    %4666 = vmatmul.f32.gmra.mxu0 %v4665
    %v4667 = vpop.f32.mrf.mxu0
    %v4668 = vadd.f32 %v4624, %v4667
    %v4669 = vand.u32 %v4039, 4294901760
    %v4670 = vsub.f32 %v4039, %v4669
    %v4671 = vand.u32 %v4670, 4294901760
    %4672 = vmatmul.f32.gmra.mxu0 %v4671
    %v4673 = vpop.f32.mrf.mxu0
    %v4674 = vadd.f32 %v4629, %v4673
    %4675 = vdwg.mxu0
    %v4676 = vand.u32 %v420, 4294901760
    %v4677 = vsub.f32 %v420, %v4676
    %v4678 = vand.u32 %v4677, 4294901760
    %4679 = vmatpush.msra.mxu0 %v4678
    %v4680 = vand.u32 %v419, 4294901760
    %v4681 = vsub.f32 %v419, %v4680
    %v4682 = vand.u32 %v4681, 4294901760
    %4683 = vmatpush.msra.mxu0 %v4682
    %v4684 = vand.u32 %v418, 4294901760
    %v4685 = vsub.f32 %v418, %v4684
    %v4686 = vand.u32 %v4685, 4294901760
    %4687 = vmatpush.msra.mxu0 %v4686
    %v4688 = vand.u32 %v417, 4294901760
    %v4689 = vsub.f32 %v417, %v4688
    %v4690 = vand.u32 %v4689, 4294901760
    %4691 = vmatpush.msra.mxu0 %v4690
    %v4692 = vand.u32 %v416, 4294901760
    %v4693 = vsub.f32 %v416, %v4692
    %v4694 = vand.u32 %v4693, 4294901760
    %4695 = vmatpush.msra.mxu0 %v4694
    %v4696 = vand.u32 %v415, 4294901760
    %v4697 = vsub.f32 %v415, %v4696
    %v4698 = vand.u32 %v4697, 4294901760
    %4699 = vmatpush.msra.mxu0 %v4698
    %v4700 = vand.u32 %v414, 4294901760
    %v4701 = vsub.f32 %v414, %v4700
    %v4702 = vand.u32 %v4701, 4294901760
    %4703 = vmatpush.msra.mxu0 %v4702
    %v4704 = vand.u32 %v413, 4294901760
    %v4705 = vsub.f32 %v413, %v4704
    %v4706 = vand.u32 %v4705, 4294901760
    %4707 = vmatpush.msra.mxu0 %v4706
    %v4708 = vand.u32 %v412, 4294901760
    %v4709 = vsub.f32 %v412, %v4708
    %v4710 = vand.u32 %v4709, 4294901760
    %4711 = vmatpush.msra.mxu0 %v4710
    %v4712 = vand.u32 %v411, 4294901760
    %v4713 = vsub.f32 %v411, %v4712
    %v4714 = vand.u32 %v4713, 4294901760
    %4715 = vmatpush.msra.mxu0 %v4714
    %v4716 = vand.u32 %v410, 4294901760
    %v4717 = vsub.f32 %v410, %v4716
    %v4718 = vand.u32 %v4717, 4294901760
    %4719 = vmatpush.msra.mxu0 %v4718
    %v4720 = vand.u32 %v409, 4294901760
    %v4721 = vsub.f32 %v409, %v4720
    %v4722 = vand.u32 %v4721, 4294901760
    %4723 = vmatpush.msra.mxu0 %v4722
    %v4724 = vand.u32 %v408, 4294901760
    %v4725 = vsub.f32 %v408, %v4724
    %v4726 = vand.u32 %v4725, 4294901760
    %4727 = vmatpush.msra.mxu0 %v4726
    %v4728 = vand.u32 %v407, 4294901760
    %v4729 = vsub.f32 %v407, %v4728
    %v4730 = vand.u32 %v4729, 4294901760
    %4731 = vmatpush.msra.mxu0 %v4730
    %v4732 = vand.u32 %v406, 4294901760
    %v4733 = vsub.f32 %v406, %v4732
    %v4734 = vand.u32 %v4733, 4294901760
    %4735 = vmatpush.msra.mxu0 %v4734
    %v4736 = vand.u32 %v405, 4294901760
    %v4737 = vsub.f32 %v405, %v4736
    %v4738 = vand.u32 %v4737, 4294901760
    %4739 = vmatpush.msra.mxu0 %v4738
    %v4740 = vand.u32 %v4031, 4294901760
    %4741 = vmatmul.f32.gmra.mxu0 %v4740
    %v4742 = vpop.f32.mrf.mxu0
    %v4743 = vadd.f32 %v4668, %v4742
    %v4744 = vand.u32 %v4039, 4294901760
    %4745 = vmatmul.f32.gmra.mxu0 %v4744
    %v4746 = vpop.f32.mrf.mxu0
    %v4747 = vadd.f32 %v4674, %v4746
    %4748 = vdwg.mxu0
    %v4749 = vand.u32 %v420, 4294901760
    %4750 = vmatpush.msra.mxu0 %v4749
    %v4751 = vand.u32 %v419, 4294901760
    %4752 = vmatpush.msra.mxu0 %v4751
    %v4753 = vand.u32 %v418, 4294901760
    %4754 = vmatpush.msra.mxu0 %v4753
    %v4755 = vand.u32 %v417, 4294901760
    %4756 = vmatpush.msra.mxu0 %v4755
    %v4757 = vand.u32 %v416, 4294901760
    %4758 = vmatpush.msra.mxu0 %v4757
    %v4759 = vand.u32 %v415, 4294901760
    %4760 = vmatpush.msra.mxu0 %v4759
    %v4761 = vand.u32 %v414, 4294901760
    %4762 = vmatpush.msra.mxu0 %v4761
    %v4763 = vand.u32 %v413, 4294901760
    %4764 = vmatpush.msra.mxu0 %v4763
    %v4765 = vand.u32 %v412, 4294901760
    %4766 = vmatpush.msra.mxu0 %v4765
    %v4767 = vand.u32 %v411, 4294901760
    %4768 = vmatpush.msra.mxu0 %v4767
    %v4769 = vand.u32 %v410, 4294901760
    %4770 = vmatpush.msra.mxu0 %v4769
    %v4771 = vand.u32 %v409, 4294901760
    %4772 = vmatpush.msra.mxu0 %v4771
    %v4773 = vand.u32 %v408, 4294901760
    %4774 = vmatpush.msra.mxu0 %v4773
    %v4775 = vand.u32 %v407, 4294901760
    %4776 = vmatpush.msra.mxu0 %v4775
    %v4777 = vand.u32 %v406, 4294901760
    %4778 = vmatpush.msra.mxu0 %v4777
    %v4779 = vand.u32 %v405, 4294901760
    %4780 = vmatpush.msra.mxu0 %v4779
    %v4781 = vand.u32 %v4031, 4294901760
    %4782 = vmatmul.f32.gmra.mxu0 %v4781
    %v4783 = vpop.f32.mrf.mxu0
    %v4784 = vadd.f32 %v4743, %v4783
    %v4785 = vand.u32 %v4039, 4294901760
    %4786 = vmatmul.f32.gmra.mxu0 %v4785
    %v4787 = vpop.f32.mrf.mxu0
    %v4788 = vadd.f32 %v4747, %v4787
    %4789 = vdwg.mxu0
    %v4790 = vand.u32 %v436, 4294901760
    %4791 = vmatpush.msra.mxu0 %v4790
    %v4792 = vand.u32 %v435, 4294901760
    %4793 = vmatpush.msra.mxu0 %v4792
    %v4794 = vand.u32 %v434, 4294901760
    %4795 = vmatpush.msra.mxu0 %v4794
    %v4796 = vand.u32 %v433, 4294901760
    %4797 = vmatpush.msra.mxu0 %v4796
    %v4798 = vand.u32 %v432, 4294901760
    %4799 = vmatpush.msra.mxu0 %v4798
    %v4800 = vand.u32 %v431, 4294901760
    %4801 = vmatpush.msra.mxu0 %v4800
    %v4802 = vand.u32 %v430, 4294901760
    %4803 = vmatpush.msra.mxu0 %v4802
    %v4804 = vand.u32 %v429, 4294901760
    %4805 = vmatpush.msra.mxu0 %v4804
    %v4806 = vand.u32 %v428, 4294901760
    %4807 = vmatpush.msra.mxu0 %v4806
    %v4808 = vand.u32 %v427, 4294901760
    %4809 = vmatpush.msra.mxu0 %v4808
    %v4810 = vand.u32 %v426, 4294901760
    %4811 = vmatpush.msra.mxu0 %v4810
    %v4812 = vand.u32 %v425, 4294901760
    %4813 = vmatpush.msra.mxu0 %v4812
    %v4814 = vand.u32 %v424, 4294901760
    %4815 = vmatpush.msra.mxu0 %v4814
    %v4816 = vand.u32 %v423, 4294901760
    %4817 = vmatpush.msra.mxu0 %v4816
    %v4818 = vand.u32 %v422, 4294901760
    %4819 = vmatpush.msra.mxu0 %v4818
    %v4820 = vand.u32 %v421, 4294901760
    %4821 = vmatpush.msra.mxu0 %v4820
    %v4822 = vand.u32 %v4032, 4294901760
    %v4823 = vsub.f32 %v4032, %v4822
    %v4824 = vand.u32 %v4823, 4294901760
    %v4825 = vsub.f32 %v4823, %v4824
    %v4826 = vand.u32 %v4825, 4294901760
    %4827 = vmatmul.f32.gmra.mxu0 %v4826
    %v4828 = vpop.f32.mrf.mxu0
    %v4829 = vadd.f32 %v4784, %v4828
    %v4830 = vand.u32 %v4040, 4294901760
    %v4831 = vsub.f32 %v4040, %v4830
    %v4832 = vand.u32 %v4831, 4294901760
    %v4833 = vsub.f32 %v4831, %v4832
    %v4834 = vand.u32 %v4833, 4294901760
    %4835 = vmatmul.f32.gmra.mxu0 %v4834
    %v4836 = vpop.f32.mrf.mxu0
    %v4837 = vadd.f32 %v4788, %v4836
    %4838 = vdwg.mxu0
    %v4839 = vand.u32 %v436, 4294901760
    %v4840 = vsub.f32 %v436, %v4839
    %v4841 = vand.u32 %v4840, 4294901760
    %v4842 = vsub.f32 %v4840, %v4841
    %v4843 = vand.u32 %v4842, 4294901760
    %4844 = vmatpush.msra.mxu0 %v4843
    %v4845 = vand.u32 %v435, 4294901760
    %v4846 = vsub.f32 %v435, %v4845
    %v4847 = vand.u32 %v4846, 4294901760
    %v4848 = vsub.f32 %v4846, %v4847
    %v4849 = vand.u32 %v4848, 4294901760
    %4850 = vmatpush.msra.mxu0 %v4849
    %v4851 = vand.u32 %v434, 4294901760
    %v4852 = vsub.f32 %v434, %v4851
    %v4853 = vand.u32 %v4852, 4294901760
    %v4854 = vsub.f32 %v4852, %v4853
    %v4855 = vand.u32 %v4854, 4294901760
    %4856 = vmatpush.msra.mxu0 %v4855
    %v4857 = vand.u32 %v433, 4294901760
    %v4858 = vsub.f32 %v433, %v4857
    %v4859 = vand.u32 %v4858, 4294901760
    %v4860 = vsub.f32 %v4858, %v4859
    %v4861 = vand.u32 %v4860, 4294901760
    %4862 = vmatpush.msra.mxu0 %v4861
    %v4863 = vand.u32 %v432, 4294901760
    %v4864 = vsub.f32 %v432, %v4863
    %v4865 = vand.u32 %v4864, 4294901760
    %v4866 = vsub.f32 %v4864, %v4865
    %v4867 = vand.u32 %v4866, 4294901760
    %4868 = vmatpush.msra.mxu0 %v4867
    %v4869 = vand.u32 %v431, 4294901760
    %v4870 = vsub.f32 %v431, %v4869
    %v4871 = vand.u32 %v4870, 4294901760
    %v4872 = vsub.f32 %v4870, %v4871
    %v4873 = vand.u32 %v4872, 4294901760
    %4874 = vmatpush.msra.mxu0 %v4873
    %v4875 = vand.u32 %v430, 4294901760
    %v4876 = vsub.f32 %v430, %v4875
    %v4877 = vand.u32 %v4876, 4294901760
    %v4878 = vsub.f32 %v4876, %v4877
    %v4879 = vand.u32 %v4878, 4294901760
    %4880 = vmatpush.msra.mxu0 %v4879
    %v4881 = vand.u32 %v429, 4294901760
    %v4882 = vsub.f32 %v429, %v4881
    %v4883 = vand.u32 %v4882, 4294901760
    %v4884 = vsub.f32 %v4882, %v4883
    %v4885 = vand.u32 %v4884, 4294901760
    %4886 = vmatpush.msra.mxu0 %v4885
    %v4887 = vand.u32 %v428, 4294901760
    %v4888 = vsub.f32 %v428, %v4887
    %v4889 = vand.u32 %v4888, 4294901760
    %v4890 = vsub.f32 %v4888, %v4889
    %v4891 = vand.u32 %v4890, 4294901760
    %4892 = vmatpush.msra.mxu0 %v4891
    %v4893 = vand.u32 %v427, 4294901760
    %v4894 = vsub.f32 %v427, %v4893
    %v4895 = vand.u32 %v4894, 4294901760
    %v4896 = vsub.f32 %v4894, %v4895
    %v4897 = vand.u32 %v4896, 4294901760
    %4898 = vmatpush.msra.mxu0 %v4897
    %v4899 = vand.u32 %v426, 4294901760
    %v4900 = vsub.f32 %v426, %v4899
    %v4901 = vand.u32 %v4900, 4294901760
    %v4902 = vsub.f32 %v4900, %v4901
    %v4903 = vand.u32 %v4902, 4294901760
    %4904 = vmatpush.msra.mxu0 %v4903
    %v4905 = vand.u32 %v425, 4294901760
    %v4906 = vsub.f32 %v425, %v4905
    %v4907 = vand.u32 %v4906, 4294901760
    %v4908 = vsub.f32 %v4906, %v4907
    %v4909 = vand.u32 %v4908, 4294901760
    %4910 = vmatpush.msra.mxu0 %v4909
    %v4911 = vand.u32 %v424, 4294901760
    %v4912 = vsub.f32 %v424, %v4911
    %v4913 = vand.u32 %v4912, 4294901760
    %v4914 = vsub.f32 %v4912, %v4913
    %v4915 = vand.u32 %v4914, 4294901760
    %4916 = vmatpush.msra.mxu0 %v4915
    %v4917 = vand.u32 %v423, 4294901760
    %v4918 = vsub.f32 %v423, %v4917
    %v4919 = vand.u32 %v4918, 4294901760
    %v4920 = vsub.f32 %v4918, %v4919
    %v4921 = vand.u32 %v4920, 4294901760
    %4922 = vmatpush.msra.mxu0 %v4921
    %v4923 = vand.u32 %v422, 4294901760
    %v4924 = vsub.f32 %v422, %v4923
    %v4925 = vand.u32 %v4924, 4294901760
    %v4926 = vsub.f32 %v4924, %v4925
    %v4927 = vand.u32 %v4926, 4294901760
    %4928 = vmatpush.msra.mxu0 %v4927
    %v4929 = vand.u32 %v421, 4294901760
    %v4930 = vsub.f32 %v421, %v4929
    %v4931 = vand.u32 %v4930, 4294901760
    %v4932 = vsub.f32 %v4930, %v4931
    %v4933 = vand.u32 %v4932, 4294901760
    %4934 = vmatpush.msra.mxu0 %v4933
    %v4935 = vand.u32 %v4032, 4294901760
    %4936 = vmatmul.f32.gmra.mxu0 %v4935
    %v4937 = vpop.f32.mrf.mxu0
    %v4938 = vadd.f32 %v4829, %v4937
    %v4939 = vand.u32 %v4040, 4294901760
    %4940 = vmatmul.f32.gmra.mxu0 %v4939
    %v4941 = vpop.f32.mrf.mxu0
    %v4942 = vadd.f32 %v4837, %v4941
    %4943 = vdwg.mxu0
    %v4944 = vand.u32 %v436, 4294901760
    %v4945 = vsub.f32 %v436, %v4944
    %4946 = vmatpush.msra.mxu0 %v4945
    %v4947 = vand.u32 %v435, 4294901760
    %v4948 = vsub.f32 %v435, %v4947
    %4949 = vmatpush.msra.mxu0 %v4948
    %v4950 = vand.u32 %v434, 4294901760
    %v4951 = vsub.f32 %v434, %v4950
    %4952 = vmatpush.msra.mxu0 %v4951
    %v4953 = vand.u32 %v433, 4294901760
    %v4954 = vsub.f32 %v433, %v4953
    %4955 = vmatpush.msra.mxu0 %v4954
    %v4956 = vand.u32 %v432, 4294901760
    %v4957 = vsub.f32 %v432, %v4956
    %4958 = vmatpush.msra.mxu0 %v4957
    %v4959 = vand.u32 %v431, 4294901760
    %v4960 = vsub.f32 %v431, %v4959
    %4961 = vmatpush.msra.mxu0 %v4960
    %v4962 = vand.u32 %v430, 4294901760
    %v4963 = vsub.f32 %v430, %v4962
    %4964 = vmatpush.msra.mxu0 %v4963
    %v4965 = vand.u32 %v429, 4294901760
    %v4966 = vsub.f32 %v429, %v4965
    %4967 = vmatpush.msra.mxu0 %v4966
    %v4968 = vand.u32 %v428, 4294901760
    %v4969 = vsub.f32 %v428, %v4968
    %4970 = vmatpush.msra.mxu0 %v4969
    %v4971 = vand.u32 %v427, 4294901760
    %v4972 = vsub.f32 %v427, %v4971
    %4973 = vmatpush.msra.mxu0 %v4972
    %v4974 = vand.u32 %v426, 4294901760
    %v4975 = vsub.f32 %v426, %v4974
    %4976 = vmatpush.msra.mxu0 %v4975
    %v4977 = vand.u32 %v425, 4294901760
    %v4978 = vsub.f32 %v425, %v4977
    %4979 = vmatpush.msra.mxu0 %v4978
    %v4980 = vand.u32 %v424, 4294901760
    %v4981 = vsub.f32 %v424, %v4980
    %4982 = vmatpush.msra.mxu0 %v4981
    %v4983 = vand.u32 %v423, 4294901760
    %v4984 = vsub.f32 %v423, %v4983
    %4985 = vmatpush.msra.mxu0 %v4984
    %v4986 = vand.u32 %v422, 4294901760
    %v4987 = vsub.f32 %v422, %v4986
    %4988 = vmatpush.msra.mxu0 %v4987
    %v4989 = vand.u32 %v421, 4294901760
    %v4990 = vsub.f32 %v421, %v4989
    %4991 = vmatpush.msra.mxu0 %v4990
    %v4992 = vand.u32 %v4032, 4294901760
    %v4993 = vsub.f32 %v4032, %v4992
    %4994 = vmatmul.f32.gmra.mxu0 %v4993
    %v4995 = vpop.f32.mrf.mxu0
    %v4996 = vadd.f32 %v4938, %v4995
    %v4997 = vand.u32 %v4040, 4294901760
    %v4998 = vsub.f32 %v4040, %v4997
    %4999 = vmatmul.f32.gmra.mxu0 %v4998
    %v5000 = vpop.f32.mrf.mxu0
    %v5001 = vadd.f32 %v4942, %v5000
    %5002 = vdwg.mxu0
    %v5003 = vand.u32 %v436, 4294901760
    %5004 = vmatpush.msra.mxu0 %v5003
    %v5005 = vand.u32 %v435, 4294901760
    %5006 = vmatpush.msra.mxu0 %v5005
    %v5007 = vand.u32 %v434, 4294901760
    %5008 = vmatpush.msra.mxu0 %v5007
    %v5009 = vand.u32 %v433, 4294901760
    %5010 = vmatpush.msra.mxu0 %v5009
    %v5011 = vand.u32 %v432, 4294901760
    %5012 = vmatpush.msra.mxu0 %v5011
    %v5013 = vand.u32 %v431, 4294901760
    %5014 = vmatpush.msra.mxu0 %v5013
    %v5015 = vand.u32 %v430, 4294901760
    %5016 = vmatpush.msra.mxu0 %v5015
    %v5017 = vand.u32 %v429, 4294901760
    %5018 = vmatpush.msra.mxu0 %v5017
    %v5019 = vand.u32 %v428, 4294901760
    %5020 = vmatpush.msra.mxu0 %v5019
    %v5021 = vand.u32 %v427, 4294901760
    %5022 = vmatpush.msra.mxu0 %v5021
    %v5023 = vand.u32 %v426, 4294901760
    %5024 = vmatpush.msra.mxu0 %v5023
    %v5025 = vand.u32 %v425, 4294901760
    %5026 = vmatpush.msra.mxu0 %v5025
    %v5027 = vand.u32 %v424, 4294901760
    %5028 = vmatpush.msra.mxu0 %v5027
    %v5029 = vand.u32 %v423, 4294901760
    %5030 = vmatpush.msra.mxu0 %v5029
    %v5031 = vand.u32 %v422, 4294901760
    %5032 = vmatpush.msra.mxu0 %v5031
    %v5033 = vand.u32 %v421, 4294901760
    %5034 = vmatpush.msra.mxu0 %v5033
    %v5035 = vand.u32 %v4032, 4294901760
    %v5036 = vsub.f32 %v4032, %v5035
    %v5037 = vand.u32 %v5036, 4294901760
    %5038 = vmatmul.f32.gmra.mxu0 %v5037
    %v5039 = vpop.f32.mrf.mxu0
    %v5040 = vadd.f32 %v4996, %v5039
    %v5041 = vand.u32 %v4040, 4294901760
    %v5042 = vsub.f32 %v4040, %v5041
    %v5043 = vand.u32 %v5042, 4294901760
    %5044 = vmatmul.f32.gmra.mxu0 %v5043
    %v5045 = vpop.f32.mrf.mxu0
    %v5046 = vadd.f32 %v5001, %v5045
    %5047 = vdwg.mxu0
    %v5048 = vand.u32 %v436, 4294901760
    %v5049 = vsub.f32 %v436, %v5048
    %v5050 = vand.u32 %v5049, 4294901760
    %5051 = vmatpush.msra.mxu0 %v5050
    %v5052 = vand.u32 %v435, 4294901760
    %v5053 = vsub.f32 %v435, %v5052
    %v5054 = vand.u32 %v5053, 4294901760
    %5055 = vmatpush.msra.mxu0 %v5054
    %v5056 = vand.u32 %v434, 4294901760
    %v5057 = vsub.f32 %v434, %v5056
    %v5058 = vand.u32 %v5057, 4294901760
    %5059 = vmatpush.msra.mxu0 %v5058
    %v5060 = vand.u32 %v433, 4294901760
    %v5061 = vsub.f32 %v433, %v5060
    %v5062 = vand.u32 %v5061, 4294901760
    %5063 = vmatpush.msra.mxu0 %v5062
    %v5064 = vand.u32 %v432, 4294901760
    %v5065 = vsub.f32 %v432, %v5064
    %v5066 = vand.u32 %v5065, 4294901760
    %5067 = vmatpush.msra.mxu0 %v5066
    %v5068 = vand.u32 %v431, 4294901760
    %v5069 = vsub.f32 %v431, %v5068
    %v5070 = vand.u32 %v5069, 4294901760
    %5071 = vmatpush.msra.mxu0 %v5070
    %v5072 = vand.u32 %v430, 4294901760
    %v5073 = vsub.f32 %v430, %v5072
    %v5074 = vand.u32 %v5073, 4294901760
    %5075 = vmatpush.msra.mxu0 %v5074
    %v5076 = vand.u32 %v429, 4294901760
    %v5077 = vsub.f32 %v429, %v5076
    %v5078 = vand.u32 %v5077, 4294901760
    %5079 = vmatpush.msra.mxu0 %v5078
    %v5080 = vand.u32 %v428, 4294901760
    %v5081 = vsub.f32 %v428, %v5080
    %v5082 = vand.u32 %v5081, 4294901760
    %5083 = vmatpush.msra.mxu0 %v5082
    %v5084 = vand.u32 %v427, 4294901760
    %v5085 = vsub.f32 %v427, %v5084
    %v5086 = vand.u32 %v5085, 4294901760
    %5087 = vmatpush.msra.mxu0 %v5086
    %v5088 = vand.u32 %v426, 4294901760
    %v5089 = vsub.f32 %v426, %v5088
    %v5090 = vand.u32 %v5089, 4294901760
    %5091 = vmatpush.msra.mxu0 %v5090
    %v5092 = vand.u32 %v425, 4294901760
    %v5093 = vsub.f32 %v425, %v5092
    %v5094 = vand.u32 %v5093, 4294901760
    %5095 = vmatpush.msra.mxu0 %v5094
    %v5096 = vand.u32 %v424, 4294901760
    %v5097 = vsub.f32 %v424, %v5096
    %v5098 = vand.u32 %v5097, 4294901760
    %5099 = vmatpush.msra.mxu0 %v5098
    %v5100 = vand.u32 %v423, 4294901760
    %v5101 = vsub.f32 %v423, %v5100
    %v5102 = vand.u32 %v5101, 4294901760
    %5103 = vmatpush.msra.mxu0 %v5102
    %v5104 = vand.u32 %v422, 4294901760
    %v5105 = vsub.f32 %v422, %v5104
    %v5106 = vand.u32 %v5105, 4294901760
    %5107 = vmatpush.msra.mxu0 %v5106
    %v5108 = vand.u32 %v421, 4294901760
    %v5109 = vsub.f32 %v421, %v5108
    %v5110 = vand.u32 %v5109, 4294901760
    %5111 = vmatpush.msra.mxu0 %v5110
    %v5112 = vand.u32 %v4032, 4294901760
    %5113 = vmatmul.f32.gmra.mxu0 %v5112
    %v5114 = vpop.f32.mrf.mxu0
    %v5115 = vadd.f32 %v5040, %v5114
    %v5116 = vand.u32 %v4040, 4294901760
    %5117 = vmatmul.f32.gmra.mxu0 %v5116
    %v5118 = vpop.f32.mrf.mxu0
    %v5119 = vadd.f32 %v5046, %v5118
    %5120 = vdwg.mxu0
    %v5121 = vand.u32 %v436, 4294901760
    %5122 = vmatpush.msra.mxu0 %v5121
    %v5123 = vand.u32 %v435, 4294901760
    %5124 = vmatpush.msra.mxu0 %v5123
    %v5125 = vand.u32 %v434, 4294901760
    %5126 = vmatpush.msra.mxu0 %v5125
    %v5127 = vand.u32 %v433, 4294901760
    %5128 = vmatpush.msra.mxu0 %v5127
    %v5129 = vand.u32 %v432, 4294901760
    %5130 = vmatpush.msra.mxu0 %v5129
    %v5131 = vand.u32 %v431, 4294901760
    %5132 = vmatpush.msra.mxu0 %v5131
    %v5133 = vand.u32 %v430, 4294901760
    %5134 = vmatpush.msra.mxu0 %v5133
    %v5135 = vand.u32 %v429, 4294901760
    %5136 = vmatpush.msra.mxu0 %v5135
    %v5137 = vand.u32 %v428, 4294901760
    %5138 = vmatpush.msra.mxu0 %v5137
    %v5139 = vand.u32 %v427, 4294901760
    %5140 = vmatpush.msra.mxu0 %v5139
    %v5141 = vand.u32 %v426, 4294901760
    %5142 = vmatpush.msra.mxu0 %v5141
    %v5143 = vand.u32 %v425, 4294901760
    %5144 = vmatpush.msra.mxu0 %v5143
    %v5145 = vand.u32 %v424, 4294901760
    %5146 = vmatpush.msra.mxu0 %v5145
    %v5147 = vand.u32 %v423, 4294901760
    %5148 = vmatpush.msra.mxu0 %v5147
    %v5149 = vand.u32 %v422, 4294901760
    %5150 = vmatpush.msra.mxu0 %v5149
    %v5151 = vand.u32 %v421, 4294901760
    %5152 = vmatpush.msra.mxu0 %v5151
    %v5153 = vand.u32 %v4032, 4294901760
    %5154 = vmatmul.f32.gmra.mxu0 %v5153
    %v5155 = vpop.f32.mrf.mxu0
    %v5156 = vadd.f32 %v5115, %v5155
    %v5157 = vand.u32 %v4040, 4294901760
    %5158 = vmatmul.f32.gmra.mxu0 %v5157
    %v5159 = vpop.f32.mrf.mxu0
    %v5160 = vadd.f32 %v5119, %v5159
    %5161 = vdwg.mxu0
    %v5162 = vand.u32 %v452, 4294901760
    %5163 = vmatpush.msra.mxu0 %v5162
    %v5164 = vand.u32 %v451, 4294901760
    %5165 = vmatpush.msra.mxu0 %v5164
    %v5166 = vand.u32 %v450, 4294901760
    %5167 = vmatpush.msra.mxu0 %v5166
    %v5168 = vand.u32 %v449, 4294901760
    %5169 = vmatpush.msra.mxu0 %v5168
    %v5170 = vand.u32 %v448, 4294901760
    %5171 = vmatpush.msra.mxu0 %v5170
    %v5172 = vand.u32 %v447, 4294901760
    %5173 = vmatpush.msra.mxu0 %v5172
    %v5174 = vand.u32 %v446, 4294901760
    %5175 = vmatpush.msra.mxu0 %v5174
    %v5176 = vand.u32 %v445, 4294901760
    %5177 = vmatpush.msra.mxu0 %v5176
    %v5178 = vand.u32 %v444, 4294901760
    %5179 = vmatpush.msra.mxu0 %v5178
    %v5180 = vand.u32 %v443, 4294901760
    %5181 = vmatpush.msra.mxu0 %v5180
    %v5182 = vand.u32 %v442, 4294901760
    %5183 = vmatpush.msra.mxu0 %v5182
    %v5184 = vand.u32 %v441, 4294901760
    %5185 = vmatpush.msra.mxu0 %v5184
    %v5186 = vand.u32 %v440, 4294901760
    %5187 = vmatpush.msra.mxu0 %v5186
    %v5188 = vand.u32 %v439, 4294901760
    %5189 = vmatpush.msra.mxu0 %v5188
    %v5190 = vand.u32 %v438, 4294901760
    %5191 = vmatpush.msra.mxu0 %v5190
    %v5192 = vand.u32 %v437, 4294901760
    %5193 = vmatpush.msra.mxu0 %v5192
    %v5194 = vand.u32 %v4033, 4294901760
    %v5195 = vsub.f32 %v4033, %v5194
    %v5196 = vand.u32 %v5195, 4294901760
    %v5197 = vsub.f32 %v5195, %v5196
    %v5198 = vand.u32 %v5197, 4294901760
    %5199 = vmatmul.f32.gmra.mxu0 %v5198
    %v5200 = vpop.f32.mrf.mxu0
    %v5201 = vadd.f32 %v5156, %v5200
    %v5202 = vand.u32 %v4041, 4294901760
    %v5203 = vsub.f32 %v4041, %v5202
    %v5204 = vand.u32 %v5203, 4294901760
    %v5205 = vsub.f32 %v5203, %v5204
    %v5206 = vand.u32 %v5205, 4294901760
    %5207 = vmatmul.f32.gmra.mxu0 %v5206
    %v5208 = vpop.f32.mrf.mxu0
    %v5209 = vadd.f32 %v5160, %v5208
    %5210 = vdwg.mxu0
    %v5211 = vand.u32 %v452, 4294901760
    %v5212 = vsub.f32 %v452, %v5211
    %v5213 = vand.u32 %v5212, 4294901760
    %v5214 = vsub.f32 %v5212, %v5213
    %v5215 = vand.u32 %v5214, 4294901760
    %5216 = vmatpush.msra.mxu0 %v5215
    %v5217 = vand.u32 %v451, 4294901760
    %v5218 = vsub.f32 %v451, %v5217
    %v5219 = vand.u32 %v5218, 4294901760
    %v5220 = vsub.f32 %v5218, %v5219
    %v5221 = vand.u32 %v5220, 4294901760
    %5222 = vmatpush.msra.mxu0 %v5221
    %v5223 = vand.u32 %v450, 4294901760
    %v5224 = vsub.f32 %v450, %v5223
    %v5225 = vand.u32 %v5224, 4294901760
    %v5226 = vsub.f32 %v5224, %v5225
    %v5227 = vand.u32 %v5226, 4294901760
    %5228 = vmatpush.msra.mxu0 %v5227
    %v5229 = vand.u32 %v449, 4294901760
    %v5230 = vsub.f32 %v449, %v5229
    %v5231 = vand.u32 %v5230, 4294901760
    %v5232 = vsub.f32 %v5230, %v5231
    %v5233 = vand.u32 %v5232, 4294901760
    %5234 = vmatpush.msra.mxu0 %v5233
    %v5235 = vand.u32 %v448, 4294901760
    %v5236 = vsub.f32 %v448, %v5235
    %v5237 = vand.u32 %v5236, 4294901760
    %v5238 = vsub.f32 %v5236, %v5237
    %v5239 = vand.u32 %v5238, 4294901760
    %5240 = vmatpush.msra.mxu0 %v5239
    %v5241 = vand.u32 %v447, 4294901760
    %v5242 = vsub.f32 %v447, %v5241
    %v5243 = vand.u32 %v5242, 4294901760
    %v5244 = vsub.f32 %v5242, %v5243
    %v5245 = vand.u32 %v5244, 4294901760
    %5246 = vmatpush.msra.mxu0 %v5245
    %v5247 = vand.u32 %v446, 4294901760
    %v5248 = vsub.f32 %v446, %v5247
    %v5249 = vand.u32 %v5248, 4294901760
    %v5250 = vsub.f32 %v5248, %v5249
    %v5251 = vand.u32 %v5250, 4294901760
    %5252 = vmatpush.msra.mxu0 %v5251
    %v5253 = vand.u32 %v445, 4294901760
    %v5254 = vsub.f32 %v445, %v5253
    %v5255 = vand.u32 %v5254, 4294901760
    %v5256 = vsub.f32 %v5254, %v5255
    %v5257 = vand.u32 %v5256, 4294901760
    %5258 = vmatpush.msra.mxu0 %v5257
    %v5259 = vand.u32 %v444, 4294901760
    %v5260 = vsub.f32 %v444, %v5259
    %v5261 = vand.u32 %v5260, 4294901760
    %v5262 = vsub.f32 %v5260, %v5261
    %v5263 = vand.u32 %v5262, 4294901760
    %5264 = vmatpush.msra.mxu0 %v5263
    %v5265 = vand.u32 %v443, 4294901760
    %v5266 = vsub.f32 %v443, %v5265
    %v5267 = vand.u32 %v5266, 4294901760
    %v5268 = vsub.f32 %v5266, %v5267
    %v5269 = vand.u32 %v5268, 4294901760
    %5270 = vmatpush.msra.mxu0 %v5269
    %v5271 = vand.u32 %v442, 4294901760
    %v5272 = vsub.f32 %v442, %v5271
    %v5273 = vand.u32 %v5272, 4294901760
    %v5274 = vsub.f32 %v5272, %v5273
    %v5275 = vand.u32 %v5274, 4294901760
    %5276 = vmatpush.msra.mxu0 %v5275
    %v5277 = vand.u32 %v441, 4294901760
    %v5278 = vsub.f32 %v441, %v5277
    %v5279 = vand.u32 %v5278, 4294901760
    %v5280 = vsub.f32 %v5278, %v5279
    %v5281 = vand.u32 %v5280, 4294901760
    %5282 = vmatpush.msra.mxu0 %v5281
    %v5283 = vand.u32 %v440, 4294901760
    %v5284 = vsub.f32 %v440, %v5283
    %v5285 = vand.u32 %v5284, 4294901760
    %v5286 = vsub.f32 %v5284, %v5285
    %v5287 = vand.u32 %v5286, 4294901760
    %5288 = vmatpush.msra.mxu0 %v5287
    %v5289 = vand.u32 %v439, 4294901760
    %v5290 = vsub.f32 %v439, %v5289
    %v5291 = vand.u32 %v5290, 4294901760
    %v5292 = vsub.f32 %v5290, %v5291
    %v5293 = vand.u32 %v5292, 4294901760
    %5294 = vmatpush.msra.mxu0 %v5293
    %v5295 = vand.u32 %v438, 4294901760
    %v5296 = vsub.f32 %v438, %v5295
    %v5297 = vand.u32 %v5296, 4294901760
    %v5298 = vsub.f32 %v5296, %v5297
    %v5299 = vand.u32 %v5298, 4294901760
    %5300 = vmatpush.msra.mxu0 %v5299
    %v5301 = vand.u32 %v437, 4294901760
    %v5302 = vsub.f32 %v437, %v5301
    %v5303 = vand.u32 %v5302, 4294901760
    %v5304 = vsub.f32 %v5302, %v5303
    %v5305 = vand.u32 %v5304, 4294901760
    %5306 = vmatpush.msra.mxu0 %v5305
    %v5307 = vand.u32 %v4033, 4294901760
    %5308 = vmatmul.f32.gmra.mxu0 %v5307
    %v5309 = vpop.f32.mrf.mxu0
    %v5310 = vadd.f32 %v5201, %v5309
    %v5311 = vand.u32 %v4041, 4294901760
    %5312 = vmatmul.f32.gmra.mxu0 %v5311
    %v5313 = vpop.f32.mrf.mxu0
    %v5314 = vadd.f32 %v5209, %v5313
    %5315 = vdwg.mxu0
    %v5316 = vand.u32 %v452, 4294901760
    %v5317 = vsub.f32 %v452, %v5316
    %5318 = vmatpush.msra.mxu0 %v5317
    %v5319 = vand.u32 %v451, 4294901760
    %v5320 = vsub.f32 %v451, %v5319
    %5321 = vmatpush.msra.mxu0 %v5320
    %v5322 = vand.u32 %v450, 4294901760
    %v5323 = vsub.f32 %v450, %v5322
    %5324 = vmatpush.msra.mxu0 %v5323
    %v5325 = vand.u32 %v449, 4294901760
    %v5326 = vsub.f32 %v449, %v5325
    %5327 = vmatpush.msra.mxu0 %v5326
    %v5328 = vand.u32 %v448, 4294901760
    %v5329 = vsub.f32 %v448, %v5328
    %5330 = vmatpush.msra.mxu0 %v5329
    %v5331 = vand.u32 %v447, 4294901760
    %v5332 = vsub.f32 %v447, %v5331
    %5333 = vmatpush.msra.mxu0 %v5332
    %v5334 = vand.u32 %v446, 4294901760
    %v5335 = vsub.f32 %v446, %v5334
    %5336 = vmatpush.msra.mxu0 %v5335
    %v5337 = vand.u32 %v445, 4294901760
    %v5338 = vsub.f32 %v445, %v5337
    %5339 = vmatpush.msra.mxu0 %v5338
    %v5340 = vand.u32 %v444, 4294901760
    %v5341 = vsub.f32 %v444, %v5340
    %5342 = vmatpush.msra.mxu0 %v5341
    %v5343 = vand.u32 %v443, 4294901760
    %v5344 = vsub.f32 %v443, %v5343
    %5345 = vmatpush.msra.mxu0 %v5344
    %v5346 = vand.u32 %v442, 4294901760
    %v5347 = vsub.f32 %v442, %v5346
    %5348 = vmatpush.msra.mxu0 %v5347
    %v5349 = vand.u32 %v441, 4294901760
    %v5350 = vsub.f32 %v441, %v5349
    %5351 = vmatpush.msra.mxu0 %v5350
    %v5352 = vand.u32 %v440, 4294901760
    %v5353 = vsub.f32 %v440, %v5352
    %5354 = vmatpush.msra.mxu0 %v5353
    %v5355 = vand.u32 %v439, 4294901760
    %v5356 = vsub.f32 %v439, %v5355
    %5357 = vmatpush.msra.mxu0 %v5356
    %v5358 = vand.u32 %v438, 4294901760
    %v5359 = vsub.f32 %v438, %v5358
    %5360 = vmatpush.msra.mxu0 %v5359
    %v5361 = vand.u32 %v437, 4294901760
    %v5362 = vsub.f32 %v437, %v5361
    %5363 = vmatpush.msra.mxu0 %v5362
    %v5364 = vand.u32 %v4033, 4294901760
    %v5365 = vsub.f32 %v4033, %v5364
    %5366 = vmatmul.f32.gmra.mxu0 %v5365
    %v5367 = vpop.f32.mrf.mxu0
    %v5368 = vadd.f32 %v5310, %v5367
    %v5369 = vand.u32 %v4041, 4294901760
    %v5370 = vsub.f32 %v4041, %v5369
    %5371 = vmatmul.f32.gmra.mxu0 %v5370
    %v5372 = vpop.f32.mrf.mxu0
    %v5373 = vadd.f32 %v5314, %v5372
    %5374 = vdwg.mxu0
    %v5375 = vand.u32 %v452, 4294901760
    %5376 = vmatpush.msra.mxu0 %v5375
    %v5377 = vand.u32 %v451, 4294901760
    %5378 = vmatpush.msra.mxu0 %v5377
    %v5379 = vand.u32 %v450, 4294901760
    %5380 = vmatpush.msra.mxu0 %v5379
    %v5381 = vand.u32 %v449, 4294901760
    %5382 = vmatpush.msra.mxu0 %v5381
    %v5383 = vand.u32 %v448, 4294901760
    %5384 = vmatpush.msra.mxu0 %v5383
    %v5385 = vand.u32 %v447, 4294901760
    %5386 = vmatpush.msra.mxu0 %v5385
    %v5387 = vand.u32 %v446, 4294901760
    %5388 = vmatpush.msra.mxu0 %v5387
    %v5389 = vand.u32 %v445, 4294901760
    %5390 = vmatpush.msra.mxu0 %v5389
    %v5391 = vand.u32 %v444, 4294901760
    %5392 = vmatpush.msra.mxu0 %v5391
    %v5393 = vand.u32 %v443, 4294901760
    %5394 = vmatpush.msra.mxu0 %v5393
    %v5395 = vand.u32 %v442, 4294901760
    %5396 = vmatpush.msra.mxu0 %v5395
    %v5397 = vand.u32 %v441, 4294901760
    %5398 = vmatpush.msra.mxu0 %v5397
    %v5399 = vand.u32 %v440, 4294901760
    %5400 = vmatpush.msra.mxu0 %v5399
    %v5401 = vand.u32 %v439, 4294901760
    %5402 = vmatpush.msra.mxu0 %v5401
    %v5403 = vand.u32 %v438, 4294901760
    %5404 = vmatpush.msra.mxu0 %v5403
    %v5405 = vand.u32 %v437, 4294901760
    %5406 = vmatpush.msra.mxu0 %v5405
    %v5407 = vand.u32 %v4033, 4294901760
    %v5408 = vsub.f32 %v4033, %v5407
    %v5409 = vand.u32 %v5408, 4294901760
    %5410 = vmatmul.f32.gmra.mxu0 %v5409
    %v5411 = vpop.f32.mrf.mxu0
    %v5412 = vadd.f32 %v5368, %v5411
    %v5413 = vand.u32 %v4041, 4294901760
    %v5414 = vsub.f32 %v4041, %v5413
    %v5415 = vand.u32 %v5414, 4294901760
    %5416 = vmatmul.f32.gmra.mxu0 %v5415
    %v5417 = vpop.f32.mrf.mxu0
    %v5418 = vadd.f32 %v5373, %v5417
    %5419 = vdwg.mxu0
    %v5420 = vand.u32 %v452, 4294901760
    %v5421 = vsub.f32 %v452, %v5420
    %v5422 = vand.u32 %v5421, 4294901760
    %5423 = vmatpush.msra.mxu0 %v5422
    %v5424 = vand.u32 %v451, 4294901760
    %v5425 = vsub.f32 %v451, %v5424
    %v5426 = vand.u32 %v5425, 4294901760
    %5427 = vmatpush.msra.mxu0 %v5426
    %v5428 = vand.u32 %v450, 4294901760
    %v5429 = vsub.f32 %v450, %v5428
    %v5430 = vand.u32 %v5429, 4294901760
    %5431 = vmatpush.msra.mxu0 %v5430
    %v5432 = vand.u32 %v449, 4294901760
    %v5433 = vsub.f32 %v449, %v5432
    %v5434 = vand.u32 %v5433, 4294901760
    %5435 = vmatpush.msra.mxu0 %v5434
    %v5436 = vand.u32 %v448, 4294901760
    %v5437 = vsub.f32 %v448, %v5436
    %v5438 = vand.u32 %v5437, 4294901760
    %5439 = vmatpush.msra.mxu0 %v5438
    %v5440 = vand.u32 %v447, 4294901760
    %v5441 = vsub.f32 %v447, %v5440
    %v5442 = vand.u32 %v5441, 4294901760
    %5443 = vmatpush.msra.mxu0 %v5442
    %v5444 = vand.u32 %v446, 4294901760
    %v5445 = vsub.f32 %v446, %v5444
    %v5446 = vand.u32 %v5445, 4294901760
    %5447 = vmatpush.msra.mxu0 %v5446
    %v5448 = vand.u32 %v445, 4294901760
    %v5449 = vsub.f32 %v445, %v5448
    %v5450 = vand.u32 %v5449, 4294901760
    %5451 = vmatpush.msra.mxu0 %v5450
    %v5452 = vand.u32 %v444, 4294901760
    %v5453 = vsub.f32 %v444, %v5452
    %v5454 = vand.u32 %v5453, 4294901760
    %5455 = vmatpush.msra.mxu0 %v5454
    %v5456 = vand.u32 %v443, 4294901760
    %v5457 = vsub.f32 %v443, %v5456
    %v5458 = vand.u32 %v5457, 4294901760
    %5459 = vmatpush.msra.mxu0 %v5458
    %v5460 = vand.u32 %v442, 4294901760
    %v5461 = vsub.f32 %v442, %v5460
    %v5462 = vand.u32 %v5461, 4294901760
    %5463 = vmatpush.msra.mxu0 %v5462
    %v5464 = vand.u32 %v441, 4294901760
    %v5465 = vsub.f32 %v441, %v5464
    %v5466 = vand.u32 %v5465, 4294901760
    %5467 = vmatpush.msra.mxu0 %v5466
    %v5468 = vand.u32 %v440, 4294901760
    %v5469 = vsub.f32 %v440, %v5468
    %v5470 = vand.u32 %v5469, 4294901760
    %5471 = vmatpush.msra.mxu0 %v5470
    %v5472 = vand.u32 %v439, 4294901760
    %v5473 = vsub.f32 %v439, %v5472
    %v5474 = vand.u32 %v5473, 4294901760
    %5475 = vmatpush.msra.mxu0 %v5474
    %v5476 = vand.u32 %v438, 4294901760
    %v5477 = vsub.f32 %v438, %v5476
    %v5478 = vand.u32 %v5477, 4294901760
    %5479 = vmatpush.msra.mxu0 %v5478
    %v5480 = vand.u32 %v437, 4294901760
    %v5481 = vsub.f32 %v437, %v5480
    %v5482 = vand.u32 %v5481, 4294901760
    %5483 = vmatpush.msra.mxu0 %v5482
    %v5484 = vand.u32 %v4033, 4294901760
    %5485 = vmatmul.f32.gmra.mxu0 %v5484
    %v5486 = vpop.f32.mrf.mxu0
    %v5487 = vadd.f32 %v5412, %v5486
    %v5488 = vand.u32 %v4041, 4294901760
    %5489 = vmatmul.f32.gmra.mxu0 %v5488
    %v5490 = vpop.f32.mrf.mxu0
    %v5491 = vadd.f32 %v5418, %v5490
    %5492 = vdwg.mxu0
    %v5493 = vand.u32 %v452, 4294901760
    %5494 = vmatpush.msra.mxu0 %v5493
    %v5495 = vand.u32 %v451, 4294901760
    %5496 = vmatpush.msra.mxu0 %v5495
    %v5497 = vand.u32 %v450, 4294901760
    %5498 = vmatpush.msra.mxu0 %v5497
    %v5499 = vand.u32 %v449, 4294901760
    %5500 = vmatpush.msra.mxu0 %v5499
    %v5501 = vand.u32 %v448, 4294901760
    %5502 = vmatpush.msra.mxu0 %v5501
    %v5503 = vand.u32 %v447, 4294901760
    %5504 = vmatpush.msra.mxu0 %v5503
    %v5505 = vand.u32 %v446, 4294901760
    %5506 = vmatpush.msra.mxu0 %v5505
    %v5507 = vand.u32 %v445, 4294901760
    %5508 = vmatpush.msra.mxu0 %v5507
    %v5509 = vand.u32 %v444, 4294901760
    %5510 = vmatpush.msra.mxu0 %v5509
    %v5511 = vand.u32 %v443, 4294901760
    %5512 = vmatpush.msra.mxu0 %v5511
    %v5513 = vand.u32 %v442, 4294901760
    %5514 = vmatpush.msra.mxu0 %v5513
    %v5515 = vand.u32 %v441, 4294901760
    %5516 = vmatpush.msra.mxu0 %v5515
    %v5517 = vand.u32 %v440, 4294901760
    %5518 = vmatpush.msra.mxu0 %v5517
    %v5519 = vand.u32 %v439, 4294901760
    %5520 = vmatpush.msra.mxu0 %v5519
    %v5521 = vand.u32 %v438, 4294901760
    %5522 = vmatpush.msra.mxu0 %v5521
    %v5523 = vand.u32 %v437, 4294901760
    %5524 = vmatpush.msra.mxu0 %v5523
    %v5525 = vand.u32 %v4033, 4294901760
    %5526 = vmatmul.f32.gmra.mxu0 %v5525
    %v5527 = vpop.f32.mrf.mxu0
    %v5528 = vadd.f32 %v5487, %v5527
    %v5529 = vand.u32 %v4041, 4294901760
    %5530 = vmatmul.f32.gmra.mxu0 %v5529
    %v5531 = vpop.f32.mrf.mxu0
    %v5532 = vadd.f32 %v5491, %v5531
    %5533 = vdwg.mxu0
    %v5534 = vand.u32 %v468, 4294901760
    %5535 = vmatpush.msra.mxu0 %v5534
    %v5536 = vand.u32 %v467, 4294901760
    %5537 = vmatpush.msra.mxu0 %v5536
    %v5538 = vand.u32 %v466, 4294901760
    %5539 = vmatpush.msra.mxu0 %v5538
    %v5540 = vand.u32 %v465, 4294901760
    %5541 = vmatpush.msra.mxu0 %v5540
    %v5542 = vand.u32 %v464, 4294901760
    %5543 = vmatpush.msra.mxu0 %v5542
    %v5544 = vand.u32 %v463, 4294901760
    %5545 = vmatpush.msra.mxu0 %v5544
    %v5546 = vand.u32 %v462, 4294901760
    %5547 = vmatpush.msra.mxu0 %v5546
    %v5548 = vand.u32 %v461, 4294901760
    %5549 = vmatpush.msra.mxu0 %v5548
    %v5550 = vand.u32 %v460, 4294901760
    %5551 = vmatpush.msra.mxu0 %v5550
    %v5552 = vand.u32 %v459, 4294901760
    %5553 = vmatpush.msra.mxu0 %v5552
    %v5554 = vand.u32 %v458, 4294901760
    %5555 = vmatpush.msra.mxu0 %v5554
    %v5556 = vand.u32 %v457, 4294901760
    %5557 = vmatpush.msra.mxu0 %v5556
    %v5558 = vand.u32 %v456, 4294901760
    %5559 = vmatpush.msra.mxu0 %v5558
    %v5560 = vand.u32 %v455, 4294901760
    %5561 = vmatpush.msra.mxu0 %v5560
    %v5562 = vand.u32 %v454, 4294901760
    %5563 = vmatpush.msra.mxu0 %v5562
    %v5564 = vand.u32 %v453, 4294901760
    %5565 = vmatpush.msra.mxu0 %v5564
    %v5566 = vand.u32 %v4034, 4294901760
    %v5567 = vsub.f32 %v4034, %v5566
    %v5568 = vand.u32 %v5567, 4294901760
    %v5569 = vsub.f32 %v5567, %v5568
    %v5570 = vand.u32 %v5569, 4294901760
    %5571 = vmatmul.f32.gmra.mxu0 %v5570
    %v5572 = vpop.f32.mrf.mxu0
    %v5573 = vadd.f32 %v5528, %v5572
    %v5574 = vand.u32 %v4042, 4294901760
    %v5575 = vsub.f32 %v4042, %v5574
    %v5576 = vand.u32 %v5575, 4294901760
    %v5577 = vsub.f32 %v5575, %v5576
    %v5578 = vand.u32 %v5577, 4294901760
    %5579 = vmatmul.f32.gmra.mxu0 %v5578
    %v5580 = vpop.f32.mrf.mxu0
    %v5581 = vadd.f32 %v5532, %v5580
    %5582 = vdwg.mxu0
    %v5583 = vand.u32 %v468, 4294901760
    %v5584 = vsub.f32 %v468, %v5583
    %v5585 = vand.u32 %v5584, 4294901760
    %v5586 = vsub.f32 %v5584, %v5585
    %v5587 = vand.u32 %v5586, 4294901760
    %5588 = vmatpush.msra.mxu0 %v5587
    %v5589 = vand.u32 %v467, 4294901760
    %v5590 = vsub.f32 %v467, %v5589
    %v5591 = vand.u32 %v5590, 4294901760
    %v5592 = vsub.f32 %v5590, %v5591
    %v5593 = vand.u32 %v5592, 4294901760
    %5594 = vmatpush.msra.mxu0 %v5593
    %v5595 = vand.u32 %v466, 4294901760
    %v5596 = vsub.f32 %v466, %v5595
    %v5597 = vand.u32 %v5596, 4294901760
    %v5598 = vsub.f32 %v5596, %v5597
    %v5599 = vand.u32 %v5598, 4294901760
    %5600 = vmatpush.msra.mxu0 %v5599
    %v5601 = vand.u32 %v465, 4294901760
    %v5602 = vsub.f32 %v465, %v5601
    %v5603 = vand.u32 %v5602, 4294901760
    %v5604 = vsub.f32 %v5602, %v5603
    %v5605 = vand.u32 %v5604, 4294901760
    %5606 = vmatpush.msra.mxu0 %v5605
    %v5607 = vand.u32 %v464, 4294901760
    %v5608 = vsub.f32 %v464, %v5607
    %v5609 = vand.u32 %v5608, 4294901760
    %v5610 = vsub.f32 %v5608, %v5609
    %v5611 = vand.u32 %v5610, 4294901760
    %5612 = vmatpush.msra.mxu0 %v5611
    %v5613 = vand.u32 %v463, 4294901760
    %v5614 = vsub.f32 %v463, %v5613
    %v5615 = vand.u32 %v5614, 4294901760
    %v5616 = vsub.f32 %v5614, %v5615
    %v5617 = vand.u32 %v5616, 4294901760
    %5618 = vmatpush.msra.mxu0 %v5617
    %v5619 = vand.u32 %v462, 4294901760
    %v5620 = vsub.f32 %v462, %v5619
    %v5621 = vand.u32 %v5620, 4294901760
    %v5622 = vsub.f32 %v5620, %v5621
    %v5623 = vand.u32 %v5622, 4294901760
    %5624 = vmatpush.msra.mxu0 %v5623
    %v5625 = vand.u32 %v461, 4294901760
    %v5626 = vsub.f32 %v461, %v5625
    %v5627 = vand.u32 %v5626, 4294901760
    %v5628 = vsub.f32 %v5626, %v5627
    %v5629 = vand.u32 %v5628, 4294901760
    %5630 = vmatpush.msra.mxu0 %v5629
    %v5631 = vand.u32 %v460, 4294901760
    %v5632 = vsub.f32 %v460, %v5631
    %v5633 = vand.u32 %v5632, 4294901760
    %v5634 = vsub.f32 %v5632, %v5633
    %v5635 = vand.u32 %v5634, 4294901760
    %5636 = vmatpush.msra.mxu0 %v5635
    %v5637 = vand.u32 %v459, 4294901760
    %v5638 = vsub.f32 %v459, %v5637
    %v5639 = vand.u32 %v5638, 4294901760
    %v5640 = vsub.f32 %v5638, %v5639
    %v5641 = vand.u32 %v5640, 4294901760
    %5642 = vmatpush.msra.mxu0 %v5641
    %v5643 = vand.u32 %v458, 4294901760
    %v5644 = vsub.f32 %v458, %v5643
    %v5645 = vand.u32 %v5644, 4294901760
    %v5646 = vsub.f32 %v5644, %v5645
    %v5647 = vand.u32 %v5646, 4294901760
    %5648 = vmatpush.msra.mxu0 %v5647
    %v5649 = vand.u32 %v457, 4294901760
    %v5650 = vsub.f32 %v457, %v5649
    %v5651 = vand.u32 %v5650, 4294901760
    %v5652 = vsub.f32 %v5650, %v5651
    %v5653 = vand.u32 %v5652, 4294901760
    %5654 = vmatpush.msra.mxu0 %v5653
    %v5655 = vand.u32 %v456, 4294901760
    %v5656 = vsub.f32 %v456, %v5655
    %v5657 = vand.u32 %v5656, 4294901760
    %v5658 = vsub.f32 %v5656, %v5657
    %v5659 = vand.u32 %v5658, 4294901760
    %5660 = vmatpush.msra.mxu0 %v5659
    %v5661 = vand.u32 %v455, 4294901760
    %v5662 = vsub.f32 %v455, %v5661
    %v5663 = vand.u32 %v5662, 4294901760
    %v5664 = vsub.f32 %v5662, %v5663
    %v5665 = vand.u32 %v5664, 4294901760
    %5666 = vmatpush.msra.mxu0 %v5665
    %v5667 = vand.u32 %v454, 4294901760
    %v5668 = vsub.f32 %v454, %v5667
    %v5669 = vand.u32 %v5668, 4294901760
    %v5670 = vsub.f32 %v5668, %v5669
    %v5671 = vand.u32 %v5670, 4294901760
    %5672 = vmatpush.msra.mxu0 %v5671
    %v5673 = vand.u32 %v453, 4294901760
    %v5674 = vsub.f32 %v453, %v5673
    %v5675 = vand.u32 %v5674, 4294901760
    %v5676 = vsub.f32 %v5674, %v5675
    %v5677 = vand.u32 %v5676, 4294901760
    %5678 = vmatpush.msra.mxu0 %v5677
    %v5679 = vand.u32 %v4034, 4294901760
    %5680 = vmatmul.f32.gmra.mxu0 %v5679
    %v5681 = vpop.f32.mrf.mxu0
    %v5682 = vadd.f32 %v5573, %v5681
    %v5683 = vand.u32 %v4042, 4294901760
    %5684 = vmatmul.f32.gmra.mxu0 %v5683
    %v5685 = vpop.f32.mrf.mxu0
    %v5686 = vadd.f32 %v5581, %v5685
    %5687 = vdwg.mxu0
    %v5688 = vand.u32 %v468, 4294901760
    %v5689 = vsub.f32 %v468, %v5688
    %5690 = vmatpush.msra.mxu0 %v5689
    %v5691 = vand.u32 %v467, 4294901760
    %v5692 = vsub.f32 %v467, %v5691
    %5693 = vmatpush.msra.mxu0 %v5692
    %v5694 = vand.u32 %v466, 4294901760
    %v5695 = vsub.f32 %v466, %v5694
    %5696 = vmatpush.msra.mxu0 %v5695
    %v5697 = vand.u32 %v465, 4294901760
    %v5698 = vsub.f32 %v465, %v5697
    %5699 = vmatpush.msra.mxu0 %v5698
    %v5700 = vand.u32 %v464, 4294901760
    %v5701 = vsub.f32 %v464, %v5700
    %5702 = vmatpush.msra.mxu0 %v5701
    %v5703 = vand.u32 %v463, 4294901760
    %v5704 = vsub.f32 %v463, %v5703
    %5705 = vmatpush.msra.mxu0 %v5704
    %v5706 = vand.u32 %v462, 4294901760
    %v5707 = vsub.f32 %v462, %v5706
    %5708 = vmatpush.msra.mxu0 %v5707
    %v5709 = vand.u32 %v461, 4294901760
    %v5710 = vsub.f32 %v461, %v5709
    %5711 = vmatpush.msra.mxu0 %v5710
    %v5712 = vand.u32 %v460, 4294901760
    %v5713 = vsub.f32 %v460, %v5712
    %5714 = vmatpush.msra.mxu0 %v5713
    %v5715 = vand.u32 %v459, 4294901760
    %v5716 = vsub.f32 %v459, %v5715
    %5717 = vmatpush.msra.mxu0 %v5716
    %v5718 = vand.u32 %v458, 4294901760
    %v5719 = vsub.f32 %v458, %v5718
    %5720 = vmatpush.msra.mxu0 %v5719
    %v5721 = vand.u32 %v457, 4294901760
    %v5722 = vsub.f32 %v457, %v5721
    %5723 = vmatpush.msra.mxu0 %v5722
    %v5724 = vand.u32 %v456, 4294901760
    %v5725 = vsub.f32 %v456, %v5724
    %5726 = vmatpush.msra.mxu0 %v5725
    %v5727 = vand.u32 %v455, 4294901760
    %v5728 = vsub.f32 %v455, %v5727
    %5729 = vmatpush.msra.mxu0 %v5728
    %v5730 = vand.u32 %v454, 4294901760
    %v5731 = vsub.f32 %v454, %v5730
    %5732 = vmatpush.msra.mxu0 %v5731
    %v5733 = vand.u32 %v453, 4294901760
    %v5734 = vsub.f32 %v453, %v5733
    %5735 = vmatpush.msra.mxu0 %v5734
    %v5736 = vand.u32 %v4034, 4294901760
    %v5737 = vsub.f32 %v4034, %v5736
    %5738 = vmatmul.f32.gmra.mxu0 %v5737
    %v5739 = vpop.f32.mrf.mxu0
    %v5740 = vadd.f32 %v5682, %v5739
    %v5741 = vand.u32 %v4042, 4294901760
    %v5742 = vsub.f32 %v4042, %v5741
    %5743 = vmatmul.f32.gmra.mxu0 %v5742
    %v5744 = vpop.f32.mrf.mxu0
    %v5745 = vadd.f32 %v5686, %v5744
    %5746 = vdwg.mxu0
    %v5747 = vand.u32 %v468, 4294901760
    %5748 = vmatpush.msra.mxu0 %v5747
    %v5749 = vand.u32 %v467, 4294901760
    %5750 = vmatpush.msra.mxu0 %v5749
    %v5751 = vand.u32 %v466, 4294901760
    %5752 = vmatpush.msra.mxu0 %v5751
    %v5753 = vand.u32 %v465, 4294901760
    %5754 = vmatpush.msra.mxu0 %v5753
    %v5755 = vand.u32 %v464, 4294901760
    %5756 = vmatpush.msra.mxu0 %v5755
    %v5757 = vand.u32 %v463, 4294901760
    %5758 = vmatpush.msra.mxu0 %v5757
    %v5759 = vand.u32 %v462, 4294901760
    %5760 = vmatpush.msra.mxu0 %v5759
    %v5761 = vand.u32 %v461, 4294901760
    %5762 = vmatpush.msra.mxu0 %v5761
    %v5763 = vand.u32 %v460, 4294901760
    %5764 = vmatpush.msra.mxu0 %v5763
    %v5765 = vand.u32 %v459, 4294901760
    %5766 = vmatpush.msra.mxu0 %v5765
    %v5767 = vand.u32 %v458, 4294901760
    %5768 = vmatpush.msra.mxu0 %v5767
    %v5769 = vand.u32 %v457, 4294901760
    %5770 = vmatpush.msra.mxu0 %v5769
    %v5771 = vand.u32 %v456, 4294901760
    %5772 = vmatpush.msra.mxu0 %v5771
    %v5773 = vand.u32 %v455, 4294901760
    %5774 = vmatpush.msra.mxu0 %v5773
    %v5775 = vand.u32 %v454, 4294901760
    %5776 = vmatpush.msra.mxu0 %v5775
    %v5777 = vand.u32 %v453, 4294901760
    %5778 = vmatpush.msra.mxu0 %v5777
    %v5779 = vand.u32 %v4034, 4294901760
    %v5780 = vsub.f32 %v4034, %v5779
    %v5781 = vand.u32 %v5780, 4294901760
    %5782 = vmatmul.f32.gmra.mxu0 %v5781
    %v5783 = vpop.f32.mrf.mxu0
    %v5784 = vadd.f32 %v5740, %v5783
    %v5785 = vand.u32 %v4042, 4294901760
    %v5786 = vsub.f32 %v4042, %v5785
    %v5787 = vand.u32 %v5786, 4294901760
    %5788 = vmatmul.f32.gmra.mxu0 %v5787
    %v5789 = vpop.f32.mrf.mxu0
    %v5790 = vadd.f32 %v5745, %v5789
    %5791 = vdwg.mxu0
    %v5792 = vand.u32 %v468, 4294901760
    %v5793 = vsub.f32 %v468, %v5792
    %v5794 = vand.u32 %v5793, 4294901760
    %5795 = vmatpush.msra.mxu0 %v5794
    %v5796 = vand.u32 %v467, 4294901760
    %v5797 = vsub.f32 %v467, %v5796
    %v5798 = vand.u32 %v5797, 4294901760
    %5799 = vmatpush.msra.mxu0 %v5798
    %v5800 = vand.u32 %v466, 4294901760
    %v5801 = vsub.f32 %v466, %v5800
    %v5802 = vand.u32 %v5801, 4294901760
    %5803 = vmatpush.msra.mxu0 %v5802
    %v5804 = vand.u32 %v465, 4294901760
    %v5805 = vsub.f32 %v465, %v5804
    %v5806 = vand.u32 %v5805, 4294901760
    %5807 = vmatpush.msra.mxu0 %v5806
    %v5808 = vand.u32 %v464, 4294901760
    %v5809 = vsub.f32 %v464, %v5808
    %v5810 = vand.u32 %v5809, 4294901760
    %5811 = vmatpush.msra.mxu0 %v5810
    %v5812 = vand.u32 %v463, 4294901760
    %v5813 = vsub.f32 %v463, %v5812
    %v5814 = vand.u32 %v5813, 4294901760
    %5815 = vmatpush.msra.mxu0 %v5814
    %v5816 = vand.u32 %v462, 4294901760
    %v5817 = vsub.f32 %v462, %v5816
    %v5818 = vand.u32 %v5817, 4294901760
    %5819 = vmatpush.msra.mxu0 %v5818
    %v5820 = vand.u32 %v461, 4294901760
    %v5821 = vsub.f32 %v461, %v5820
    %v5822 = vand.u32 %v5821, 4294901760
    %5823 = vmatpush.msra.mxu0 %v5822
    %v5824 = vand.u32 %v460, 4294901760
    %v5825 = vsub.f32 %v460, %v5824
    %v5826 = vand.u32 %v5825, 4294901760
    %5827 = vmatpush.msra.mxu0 %v5826
    %v5828 = vand.u32 %v459, 4294901760
    %v5829 = vsub.f32 %v459, %v5828
    %v5830 = vand.u32 %v5829, 4294901760
    %5831 = vmatpush.msra.mxu0 %v5830
    %v5832 = vand.u32 %v458, 4294901760
    %v5833 = vsub.f32 %v458, %v5832
    %v5834 = vand.u32 %v5833, 4294901760
    %5835 = vmatpush.msra.mxu0 %v5834
    %v5836 = vand.u32 %v457, 4294901760
    %v5837 = vsub.f32 %v457, %v5836
    %v5838 = vand.u32 %v5837, 4294901760
    %5839 = vmatpush.msra.mxu0 %v5838
    %v5840 = vand.u32 %v456, 4294901760
    %v5841 = vsub.f32 %v456, %v5840
    %v5842 = vand.u32 %v5841, 4294901760
    %5843 = vmatpush.msra.mxu0 %v5842
    %v5844 = vand.u32 %v455, 4294901760
    %v5845 = vsub.f32 %v455, %v5844
    %v5846 = vand.u32 %v5845, 4294901760
    %5847 = vmatpush.msra.mxu0 %v5846
    %v5848 = vand.u32 %v454, 4294901760
    %v5849 = vsub.f32 %v454, %v5848
    %v5850 = vand.u32 %v5849, 4294901760
    %5851 = vmatpush.msra.mxu0 %v5850
    %v5852 = vand.u32 %v453, 4294901760
    %v5853 = vsub.f32 %v453, %v5852
    %v5854 = vand.u32 %v5853, 4294901760
    %5855 = vmatpush.msra.mxu0 %v5854
    %v5856 = vand.u32 %v4034, 4294901760
    %5857 = vmatmul.f32.gmra.mxu0 %v5856
    %v5858 = vpop.f32.mrf.mxu0
    %v5859 = vadd.f32 %v5784, %v5858
    %v5860 = vand.u32 %v4042, 4294901760
    %5861 = vmatmul.f32.gmra.mxu0 %v5860
    %v5862 = vpop.f32.mrf.mxu0
    %v5863 = vadd.f32 %v5790, %v5862
    %5864 = vdwg.mxu0
    %v5865 = vand.u32 %v468, 4294901760
    %5866 = vmatpush.msra.mxu0 %v5865
    %v5867 = vand.u32 %v467, 4294901760
    %5868 = vmatpush.msra.mxu0 %v5867
    %v5869 = vand.u32 %v466, 4294901760
    %5870 = vmatpush.msra.mxu0 %v5869
    %v5871 = vand.u32 %v465, 4294901760
    %5872 = vmatpush.msra.mxu0 %v5871
    %v5873 = vand.u32 %v464, 4294901760
    %5874 = vmatpush.msra.mxu0 %v5873
    %v5875 = vand.u32 %v463, 4294901760
    %5876 = vmatpush.msra.mxu0 %v5875
    %v5877 = vand.u32 %v462, 4294901760
    %5878 = vmatpush.msra.mxu0 %v5877
    %v5879 = vand.u32 %v461, 4294901760
    %5880 = vmatpush.msra.mxu0 %v5879
    %v5881 = vand.u32 %v460, 4294901760
    %5882 = vmatpush.msra.mxu0 %v5881
    %v5883 = vand.u32 %v459, 4294901760
    %5884 = vmatpush.msra.mxu0 %v5883
    %v5885 = vand.u32 %v458, 4294901760
    %5886 = vmatpush.msra.mxu0 %v5885
    %v5887 = vand.u32 %v457, 4294901760
    %5888 = vmatpush.msra.mxu0 %v5887
    %v5889 = vand.u32 %v456, 4294901760
    %5890 = vmatpush.msra.mxu0 %v5889
    %v5891 = vand.u32 %v455, 4294901760
    %5892 = vmatpush.msra.mxu0 %v5891
    %v5893 = vand.u32 %v454, 4294901760
    %5894 = vmatpush.msra.mxu0 %v5893
    %v5895 = vand.u32 %v453, 4294901760
    %5896 = vmatpush.msra.mxu0 %v5895
    %v5897 = vand.u32 %v4034, 4294901760
    %5898 = vmatmul.f32.gmra.mxu0 %v5897
    %v5899 = vpop.f32.mrf.mxu0
    %v5900 = vadd.f32 %v5859, %v5899
    %v5901 = vand.u32 %v4042, 4294901760
    %5902 = vmatmul.f32.gmra.mxu0 %v5901
    %v5903 = vpop.f32.mrf.mxu0
    %v5904 = vadd.f32 %v5863, %v5903
    %5905 = vdwg.mxu0
    %v5906 = vand.u32 %v484, 4294901760
    %5907 = vmatpush.msra.mxu0 %v5906
    %v5908 = vand.u32 %v483, 4294901760
    %5909 = vmatpush.msra.mxu0 %v5908
    %v5910 = vand.u32 %v482, 4294901760
    %5911 = vmatpush.msra.mxu0 %v5910
    %v5912 = vand.u32 %v481, 4294901760
    %5913 = vmatpush.msra.mxu0 %v5912
    %v5914 = vand.u32 %v480, 4294901760
    %5915 = vmatpush.msra.mxu0 %v5914
    %v5916 = vand.u32 %v479, 4294901760
    %5917 = vmatpush.msra.mxu0 %v5916
    %v5918 = vand.u32 %v478, 4294901760
    %5919 = vmatpush.msra.mxu0 %v5918
    %v5920 = vand.u32 %v477, 4294901760
    %5921 = vmatpush.msra.mxu0 %v5920
    %v5922 = vand.u32 %v476, 4294901760
    %5923 = vmatpush.msra.mxu0 %v5922
    %v5924 = vand.u32 %v475, 4294901760
    %5925 = vmatpush.msra.mxu0 %v5924
    %v5926 = vand.u32 %v474, 4294901760
    %5927 = vmatpush.msra.mxu0 %v5926
    %v5928 = vand.u32 %v473, 4294901760
    %5929 = vmatpush.msra.mxu0 %v5928
    %v5930 = vand.u32 %v472, 4294901760
    %5931 = vmatpush.msra.mxu0 %v5930
    %v5932 = vand.u32 %v471, 4294901760
    %5933 = vmatpush.msra.mxu0 %v5932
    %v5934 = vand.u32 %v470, 4294901760
    %5935 = vmatpush.msra.mxu0 %v5934
    %v5936 = vand.u32 %v469, 4294901760
    %5937 = vmatpush.msra.mxu0 %v5936
    %v5938 = vand.u32 %v4035, 4294901760
    %v5939 = vsub.f32 %v4035, %v5938
    %v5940 = vand.u32 %v5939, 4294901760
    %v5941 = vsub.f32 %v5939, %v5940
    %v5942 = vand.u32 %v5941, 4294901760
    %5943 = vmatmul.f32.gmra.mxu0 %v5942
    %v5944 = vpop.f32.mrf.mxu0
    %v5945 = vadd.f32 %v5900, %v5944
    %v5946 = vand.u32 %v4043, 4294901760
    %v5947 = vsub.f32 %v4043, %v5946
    %v5948 = vand.u32 %v5947, 4294901760
    %v5949 = vsub.f32 %v5947, %v5948
    %v5950 = vand.u32 %v5949, 4294901760
    %5951 = vmatmul.f32.gmra.mxu0 %v5950
    %v5952 = vpop.f32.mrf.mxu0
    %v5953 = vadd.f32 %v5904, %v5952
    %5954 = vdwg.mxu0
    %v5955 = vand.u32 %v484, 4294901760
    %v5956 = vsub.f32 %v484, %v5955
    %v5957 = vand.u32 %v5956, 4294901760
    %v5958 = vsub.f32 %v5956, %v5957
    %v5959 = vand.u32 %v5958, 4294901760
    %5960 = vmatpush.msra.mxu0 %v5959
    %v5961 = vand.u32 %v483, 4294901760
    %v5962 = vsub.f32 %v483, %v5961
    %v5963 = vand.u32 %v5962, 4294901760
    %v5964 = vsub.f32 %v5962, %v5963
    %v5965 = vand.u32 %v5964, 4294901760
    %5966 = vmatpush.msra.mxu0 %v5965
    %v5967 = vand.u32 %v482, 4294901760
    %v5968 = vsub.f32 %v482, %v5967
    %v5969 = vand.u32 %v5968, 4294901760
    %v5970 = vsub.f32 %v5968, %v5969
    %v5971 = vand.u32 %v5970, 4294901760
    %5972 = vmatpush.msra.mxu0 %v5971
    %v5973 = vand.u32 %v481, 4294901760
    %v5974 = vsub.f32 %v481, %v5973
    %v5975 = vand.u32 %v5974, 4294901760
    %v5976 = vsub.f32 %v5974, %v5975
    %v5977 = vand.u32 %v5976, 4294901760
    %5978 = vmatpush.msra.mxu0 %v5977
    %v5979 = vand.u32 %v480, 4294901760
    %v5980 = vsub.f32 %v480, %v5979
    %v5981 = vand.u32 %v5980, 4294901760
    %v5982 = vsub.f32 %v5980, %v5981
    %v5983 = vand.u32 %v5982, 4294901760
    %5984 = vmatpush.msra.mxu0 %v5983
    %v5985 = vand.u32 %v479, 4294901760
    %v5986 = vsub.f32 %v479, %v5985
    %v5987 = vand.u32 %v5986, 4294901760
    %v5988 = vsub.f32 %v5986, %v5987
    %v5989 = vand.u32 %v5988, 4294901760
    %5990 = vmatpush.msra.mxu0 %v5989
    %v5991 = vand.u32 %v478, 4294901760
    %v5992 = vsub.f32 %v478, %v5991
    %v5993 = vand.u32 %v5992, 4294901760
    %v5994 = vsub.f32 %v5992, %v5993
    %v5995 = vand.u32 %v5994, 4294901760
    %5996 = vmatpush.msra.mxu0 %v5995
    %v5997 = vand.u32 %v477, 4294901760
    %v5998 = vsub.f32 %v477, %v5997
    %v5999 = vand.u32 %v5998, 4294901760
    %v6000 = vsub.f32 %v5998, %v5999
    %v6001 = vand.u32 %v6000, 4294901760
    %6002 = vmatpush.msra.mxu0 %v6001
    %v6003 = vand.u32 %v476, 4294901760
    %v6004 = vsub.f32 %v476, %v6003
    %v6005 = vand.u32 %v6004, 4294901760
    %v6006 = vsub.f32 %v6004, %v6005
    %v6007 = vand.u32 %v6006, 4294901760
    %6008 = vmatpush.msra.mxu0 %v6007
    %v6009 = vand.u32 %v475, 4294901760
    %v6010 = vsub.f32 %v475, %v6009
    %v6011 = vand.u32 %v6010, 4294901760
    %v6012 = vsub.f32 %v6010, %v6011
    %v6013 = vand.u32 %v6012, 4294901760
    %6014 = vmatpush.msra.mxu0 %v6013
    %v6015 = vand.u32 %v474, 4294901760
    %v6016 = vsub.f32 %v474, %v6015
    %v6017 = vand.u32 %v6016, 4294901760
    %v6018 = vsub.f32 %v6016, %v6017
    %v6019 = vand.u32 %v6018, 4294901760
    %6020 = vmatpush.msra.mxu0 %v6019
    %v6021 = vand.u32 %v473, 4294901760
    %v6022 = vsub.f32 %v473, %v6021
    %v6023 = vand.u32 %v6022, 4294901760
    %v6024 = vsub.f32 %v6022, %v6023
    %v6025 = vand.u32 %v6024, 4294901760
    %6026 = vmatpush.msra.mxu0 %v6025
    %v6027 = vand.u32 %v472, 4294901760
    %v6028 = vsub.f32 %v472, %v6027
    %v6029 = vand.u32 %v6028, 4294901760
    %v6030 = vsub.f32 %v6028, %v6029
    %v6031 = vand.u32 %v6030, 4294901760
    %6032 = vmatpush.msra.mxu0 %v6031
    %v6033 = vand.u32 %v471, 4294901760
    %v6034 = vsub.f32 %v471, %v6033
    %v6035 = vand.u32 %v6034, 4294901760
    %v6036 = vsub.f32 %v6034, %v6035
    %v6037 = vand.u32 %v6036, 4294901760
    %6038 = vmatpush.msra.mxu0 %v6037
    %v6039 = vand.u32 %v470, 4294901760
    %v6040 = vsub.f32 %v470, %v6039
    %v6041 = vand.u32 %v6040, 4294901760
    %v6042 = vsub.f32 %v6040, %v6041
    %v6043 = vand.u32 %v6042, 4294901760
    %6044 = vmatpush.msra.mxu0 %v6043
    %v6045 = vand.u32 %v469, 4294901760
    %v6046 = vsub.f32 %v469, %v6045
    %v6047 = vand.u32 %v6046, 4294901760
    %v6048 = vsub.f32 %v6046, %v6047
    %v6049 = vand.u32 %v6048, 4294901760
    %6050 = vmatpush.msra.mxu0 %v6049
    %v6051 = vand.u32 %v4035, 4294901760
    %6052 = vmatmul.f32.gmra.mxu0 %v6051
    %v6053 = vpop.f32.mrf.mxu0
    %v6054 = vadd.f32 %v5945, %v6053
    %v6055 = vand.u32 %v4043, 4294901760
    %6056 = vmatmul.f32.gmra.mxu0 %v6055
    %v6057 = vpop.f32.mrf.mxu0
    %v6058 = vadd.f32 %v5953, %v6057
    %6059 = vdwg.mxu0
    %v6060 = vand.u32 %v484, 4294901760
    %v6061 = vsub.f32 %v484, %v6060
    %6062 = vmatpush.msra.mxu0 %v6061
    %v6063 = vand.u32 %v483, 4294901760
    %v6064 = vsub.f32 %v483, %v6063
    %6065 = vmatpush.msra.mxu0 %v6064
    %v6066 = vand.u32 %v482, 4294901760
    %v6067 = vsub.f32 %v482, %v6066
    %6068 = vmatpush.msra.mxu0 %v6067
    %v6069 = vand.u32 %v481, 4294901760
    %v6070 = vsub.f32 %v481, %v6069
    %6071 = vmatpush.msra.mxu0 %v6070
    %v6072 = vand.u32 %v480, 4294901760
    %v6073 = vsub.f32 %v480, %v6072
    %6074 = vmatpush.msra.mxu0 %v6073
    %v6075 = vand.u32 %v479, 4294901760
    %v6076 = vsub.f32 %v479, %v6075
    %6077 = vmatpush.msra.mxu0 %v6076
    %v6078 = vand.u32 %v478, 4294901760
    %v6079 = vsub.f32 %v478, %v6078
    %6080 = vmatpush.msra.mxu0 %v6079
    %v6081 = vand.u32 %v477, 4294901760
    %v6082 = vsub.f32 %v477, %v6081
    %6083 = vmatpush.msra.mxu0 %v6082
    %v6084 = vand.u32 %v476, 4294901760
    %v6085 = vsub.f32 %v476, %v6084
    %6086 = vmatpush.msra.mxu0 %v6085
    %v6087 = vand.u32 %v475, 4294901760
    %v6088 = vsub.f32 %v475, %v6087
    %6089 = vmatpush.msra.mxu0 %v6088
    %v6090 = vand.u32 %v474, 4294901760
    %v6091 = vsub.f32 %v474, %v6090
    %6092 = vmatpush.msra.mxu0 %v6091
    %v6093 = vand.u32 %v473, 4294901760
    %v6094 = vsub.f32 %v473, %v6093
    %6095 = vmatpush.msra.mxu0 %v6094
    %v6096 = vand.u32 %v472, 4294901760
    %v6097 = vsub.f32 %v472, %v6096
    %6098 = vmatpush.msra.mxu0 %v6097
    %v6099 = vand.u32 %v471, 4294901760
    %v6100 = vsub.f32 %v471, %v6099
    %6101 = vmatpush.msra.mxu0 %v6100
    %v6102 = vand.u32 %v470, 4294901760
    %v6103 = vsub.f32 %v470, %v6102
    %6104 = vmatpush.msra.mxu0 %v6103
    %v6105 = vand.u32 %v469, 4294901760
    %v6106 = vsub.f32 %v469, %v6105
    %6107 = vmatpush.msra.mxu0 %v6106
    %v6108 = vand.u32 %v4035, 4294901760
    %v6109 = vsub.f32 %v4035, %v6108
    %6110 = vmatmul.f32.gmra.mxu0 %v6109
    %v6111 = vpop.f32.mrf.mxu0
    %v6112 = vadd.f32 %v6054, %v6111
    %v6113 = vand.u32 %v4043, 4294901760
    %v6114 = vsub.f32 %v4043, %v6113
    %6115 = vmatmul.f32.gmra.mxu0 %v6114
    %v6116 = vpop.f32.mrf.mxu0
    %v6117 = vadd.f32 %v6058, %v6116
    %6118 = vdwg.mxu0
    %v6119 = vand.u32 %v484, 4294901760
    %6120 = vmatpush.msra.mxu0 %v6119
    %v6121 = vand.u32 %v483, 4294901760
    %6122 = vmatpush.msra.mxu0 %v6121
    %v6123 = vand.u32 %v482, 4294901760
    %6124 = vmatpush.msra.mxu0 %v6123
    %v6125 = vand.u32 %v481, 4294901760
    %6126 = vmatpush.msra.mxu0 %v6125
    %v6127 = vand.u32 %v480, 4294901760
    %6128 = vmatpush.msra.mxu0 %v6127
    %v6129 = vand.u32 %v479, 4294901760
    %6130 = vmatpush.msra.mxu0 %v6129
    %v6131 = vand.u32 %v478, 4294901760
    %6132 = vmatpush.msra.mxu0 %v6131
    %v6133 = vand.u32 %v477, 4294901760
    %6134 = vmatpush.msra.mxu0 %v6133
    %v6135 = vand.u32 %v476, 4294901760
    %6136 = vmatpush.msra.mxu0 %v6135
    %v6137 = vand.u32 %v475, 4294901760
    %6138 = vmatpush.msra.mxu0 %v6137
    %v6139 = vand.u32 %v474, 4294901760
    %6140 = vmatpush.msra.mxu0 %v6139
    %v6141 = vand.u32 %v473, 4294901760
    %6142 = vmatpush.msra.mxu0 %v6141
    %v6143 = vand.u32 %v472, 4294901760
    %6144 = vmatpush.msra.mxu0 %v6143
    %v6145 = vand.u32 %v471, 4294901760
    %6146 = vmatpush.msra.mxu0 %v6145
    %v6147 = vand.u32 %v470, 4294901760
    %6148 = vmatpush.msra.mxu0 %v6147
    %v6149 = vand.u32 %v469, 4294901760
    %6150 = vmatpush.msra.mxu0 %v6149
    %v6151 = vand.u32 %v4035, 4294901760
    %v6152 = vsub.f32 %v4035, %v6151
    %v6153 = vand.u32 %v6152, 4294901760
    %6154 = vmatmul.f32.gmra.mxu0 %v6153
    %v6155 = vpop.f32.mrf.mxu0
    %v6156 = vadd.f32 %v6112, %v6155
    %v6157 = vand.u32 %v4043, 4294901760
    %v6158 = vsub.f32 %v4043, %v6157
    %v6159 = vand.u32 %v6158, 4294901760
    %6160 = vmatmul.f32.gmra.mxu0 %v6159
    %v6161 = vpop.f32.mrf.mxu0
    %v6162 = vadd.f32 %v6117, %v6161
    %6163 = vdwg.mxu0
    %v6164 = vand.u32 %v484, 4294901760
    %v6165 = vsub.f32 %v484, %v6164
    %v6166 = vand.u32 %v6165, 4294901760
    %6167 = vmatpush.msra.mxu0 %v6166
    %v6168 = vand.u32 %v483, 4294901760
    %v6169 = vsub.f32 %v483, %v6168
    %v6170 = vand.u32 %v6169, 4294901760
    %6171 = vmatpush.msra.mxu0 %v6170
    %v6172 = vand.u32 %v482, 4294901760
    %v6173 = vsub.f32 %v482, %v6172
    %v6174 = vand.u32 %v6173, 4294901760
    %6175 = vmatpush.msra.mxu0 %v6174
    %v6176 = vand.u32 %v481, 4294901760
    %v6177 = vsub.f32 %v481, %v6176
    %v6178 = vand.u32 %v6177, 4294901760
    %6179 = vmatpush.msra.mxu0 %v6178
    %v6180 = vand.u32 %v480, 4294901760
    %v6181 = vsub.f32 %v480, %v6180
    %v6182 = vand.u32 %v6181, 4294901760
    %6183 = vmatpush.msra.mxu0 %v6182
    %v6184 = vand.u32 %v479, 4294901760
    %v6185 = vsub.f32 %v479, %v6184
    %v6186 = vand.u32 %v6185, 4294901760
    %6187 = vmatpush.msra.mxu0 %v6186
    %v6188 = vand.u32 %v478, 4294901760
    %v6189 = vsub.f32 %v478, %v6188
    %v6190 = vand.u32 %v6189, 4294901760
    %6191 = vmatpush.msra.mxu0 %v6190
    %v6192 = vand.u32 %v477, 4294901760
    %v6193 = vsub.f32 %v477, %v6192
    %v6194 = vand.u32 %v6193, 4294901760
    %6195 = vmatpush.msra.mxu0 %v6194
    %v6196 = vand.u32 %v476, 4294901760
    %v6197 = vsub.f32 %v476, %v6196
    %v6198 = vand.u32 %v6197, 4294901760
    %6199 = vmatpush.msra.mxu0 %v6198
    %v6200 = vand.u32 %v475, 4294901760
    %v6201 = vsub.f32 %v475, %v6200
    %v6202 = vand.u32 %v6201, 4294901760
    %6203 = vmatpush.msra.mxu0 %v6202
    %v6204 = vand.u32 %v474, 4294901760
    %v6205 = vsub.f32 %v474, %v6204
    %v6206 = vand.u32 %v6205, 4294901760
    %6207 = vmatpush.msra.mxu0 %v6206
    %v6208 = vand.u32 %v473, 4294901760
    %v6209 = vsub.f32 %v473, %v6208
    %v6210 = vand.u32 %v6209, 4294901760
    %6211 = vmatpush.msra.mxu0 %v6210
    %v6212 = vand.u32 %v472, 4294901760
    %v6213 = vsub.f32 %v472, %v6212
    %v6214 = vand.u32 %v6213, 4294901760
    %6215 = vmatpush.msra.mxu0 %v6214
    %v6216 = vand.u32 %v471, 4294901760
    %v6217 = vsub.f32 %v471, %v6216
    %v6218 = vand.u32 %v6217, 4294901760
    %6219 = vmatpush.msra.mxu0 %v6218
    %v6220 = vand.u32 %v470, 4294901760
    %v6221 = vsub.f32 %v470, %v6220
    %v6222 = vand.u32 %v6221, 4294901760
    %6223 = vmatpush.msra.mxu0 %v6222
    %v6224 = vand.u32 %v469, 4294901760
    %v6225 = vsub.f32 %v469, %v6224
    %v6226 = vand.u32 %v6225, 4294901760
    %6227 = vmatpush.msra.mxu0 %v6226
    %v6228 = vand.u32 %v4035, 4294901760
    %6229 = vmatmul.f32.gmra.mxu0 %v6228
    %v6230 = vpop.f32.mrf.mxu0
    %v6231 = vadd.f32 %v6156, %v6230
    %v6232 = vand.u32 %v4043, 4294901760
    %6233 = vmatmul.f32.gmra.mxu0 %v6232
    %v6234 = vpop.f32.mrf.mxu0
    %v6235 = vadd.f32 %v6162, %v6234
    %6236 = vdwg.mxu0
    %v6237 = vand.u32 %v484, 4294901760
    %6238 = vmatpush.msra.mxu0 %v6237
    %v6239 = vand.u32 %v483, 4294901760
    %6240 = vmatpush.msra.mxu0 %v6239
    %v6241 = vand.u32 %v482, 4294901760
    %6242 = vmatpush.msra.mxu0 %v6241
    %v6243 = vand.u32 %v481, 4294901760
    %6244 = vmatpush.msra.mxu0 %v6243
    %v6245 = vand.u32 %v480, 4294901760
    %6246 = vmatpush.msra.mxu0 %v6245
    %v6247 = vand.u32 %v479, 4294901760
    %6248 = vmatpush.msra.mxu0 %v6247
    %v6249 = vand.u32 %v478, 4294901760
    %6250 = vmatpush.msra.mxu0 %v6249
    %v6251 = vand.u32 %v477, 4294901760
    %6252 = vmatpush.msra.mxu0 %v6251
    %v6253 = vand.u32 %v476, 4294901760
    %6254 = vmatpush.msra.mxu0 %v6253
    %v6255 = vand.u32 %v475, 4294901760
    %6256 = vmatpush.msra.mxu0 %v6255
    %v6257 = vand.u32 %v474, 4294901760
    %6258 = vmatpush.msra.mxu0 %v6257
    %v6259 = vand.u32 %v473, 4294901760
    %6260 = vmatpush.msra.mxu0 %v6259
    %v6261 = vand.u32 %v472, 4294901760
    %6262 = vmatpush.msra.mxu0 %v6261
    %v6263 = vand.u32 %v471, 4294901760
    %6264 = vmatpush.msra.mxu0 %v6263
    %v6265 = vand.u32 %v470, 4294901760
    %6266 = vmatpush.msra.mxu0 %v6265
    %v6267 = vand.u32 %v469, 4294901760
    %6268 = vmatpush.msra.mxu0 %v6267
    %v6269 = vand.u32 %v4035, 4294901760
    %6270 = vmatmul.f32.gmra.mxu0 %v6269
    %v6271 = vpop.f32.mrf.mxu0
    %v6272 = vadd.f32 %v6231, %v6271
    %v6273 = vand.u32 %v4043, 4294901760
    %6274 = vmatmul.f32.gmra.mxu0 %v6273
    %v6275 = vpop.f32.mrf.mxu0
    %v6276 = vadd.f32 %v6235, %v6275
    %6277 = vdwg.mxu0
    %v6278 = vand.u32 %v500, 4294901760
    %6279 = vmatpush.msra.mxu0 %v6278
    %v6280 = vand.u32 %v499, 4294901760
    %6281 = vmatpush.msra.mxu0 %v6280
    %v6282 = vand.u32 %v498, 4294901760
    %6283 = vmatpush.msra.mxu0 %v6282
    %v6284 = vand.u32 %v497, 4294901760
    %6285 = vmatpush.msra.mxu0 %v6284
    %v6286 = vand.u32 %v496, 4294901760
    %6287 = vmatpush.msra.mxu0 %v6286
    %v6288 = vand.u32 %v495, 4294901760
    %6289 = vmatpush.msra.mxu0 %v6288
    %v6290 = vand.u32 %v494, 4294901760
    %6291 = vmatpush.msra.mxu0 %v6290
    %v6292 = vand.u32 %v493, 4294901760
    %6293 = vmatpush.msra.mxu0 %v6292
    %v6294 = vand.u32 %v492, 4294901760
    %6295 = vmatpush.msra.mxu0 %v6294
    %v6296 = vand.u32 %v491, 4294901760
    %6297 = vmatpush.msra.mxu0 %v6296
    %v6298 = vand.u32 %v490, 4294901760
    %6299 = vmatpush.msra.mxu0 %v6298
    %v6300 = vand.u32 %v489, 4294901760
    %6301 = vmatpush.msra.mxu0 %v6300
    %v6302 = vand.u32 %v488, 4294901760
    %6303 = vmatpush.msra.mxu0 %v6302
    %v6304 = vand.u32 %v487, 4294901760
    %6305 = vmatpush.msra.mxu0 %v6304
    %v6306 = vand.u32 %v486, 4294901760
    %6307 = vmatpush.msra.mxu0 %v6306
    %v6308 = vand.u32 %v485, 4294901760
    %6309 = vmatpush.msra.mxu0 %v6308
    %v6310 = vand.u32 %v4036, 4294901760
    %v6311 = vsub.f32 %v4036, %v6310
    %v6312 = vand.u32 %v6311, 4294901760
    %v6313 = vsub.f32 %v6311, %v6312
    %v6314 = vand.u32 %v6313, 4294901760
    %6315 = vmatmul.f32.gmra.mxu0 %v6314
    %v6316 = vpop.f32.mrf.mxu0
    %v6317 = vadd.f32 %v6272, %v6316
    %v6318 = vand.u32 %v4044, 4294901760
    %v6319 = vsub.f32 %v4044, %v6318
    %v6320 = vand.u32 %v6319, 4294901760
    %v6321 = vsub.f32 %v6319, %v6320
    %v6322 = vand.u32 %v6321, 4294901760
    %6323 = vmatmul.f32.gmra.mxu0 %v6322
    %v6324 = vpop.f32.mrf.mxu0
    %v6325 = vadd.f32 %v6276, %v6324
    %6326 = vdwg.mxu0
    %v6327 = vand.u32 %v500, 4294901760
    %v6328 = vsub.f32 %v500, %v6327
    %v6329 = vand.u32 %v6328, 4294901760
    %v6330 = vsub.f32 %v6328, %v6329
    %v6331 = vand.u32 %v6330, 4294901760
    %6332 = vmatpush.msra.mxu0 %v6331
    %v6333 = vand.u32 %v499, 4294901760
    %v6334 = vsub.f32 %v499, %v6333
    %v6335 = vand.u32 %v6334, 4294901760
    %v6336 = vsub.f32 %v6334, %v6335
    %v6337 = vand.u32 %v6336, 4294901760
    %6338 = vmatpush.msra.mxu0 %v6337
    %v6339 = vand.u32 %v498, 4294901760
    %v6340 = vsub.f32 %v498, %v6339
    %v6341 = vand.u32 %v6340, 4294901760
    %v6342 = vsub.f32 %v6340, %v6341
    %v6343 = vand.u32 %v6342, 4294901760
    %6344 = vmatpush.msra.mxu0 %v6343
    %v6345 = vand.u32 %v497, 4294901760
    %v6346 = vsub.f32 %v497, %v6345
    %v6347 = vand.u32 %v6346, 4294901760
    %v6348 = vsub.f32 %v6346, %v6347
    %v6349 = vand.u32 %v6348, 4294901760
    %6350 = vmatpush.msra.mxu0 %v6349
    %v6351 = vand.u32 %v496, 4294901760
    %v6352 = vsub.f32 %v496, %v6351
    %v6353 = vand.u32 %v6352, 4294901760
    %v6354 = vsub.f32 %v6352, %v6353
    %v6355 = vand.u32 %v6354, 4294901760
    %6356 = vmatpush.msra.mxu0 %v6355
    %v6357 = vand.u32 %v495, 4294901760
    %v6358 = vsub.f32 %v495, %v6357
    %v6359 = vand.u32 %v6358, 4294901760
    %v6360 = vsub.f32 %v6358, %v6359
    %v6361 = vand.u32 %v6360, 4294901760
    %6362 = vmatpush.msra.mxu0 %v6361
    %v6363 = vand.u32 %v494, 4294901760
    %v6364 = vsub.f32 %v494, %v6363
    %v6365 = vand.u32 %v6364, 4294901760
    %v6366 = vsub.f32 %v6364, %v6365
    %v6367 = vand.u32 %v6366, 4294901760
    %6368 = vmatpush.msra.mxu0 %v6367
    %v6369 = vand.u32 %v493, 4294901760
    %v6370 = vsub.f32 %v493, %v6369
    %v6371 = vand.u32 %v6370, 4294901760
    %v6372 = vsub.f32 %v6370, %v6371
    %v6373 = vand.u32 %v6372, 4294901760
    %6374 = vmatpush.msra.mxu0 %v6373
    %v6375 = vand.u32 %v492, 4294901760
    %v6376 = vsub.f32 %v492, %v6375
    %v6377 = vand.u32 %v6376, 4294901760
    %v6378 = vsub.f32 %v6376, %v6377
    %v6379 = vand.u32 %v6378, 4294901760
    %6380 = vmatpush.msra.mxu0 %v6379
    %v6381 = vand.u32 %v491, 4294901760
    %v6382 = vsub.f32 %v491, %v6381
    %v6383 = vand.u32 %v6382, 4294901760
    %v6384 = vsub.f32 %v6382, %v6383
    %v6385 = vand.u32 %v6384, 4294901760
    %6386 = vmatpush.msra.mxu0 %v6385
    %v6387 = vand.u32 %v490, 4294901760
    %v6388 = vsub.f32 %v490, %v6387
    %v6389 = vand.u32 %v6388, 4294901760
    %v6390 = vsub.f32 %v6388, %v6389
    %v6391 = vand.u32 %v6390, 4294901760
    %6392 = vmatpush.msra.mxu0 %v6391
    %v6393 = vand.u32 %v489, 4294901760
    %v6394 = vsub.f32 %v489, %v6393
    %v6395 = vand.u32 %v6394, 4294901760
    %v6396 = vsub.f32 %v6394, %v6395
    %v6397 = vand.u32 %v6396, 4294901760
    %6398 = vmatpush.msra.mxu0 %v6397
    %v6399 = vand.u32 %v488, 4294901760
    %v6400 = vsub.f32 %v488, %v6399
    %v6401 = vand.u32 %v6400, 4294901760
    %v6402 = vsub.f32 %v6400, %v6401
    %v6403 = vand.u32 %v6402, 4294901760
    %6404 = vmatpush.msra.mxu0 %v6403
    %v6405 = vand.u32 %v487, 4294901760
    %v6406 = vsub.f32 %v487, %v6405
    %v6407 = vand.u32 %v6406, 4294901760
    %v6408 = vsub.f32 %v6406, %v6407
    %v6409 = vand.u32 %v6408, 4294901760
    %6410 = vmatpush.msra.mxu0 %v6409
    %v6411 = vand.u32 %v486, 4294901760
    %v6412 = vsub.f32 %v486, %v6411
    %v6413 = vand.u32 %v6412, 4294901760
    %v6414 = vsub.f32 %v6412, %v6413
    %v6415 = vand.u32 %v6414, 4294901760
    %6416 = vmatpush.msra.mxu0 %v6415
    %v6417 = vand.u32 %v485, 4294901760
    %v6418 = vsub.f32 %v485, %v6417
    %v6419 = vand.u32 %v6418, 4294901760
    %v6420 = vsub.f32 %v6418, %v6419
    %v6421 = vand.u32 %v6420, 4294901760
    %6422 = vmatpush.msra.mxu0 %v6421
    %v6423 = vand.u32 %v4036, 4294901760
    %6424 = vmatmul.f32.gmra.mxu0 %v6423
    %v6425 = vpop.f32.mrf.mxu0
    %v6426 = vadd.f32 %v6317, %v6425
    %v6427 = vand.u32 %v4044, 4294901760
    %6428 = vmatmul.f32.gmra.mxu0 %v6427
    %v6429 = vpop.f32.mrf.mxu0
    %v6430 = vadd.f32 %v6325, %v6429
    %6431 = vdwg.mxu0
    %v6432 = vand.u32 %v500, 4294901760
    %v6433 = vsub.f32 %v500, %v6432
    %6434 = vmatpush.msra.mxu0 %v6433
    %v6435 = vand.u32 %v499, 4294901760
    %v6436 = vsub.f32 %v499, %v6435
    %6437 = vmatpush.msra.mxu0 %v6436
    %v6438 = vand.u32 %v498, 4294901760
    %v6439 = vsub.f32 %v498, %v6438
    %6440 = vmatpush.msra.mxu0 %v6439
    %v6441 = vand.u32 %v497, 4294901760
    %v6442 = vsub.f32 %v497, %v6441
    %6443 = vmatpush.msra.mxu0 %v6442
    %v6444 = vand.u32 %v496, 4294901760
    %v6445 = vsub.f32 %v496, %v6444
    %6446 = vmatpush.msra.mxu0 %v6445
    %v6447 = vand.u32 %v495, 4294901760
    %v6448 = vsub.f32 %v495, %v6447
    %6449 = vmatpush.msra.mxu0 %v6448
    %v6450 = vand.u32 %v494, 4294901760
    %v6451 = vsub.f32 %v494, %v6450
    %6452 = vmatpush.msra.mxu0 %v6451
    %v6453 = vand.u32 %v493, 4294901760
    %v6454 = vsub.f32 %v493, %v6453
    %6455 = vmatpush.msra.mxu0 %v6454
    %v6456 = vand.u32 %v492, 4294901760
    %v6457 = vsub.f32 %v492, %v6456
    %6458 = vmatpush.msra.mxu0 %v6457
    %v6459 = vand.u32 %v491, 4294901760
    %v6460 = vsub.f32 %v491, %v6459
    %6461 = vmatpush.msra.mxu0 %v6460
    %v6462 = vand.u32 %v490, 4294901760
    %v6463 = vsub.f32 %v490, %v6462
    %6464 = vmatpush.msra.mxu0 %v6463
    %v6465 = vand.u32 %v489, 4294901760
    %v6466 = vsub.f32 %v489, %v6465
    %6467 = vmatpush.msra.mxu0 %v6466
    %v6468 = vand.u32 %v488, 4294901760
    %v6469 = vsub.f32 %v488, %v6468
    %6470 = vmatpush.msra.mxu0 %v6469
    %v6471 = vand.u32 %v487, 4294901760
    %v6472 = vsub.f32 %v487, %v6471
    %6473 = vmatpush.msra.mxu0 %v6472
    %v6474 = vand.u32 %v486, 4294901760
    %v6475 = vsub.f32 %v486, %v6474
    %6476 = vmatpush.msra.mxu0 %v6475
    %v6477 = vand.u32 %v485, 4294901760
    %v6478 = vsub.f32 %v485, %v6477
    %6479 = vmatpush.msra.mxu0 %v6478
    %v6480 = vand.u32 %v4036, 4294901760
    %v6481 = vsub.f32 %v4036, %v6480
    %6482 = vmatmul.f32.gmra.mxu0 %v6481
    %v6483 = vpop.f32.mrf.mxu0
    %v6484 = vadd.f32 %v6426, %v6483
    %v6485 = vand.u32 %v4044, 4294901760
    %v6486 = vsub.f32 %v4044, %v6485
    %6487 = vmatmul.f32.gmra.mxu0 %v6486
    %v6488 = vpop.f32.mrf.mxu0
    %v6489 = vadd.f32 %v6430, %v6488
    %6490 = vdwg.mxu0
    %v6491 = vand.u32 %v500, 4294901760
    %6492 = vmatpush.msra.mxu0 %v6491
    %v6493 = vand.u32 %v499, 4294901760
    %6494 = vmatpush.msra.mxu0 %v6493
    %v6495 = vand.u32 %v498, 4294901760
    %6496 = vmatpush.msra.mxu0 %v6495
    %v6497 = vand.u32 %v497, 4294901760
    %6498 = vmatpush.msra.mxu0 %v6497
    %v6499 = vand.u32 %v496, 4294901760
    %6500 = vmatpush.msra.mxu0 %v6499
    %v6501 = vand.u32 %v495, 4294901760
    %6502 = vmatpush.msra.mxu0 %v6501
    %v6503 = vand.u32 %v494, 4294901760
    %6504 = vmatpush.msra.mxu0 %v6503
    %v6505 = vand.u32 %v493, 4294901760
    %6506 = vmatpush.msra.mxu0 %v6505
    %v6507 = vand.u32 %v492, 4294901760
    %6508 = vmatpush.msra.mxu0 %v6507
    %v6509 = vand.u32 %v491, 4294901760
    %6510 = vmatpush.msra.mxu0 %v6509
    %v6511 = vand.u32 %v490, 4294901760
    %6512 = vmatpush.msra.mxu0 %v6511
    %v6513 = vand.u32 %v489, 4294901760
    %6514 = vmatpush.msra.mxu0 %v6513
    %v6515 = vand.u32 %v488, 4294901760
    %6516 = vmatpush.msra.mxu0 %v6515
    %v6517 = vand.u32 %v487, 4294901760
    %6518 = vmatpush.msra.mxu0 %v6517
    %v6519 = vand.u32 %v486, 4294901760
    %6520 = vmatpush.msra.mxu0 %v6519
    %v6521 = vand.u32 %v485, 4294901760
    %6522 = vmatpush.msra.mxu0 %v6521
    %v6523 = vand.u32 %v4036, 4294901760
    %v6524 = vsub.f32 %v4036, %v6523
    %v6525 = vand.u32 %v6524, 4294901760
    %6526 = vmatmul.f32.gmra.mxu0 %v6525
    %v6527 = vpop.f32.mrf.mxu0
    %v6528 = vadd.f32 %v6484, %v6527
    %v6529 = vand.u32 %v4044, 4294901760
    %v6530 = vsub.f32 %v4044, %v6529
    %v6531 = vand.u32 %v6530, 4294901760
    %6532 = vmatmul.f32.gmra.mxu0 %v6531
    %v6533 = vpop.f32.mrf.mxu0
    %v6534 = vadd.f32 %v6489, %v6533
    %6535 = vdwg.mxu0
    %v6536 = vand.u32 %v500, 4294901760
    %v6537 = vsub.f32 %v500, %v6536
    %v6538 = vand.u32 %v6537, 4294901760
    %6539 = vmatpush.msra.mxu0 %v6538
    %v6540 = vand.u32 %v499, 4294901760
    %v6541 = vsub.f32 %v499, %v6540
    %v6542 = vand.u32 %v6541, 4294901760
    %6543 = vmatpush.msra.mxu0 %v6542
    %v6544 = vand.u32 %v498, 4294901760
    %v6545 = vsub.f32 %v498, %v6544
    %v6546 = vand.u32 %v6545, 4294901760
    %6547 = vmatpush.msra.mxu0 %v6546
    %v6548 = vand.u32 %v497, 4294901760
    %v6549 = vsub.f32 %v497, %v6548
    %v6550 = vand.u32 %v6549, 4294901760
    %6551 = vmatpush.msra.mxu0 %v6550
    %v6552 = vand.u32 %v496, 4294901760
    %v6553 = vsub.f32 %v496, %v6552
    %v6554 = vand.u32 %v6553, 4294901760
    %6555 = vmatpush.msra.mxu0 %v6554
    %v6556 = vand.u32 %v495, 4294901760
    %v6557 = vsub.f32 %v495, %v6556
    %v6558 = vand.u32 %v6557, 4294901760
    %6559 = vmatpush.msra.mxu0 %v6558
    %v6560 = vand.u32 %v494, 4294901760
    %v6561 = vsub.f32 %v494, %v6560
    %v6562 = vand.u32 %v6561, 4294901760
    %6563 = vmatpush.msra.mxu0 %v6562
    %v6564 = vand.u32 %v493, 4294901760
    %v6565 = vsub.f32 %v493, %v6564
    %v6566 = vand.u32 %v6565, 4294901760
    %6567 = vmatpush.msra.mxu0 %v6566
    %v6568 = vand.u32 %v492, 4294901760
    %v6569 = vsub.f32 %v492, %v6568
    %v6570 = vand.u32 %v6569, 4294901760
    %6571 = vmatpush.msra.mxu0 %v6570
    %v6572 = vand.u32 %v491, 4294901760
    %v6573 = vsub.f32 %v491, %v6572
    %v6574 = vand.u32 %v6573, 4294901760
    %6575 = vmatpush.msra.mxu0 %v6574
    %v6576 = vand.u32 %v490, 4294901760
    %v6577 = vsub.f32 %v490, %v6576
    %v6578 = vand.u32 %v6577, 4294901760
    %6579 = vmatpush.msra.mxu0 %v6578
    %v6580 = vand.u32 %v489, 4294901760
    %v6581 = vsub.f32 %v489, %v6580
    %v6582 = vand.u32 %v6581, 4294901760
    %6583 = vmatpush.msra.mxu0 %v6582
    %v6584 = vand.u32 %v488, 4294901760
    %v6585 = vsub.f32 %v488, %v6584
    %v6586 = vand.u32 %v6585, 4294901760
    %6587 = vmatpush.msra.mxu0 %v6586
    %v6588 = vand.u32 %v487, 4294901760
    %v6589 = vsub.f32 %v487, %v6588
    %v6590 = vand.u32 %v6589, 4294901760
    %6591 = vmatpush.msra.mxu0 %v6590
    %v6592 = vand.u32 %v486, 4294901760
    %v6593 = vsub.f32 %v486, %v6592
    %v6594 = vand.u32 %v6593, 4294901760
    %6595 = vmatpush.msra.mxu0 %v6594
    %v6596 = vand.u32 %v485, 4294901760
    %v6597 = vsub.f32 %v485, %v6596
    %v6598 = vand.u32 %v6597, 4294901760
    %6599 = vmatpush.msra.mxu0 %v6598
    %v6600 = vand.u32 %v4036, 4294901760
    %6601 = vmatmul.f32.gmra.mxu0 %v6600
    %v6602 = vpop.f32.mrf.mxu0
    %v6603 = vadd.f32 %v6528, %v6602
    %v6604 = vand.u32 %v4044, 4294901760
    %6605 = vmatmul.f32.gmra.mxu0 %v6604
    %v6606 = vpop.f32.mrf.mxu0
    %v6607 = vadd.f32 %v6534, %v6606
    %6608 = vdwg.mxu0
    %v6609 = vand.u32 %v500, 4294901760
    %6610 = vmatpush.msra.mxu0 %v6609
    %v6611 = vand.u32 %v499, 4294901760
    %6612 = vmatpush.msra.mxu0 %v6611
    %v6613 = vand.u32 %v498, 4294901760
    %6614 = vmatpush.msra.mxu0 %v6613
    %v6615 = vand.u32 %v497, 4294901760
    %6616 = vmatpush.msra.mxu0 %v6615
    %v6617 = vand.u32 %v496, 4294901760
    %6618 = vmatpush.msra.mxu0 %v6617
    %v6619 = vand.u32 %v495, 4294901760
    %6620 = vmatpush.msra.mxu0 %v6619
    %v6621 = vand.u32 %v494, 4294901760
    %6622 = vmatpush.msra.mxu0 %v6621
    %v6623 = vand.u32 %v493, 4294901760
    %6624 = vmatpush.msra.mxu0 %v6623
    %v6625 = vand.u32 %v492, 4294901760
    %6626 = vmatpush.msra.mxu0 %v6625
    %v6627 = vand.u32 %v491, 4294901760
    %6628 = vmatpush.msra.mxu0 %v6627
    %v6629 = vand.u32 %v490, 4294901760
    %6630 = vmatpush.msra.mxu0 %v6629
    %v6631 = vand.u32 %v489, 4294901760
    %6632 = vmatpush.msra.mxu0 %v6631
    %v6633 = vand.u32 %v488, 4294901760
    %6634 = vmatpush.msra.mxu0 %v6633
    %v6635 = vand.u32 %v487, 4294901760
    %6636 = vmatpush.msra.mxu0 %v6635
    %v6637 = vand.u32 %v486, 4294901760
    %6638 = vmatpush.msra.mxu0 %v6637
    %v6639 = vand.u32 %v485, 4294901760
    %6640 = vmatpush.msra.mxu0 %v6639
    %v6641 = vand.u32 %v4036, 4294901760
    %6642 = vmatmul.f32.gmra.mxu0 %v6641
    %v6643 = vpop.f32.mrf.mxu0
    %v6644 = vadd.f32 %v6603, %v6643
    %v6645 = vand.u32 %v4044, 4294901760
    %6646 = vmatmul.f32.gmra.mxu0 %v6645
    %v6647 = vpop.f32.mrf.mxu0
    %v6648 = vadd.f32 %v6607, %v6647
    %6649 = vdwg.mxu0
    %v6650 = vand.u32 %v516, 4294901760
    %6651 = vmatpush.msra.mxu0 %v6650
    %v6652 = vand.u32 %v515, 4294901760
    %6653 = vmatpush.msra.mxu0 %v6652
    %v6654 = vand.u32 %v514, 4294901760
    %6655 = vmatpush.msra.mxu0 %v6654
    %v6656 = vand.u32 %v513, 4294901760
    %6657 = vmatpush.msra.mxu0 %v6656
    %v6658 = vand.u32 %v512, 4294901760
    %6659 = vmatpush.msra.mxu0 %v6658
    %v6660 = vand.u32 %v511, 4294901760
    %6661 = vmatpush.msra.mxu0 %v6660
    %v6662 = vand.u32 %v510, 4294901760
    %6663 = vmatpush.msra.mxu0 %v6662
    %v6664 = vand.u32 %v509, 4294901760
    %6665 = vmatpush.msra.mxu0 %v6664
    %v6666 = vand.u32 %v508, 4294901760
    %6667 = vmatpush.msra.mxu0 %v6666
    %v6668 = vand.u32 %v507, 4294901760
    %6669 = vmatpush.msra.mxu0 %v6668
    %v6670 = vand.u32 %v506, 4294901760
    %6671 = vmatpush.msra.mxu0 %v6670
    %v6672 = vand.u32 %v505, 4294901760
    %6673 = vmatpush.msra.mxu0 %v6672
    %v6674 = vand.u32 %v504, 4294901760
    %6675 = vmatpush.msra.mxu0 %v6674
    %v6676 = vand.u32 %v503, 4294901760
    %6677 = vmatpush.msra.mxu0 %v6676
    %v6678 = vand.u32 %v502, 4294901760
    %6679 = vmatpush.msra.mxu0 %v6678
    %v6680 = vand.u32 %v501, 4294901760
    %6681 = vmatpush.msra.mxu0 %v6680
    %v6682 = vand.u32 %v4037, 4294901760
    %v6683 = vsub.f32 %v4037, %v6682
    %v6684 = vand.u32 %v6683, 4294901760
    %v6685 = vsub.f32 %v6683, %v6684
    %v6686 = vand.u32 %v6685, 4294901760
    %6687 = vmatmul.f32.gmra.mxu0 %v6686
    %v6688 = vpop.f32.mrf.mxu0
    %v6689 = vadd.f32 %v6644, %v6688
    %v6690 = vand.u32 %v4045, 4294901760
    %v6691 = vsub.f32 %v4045, %v6690
    %v6692 = vand.u32 %v6691, 4294901760
    %v6693 = vsub.f32 %v6691, %v6692
    %v6694 = vand.u32 %v6693, 4294901760
    %6695 = vmatmul.f32.gmra.mxu0 %v6694
    %v6696 = vpop.f32.mrf.mxu0
    %v6697 = vadd.f32 %v6648, %v6696
    %6698 = vdwg.mxu0
    %v6699 = vand.u32 %v516, 4294901760
    %v6700 = vsub.f32 %v516, %v6699
    %v6701 = vand.u32 %v6700, 4294901760
    %v6702 = vsub.f32 %v6700, %v6701
    %v6703 = vand.u32 %v6702, 4294901760
    %6704 = vmatpush.msra.mxu0 %v6703
    %v6705 = vand.u32 %v515, 4294901760
    %v6706 = vsub.f32 %v515, %v6705
    %v6707 = vand.u32 %v6706, 4294901760
    %v6708 = vsub.f32 %v6706, %v6707
    %v6709 = vand.u32 %v6708, 4294901760
    %6710 = vmatpush.msra.mxu0 %v6709
    %v6711 = vand.u32 %v514, 4294901760
    %v6712 = vsub.f32 %v514, %v6711
    %v6713 = vand.u32 %v6712, 4294901760
    %v6714 = vsub.f32 %v6712, %v6713
    %v6715 = vand.u32 %v6714, 4294901760
    %6716 = vmatpush.msra.mxu0 %v6715
    %v6717 = vand.u32 %v513, 4294901760
    %v6718 = vsub.f32 %v513, %v6717
    %v6719 = vand.u32 %v6718, 4294901760
    %v6720 = vsub.f32 %v6718, %v6719
    %v6721 = vand.u32 %v6720, 4294901760
    %6722 = vmatpush.msra.mxu0 %v6721
    %v6723 = vand.u32 %v512, 4294901760
    %v6724 = vsub.f32 %v512, %v6723
    %v6725 = vand.u32 %v6724, 4294901760
    %v6726 = vsub.f32 %v6724, %v6725
    %v6727 = vand.u32 %v6726, 4294901760
    %6728 = vmatpush.msra.mxu0 %v6727
    %v6729 = vand.u32 %v511, 4294901760
    %v6730 = vsub.f32 %v511, %v6729
    %v6731 = vand.u32 %v6730, 4294901760
    %v6732 = vsub.f32 %v6730, %v6731
    %v6733 = vand.u32 %v6732, 4294901760
    %6734 = vmatpush.msra.mxu0 %v6733
    %v6735 = vand.u32 %v510, 4294901760
    %v6736 = vsub.f32 %v510, %v6735
    %v6737 = vand.u32 %v6736, 4294901760
    %v6738 = vsub.f32 %v6736, %v6737
    %v6739 = vand.u32 %v6738, 4294901760
    %6740 = vmatpush.msra.mxu0 %v6739
    %v6741 = vand.u32 %v509, 4294901760
    %v6742 = vsub.f32 %v509, %v6741
    %v6743 = vand.u32 %v6742, 4294901760
    %v6744 = vsub.f32 %v6742, %v6743
    %v6745 = vand.u32 %v6744, 4294901760
    %6746 = vmatpush.msra.mxu0 %v6745
    %v6747 = vand.u32 %v508, 4294901760
    %v6748 = vsub.f32 %v508, %v6747
    %v6749 = vand.u32 %v6748, 4294901760
    %v6750 = vsub.f32 %v6748, %v6749
    %v6751 = vand.u32 %v6750, 4294901760
    %6752 = vmatpush.msra.mxu0 %v6751
    %v6753 = vand.u32 %v507, 4294901760
    %v6754 = vsub.f32 %v507, %v6753
    %v6755 = vand.u32 %v6754, 4294901760
    %v6756 = vsub.f32 %v6754, %v6755
    %v6757 = vand.u32 %v6756, 4294901760
    %6758 = vmatpush.msra.mxu0 %v6757
    %v6759 = vand.u32 %v506, 4294901760
    %v6760 = vsub.f32 %v506, %v6759
    %v6761 = vand.u32 %v6760, 4294901760
    %v6762 = vsub.f32 %v6760, %v6761
    %v6763 = vand.u32 %v6762, 4294901760
    %6764 = vmatpush.msra.mxu0 %v6763
    %v6765 = vand.u32 %v505, 4294901760
    %v6766 = vsub.f32 %v505, %v6765
    %v6767 = vand.u32 %v6766, 4294901760
    %v6768 = vsub.f32 %v6766, %v6767
    %v6769 = vand.u32 %v6768, 4294901760
    %6770 = vmatpush.msra.mxu0 %v6769
    %v6771 = vand.u32 %v504, 4294901760
    %v6772 = vsub.f32 %v504, %v6771
    %v6773 = vand.u32 %v6772, 4294901760
    %v6774 = vsub.f32 %v6772, %v6773
    %v6775 = vand.u32 %v6774, 4294901760
    %6776 = vmatpush.msra.mxu0 %v6775
    %v6777 = vand.u32 %v503, 4294901760
    %v6778 = vsub.f32 %v503, %v6777
    %v6779 = vand.u32 %v6778, 4294901760
    %v6780 = vsub.f32 %v6778, %v6779
    %v6781 = vand.u32 %v6780, 4294901760
    %6782 = vmatpush.msra.mxu0 %v6781
    %v6783 = vand.u32 %v502, 4294901760
    %v6784 = vsub.f32 %v502, %v6783
    %v6785 = vand.u32 %v6784, 4294901760
    %v6786 = vsub.f32 %v6784, %v6785
    %v6787 = vand.u32 %v6786, 4294901760
    %6788 = vmatpush.msra.mxu0 %v6787
    %v6789 = vand.u32 %v501, 4294901760
    %v6790 = vsub.f32 %v501, %v6789
    %v6791 = vand.u32 %v6790, 4294901760
    %v6792 = vsub.f32 %v6790, %v6791
    %v6793 = vand.u32 %v6792, 4294901760
    %6794 = vmatpush.msra.mxu0 %v6793
    %v6795 = vand.u32 %v4037, 4294901760
    %6796 = vmatmul.f32.gmra.mxu0 %v6795
    %v6797 = vpop.f32.mrf.mxu0
    %v6798 = vadd.f32 %v6689, %v6797
    %v6799 = vand.u32 %v4045, 4294901760
    %6800 = vmatmul.f32.gmra.mxu0 %v6799
    %v6801 = vpop.f32.mrf.mxu0
    %v6802 = vadd.f32 %v6697, %v6801
    %6803 = vdwg.mxu0
    %v6804 = vand.u32 %v516, 4294901760
    %v6805 = vsub.f32 %v516, %v6804
    %6806 = vmatpush.msra.mxu0 %v6805
    %v6807 = vand.u32 %v515, 4294901760
    %v6808 = vsub.f32 %v515, %v6807
    %6809 = vmatpush.msra.mxu0 %v6808
    %v6810 = vand.u32 %v514, 4294901760
    %v6811 = vsub.f32 %v514, %v6810
    %6812 = vmatpush.msra.mxu0 %v6811
    %v6813 = vand.u32 %v513, 4294901760
    %v6814 = vsub.f32 %v513, %v6813
    %6815 = vmatpush.msra.mxu0 %v6814
    %v6816 = vand.u32 %v512, 4294901760
    %v6817 = vsub.f32 %v512, %v6816
    %6818 = vmatpush.msra.mxu0 %v6817
    %v6819 = vand.u32 %v511, 4294901760
    %v6820 = vsub.f32 %v511, %v6819
    %6821 = vmatpush.msra.mxu0 %v6820
    %v6822 = vand.u32 %v510, 4294901760
    %v6823 = vsub.f32 %v510, %v6822
    %6824 = vmatpush.msra.mxu0 %v6823
    %v6825 = vand.u32 %v509, 4294901760
    %v6826 = vsub.f32 %v509, %v6825
    %6827 = vmatpush.msra.mxu0 %v6826
    %v6828 = vand.u32 %v508, 4294901760
    %v6829 = vsub.f32 %v508, %v6828
    %6830 = vmatpush.msra.mxu0 %v6829
    %v6831 = vand.u32 %v507, 4294901760
    %v6832 = vsub.f32 %v507, %v6831
    %6833 = vmatpush.msra.mxu0 %v6832
    %v6834 = vand.u32 %v506, 4294901760
    %v6835 = vsub.f32 %v506, %v6834
    %6836 = vmatpush.msra.mxu0 %v6835
    %v6837 = vand.u32 %v505, 4294901760
    %v6838 = vsub.f32 %v505, %v6837
    %6839 = vmatpush.msra.mxu0 %v6838
    %v6840 = vand.u32 %v504, 4294901760
    %v6841 = vsub.f32 %v504, %v6840
    %6842 = vmatpush.msra.mxu0 %v6841
    %v6843 = vand.u32 %v503, 4294901760
    %v6844 = vsub.f32 %v503, %v6843
    %6845 = vmatpush.msra.mxu0 %v6844
    %v6846 = vand.u32 %v502, 4294901760
    %v6847 = vsub.f32 %v502, %v6846
    %6848 = vmatpush.msra.mxu0 %v6847
    %v6849 = vand.u32 %v501, 4294901760
    %v6850 = vsub.f32 %v501, %v6849
    %6851 = vmatpush.msra.mxu0 %v6850
    %v6852 = vand.u32 %v4037, 4294901760
    %v6853 = vsub.f32 %v4037, %v6852
    %6854 = vmatmul.f32.gmra.mxu0 %v6853
    %v6855 = vpop.f32.mrf.mxu0
    %v6856 = vadd.f32 %v6798, %v6855
    %v6857 = vand.u32 %v4045, 4294901760
    %v6858 = vsub.f32 %v4045, %v6857
    %6859 = vmatmul.f32.gmra.mxu0 %v6858
    %v6860 = vpop.f32.mrf.mxu0
    %v6861 = vadd.f32 %v6802, %v6860
    %6862 = vdwg.mxu0
    %v6863 = vand.u32 %v516, 4294901760
    %6864 = vmatpush.msra.mxu0 %v6863
    %v6865 = vand.u32 %v515, 4294901760
    %6866 = vmatpush.msra.mxu0 %v6865
    %v6867 = vand.u32 %v514, 4294901760
    %6868 = vmatpush.msra.mxu0 %v6867
    %v6869 = vand.u32 %v513, 4294901760
    %6870 = vmatpush.msra.mxu0 %v6869
    %v6871 = vand.u32 %v512, 4294901760
    %6872 = vmatpush.msra.mxu0 %v6871
    %v6873 = vand.u32 %v511, 4294901760
    %6874 = vmatpush.msra.mxu0 %v6873
    %v6875 = vand.u32 %v510, 4294901760
    %6876 = vmatpush.msra.mxu0 %v6875
    %v6877 = vand.u32 %v509, 4294901760
    %6878 = vmatpush.msra.mxu0 %v6877
    %v6879 = vand.u32 %v508, 4294901760
    %6880 = vmatpush.msra.mxu0 %v6879
    %v6881 = vand.u32 %v507, 4294901760
    %6882 = vmatpush.msra.mxu0 %v6881
    %v6883 = vand.u32 %v506, 4294901760
    %6884 = vmatpush.msra.mxu0 %v6883
    %v6885 = vand.u32 %v505, 4294901760
    %6886 = vmatpush.msra.mxu0 %v6885
    %v6887 = vand.u32 %v504, 4294901760
    %6888 = vmatpush.msra.mxu0 %v6887
    %v6889 = vand.u32 %v503, 4294901760
    %6890 = vmatpush.msra.mxu0 %v6889
    %v6891 = vand.u32 %v502, 4294901760
    %6892 = vmatpush.msra.mxu0 %v6891
    %v6893 = vand.u32 %v501, 4294901760
    %6894 = vmatpush.msra.mxu0 %v6893
    %v6895 = vand.u32 %v4037, 4294901760
    %v6896 = vsub.f32 %v4037, %v6895
    %v6897 = vand.u32 %v6896, 4294901760
    %6898 = vmatmul.f32.gmra.mxu0 %v6897
    %v6899 = vpop.f32.mrf.mxu0
    %v6900 = vadd.f32 %v6856, %v6899
    %v6901 = vand.u32 %v4045, 4294901760
    %v6902 = vsub.f32 %v4045, %v6901
    %v6903 = vand.u32 %v6902, 4294901760
    %6904 = vmatmul.f32.gmra.mxu0 %v6903
    %v6905 = vpop.f32.mrf.mxu0
    %v6906 = vadd.f32 %v6861, %v6905
    %6907 = vdwg.mxu0
    %v6908 = vand.u32 %v516, 4294901760
    %v6909 = vsub.f32 %v516, %v6908
    %v6910 = vand.u32 %v6909, 4294901760
    %6911 = vmatpush.msra.mxu0 %v6910
    %v6912 = vand.u32 %v515, 4294901760
    %v6913 = vsub.f32 %v515, %v6912
    %v6914 = vand.u32 %v6913, 4294901760
    %6915 = vmatpush.msra.mxu0 %v6914
    %v6916 = vand.u32 %v514, 4294901760
    %v6917 = vsub.f32 %v514, %v6916
    %v6918 = vand.u32 %v6917, 4294901760
    %6919 = vmatpush.msra.mxu0 %v6918
    %v6920 = vand.u32 %v513, 4294901760
    %v6921 = vsub.f32 %v513, %v6920
    %v6922 = vand.u32 %v6921, 4294901760
    %6923 = vmatpush.msra.mxu0 %v6922
    %v6924 = vand.u32 %v512, 4294901760
    %v6925 = vsub.f32 %v512, %v6924
    %v6926 = vand.u32 %v6925, 4294901760
    %6927 = vmatpush.msra.mxu0 %v6926
    %v6928 = vand.u32 %v511, 4294901760
    %v6929 = vsub.f32 %v511, %v6928
    %v6930 = vand.u32 %v6929, 4294901760
    %6931 = vmatpush.msra.mxu0 %v6930
    %v6932 = vand.u32 %v510, 4294901760
    %v6933 = vsub.f32 %v510, %v6932
    %v6934 = vand.u32 %v6933, 4294901760
    %6935 = vmatpush.msra.mxu0 %v6934
    %v6936 = vand.u32 %v509, 4294901760
    %v6937 = vsub.f32 %v509, %v6936
    %v6938 = vand.u32 %v6937, 4294901760
    %6939 = vmatpush.msra.mxu0 %v6938
    %v6940 = vand.u32 %v508, 4294901760
    %v6941 = vsub.f32 %v508, %v6940
    %v6942 = vand.u32 %v6941, 4294901760
    %6943 = vmatpush.msra.mxu0 %v6942
    %v6944 = vand.u32 %v507, 4294901760
    %v6945 = vsub.f32 %v507, %v6944
    %v6946 = vand.u32 %v6945, 4294901760
    %6947 = vmatpush.msra.mxu0 %v6946
    %v6948 = vand.u32 %v506, 4294901760
    %v6949 = vsub.f32 %v506, %v6948
    %v6950 = vand.u32 %v6949, 4294901760
    %6951 = vmatpush.msra.mxu0 %v6950
    %v6952 = vand.u32 %v505, 4294901760
    %v6953 = vsub.f32 %v505, %v6952
    %v6954 = vand.u32 %v6953, 4294901760
    %6955 = vmatpush.msra.mxu0 %v6954
    %v6956 = vand.u32 %v504, 4294901760
    %v6957 = vsub.f32 %v504, %v6956
    %v6958 = vand.u32 %v6957, 4294901760
    %6959 = vmatpush.msra.mxu0 %v6958
    %v6960 = vand.u32 %v503, 4294901760
    %v6961 = vsub.f32 %v503, %v6960
    %v6962 = vand.u32 %v6961, 4294901760
    %6963 = vmatpush.msra.mxu0 %v6962
    %v6964 = vand.u32 %v502, 4294901760
    %v6965 = vsub.f32 %v502, %v6964
    %v6966 = vand.u32 %v6965, 4294901760
    %6967 = vmatpush.msra.mxu0 %v6966
    %v6968 = vand.u32 %v501, 4294901760
    %v6969 = vsub.f32 %v501, %v6968
    %v6970 = vand.u32 %v6969, 4294901760
    %6971 = vmatpush.msra.mxu0 %v6970
    %v6972 = vand.u32 %v4037, 4294901760
    %6973 = vmatmul.f32.gmra.mxu0 %v6972
    %v6974 = vpop.f32.mrf.mxu0
    %v6975 = vadd.f32 %v6900, %v6974
    %v6976 = vand.u32 %v4045, 4294901760
    %6977 = vmatmul.f32.gmra.mxu0 %v6976
    %v6978 = vpop.f32.mrf.mxu0
    %v6979 = vadd.f32 %v6906, %v6978
    %6980 = vdwg.mxu0
    %v6981 = vand.u32 %v516, 4294901760
    %6982 = vmatpush.msra.mxu0 %v6981
    %v6983 = vand.u32 %v515, 4294901760
    %6984 = vmatpush.msra.mxu0 %v6983
    %v6985 = vand.u32 %v514, 4294901760
    %6986 = vmatpush.msra.mxu0 %v6985
    %v6987 = vand.u32 %v513, 4294901760
    %6988 = vmatpush.msra.mxu0 %v6987
    %v6989 = vand.u32 %v512, 4294901760
    %6990 = vmatpush.msra.mxu0 %v6989
    %v6991 = vand.u32 %v511, 4294901760
    %6992 = vmatpush.msra.mxu0 %v6991
    %v6993 = vand.u32 %v510, 4294901760
    %6994 = vmatpush.msra.mxu0 %v6993
    %v6995 = vand.u32 %v509, 4294901760
    %6996 = vmatpush.msra.mxu0 %v6995
    %v6997 = vand.u32 %v508, 4294901760
    %6998 = vmatpush.msra.mxu0 %v6997
    %v6999 = vand.u32 %v507, 4294901760
    %7000 = vmatpush.msra.mxu0 %v6999
    %v7001 = vand.u32 %v506, 4294901760
    %7002 = vmatpush.msra.mxu0 %v7001
    %v7003 = vand.u32 %v505, 4294901760
    %7004 = vmatpush.msra.mxu0 %v7003
    %v7005 = vand.u32 %v504, 4294901760
    %7006 = vmatpush.msra.mxu0 %v7005
    %v7007 = vand.u32 %v503, 4294901760
    %7008 = vmatpush.msra.mxu0 %v7007
    %v7009 = vand.u32 %v502, 4294901760
    %7010 = vmatpush.msra.mxu0 %v7009
    %v7011 = vand.u32 %v501, 4294901760
    %7012 = vmatpush.msra.mxu0 %v7011
    %v7013 = vand.u32 %v4037, 4294901760
    %7014 = vmatmul.f32.gmra.mxu0 %v7013
    %v7015 = vpop.f32.mrf.mxu0
    %v7016 = vadd.f32 %v6975, %v7015
    %v7017 = vand.u32 %v4045, 4294901760
    %7018 = vmatmul.f32.gmra.mxu0 %v7017
    %v7019 = vpop.f32.mrf.mxu0
    %v7020 = vadd.f32 %v6979, %v7019
    %7021 = vdwg.mxu0
    %v7022 = vsub.f32 %v7016, %v323
    %v7023 = vsub.f32 %v7020, %v324
    %v7024 = vmul.f32 %v7022, %v7022
    %v7025 = vmul.f32 %v7023, %v7023
    %v7026 = vsel %vm39, %v7024, 0.0
    %7027 = vadd.xlane.f32.xlu0 %v7026
    %v7028 = vpop.xlane.xlu0 %7027
    %v7029 = vsel %vm39, %v7025, 0.0
    %7030 = vadd.xlane.f32.xlu0 %v7029
    %v7031 = vpop.xlane.xlu0 %7030
    %7032 = vst.msk [vmem:[#allocation2] sm:$0xff] %vm39, %v7016
    %7033 = vst.msk [vmem:[#allocation2 + $0x8] sm:$0xff] %vm39, %v7020
    %vm7034 = vcmask 7168
    %7035 = vst.msk [vmem:[%s7] sm:$0xff] %vm7034, %v3969
    %7036 = vst.msk [vmem:[%s7 + $0x8] sm:$0xff] %vm7034, %v3997
    %vm7037 = vcmask 130048
    %v7039 = vsel %vm7037, 1.0, 0
    %7041 = vmatpush.msra.mxu0 0.0
    %7042 = vmatpush.msra.mxu0 0.0
    %7043 = vmatpush.msra.mxu0 0.0
    %7044 = vmatpush.msra.mxu0 0.0
    %7045 = vmatpush.msra.mxu0 0.0
    %7046 = vmatpush.msra.mxu0 0.0
    %7047 = vmatpush.msra.mxu0 0.0
    %7048 = vmatpush.msra.mxu0 0.0
    %7049 = vmatpush.msra.mxu0 0.0
    %7050 = vmatpush.msra.mxu0 0.0
    %7051 = vmatpush.msra.mxu0 0.0
    %7052 = vmatpush.msra.mxu0 0.0
    %7053 = vmatpush.msra.mxu0 0.0
    %7054 = vmatpush.msra.mxu0 0.0
    %7055 = vmatpush.msra.mxu0 %v4038
    %7056 = vmatpush.msra.mxu0 %v4030
    %7057 = vmatmul.f32.gmra.mxu0 %v7039
    %v7058 = vpop.f32.mrf.mxu0
    %v7059 = vadd.f32 0.0, %v7058
    %7060 = vdwg.mxu0
    %7061 = vmatpush.msra.mxu0 0.0
    %7062 = vmatpush.msra.mxu0 0.0
    %7063 = vmatpush.msra.mxu0 0.0
    %7064 = vmatpush.msra.mxu0 0.0
    %7065 = vmatpush.msra.mxu0 0.0
    %7066 = vmatpush.msra.mxu0 0.0
    %7067 = vmatpush.msra.mxu0 0.0
    %7068 = vmatpush.msra.mxu0 0.0
    %7069 = vmatpush.msra.mxu0 0.0
    %7070 = vmatpush.msra.mxu0 0.0
    %7071 = vmatpush.msra.mxu0 0.0
    %7072 = vmatpush.msra.mxu0 0.0
    %7073 = vmatpush.msra.mxu0 0.0
    %7074 = vmatpush.msra.mxu0 0.0
    %7075 = vmatpush.msra.mxu0 %v4039
    %7076 = vmatpush.msra.mxu0 %v4031
    %7077 = vmatmul.f32.gmra.mxu0 %v7039
    %v7078 = vpop.f32.mrf.mxu0
    %v7079 = vadd.f32 0.0, %v7078
    %7080 = vdwg.mxu0
    %7081 = vmatpush.msra.mxu0 0.0
    %7082 = vmatpush.msra.mxu0 0.0
    %7083 = vmatpush.msra.mxu0 0.0
    %7084 = vmatpush.msra.mxu0 0.0
    %7085 = vmatpush.msra.mxu0 0.0
    %7086 = vmatpush.msra.mxu0 0.0
    %7087 = vmatpush.msra.mxu0 0.0
    %7088 = vmatpush.msra.mxu0 0.0
    %7089 = vmatpush.msra.mxu0 0.0
    %7090 = vmatpush.msra.mxu0 0.0
    %7091 = vmatpush.msra.mxu0 0.0
    %7092 = vmatpush.msra.mxu0 0.0
    %7093 = vmatpush.msra.mxu0 0.0
    %7094 = vmatpush.msra.mxu0 0.0
    %7095 = vmatpush.msra.mxu0 %v4040
    %7096 = vmatpush.msra.mxu0 %v4032
    %7097 = vmatmul.f32.gmra.mxu0 %v7039
    %v7098 = vpop.f32.mrf.mxu0
    %v7099 = vadd.f32 0.0, %v7098
    %7100 = vdwg.mxu0
    %7101 = vmatpush.msra.mxu0 0.0
    %7102 = vmatpush.msra.mxu0 0.0
    %7103 = vmatpush.msra.mxu0 0.0
    %7104 = vmatpush.msra.mxu0 0.0
    %7105 = vmatpush.msra.mxu0 0.0
    %7106 = vmatpush.msra.mxu0 0.0
    %7107 = vmatpush.msra.mxu0 0.0
    %7108 = vmatpush.msra.mxu0 0.0
    %7109 = vmatpush.msra.mxu0 0.0
    %7110 = vmatpush.msra.mxu0 0.0
    %7111 = vmatpush.msra.mxu0 0.0
    %7112 = vmatpush.msra.mxu0 0.0
    %7113 = vmatpush.msra.mxu0 0.0
    %7114 = vmatpush.msra.mxu0 0.0
    %7115 = vmatpush.msra.mxu0 %v4041
    %7116 = vmatpush.msra.mxu0 %v4033
    %7117 = vmatmul.f32.gmra.mxu0 %v7039
    %v7118 = vpop.f32.mrf.mxu0
    %v7119 = vadd.f32 0.0, %v7118
    %7120 = vdwg.mxu0
    %7121 = vmatpush.msra.mxu0 0.0
    %7122 = vmatpush.msra.mxu0 0.0
    %7123 = vmatpush.msra.mxu0 0.0
    %7124 = vmatpush.msra.mxu0 0.0
    %7125 = vmatpush.msra.mxu0 0.0
    %7126 = vmatpush.msra.mxu0 0.0
    %7127 = vmatpush.msra.mxu0 0.0
    %7128 = vmatpush.msra.mxu0 0.0
    %7129 = vmatpush.msra.mxu0 0.0
    %7130 = vmatpush.msra.mxu0 0.0
    %7131 = vmatpush.msra.mxu0 0.0
    %7132 = vmatpush.msra.mxu0 0.0
    %7133 = vmatpush.msra.mxu0 0.0
    %7134 = vmatpush.msra.mxu0 0.0
    %7135 = vmatpush.msra.mxu0 %v4042
    %7136 = vmatpush.msra.mxu0 %v4034
    %7137 = vmatmul.f32.gmra.mxu0 %v7039
    %v7138 = vpop.f32.mrf.mxu0
    %v7139 = vadd.f32 0.0, %v7138
    %7140 = vdwg.mxu0
    %7141 = vmatpush.msra.mxu0 0.0
    %7142 = vmatpush.msra.mxu0 0.0
    %7143 = vmatpush.msra.mxu0 0.0
    %7144 = vmatpush.msra.mxu0 0.0
    %7145 = vmatpush.msra.mxu0 0.0
    %7146 = vmatpush.msra.mxu0 0.0
    %7147 = vmatpush.msra.mxu0 0.0
    %7148 = vmatpush.msra.mxu0 0.0
    %7149 = vmatpush.msra.mxu0 0.0
    %7150 = vmatpush.msra.mxu0 0.0
    %7151 = vmatpush.msra.mxu0 0.0
    %7152 = vmatpush.msra.mxu0 0.0
    %7153 = vmatpush.msra.mxu0 0.0
    %7154 = vmatpush.msra.mxu0 0.0
    %7155 = vmatpush.msra.mxu0 %v4043
    %7156 = vmatpush.msra.mxu0 %v4035
    %7157 = vmatmul.f32.gmra.mxu0 %v7039
    %v7158 = vpop.f32.mrf.mxu0
    %v7159 = vadd.f32 0.0, %v7158
    %7160 = vdwg.mxu0
    %7161 = vmatpush.msra.mxu0 0.0
    %7162 = vmatpush.msra.mxu0 0.0
    %7163 = vmatpush.msra.mxu0 0.0
    %7164 = vmatpush.msra.mxu0 0.0
    %7165 = vmatpush.msra.mxu0 0.0
    %7166 = vmatpush.msra.mxu0 0.0
    %7167 = vmatpush.msra.mxu0 0.0
    %7168 = vmatpush.msra.mxu0 0.0
    %7169 = vmatpush.msra.mxu0 0.0
    %7170 = vmatpush.msra.mxu0 0.0
    %7171 = vmatpush.msra.mxu0 0.0
    %7172 = vmatpush.msra.mxu0 0.0
    %7173 = vmatpush.msra.mxu0 0.0
    %7174 = vmatpush.msra.mxu0 0.0
    %7175 = vmatpush.msra.mxu0 %v4044
    %7176 = vmatpush.msra.mxu0 %v4036
    %7177 = vmatmul.f32.gmra.mxu0 %v7039
    %v7178 = vpop.f32.mrf.mxu0
    %v7179 = vadd.f32 0.0, %v7178
    %7180 = vdwg.mxu0
    %7181 = vmatpush.msra.mxu0 0.0
    %7182 = vmatpush.msra.mxu0 0.0
    %7183 = vmatpush.msra.mxu0 0.0
    %7184 = vmatpush.msra.mxu0 0.0
    %7185 = vmatpush.msra.mxu0 0.0
    %7186 = vmatpush.msra.mxu0 0.0
    %7187 = vmatpush.msra.mxu0 0.0
    %7188 = vmatpush.msra.mxu0 0.0
    %7189 = vmatpush.msra.mxu0 0.0
    %7190 = vmatpush.msra.mxu0 0.0
    %7191 = vmatpush.msra.mxu0 0.0
    %7192 = vmatpush.msra.mxu0 0.0
    %7193 = vmatpush.msra.mxu0 0.0
    %7194 = vmatpush.msra.mxu0 0.0
    %7195 = vmatpush.msra.mxu0 %v4045
    %7196 = vmatpush.msra.mxu0 %v4037
    %7197 = vmatmul.f32.gmra.mxu0 %v7039
    %v7198 = vpop.f32.mrf.mxu0
    %v7199 = vadd.f32 0.0, %v7198
    %7200 = vdwg.mxu0
    %v7201 = vperm.slane %v7059, 0
    %v7202 = vperm.slane %v7079, 0
    %v7203 = vperm.slane %v7099, 0
    %v7204 = vperm.slane %v7119, 0
    %v7205 = vperm.slane %v7139, 0
    %v7206 = vperm.slane %v7159, 0
    %v7207 = vperm.slane %v7179, 0
    %v7208 = vperm.slane %v7199, 0
    %7209 = vst [vmem:[#allocation4] sm:$0xff] %v7201
    %7210 = vst [vmem:[#allocation4 + $0x8] sm:$0xff] %v7202
    %7211 = vst [vmem:[#allocation4 + $0x10] sm:$0xff] %v7203
    %7212 = vst [vmem:[#allocation4 + $0x18] sm:$0xff] %v7204
    %7213 = vst [vmem:[#allocation4 + $0x20] sm:$0xff] %v7205
    %7214 = vst [vmem:[#allocation4 + $0x28] sm:$0xff] %v7206
    %7215 = vst [vmem:[#allocation4 + $0x30] sm:$0xff] %v7207
    %7216 = vst [vmem:[#allocation4 + $0x38] sm:$0xff] %v7208
    %v7217 = vsel %vm7034, %v7028, 0.0
    %v7218 = vsel %vm7034, %v7031, 0.0
    %v7219 = vadd.f32 %v7217, %v7218
    %7220 = vadd.xlane.f32.xlu0 %v7219
    %v7221 = vpop.xlane.xlu0 %7220
    %v7222 = vrot.slane %v7221, 4
    %v7223 = vadd.f32 %v7221, %v7222
    %v7224 = vrot.slane %v7223, 2
    %v7225 = vadd.f32 %v7223, %v7224
    %v7226 = vrot.slane %v7225, 1
    %v7227 = vadd.f32 %v7225, %v7226
    %s7228 = vtos %v7227
    %v7229 = vstv %s7228
    %7230 = vst [vmem:[#allocation6] sm:$0xff] %v7229
    // Predicated region
    $region26: #{tpu_custom_call.1} parent=1 // pred_check
      _
    $region27: #{tpu_custom_call.1} parent=1 // pred_check_branch
      %7232 = sbr.rel (0) target = $region29
    $region28: #{tpu_custom_call.1} parent=1 // pred_region
      %7234 = vsyncadd [#allocation3], 0
      %s7235 = sshll.u32 [#allocation2], 4
      %s7236 = int_to_ptr.vmem [resolvable:$true] %s7235
      %s7237 = sshll.u32 %s6, 4
      %s7238 = int_to_ptr.hbm [resolvable:$true] %s7237
      %7243 = dma.vmem_to_hbm [thread:$0]  %s7236, 256, %s7238, [#allocation3], 128, 128, 8
    $region29: #{tpu_custom_call.1} parent=1 // pred_fallthru
      _
    // Predicated region
    $region30: #{tpu_custom_call.1} parent=1 // pred_check
      _
    $region31: #{tpu_custom_call.1} parent=1 // pred_check_branch
      %7245 = sbr.rel (0) target = $region33
    $region32: #{tpu_custom_call.1} parent=1 // pred_region
      _
    $region33: #{tpu_custom_call.1} parent=1 // pred_fallthru
      _
    // Predicated region
    $region34: #{tpu_custom_call.1} parent=1 // pred_check
      _
    $region35: #{tpu_custom_call.1} parent=1 // pred_check_branch
      %7247 = sbr.rel (0) target = $region37
    $region36: #{tpu_custom_call.1} parent=1 // pred_region
      %7249 = vsyncadd [#allocation5], 0
      %s7251 = sshll.u32 [#allocation4], 4
      %s7252 = int_to_ptr.vmem [resolvable:$true] %s7251
      %s7253 = sshll.u32 %s8, 4
      %s7254 = int_to_ptr.hbm [resolvable:$true] %s7253
      %7256 = dma.vmem_to_hbm [thread:$0]  %s7252, 1024, %s7254, [#allocation5]
    $region37: #{tpu_custom_call.1} parent=1 // pred_fallthru
      _
    // Predicated region
    $region38: #{tpu_custom_call.1} parent=1 // pred_check
      _
    $region39: #{tpu_custom_call.1} parent=1 // pred_check_branch
      %7258 = sbr.rel (0) target = $region41
    $region40: #{tpu_custom_call.1} parent=1 // pred_region
      %7260 = vsyncadd [#allocation5], 0
      %s7262 = sshll.u32 [#allocation6], 4
      %s7263 = int_to_ptr.vmem [resolvable:$true] %s7262
      %s7264 = sshll.u32 %s9, 4
      %s7265 = int_to_ptr.hbm [resolvable:$true] %s7264
      %7267 = dma.vmem_to_hbm [thread:$0]  %s7263, 128, %s7265, [#allocation5]
    $region41: #{tpu_custom_call.1} parent=1 // pred_fallthru
      _
    // Predicated region
    $region42: #{tpu_custom_call.1} parent=1 // pred_check
      _
    $region43: #{tpu_custom_call.1} parent=1 // pred_check_branch
      %7269 = sbr.rel (0) target = $region45
    $region44: #{tpu_custom_call.1} parent=1 // pred_region
      %7271 = dma.done [#allocation3], 256
    $region45: #{tpu_custom_call.1} parent=1 // pred_fallthru
      _
    // Predicated region
    $region46: #{tpu_custom_call.1} parent=1 // pred_check
      _
    $region47: #{tpu_custom_call.1} parent=1 // pred_check_branch
      %7273 = sbr.rel (0) target = $region49
    $region48: #{tpu_custom_call.1} parent=1 // pred_region
      _
    $region49: #{tpu_custom_call.1} parent=1 // pred_fallthru
      _
    // Predicated region
    $region50: #{tpu_custom_call.1} parent=1 // pred_check
      _
    $region51: #{tpu_custom_call.1} parent=1 // pred_check_branch
      %7275 = sbr.rel (0) target = $region53
    $region52: #{tpu_custom_call.1} parent=1 // pred_region
      %7277 = dma.done [#allocation5], 1024
    $region53: #{tpu_custom_call.1} parent=1 // pred_fallthru
      _
    // Predicated region
    $region54: #{tpu_custom_call.1} parent=1 // pred_check
      _
    $region55: #{tpu_custom_call.1} parent=1 // pred_check_branch
      %7279 = sbr.rel (0) target = $region57
    $region56: #{tpu_custom_call.1} parent=1 // pred_region
      %7281 = dma.done [#allocation5], 128
    $region57: #{tpu_custom_call.1} parent=1 // pred_fallthru
      _
    %7282 = vsyncpa [#allocation3], 1
    %7283 = vsyncpa [#allocation5], 1

</llo_original>
